<compile_context>
chip_gen: v7x
topology: tpu7x:2x2x1
jax: 0.10.0
libtpu: 0.0.40
codegen_flags: <defaults>
</compile_context>

<pallas_src>
import numpy as np

import jax
import jax.numpy as jnp
from jax.experimental import pallas as pl
from jax.experimental.pallas import tpu as pltpu


# ----------------------------------------------------------------------------
# Layout constants
# ----------------------------------------------------------------------------
TB = 16                        # samples per grid step (batch block)

IMG = 28                       # input spatial size (required by fc1 = 16*7*7)
WP1 = 32                       # stage-1 padded row stride (1+28+3)
FLAT1 = 30 * WP1               # 960 flat positions (30 padded rows x 32)
BASE1 = WP1 + 1                # flat index of output pixel (0,0)'s center
L1 = (IMG - 1) * WP1 + IMG     # 892 contiguous conv1-output columns

WP2 = 16                       # stage-2 padded row stride (1+14+1)
FLAT2 = 16 * WP2               # 256 flat positions for the padded 14x14 map
BASE2 = WP2 + 1                # 17
L2 = 13 * WP2 + 14             # 222 contiguous conv2-output columns

TAPS1 = tuple(BASE1 + (dh - 1) * WP1 + (dw - 1)
              for dh in range(3) for dw in range(3))
TAPS2 = tuple(BASE2 + (dh - 1) * WP2 + (dw - 1)
              for dh in range(3) for dw in range(3))


def _round_up(a, m):
    return (a + m - 1) // m * m


# ----------------------------------------------------------------------------
# Host-side constant matrices
# ----------------------------------------------------------------------------
def _pool1_scatter_matrix():
    """(L1, FLAT2): conv1+relu columns -> 2x2-avg pooled values placed into the
    zero-padded 16x16 flat layout consumed by conv2 (garbage pad columns of the
    conv1 output map to nothing)."""
    m = np.zeros((L1, FLAT2), np.float32)
    for h in range(14):
        for w in range(14):
            r2 = WP2 * (h + 1) + (w + 1)
            for i in range(2):
                for l in range(2):
                    j = WP1 * (2 * h + i) + (2 * w + l)
                    m[j, r2] = 0.25
    return m


def _pool2_matrix():
    """(L2, 49): conv2+relu columns -> pooled 7x7 values at q = 7*hq + wq."""
    m = np.zeros((L2, 49), np.float32)
    for hq in range(7):
        for wq in range(7):
            q = 7 * hq + wq
            for i in range(2):
                for l in range(2):
                    j = WP2 * (2 * hq + i) + (2 * wq + l)
                    m[j, q] = 0.25
    return m


# ----------------------------------------------------------------------------
# The fused Pallas kernel (one grid step = TB samples)
# ----------------------------------------------------------------------------
def _lenet5_kernel(x_ref, w1_ref, b1_ref, p1_ref, w2_ref, b2_ref, q_ref,
                   bf1_ref, wf2_ref, bf2_ref, wf3_ref, bf3_ref, o_ref):
    f32 = jnp.float32
    bf16 = jnp.bfloat16

    # ---- conv1 + ReLU: one MXU matmul over a tap-stacked operand -----------
    # xs1 rows are (tap k, sample b); W1big[(b,c),(k,b)] = conv1_w[c,k].
    x = x_ref[...]                                                 # (TB, 960)
    xs1 = jnp.concatenate([x[:, s:s + L1] for s in TAPS1], axis=0)  # (9TB, L1)
    a1 = jnp.dot(w1_ref[...], xs1.astype(bf16),
                 preferred_element_type=f32)
    a1 = jnp.maximum(a1 + b1_ref[...], 0.0)            # (6TB, L1) rows (b, c)

    # ---- pool1 (2x2 avg) fused with zero re-padding into stage-2 layout ----
    f2 = jnp.dot(a1.astype(bf16), p1_ref[...],
                 preferred_element_type=f32)            # (6TB, 256) rows (b,c)

    # ---- conv2 + ReLU: one MXU matmul, contraction over (tap, Cin) with a
    # per-sample block-diagonal big weight; output rows are (Cout, b). --------
    xs2 = jnp.concatenate([f2[:, s:s + L2] for s in TAPS2], axis=0)  # (54TB,L2)
    a2 = jnp.dot(w2_ref[...], xs2.astype(bf16),
                 preferred_element_type=f32)
    a2 = jnp.maximum(a2 + b2_ref[...], 0.0).astype(bf16)  # (16TB, L2) (co, b)

    # ---- pool2 + NCHW flatten + fc1 fused (both linear -> constant Q):
    # 16 accumulating (TB, L2) x (L2, 120) dots, one per conv2 channel. ------
    h = bf1_ref[...]                                               # (1, 120)
    for c in range(16):
        h = h + jnp.dot(a2[c * TB:(c + 1) * TB, :],
                        q_ref[c * L2:(c + 1) * L2, :],
                        preferred_element_type=f32)
    h = jnp.maximum(h, 0.0)                                        # (TB, 120)

    # ---- fc2 + ReLU ---------------------------------------------------------
    h = jnp.maximum(
        jnp.dot(h.astype(bf16), wf2_ref[...],
                preferred_element_type=f32) + bf2_ref[...], 0.0)   # (TB, 84)

    # Dropout(0.2) is identity in eval mode.
    # TODO(synk): training-mode dropout would need pltpu.prng_seed /
    # pltpu.prng_random_bits + masking in-kernel.

    # ---- fc3 (output lanes padded to a multiple of 128 -> unmasked store) ---
    out = jnp.dot(h.astype(bf16), wf3_ref[...],
                  preferred_element_type=f32) + bf3_ref[...]       # (TB, ncp)
    o_ref[...] = out.astype(o_ref.dtype)


# ----------------------------------------------------------------------------
# Forward pass wrapper
# ----------------------------------------------------------------------------
def lenet5_dropout_forward(x_nchw, kp, num_classes):
    n = x_nchw.shape[0]
    ncpad = kp["wf3"].shape[1]

    # XLA glue: embed the 28x28 image into the stage-1 zero-padded flat layout
    # (row stride 32) and pad the batch up to a multiple of TB.
    img = x_nchw.reshape(n, IMG, IMG).astype(jnp.float32)
    img = jnp.pad(img, ((0, 0), (1, 1), (1, WP1 - IMG - 1)))
    x_flat = img.reshape(n, FLAT1)

    npad = _round_up(n, TB)
    if npad != n:
        x_flat = jnp.pad(x_flat, ((0, npad - n), (0, 0)))

    out = pl.pallas_call(
        _lenet5_kernel,
        out_shape=jax.ShapeDtypeStruct((npad, ncpad), jnp.float32),
        grid=(npad // TB,),
        in_specs=[
            pl.BlockSpec((TB, FLAT1), lambda i: (i, 0)),          # images
            pl.BlockSpec((6 * TB, 9 * TB), lambda i: (0, 0)),     # conv1 big w
            pl.BlockSpec((6 * TB, 1), lambda i: (0, 0)),          # conv1 bias
            pl.BlockSpec((L1, FLAT2), lambda i: (0, 0)),          # pool1 matrix
            pl.BlockSpec((16 * TB, 54 * TB), lambda i: (0, 0)),   # conv2 big w
            pl.BlockSpec((16 * TB, 1), lambda i: (0, 0)),         # conv2 bias
            pl.BlockSpec((16 * L2, 120), lambda i: (0, 0)),       # pool2+fc1 Q
            pl.BlockSpec((1, 120), lambda i: (0, 0)),             # fc1 bias
            pl.BlockSpec((120, 84), lambda i: (0, 0)),            # fc2 w
            pl.BlockSpec((1, 84), lambda i: (0, 0)),              # fc2 bias
            pl.BlockSpec((84, ncpad), lambda i: (0, 0)),          # fc3 w (pad)
            pl.BlockSpec((1, ncpad), lambda i: (0, 0)),           # fc3 b (pad)
        ],
        out_specs=pl.BlockSpec((TB, ncpad), lambda i: (i, 0)),
        compiler_params=pltpu.CompilerParams(
            dimension_semantics=("parallel",)),
    )(x_flat, kp["w1big"], kp["b1rep"], kp["p1"], kp["w2big"], kp["b2rep"],
      kp["q"], kp["bf1"], kp["wf2"], kp["bf2"], kp["wf3"], kp["bf3"])
    return out[:n, :num_classes]


# ----------------------------------------------------------------------------
# Parameters: raw PyTorch-layout init + one-time kernel-layout repack
# ----------------------------------------------------------------------------
def init_params(key, output_classes):
    ks = jax.random.split(key, 10)
    s = 0.1
    return {
        "conv1_w": s * jax.random.normal(ks[0], (6, 1, 3, 3), jnp.float32),
        "conv1_b": s * jax.random.normal(ks[1], (6,), jnp.float32),
        "conv2_w": s * jax.random.normal(ks[2], (16, 6, 3, 3), jnp.float32),
        "conv2_b": s * jax.random.normal(ks[3], (16,), jnp.float32),
        "fc1_w": s * jax.random.normal(ks[4], (120, 16 * 7 * 7), jnp.float32),
        "fc1_b": s * jax.random.normal(ks[5], (120,), jnp.float32),
        "fc2_w": s * jax.random.normal(ks[6], (84, 120), jnp.float32),
        "fc2_b": s * jax.random.normal(ks[7], (84,), jnp.float32),
        "fc3_w": s * jax.random.normal(ks[8], (output_classes, 84), jnp.float32),
        "fc3_b": s * jax.random.normal(ks[9], (output_classes,), jnp.float32),
    }


def prepare_params(p):
    """One-time repack of PyTorch-layout weights into kernel-layout constants."""
    f32 = np.float32
    w1 = np.asarray(p["conv1_w"], f32).reshape(6, 9)
    b1 = np.asarray(p["conv1_b"], f32)
    w2 = np.asarray(p["conv2_w"], f32).reshape(16, 6, 9)
    b2 = np.asarray(p["conv2_b"], f32)
    fc1_w = np.asarray(p["fc1_w"], f32)                 # (120, 784)
    fc1_b = np.asarray(p["fc1_b"], f32)
    fc2_w = np.asarray(p["fc2_w"], f32)                 # (84, 120)
    fc2_b = np.asarray(p["fc2_b"], f32)
    fc3_w = np.asarray(p["fc3_w"], f32)                 # (nc, 84)
    fc3_b = np.asarray(p["fc3_b"], f32)
    nc = fc3_w.shape[0]
    ncpad = _round_up(nc, 128)

    # conv1 "big" weight: output rows (b, c), contraction rows (tap k, b).
    w1big = np.zeros((6 * TB, 9 * TB), f32)
    for b in range(TB):
        for c in range(6):
            for k in range(9):
                w1big[b * 6 + c, k * TB + b] = w1[c, k]
    b1rep = np.tile(b1, TB).reshape(6 * TB, 1)          # row b*6+c -> b1[c]

    # conv2 "big" weight: output rows (co, b), contraction rows (k, b, ci).
    w2big = np.zeros((16 * TB, 9 * 6 * TB), f32)
    for co in range(16):
        for b in range(TB):
            for k in range(9):
                for ci in range(6):
                    w2big[co * TB + b, k * 6 * TB + b * 6 + ci] = w2[co, ci, k]
    b2rep = np.repeat(b2, TB).reshape(16 * TB, 1)       # row co*TB+b -> b2[co]

    # pool2 + NCHW flatten + fc1 fused (both linear):
    # Q[c*L2 + j, o] = sum_q pool2[j, q] * fc1_w[o, c*49 + q]
    p2m = _pool2_matrix()                                # (L2, 49)
    wf1 = fc1_w.reshape(120, 16, 49).transpose(1, 2, 0)  # (16, 49, 120)
    q = np.einsum("jq,cqo->cjo", p2m, wf1).reshape(16 * L2, 120)

    wf3 = np.zeros((84, ncpad), f32)
    wf3[:, :nc] = fc3_w.T
    bf3 = np.zeros((1, ncpad), f32)
    bf3[0, :nc] = fc3_b

    bf16 = jnp.bfloat16
    return {
        "w1big": jnp.asarray(w1big, bf16),
        "b1rep": jnp.asarray(b1rep, jnp.float32),
        "p1": jnp.asarray(_pool1_scatter_matrix(), bf16),
        "w2big": jnp.asarray(w2big, bf16),
        "b2rep": jnp.asarray(b2rep, jnp.float32),
        "q": jnp.asarray(q, bf16),
        "bf1": jnp.asarray(fc1_b.reshape(1, 120), jnp.float32),
        "wf2": jnp.asarray(fc2_w.T, bf16),
        "bf2": jnp.asarray(fc2_b.reshape(1, 84), jnp.float32),
        "wf3": jnp.asarray(wf3, bf16),
        "bf3": jnp.asarray(bf3, jnp.float32),
    }


# ----------------------------------------------------------------------------
# Pure-JAX reference (mirrors the PyTorch module, eval mode) for verification
# ----------------------------------------------------------------------------
def lenet5_reference(x, p):
    hi = jax.lax.Precision.HIGHEST
    y = jax.lax.conv_general_dilated(
        x, p["conv1_w"], (1, 1), ((1, 1), (1, 1)),
        dimension_numbers=("NCHW", "OIHW", "NCHW"), precision=hi)
    y = jax.nn.relu(y + p["conv1_b"].reshape(1, 6, 1, 1))
    n, c, h, w = y.shape
    y = y.reshape(n, c, h // 2, 2, w // 2, 2).mean(axis=(3, 5))
    y = jax.lax.conv_general_dilated(
        y, p["conv2_w"], (1, 1), ((1, 1), (1, 1)),
        dimension_numbers=("NCHW", "OIHW", "NCHW"), precision=hi)
    y = jax.nn.relu(y + p["conv2_b"].reshape(1, 16, 1, 1))
    n, c, h, w = y.shape
    y = y.reshape(n, c, h // 2, 2, w // 2, 2).mean(axis=(3, 5))
    y = y.reshape(n, -1)                                   # NCHW flatten
    y = jax.nn.relu(jnp.dot(y, p["fc1_w"].T, precision=hi) + p["fc1_b"])
    y = jax.nn.relu(jnp.dot(y, p["fc2_w"].T, precision=hi) + p["fc2_b"])
    # Dropout(0.2): eval-mode identity.
    return jnp.dot(y, p["fc3_w"].T, precision=hi) + p["fc3_b"]


# ----------------------------------------------------------------------------
if __name__ == "__main__":
    OUTPUT_CLASSES = 10
    BATCH = 2

    key = jax.random.PRNGKey(0)
    k_x, k_p = jax.random.split(key)

    # 28x28 single-channel input is required by fc1 = Linear(16*7*7, 120).
    x = jax.random.normal(k_x, (BATCH, 1, 28, 28), jnp.float32)
    params = init_params(k_p, OUTPUT_CLASSES)
    kparams = prepare_params(params)            # one-time constant build

    fwd = jax.jit(lenet5_dropout_forward, static_argnums=(2,))
    out = fwd(x, kparams, OUTPUT_CLASSES)
    jax.block_until_ready(out)

    assert out.shape == (BATCH, OUTPUT_CLASSES), out.shape
    assert bool(jnp.all(jnp.isfinite(out)))

    ref = jax.jit(lenet5_reference)(x, params)
    max_err = float(jnp.max(jnp.abs(out - ref)))
    assert jnp.allclose(out, ref, rtol=2e-2, atol=2e-2), max_err

    print("KERNEL_OK")
</pallas_src>

<mosaic_0001>
module attributes {stable_mosaic.version = 11 : i64} {
  func.func @_lenet5_kernel(%arg0: i32, %arg1: memref<16x960xf32, #tpu.memory_space<vmem>>, %arg2: memref<96x144xbf16, #tpu.memory_space<vmem>>, %arg3: memref<96x1xf32, #tpu.memory_space<vmem>>, %arg4: memref<892x256xbf16, #tpu.memory_space<vmem>>, %arg5: memref<256x864xbf16, #tpu.memory_space<vmem>>, %arg6: memref<256x1xf32, #tpu.memory_space<vmem>>, %arg7: memref<3552x120xbf16, #tpu.memory_space<vmem>>, %arg8: memref<1x120xf32, #tpu.memory_space<vmem>>, %arg9: memref<120x84xbf16, #tpu.memory_space<vmem>>, %arg10: memref<1x84xf32, #tpu.memory_space<vmem>>, %arg11: memref<84x128xbf16, #tpu.memory_space<vmem>>, %arg12: memref<1x128xf32, #tpu.memory_space<vmem>>, %arg13: memref<16x128xf32, #tpu.memory_space<vmem>>) attributes {dimension_semantics = [#tpu.dimension_semantics<parallel>], iteration_bounds = array<i64: 1>, scalar_prefetch = 0 : i64, scratch_operands = 0 : i64, tpu.core_type = #tpu.core_type<tc>, window_params = [{transform_indices = @transform_0, window_bounds = array<i64: 16, 960>}, {pipeline_mode = #tpu.pipeline_mode<synchronous>, transform_indices = @transform_1, window_bounds = array<i64: 96, 144>}, {pipeline_mode = #tpu.pipeline_mode<synchronous>, transform_indices = @transform_2, window_bounds = array<i64: 96, 1>}, {pipeline_mode = #tpu.pipeline_mode<synchronous>, transform_indices = @transform_3, window_bounds = array<i64: 892, 256>}, {pipeline_mode = #tpu.pipeline_mode<synchronous>, transform_indices = @transform_4, window_bounds = array<i64: 256, 864>}, {pipeline_mode = #tpu.pipeline_mode<synchronous>, transform_indices = @transform_5, window_bounds = array<i64: 256, 1>}, {pipeline_mode = #tpu.pipeline_mode<synchronous>, transform_indices = @transform_6, window_bounds = array<i64: 3552, 120>}, {pipeline_mode = #tpu.pipeline_mode<synchronous>, transform_indices = @transform_7, window_bounds = array<i64: 1, 120>}, {pipeline_mode = #tpu.pipeline_mode<synchronous>, transform_indices = @transform_8, window_bounds = array<i64: 120, 84>}, {pipeline_mode = #tpu.pipeline_mode<synchronous>, transform_indices = @transform_9, window_bounds = array<i64: 1, 84>}, {pipeline_mode = #tpu.pipeline_mode<synchronous>, transform_indices = @transform_10, window_bounds = array<i64: 84, 128>}, {pipeline_mode = #tpu.pipeline_mode<synchronous>, transform_indices = @transform_11, window_bounds = array<i64: 1, 128>}, {transform_indices = @transform_12, window_bounds = array<i64: 16, 128>}]} {
    %c0 = arith.constant 0 : index
    %c0_0 = arith.constant 0 : index
    %0 = vector.load %arg1[%c0, %c0_0] : memref<16x960xf32, #tpu.memory_space<vmem>>, vector<16x960xf32>
    %1 = vector.extract_strided_slice %0 {offsets = [0, 0], sizes = [16, 892], strides = [1, 1]} : vector<16x960xf32> to vector<16x892xf32>
    %2 = vector.extract_strided_slice %0 {offsets = [0, 1], sizes = [16, 892], strides = [1, 1]} : vector<16x960xf32> to vector<16x892xf32>
    %3 = vector.extract_strided_slice %0 {offsets = [0, 2], sizes = [16, 892], strides = [1, 1]} : vector<16x960xf32> to vector<16x892xf32>
    %4 = vector.extract_strided_slice %0 {offsets = [0, 32], sizes = [16, 892], strides = [1, 1]} : vector<16x960xf32> to vector<16x892xf32>
    %5 = vector.extract_strided_slice %0 {offsets = [0, 33], sizes = [16, 892], strides = [1, 1]} : vector<16x960xf32> to vector<16x892xf32>
    %6 = vector.extract_strided_slice %0 {offsets = [0, 34], sizes = [16, 892], strides = [1, 1]} : vector<16x960xf32> to vector<16x892xf32>
    %7 = vector.extract_strided_slice %0 {offsets = [0, 64], sizes = [16, 892], strides = [1, 1]} : vector<16x960xf32> to vector<16x892xf32>
    %8 = vector.extract_strided_slice %0 {offsets = [0, 65], sizes = [16, 892], strides = [1, 1]} : vector<16x960xf32> to vector<16x892xf32>
    %9 = vector.extract_strided_slice %0 {offsets = [0, 66], sizes = [16, 892], strides = [1, 1]} : vector<16x960xf32> to vector<16x892xf32>
    %10 = tpu.concatenate %1, %2, %3, %4, %5, %6, %7, %8, %9 in 0 : vector<16x892xf32>, vector<16x892xf32>, vector<16x892xf32>, vector<16x892xf32>, vector<16x892xf32>, vector<16x892xf32>, vector<16x892xf32>, vector<16x892xf32>, vector<16x892xf32> -> vector<144x892xf32>
    %c0_1 = arith.constant 0 : index
    %c0_2 = arith.constant 0 : index
    %11 = vector.load %arg2[%c0_1, %c0_2] : memref<96x144xbf16, #tpu.memory_space<vmem>>, vector<96x144xbf16>
    %12 = arith.truncf %10 : vector<144x892xf32> to vector<144x892xbf16>
    %cst = arith.constant dense<0.000000e+00> : vector<96x892xf32>
    %13 = tpu.matmul %11, %12, %cst {dimension_numbers = #tpu.dot_dimension_numbers<[1], [0], [0], [1], [0, 0, 1, 1], [], []>} : vector<96x144xbf16>, vector<144x892xbf16>, vector<96x892xf32> -> vector<96x892xf32>
    %c0_3 = arith.constant 0 : index
    %c0_4 = arith.constant 0 : index
    %14 = vector.load %arg3[%c0_3, %c0_4] : memref<96x1xf32, #tpu.memory_space<vmem>>, vector<96x1xf32>
    %15 = vector.broadcast %14 : vector<96x1xf32> to vector<96x892xf32>
    %16 = arith.addf %13, %15 : vector<96x892xf32>
    %cst_5 = arith.constant 0.000000e+00 : f32
    %17 = vector.broadcast %cst_5 : f32 to vector<96x892xf32>
    %18 = arith.maximumf %16, %17 : vector<96x892xf32>
    %19 = arith.truncf %18 : vector<96x892xf32> to vector<96x892xbf16>
    %c0_6 = arith.constant 0 : index
    %c0_7 = arith.constant 0 : index
    %20 = vector.load %arg4[%c0_6, %c0_7] : memref<892x256xbf16, #tpu.memory_space<vmem>>, vector<892x256xbf16>
    %cst_8 = arith.constant dense<0.000000e+00> : vector<96x256xf32>
    %21 = tpu.matmul %19, %20, %cst_8 {dimension_numbers = #tpu.dot_dimension_numbers<[1], [0], [0], [1], [0, 0, 1, 1], [], []>} : vector<96x892xbf16>, vector<892x256xbf16>, vector<96x256xf32> -> vector<96x256xf32>
    %22 = vector.extract_strided_slice %21 {offsets = [0, 0], sizes = [96, 222], strides = [1, 1]} : vector<96x256xf32> to vector<96x222xf32>
    %23 = vector.extract_strided_slice %21 {offsets = [0, 1], sizes = [96, 222], strides = [1, 1]} : vector<96x256xf32> to vector<96x222xf32>
    %24 = vector.extract_strided_slice %21 {offsets = [0, 2], sizes = [96, 222], strides = [1, 1]} : vector<96x256xf32> to vector<96x222xf32>
    %25 = vector.extract_strided_slice %21 {offsets = [0, 16], sizes = [96, 222], strides = [1, 1]} : vector<96x256xf32> to vector<96x222xf32>
    %26 = vector.extract_strided_slice %21 {offsets = [0, 17], sizes = [96, 222], strides = [1, 1]} : vector<96x256xf32> to vector<96x222xf32>
    %27 = vector.extract_strided_slice %21 {offsets = [0, 18], sizes = [96, 222], strides = [1, 1]} : vector<96x256xf32> to vector<96x222xf32>
    %28 = vector.extract_strided_slice %21 {offsets = [0, 32], sizes = [96, 222], strides = [1, 1]} : vector<96x256xf32> to vector<96x222xf32>
    %29 = vector.extract_strided_slice %21 {offsets = [0, 33], sizes = [96, 222], strides = [1, 1]} : vector<96x256xf32> to vector<96x222xf32>
    %30 = vector.extract_strided_slice %21 {offsets = [0, 34], sizes = [96, 222], strides = [1, 1]} : vector<96x256xf32> to vector<96x222xf32>
    %31 = tpu.concatenate %22, %23, %24, %25, %26, %27, %28, %29, %30 in 0 : vector<96x222xf32>, vector<96x222xf32>, vector<96x222xf32>, vector<96x222xf32>, vector<96x222xf32>, vector<96x222xf32>, vector<96x222xf32>, vector<96x222xf32>, vector<96x222xf32> -> vector<864x222xf32>
    %c0_9 = arith.constant 0 : index
    %c0_10 = arith.constant 0 : index
    %32 = vector.load %arg5[%c0_9, %c0_10] : memref<256x864xbf16, #tpu.memory_space<vmem>>, vector<256x864xbf16>
    %33 = arith.truncf %31 : vector<864x222xf32> to vector<864x222xbf16>
    %cst_11 = arith.constant dense<0.000000e+00> : vector<256x222xf32>
    %34 = tpu.matmul %32, %33, %cst_11 {dimension_numbers = #tpu.dot_dimension_numbers<[1], [0], [0], [1], [0, 0, 1, 1], [], []>} : vector<256x864xbf16>, vector<864x222xbf16>, vector<256x222xf32> -> vector<256x222xf32>
    %c0_12 = arith.constant 0 : index
    %c0_13 = arith.constant 0 : index
    %35 = vector.load %arg6[%c0_12, %c0_13] : memref<256x1xf32, #tpu.memory_space<vmem>>, vector<256x1xf32>
    %36 = vector.broadcast %35 : vector<256x1xf32> to vector<256x222xf32>
    %37 = arith.addf %34, %36 : vector<256x222xf32>
    %cst_14 = arith.constant 0.000000e+00 : f32
    %38 = vector.broadcast %cst_14 : f32 to vector<256x222xf32>
    %39 = arith.maximumf %37, %38 : vector<256x222xf32>
    %40 = arith.truncf %39 : vector<256x222xf32> to vector<256x222xbf16>
    %c0_15 = arith.constant 0 : index
    %c0_16 = arith.constant 0 : index
    %41 = vector.load %arg8[%c0_15, %c0_16] : memref<1x120xf32, #tpu.memory_space<vmem>>, vector<1x120xf32>
    %42 = vector.extract_strided_slice %40 {offsets = [0, 0], sizes = [16, 222], strides = [1, 1]} : vector<256x222xbf16> to vector<16x222xbf16>
    %c0_17 = arith.constant 0 : index
    %c0_18 = arith.constant 0 : index
    %43 = vector.load %arg7[%c0_17, %c0_18] : memref<3552x120xbf16, #tpu.memory_space<vmem>>, vector<222x120xbf16>
    %cst_19 = arith.constant dense<0.000000e+00> : vector<16x120xf32>
    %44 = tpu.matmul %42, %43, %cst_19 {dimension_numbers = #tpu.dot_dimension_numbers<[1], [0], [0], [1], [0, 0, 1, 1], [], []>} : vector<16x222xbf16>, vector<222x120xbf16>, vector<16x120xf32> -> vector<16x120xf32>
    %45 = vector.broadcast %41 : vector<1x120xf32> to vector<16x120xf32>
    %46 = arith.addf %45, %44 : vector<16x120xf32>
    %47 = vector.extract_strided_slice %40 {offsets = [16, 0], sizes = [16, 222], strides = [1, 1]} : vector<256x222xbf16> to vector<16x222xbf16>
    %c222 = arith.constant 222 : index
    %c0_20 = arith.constant 0 : index
    %48 = vector.load %arg7[%c222, %c0_20] : memref<3552x120xbf16, #tpu.memory_space<vmem>>, vector<222x120xbf16>
    %cst_21 = arith.constant dense<0.000000e+00> : vector<16x120xf32>
    %49 = tpu.matmul %47, %48, %cst_21 {dimension_numbers = #tpu.dot_dimension_numbers<[1], [0], [0], [1], [0, 0, 1, 1], [], []>} : vector<16x222xbf16>, vector<222x120xbf16>, vector<16x120xf32> -> vector<16x120xf32>
    %50 = arith.addf %46, %49 : vector<16x120xf32>
    %51 = vector.extract_strided_slice %40 {offsets = [32, 0], sizes = [16, 222], strides = [1, 1]} : vector<256x222xbf16> to vector<16x222xbf16>
    %c444 = arith.constant 444 : index
    %c0_22 = arith.constant 0 : index
    %52 = vector.load %arg7[%c444, %c0_22] : memref<3552x120xbf16, #tpu.memory_space<vmem>>, vector<222x120xbf16>
    %cst_23 = arith.constant dense<0.000000e+00> : vector<16x120xf32>
    %53 = tpu.matmul %51, %52, %cst_23 {dimension_numbers = #tpu.dot_dimension_numbers<[1], [0], [0], [1], [0, 0, 1, 1], [], []>} : vector<16x222xbf16>, vector<222x120xbf16>, vector<16x120xf32> -> vector<16x120xf32>
    %54 = arith.addf %50, %53 : vector<16x120xf32>
    %55 = vector.extract_strided_slice %40 {offsets = [48, 0], sizes = [16, 222], strides = [1, 1]} : vector<256x222xbf16> to vector<16x222xbf16>
    %c666 = arith.constant 666 : index
    %c0_24 = arith.constant 0 : index
    %56 = vector.load %arg7[%c666, %c0_24] : memref<3552x120xbf16, #tpu.memory_space<vmem>>, vector<222x120xbf16>
    %cst_25 = arith.constant dense<0.000000e+00> : vector<16x120xf32>
    %57 = tpu.matmul %55, %56, %cst_25 {dimension_numbers = #tpu.dot_dimension_numbers<[1], [0], [0], [1], [0, 0, 1, 1], [], []>} : vector<16x222xbf16>, vector<222x120xbf16>, vector<16x120xf32> -> vector<16x120xf32>
    %58 = arith.addf %54, %57 : vector<16x120xf32>
    %59 = vector.extract_strided_slice %40 {offsets = [64, 0], sizes = [16, 222], strides = [1, 1]} : vector<256x222xbf16> to vector<16x222xbf16>
    %c888 = arith.constant 888 : index
    %c0_26 = arith.constant 0 : index
    %60 = vector.load %arg7[%c888, %c0_26] : memref<3552x120xbf16, #tpu.memory_space<vmem>>, vector<222x120xbf16>
    %cst_27 = arith.constant dense<0.000000e+00> : vector<16x120xf32>
    %61 = tpu.matmul %59, %60, %cst_27 {dimension_numbers = #tpu.dot_dimension_numbers<[1], [0], [0], [1], [0, 0, 1, 1], [], []>} : vector<16x222xbf16>, vector<222x120xbf16>, vector<16x120xf32> -> vector<16x120xf32>
    %62 = arith.addf %58, %61 : vector<16x120xf32>
    %63 = vector.extract_strided_slice %40 {offsets = [80, 0], sizes = [16, 222], strides = [1, 1]} : vector<256x222xbf16> to vector<16x222xbf16>
    %c1110 = arith.constant 1110 : index
    %c0_28 = arith.constant 0 : index
    %64 = vector.load %arg7[%c1110, %c0_28] : memref<3552x120xbf16, #tpu.memory_space<vmem>>, vector<222x120xbf16>
    %cst_29 = arith.constant dense<0.000000e+00> : vector<16x120xf32>
    %65 = tpu.matmul %63, %64, %cst_29 {dimension_numbers = #tpu.dot_dimension_numbers<[1], [0], [0], [1], [0, 0, 1, 1], [], []>} : vector<16x222xbf16>, vector<222x120xbf16>, vector<16x120xf32> -> vector<16x120xf32>
    %66 = arith.addf %62, %65 : vector<16x120xf32>
    %67 = vector.extract_strided_slice %40 {offsets = [96, 0], sizes = [16, 222], strides = [1, 1]} : vector<256x222xbf16> to vector<16x222xbf16>
    %c1332 = arith.constant 1332 : index
    %c0_30 = arith.constant 0 : index
    %68 = vector.load %arg7[%c1332, %c0_30] : memref<3552x120xbf16, #tpu.memory_space<vmem>>, vector<222x120xbf16>
    %cst_31 = arith.constant dense<0.000000e+00> : vector<16x120xf32>
    %69 = tpu.matmul %67, %68, %cst_31 {dimension_numbers = #tpu.dot_dimension_numbers<[1], [0], [0], [1], [0, 0, 1, 1], [], []>} : vector<16x222xbf16>, vector<222x120xbf16>, vector<16x120xf32> -> vector<16x120xf32>
    %70 = arith.addf %66, %69 : vector<16x120xf32>
    %71 = vector.extract_strided_slice %40 {offsets = [112, 0], sizes = [16, 222], strides = [1, 1]} : vector<256x222xbf16> to vector<16x222xbf16>
    %c1554 = arith.constant 1554 : index
    %c0_32 = arith.constant 0 : index
    %72 = vector.load %arg7[%c1554, %c0_32] : memref<3552x120xbf16, #tpu.memory_space<vmem>>, vector<222x120xbf16>
    %cst_33 = arith.constant dense<0.000000e+00> : vector<16x120xf32>
    %73 = tpu.matmul %71, %72, %cst_33 {dimension_numbers = #tpu.dot_dimension_numbers<[1], [0], [0], [1], [0, 0, 1, 1], [], []>} : vector<16x222xbf16>, vector<222x120xbf16>, vector<16x120xf32> -> vector<16x120xf32>
    %74 = arith.addf %70, %73 : vector<16x120xf32>
    %75 = vector.extract_strided_slice %40 {offsets = [128, 0], sizes = [16, 222], strides = [1, 1]} : vector<256x222xbf16> to vector<16x222xbf16>
    %c1776 = arith.constant 1776 : index
    %c0_34 = arith.constant 0 : index
    %76 = vector.load %arg7[%c1776, %c0_34] : memref<3552x120xbf16, #tpu.memory_space<vmem>>, vector<222x120xbf16>
    %cst_35 = arith.constant dense<0.000000e+00> : vector<16x120xf32>
    %77 = tpu.matmul %75, %76, %cst_35 {dimension_numbers = #tpu.dot_dimension_numbers<[1], [0], [0], [1], [0, 0, 1, 1], [], []>} : vector<16x222xbf16>, vector<222x120xbf16>, vector<16x120xf32> -> vector<16x120xf32>
    %78 = arith.addf %74, %77 : vector<16x120xf32>
    %79 = vector.extract_strided_slice %40 {offsets = [144, 0], sizes = [16, 222], strides = [1, 1]} : vector<256x222xbf16> to vector<16x222xbf16>
    %c1998 = arith.constant 1998 : index
    %c0_36 = arith.constant 0 : index
    %80 = vector.load %arg7[%c1998, %c0_36] : memref<3552x120xbf16, #tpu.memory_space<vmem>>, vector<222x120xbf16>
    %cst_37 = arith.constant dense<0.000000e+00> : vector<16x120xf32>
    %81 = tpu.matmul %79, %80, %cst_37 {dimension_numbers = #tpu.dot_dimension_numbers<[1], [0], [0], [1], [0, 0, 1, 1], [], []>} : vector<16x222xbf16>, vector<222x120xbf16>, vector<16x120xf32> -> vector<16x120xf32>
    %82 = arith.addf %78, %81 : vector<16x120xf32>
    %83 = vector.extract_strided_slice %40 {offsets = [160, 0], sizes = [16, 222], strides = [1, 1]} : vector<256x222xbf16> to vector<16x222xbf16>
    %c2220 = arith.constant 2220 : index
    %c0_38 = arith.constant 0 : index
    %84 = vector.load %arg7[%c2220, %c0_38] : memref<3552x120xbf16, #tpu.memory_space<vmem>>, vector<222x120xbf16>
    %cst_39 = arith.constant dense<0.000000e+00> : vector<16x120xf32>
    %85 = tpu.matmul %83, %84, %cst_39 {dimension_numbers = #tpu.dot_dimension_numbers<[1], [0], [0], [1], [0, 0, 1, 1], [], []>} : vector<16x222xbf16>, vector<222x120xbf16>, vector<16x120xf32> -> vector<16x120xf32>
    %86 = arith.addf %82, %85 : vector<16x120xf32>
    %87 = vector.extract_strided_slice %40 {offsets = [176, 0], sizes = [16, 222], strides = [1, 1]} : vector<256x222xbf16> to vector<16x222xbf16>
    %c2442 = arith.constant 2442 : index
    %c0_40 = arith.constant 0 : index
    %88 = vector.load %arg7[%c2442, %c0_40] : memref<3552x120xbf16, #tpu.memory_space<vmem>>, vector<222x120xbf16>
    %cst_41 = arith.constant dense<0.000000e+00> : vector<16x120xf32>
    %89 = tpu.matmul %87, %88, %cst_41 {dimension_numbers = #tpu.dot_dimension_numbers<[1], [0], [0], [1], [0, 0, 1, 1], [], []>} : vector<16x222xbf16>, vector<222x120xbf16>, vector<16x120xf32> -> vector<16x120xf32>
    %90 = arith.addf %86, %89 : vector<16x120xf32>
    %91 = vector.extract_strided_slice %40 {offsets = [192, 0], sizes = [16, 222], strides = [1, 1]} : vector<256x222xbf16> to vector<16x222xbf16>
    %c2664 = arith.constant 2664 : index
    %c0_42 = arith.constant 0 : index
    %92 = vector.load %arg7[%c2664, %c0_42] : memref<3552x120xbf16, #tpu.memory_space<vmem>>, vector<222x120xbf16>
    %cst_43 = arith.constant dense<0.000000e+00> : vector<16x120xf32>
    %93 = tpu.matmul %91, %92, %cst_43 {dimension_numbers = #tpu.dot_dimension_numbers<[1], [0], [0], [1], [0, 0, 1, 1], [], []>} : vector<16x222xbf16>, vector<222x120xbf16>, vector<16x120xf32> -> vector<16x120xf32>
    %94 = arith.addf %90, %93 : vector<16x120xf32>
    %95 = vector.extract_strided_slice %40 {offsets = [208, 0], sizes = [16, 222], strides = [1, 1]} : vector<256x222xbf16> to vector<16x222xbf16>
    %c2886 = arith.constant 2886 : index
    %c0_44 = arith.constant 0 : index
    %96 = vector.load %arg7[%c2886, %c0_44] : memref<3552x120xbf16, #tpu.memory_space<vmem>>, vector<222x120xbf16>
    %cst_45 = arith.constant dense<0.000000e+00> : vector<16x120xf32>
    %97 = tpu.matmul %95, %96, %cst_45 {dimension_numbers = #tpu.dot_dimension_numbers<[1], [0], [0], [1], [0, 0, 1, 1], [], []>} : vector<16x222xbf16>, vector<222x120xbf16>, vector<16x120xf32> -> vector<16x120xf32>
    %98 = arith.addf %94, %97 : vector<16x120xf32>
    %99 = vector.extract_strided_slice %40 {offsets = [224, 0], sizes = [16, 222], strides = [1, 1]} : vector<256x222xbf16> to vector<16x222xbf16>
    %c3108 = arith.constant 3108 : index
    %c0_46 = arith.constant 0 : index
    %100 = vector.load %arg7[%c3108, %c0_46] : memref<3552x120xbf16, #tpu.memory_space<vmem>>, vector<222x120xbf16>
    %cst_47 = arith.constant dense<0.000000e+00> : vector<16x120xf32>
    %101 = tpu.matmul %99, %100, %cst_47 {dimension_numbers = #tpu.dot_dimension_numbers<[1], [0], [0], [1], [0, 0, 1, 1], [], []>} : vector<16x222xbf16>, vector<222x120xbf16>, vector<16x120xf32> -> vector<16x120xf32>
    %102 = arith.addf %98, %101 : vector<16x120xf32>
    %103 = vector.extract_strided_slice %40 {offsets = [240, 0], sizes = [16, 222], strides = [1, 1]} : vector<256x222xbf16> to vector<16x222xbf16>
    %c3330 = arith.constant 3330 : index
    %c0_48 = arith.constant 0 : index
    %104 = vector.load %arg7[%c3330, %c0_48] : memref<3552x120xbf16, #tpu.memory_space<vmem>>, vector<222x120xbf16>
    %cst_49 = arith.constant dense<0.000000e+00> : vector<16x120xf32>
    %105 = tpu.matmul %103, %104, %cst_49 {dimension_numbers = #tpu.dot_dimension_numbers<[1], [0], [0], [1], [0, 0, 1, 1], [], []>} : vector<16x222xbf16>, vector<222x120xbf16>, vector<16x120xf32> -> vector<16x120xf32>
    %106 = arith.addf %102, %105 : vector<16x120xf32>
    %cst_50 = arith.constant 0.000000e+00 : f32
    %107 = vector.broadcast %cst_50 : f32 to vector<16x120xf32>
    %108 = arith.maximumf %106, %107 : vector<16x120xf32>
    %109 = arith.truncf %108 : vector<16x120xf32> to vector<16x120xbf16>
    %c0_51 = arith.constant 0 : index
    %c0_52 = arith.constant 0 : index
    %110 = vector.load %arg9[%c0_51, %c0_52] : memref<120x84xbf16, #tpu.memory_space<vmem>>, vector<120x84xbf16>
    %cst_53 = arith.constant dense<0.000000e+00> : vector<16x84xf32>
    %111 = tpu.matmul %109, %110, %cst_53 {dimension_numbers = #tpu.dot_dimension_numbers<[1], [0], [0], [1], [0, 0, 1, 1], [], []>} : vector<16x120xbf16>, vector<120x84xbf16>, vector<16x84xf32> -> vector<16x84xf32>
    %c0_54 = arith.constant 0 : index
    %c0_55 = arith.constant 0 : index
    %112 = vector.load %arg10[%c0_54, %c0_55] : memref<1x84xf32, #tpu.memory_space<vmem>>, vector<1x84xf32>
    %113 = vector.broadcast %112 : vector<1x84xf32> to vector<16x84xf32>
    %114 = arith.addf %111, %113 : vector<16x84xf32>
    %cst_56 = arith.constant 0.000000e+00 : f32
    %115 = vector.broadcast %cst_56 : f32 to vector<16x84xf32>
    %116 = arith.maximumf %114, %115 : vector<16x84xf32>
    %117 = arith.truncf %116 : vector<16x84xf32> to vector<16x84xbf16>
    %c0_57 = arith.constant 0 : index
    %c0_58 = arith.constant 0 : index
    %118 = vector.load %arg11[%c0_57, %c0_58] : memref<84x128xbf16, #tpu.memory_space<vmem>>, vector<84x128xbf16>
    %cst_59 = arith.constant dense<0.000000e+00> : vector<16x128xf32>
    %119 = tpu.matmul %117, %118, %cst_59 {dimension_numbers = #tpu.dot_dimension_numbers<[1], [0], [0], [1], [0, 0, 1, 1], [], []>} : vector<16x84xbf16>, vector<84x128xbf16>, vector<16x128xf32> -> vector<16x128xf32>
    %c0_60 = arith.constant 0 : index
    %c0_61 = arith.constant 0 : index
    %120 = vector.load %arg12[%c0_60, %c0_61] : memref<1x128xf32, #tpu.memory_space<vmem>>, vector<1x128xf32>
    %121 = vector.broadcast %120 : vector<1x128xf32> to vector<16x128xf32>
    %122 = arith.addf %119, %121 : vector<16x128xf32>
    %c0_62 = arith.constant 0 : index
    %c0_63 = arith.constant 0 : index
    %123 = vector.load %arg13[%c0_62, %c0_63] : memref<16x128xf32, #tpu.memory_space<vmem>>, vector<16x128xf32>
    tpu.vector_store %arg13[%c0_62, %c0_63], %122 {strides = array<i32>} : memref<16x128xf32, #tpu.memory_space<vmem>>, vector<16x128xf32>,
    return
  }
  func.func @transform_0(%arg0: i32) -> (i32, i32) {
    %c0_i32 = arith.constant 0 : i32
    %c0_i32_0 = arith.constant 0 : i32
    return %arg0, %c0_i32 : i32, i32
  }
  func.func @transform_1(%arg0: i32) -> (i32, i32) {
    %c0_i32 = arith.constant 0 : i32
    %c0_i32_0 = arith.constant 0 : i32
    %c0_i32_1 = arith.constant 0 : i32
    return %c0_i32, %c0_i32_0 : i32, i32
  }
  func.func @transform_2(%arg0: i32) -> (i32, i32) {
    %c0_i32 = arith.constant 0 : i32
    %c0_i32_0 = arith.constant 0 : i32
    %c0_i32_1 = arith.constant 0 : i32
    return %c0_i32, %c0_i32_0 : i32, i32
  }
  func.func @transform_3(%arg0: i32) -> (i32, i32) {
    %c0_i32 = arith.constant 0 : i32
    %c0_i32_0 = arith.constant 0 : i32
    %c0_i32_1 = arith.constant 0 : i32
    return %c0_i32, %c0_i32_0 : i32, i32
  }
  func.func @transform_4(%arg0: i32) -> (i32, i32) {
    %c0_i32 = arith.constant 0 : i32
    %c0_i32_0 = arith.constant 0 : i32
    %c0_i32_1 = arith.constant 0 : i32
    return %c0_i32, %c0_i32_0 : i32, i32
  }
  func.func @transform_5(%arg0: i32) -> (i32, i32) {
    %c0_i32 = arith.constant 0 : i32
    %c0_i32_0 = arith.constant 0 : i32
    %c0_i32_1 = arith.constant 0 : i32
    return %c0_i32, %c0_i32_0 : i32, i32
  }
  func.func @transform_6(%arg0: i32) -> (i32, i32) {
    %c0_i32 = arith.constant 0 : i32
    %c0_i32_0 = arith.constant 0 : i32
    %c0_i32_1 = arith.constant 0 : i32
    return %c0_i32, %c0_i32_0 : i32, i32
  }
  func.func @transform_7(%arg0: i32) -> (i32, i32) {
    %c0_i32 = arith.constant 0 : i32
    %c0_i32_0 = arith.constant 0 : i32
    %c0_i32_1 = arith.constant 0 : i32
    return %c0_i32, %c0_i32_0 : i32, i32
  }
  func.func @transform_8(%arg0: i32) -> (i32, i32) {
    %c0_i32 = arith.constant 0 : i32
    %c0_i32_0 = arith.constant 0 : i32
    %c0_i32_1 = arith.constant 0 : i32
    return %c0_i32, %c0_i32_0 : i32, i32
  }
  func.func @transform_9(%arg0: i32) -> (i32, i32) {
    %c0_i32 = arith.constant 0 : i32
    %c0_i32_0 = arith.constant 0 : i32
    %c0_i32_1 = arith.constant 0 : i32
    return %c0_i32, %c0_i32_0 : i32, i32
  }
  func.func @transform_10(%arg0: i32) -> (i32, i32) {
    %c0_i32 = arith.constant 0 : i32
    %c0_i32_0 = arith.constant 0 : i32
    %c0_i32_1 = arith.constant 0 : i32
    return %c0_i32, %c0_i32_0 : i32, i32
  }
  func.func @transform_11(%arg0: i32) -> (i32, i32) {
    %c0_i32 = arith.constant 0 : i32
    %c0_i32_0 = arith.constant 0 : i32
    %c0_i32_1 = arith.constant 0 : i32
    return %c0_i32, %c0_i32_0 : i32, i32
  }
  func.func @transform_12(%arg0: i32) -> (i32, i32) {
    %c0_i32 = arith.constant 0 : i32
    %c0_i32_0 = arith.constant 0 : i32
    return %arg0, %c0_i32 : i32, i32
  }
}

</mosaic_0001>

<llo_original>
// kernel: lenet5_dropout_forward.1
$region0: #{lenet5_dropout_forward.1}
  #allocation0 [shape = 'u32[]', space=smem, size = 0x4, offset = 0x4, fixed_abs, tag = 'smem constant byte address 0x4 - core index']
  #allocation1 [shape = 'u32[144,128]{1,0:T(1,128)}', space=vmem, size = 0x12000, scoped, tag = 'internal scratch']
  %s0 = inlined_call_operand.vmem [shape: f32[16,960], index: 0, kind: input, shape index: {}]
  %s1 = inlined_call_operand.vmem [shape: bf16[96,144], index: 1, kind: input, shape index: {}]
  %s2 = inlined_call_operand.vmem [shape: f32[96,1], index: 2, kind: input, shape index: {}]
  %s3 = inlined_call_operand.vmem [shape: bf16[892,256], index: 3, kind: input, shape index: {}]
  %s4 = inlined_call_operand.vmem [shape: bf16[256,864], index: 4, kind: input, shape index: {}]
  %s5 = inlined_call_operand.vmem [shape: f32[256,1], index: 5, kind: input, shape index: {}]
  %s6 = inlined_call_operand.vmem [shape: bf16[3552,120], index: 6, kind: input, shape index: {}]
  %s7 = inlined_call_operand.vmem [shape: f32[1,120], index: 7, kind: input, shape index: {}]
  %s8 = inlined_call_operand.vmem [shape: bf16[120,84], index: 8, kind: input, shape index: {}]
  %s9 = inlined_call_operand.vmem [shape: f32[1,84], index: 9, kind: input, shape index: {}]
  %s10 = inlined_call_operand.vmem [shape: bf16[84,128], index: 10, kind: input, shape index: {}]
  %s11 = inlined_call_operand.vmem [shape: f32[1,128], index: 11, kind: input, shape index: {}]
  %s12 = inlined_call_operand.vmem [shape: f32[16,128], index: 12, kind: output, shape index: {}]
  %s13 = sld [smem:[#allocation0]]
  $region58: #{lenet5_dropout_forward.1} parent=0
    _
  %s15 = ssub.s32 1, %s13
  %s16 = scalar_select 0, %s15, %s13
  // Predicated region
  $region2: #{lenet5_dropout_forward.1} parent=0 // pred_check
    _
  $region3: #{lenet5_dropout_forward.1} parent=0 // pred_check_branch
    %18 = sbr.rel (0) target = $region5
  $region4: #{lenet5_dropout_forward.1} parent=0 // pred_region
    _
  $region5: #{lenet5_dropout_forward.1} parent=0 // pred_fallthru
    _
  // Predicated region
  $region6: #{lenet5_dropout_forward.1} parent=0 // pred_check
    _
  $region7: #{lenet5_dropout_forward.1} parent=0 // pred_check_branch
    %20 = sbr.rel (0) target = $region9
  $region8: #{lenet5_dropout_forward.1} parent=0 // pred_region
    _
  $region9: #{lenet5_dropout_forward.1} parent=0 // pred_fallthru
    _
  // Predicated region
  $region10: #{lenet5_dropout_forward.1} parent=0 // pred_check
    _
  $region11: #{lenet5_dropout_forward.1} parent=0 // pred_check_branch
    %22 = sbr.rel (0) target = $region13
  $region12: #{lenet5_dropout_forward.1} parent=0 // pred_region
    _
  $region13: #{lenet5_dropout_forward.1} parent=0 // pred_fallthru
    _
  // Predicated region
  $region14: #{lenet5_dropout_forward.1} parent=0 // pred_check
    _
  $region15: #{lenet5_dropout_forward.1} parent=0 // pred_check_branch
    %24 = sbr.rel (0) target = $region17
  $region16: #{lenet5_dropout_forward.1} parent=0 // pred_region
    _
  $region17: #{lenet5_dropout_forward.1} parent=0 // pred_fallthru
    _
  // Predicated region
  $region18: #{lenet5_dropout_forward.1} parent=0 // pred_check
    _
  $region19: #{lenet5_dropout_forward.1} parent=0 // pred_check_branch
    %26 = sbr.rel (0) target = $region21
  $region20: #{lenet5_dropout_forward.1} parent=0 // pred_region
    _
  $region21: #{lenet5_dropout_forward.1} parent=0 // pred_fallthru
    _
  // Predicated region
  $region22: #{lenet5_dropout_forward.1} parent=0 // pred_check
    _
  $region23: #{lenet5_dropout_forward.1} parent=0 // pred_check_branch
    %28 = sbr.rel (0) target = $region25
  $region24: #{lenet5_dropout_forward.1} parent=0 // pred_region
    _
  $region25: #{lenet5_dropout_forward.1} parent=0 // pred_fallthru
    _
  // Predicated region
  $region26: #{lenet5_dropout_forward.1} parent=0 // pred_check
    _
  $region27: #{lenet5_dropout_forward.1} parent=0 // pred_check_branch
    %30 = sbr.rel (0) target = $region29
  $region28: #{lenet5_dropout_forward.1} parent=0 // pred_region
    _
  $region29: #{lenet5_dropout_forward.1} parent=0 // pred_fallthru
    _
  // Predicated region
  $region30: #{lenet5_dropout_forward.1} parent=0 // pred_check
    _
  $region31: #{lenet5_dropout_forward.1} parent=0 // pred_check_branch
    %32 = sbr.rel (0) target = $region33
  $region32: #{lenet5_dropout_forward.1} parent=0 // pred_region
    _
  $region33: #{lenet5_dropout_forward.1} parent=0 // pred_fallthru
    _
  // Predicated region
  $region34: #{lenet5_dropout_forward.1} parent=0 // pred_check
    _
  $region35: #{lenet5_dropout_forward.1} parent=0 // pred_check_branch
    %34 = sbr.rel (0) target = $region37
  $region36: #{lenet5_dropout_forward.1} parent=0 // pred_region
    _
  $region37: #{lenet5_dropout_forward.1} parent=0 // pred_fallthru
    _
  // Predicated region
  $region38: #{lenet5_dropout_forward.1} parent=0 // pred_check
    _
  $region39: #{lenet5_dropout_forward.1} parent=0 // pred_check_branch
    %36 = sbr.rel (0) target = $region41
  $region40: #{lenet5_dropout_forward.1} parent=0 // pred_region
    _
  $region41: #{lenet5_dropout_forward.1} parent=0 // pred_fallthru
    _
  // Predicated region
  $region42: #{lenet5_dropout_forward.1} parent=0 // pred_check
    _
  $region43: #{lenet5_dropout_forward.1} parent=0 // pred_check_branch
    %38 = sbr.rel (0) target = $region45
  $region44: #{lenet5_dropout_forward.1} parent=0 // pred_region
    _
  $region45: #{lenet5_dropout_forward.1} parent=0 // pred_fallthru
    _
  // Predicated region
  $region46: #{lenet5_dropout_forward.1} parent=0 // pred_check
    _
  $region47: #{lenet5_dropout_forward.1} parent=0 // pred_check_branch
    %40 = sbr.rel (0) target = $region49
  $region48: #{lenet5_dropout_forward.1} parent=0 // pred_region
    _
  $region49: #{lenet5_dropout_forward.1} parent=0 // pred_fallthru
    _
  %v42 = vld [vmem:[%s0] sm:$0xff]
  %v43 = vld [vmem:[%s0 + $0x8] sm:$0xff]
  %v44 = vld [vmem:[%s0 + $0x10] sm:$0xff]
  %v45 = vld [vmem:[%s0 + $0x18] sm:$0xff]
  %v46 = vld [vmem:[%s0 + $0x20] sm:$0xff]
  %v47 = vld [vmem:[%s0 + $0x28] sm:$0xff]
  %v48 = vld [vmem:[%s0 + $0x30] sm:$0xff]
  %v49 = vld [vmem:[%s0 + $0x38] sm:$0xff]
  %v50 = vld [vmem:[%s0 + $0x40] sm:$0xff]
  %v51 = vld [vmem:[%s0 + $0x48] sm:$0xff]
  %v52 = vld [vmem:[%s0 + $0x50] sm:$0xff]
  %v53 = vld [vmem:[%s0 + $0x58] sm:$0xff]
  %v54 = vld [vmem:[%s0 + $0x60] sm:$0xff]
  %v55 = vld [vmem:[%s0 + $0x68] sm:$0xff]
  %v56 = vld [vmem:[%s0 + $0x70] sm:$0xff]
  %v57 = vld [vmem:[%s0 + $0x78] sm:$0xff]
  %72 = vrot.lane.b32.xlu0 %v42, 127
  %v73 = vpop.permute.xlu0 %72
  %74 = vrot.lane.b32.xlu0 %v43, 127
  %v75 = vpop.permute.xlu0 %74
  %76 = vrot.lane.b32.xlu0 %v44, 127
  %v77 = vpop.permute.xlu0 %76
  %78 = vrot.lane.b32.xlu0 %v45, 127
  %v79 = vpop.permute.xlu0 %78
  %80 = vrot.lane.b32.xlu0 %v46, 127
  %v81 = vpop.permute.xlu0 %80
  %82 = vrot.lane.b32.xlu0 %v47, 127
  %v83 = vpop.permute.xlu0 %82
  %84 = vrot.lane.b32.xlu0 %v48, 127
  %v85 = vpop.permute.xlu0 %84
  %86 = vrot.lane.b32.xlu0 %v50, 127
  %v87 = vpop.permute.xlu0 %86
  %88 = vrot.lane.b32.xlu0 %v51, 127
  %v89 = vpop.permute.xlu0 %88
  %90 = vrot.lane.b32.xlu0 %v52, 127
  %v91 = vpop.permute.xlu0 %90
  %92 = vrot.lane.b32.xlu0 %v53, 127
  %v93 = vpop.permute.xlu0 %92
  %94 = vrot.lane.b32.xlu0 %v54, 127
  %v95 = vpop.permute.xlu0 %94
  %96 = vrot.lane.b32.xlu0 %v55, 127
  %v97 = vpop.permute.xlu0 %96
  %98 = vrot.lane.b32.xlu0 %v56, 127
  %v99 = vpop.permute.xlu0 %98
  %vm100 = vcmask 1039360
  %v101 = vsel %vm100, %v73, %v75
  %v102 = vsel %vm100, %v75, %v77
  %v103 = vsel %vm100, %v77, %v79
  %v104 = vsel %vm100, %v79, %v81
  %v105 = vsel %vm100, %v81, %v83
  %v106 = vsel %vm100, %v83, %v85
  %v107 = vsel %vm100, %v87, %v89
  %v108 = vsel %vm100, %v89, %v91
  %v109 = vsel %vm100, %v91, %v93
  %v110 = vsel %vm100, %v93, %v95
  %v111 = vsel %vm100, %v95, %v97
  %v112 = vsel %vm100, %v97, %v99
  %127 = vrot.lane.b32.xlu0 %v42, 126
  %v128 = vpop.permute.xlu0 %127
  %129 = vrot.lane.b32.xlu0 %v43, 126
  %v130 = vpop.permute.xlu0 %129
  %131 = vrot.lane.b32.xlu0 %v44, 126
  %v132 = vpop.permute.xlu0 %131
  %133 = vrot.lane.b32.xlu0 %v45, 126
  %v134 = vpop.permute.xlu0 %133
  %135 = vrot.lane.b32.xlu0 %v46, 126
  %v136 = vpop.permute.xlu0 %135
  %137 = vrot.lane.b32.xlu0 %v47, 126
  %v138 = vpop.permute.xlu0 %137
  %139 = vrot.lane.b32.xlu0 %v48, 126
  %v140 = vpop.permute.xlu0 %139
  %141 = vrot.lane.b32.xlu0 %v50, 126
  %v142 = vpop.permute.xlu0 %141
  %143 = vrot.lane.b32.xlu0 %v51, 126
  %v144 = vpop.permute.xlu0 %143
  %145 = vrot.lane.b32.xlu0 %v52, 126
  %v146 = vpop.permute.xlu0 %145
  %147 = vrot.lane.b32.xlu0 %v53, 126
  %v148 = vpop.permute.xlu0 %147
  %149 = vrot.lane.b32.xlu0 %v54, 126
  %v150 = vpop.permute.xlu0 %149
  %151 = vrot.lane.b32.xlu0 %v55, 126
  %v152 = vpop.permute.xlu0 %151
  %153 = vrot.lane.b32.xlu0 %v56, 126
  %v154 = vpop.permute.xlu0 %153
  %vm155 = vcmask 1031168
  %v156 = vsel %vm155, %v128, %v130
  %v157 = vsel %vm155, %v130, %v132
  %v158 = vsel %vm155, %v132, %v134
  %v159 = vsel %vm155, %v134, %v136
  %v160 = vsel %vm155, %v136, %v138
  %v161 = vsel %vm155, %v138, %v140
  %v162 = vsel %vm155, %v142, %v144
  %v163 = vsel %vm155, %v144, %v146
  %v164 = vsel %vm155, %v146, %v148
  %v165 = vsel %vm155, %v148, %v150
  %v166 = vsel %vm155, %v150, %v152
  %v167 = vsel %vm155, %v152, %v154
  %184 = vrot.lane.b32.xlu0 %v42, 96
  %v185 = vpop.permute.xlu0 %184
  %186 = vrot.lane.b32.xlu0 %v43, 96
  %v187 = vpop.permute.xlu0 %186
  %188 = vrot.lane.b32.xlu0 %v44, 96
  %v189 = vpop.permute.xlu0 %188
  %190 = vrot.lane.b32.xlu0 %v45, 96
  %v191 = vpop.permute.xlu0 %190
  %192 = vrot.lane.b32.xlu0 %v46, 96
  %v193 = vpop.permute.xlu0 %192
  %194 = vrot.lane.b32.xlu0 %v47, 96
  %v195 = vpop.permute.xlu0 %194
  %196 = vrot.lane.b32.xlu0 %v48, 96
  %v197 = vpop.permute.xlu0 %196
  %198 = vrot.lane.b32.xlu0 %v49, 96
  %v199 = vpop.permute.xlu0 %198
  %200 = vrot.lane.b32.xlu0 %v50, 96
  %v201 = vpop.permute.xlu0 %200
  %202 = vrot.lane.b32.xlu0 %v51, 96
  %v203 = vpop.permute.xlu0 %202
  %204 = vrot.lane.b32.xlu0 %v52, 96
  %v205 = vpop.permute.xlu0 %204
  %206 = vrot.lane.b32.xlu0 %v53, 96
  %v207 = vpop.permute.xlu0 %206
  %208 = vrot.lane.b32.xlu0 %v54, 96
  %v209 = vpop.permute.xlu0 %208
  %210 = vrot.lane.b32.xlu0 %v55, 96
  %v211 = vpop.permute.xlu0 %210
  %212 = vrot.lane.b32.xlu0 %v56, 96
  %v213 = vpop.permute.xlu0 %212
  %214 = vrot.lane.b32.xlu0 %v57, 96
  %v215 = vpop.permute.xlu0 %214
  %vm216 = vcmask 785408
  %v217 = vsel %vm216, %v185, %v187
  %v218 = vsel %vm216, %v187, %v189
  %v219 = vsel %vm216, %v189, %v191
  %v220 = vsel %vm216, %v191, %v193
  %v221 = vsel %vm216, %v193, %v195
  %v222 = vsel %vm216, %v195, %v197
  %v223 = vsel %vm216, %v197, %v199
  %v224 = vsel %vm216, %v201, %v203
  %v225 = vsel %vm216, %v203, %v205
  %v226 = vsel %vm216, %v205, %v207
  %v227 = vsel %vm216, %v207, %v209
  %v228 = vsel %vm216, %v209, %v211
  %v229 = vsel %vm216, %v211, %v213
  %v230 = vsel %vm216, %v213, %v215
  %245 = vrot.lane.b32.xlu0 %v42, 95
  %v246 = vpop.permute.xlu0 %245
  %247 = vrot.lane.b32.xlu0 %v43, 95
  %v248 = vpop.permute.xlu0 %247
  %249 = vrot.lane.b32.xlu0 %v44, 95
  %v250 = vpop.permute.xlu0 %249
  %251 = vrot.lane.b32.xlu0 %v45, 95
  %v252 = vpop.permute.xlu0 %251
  %253 = vrot.lane.b32.xlu0 %v46, 95
  %v254 = vpop.permute.xlu0 %253
  %255 = vrot.lane.b32.xlu0 %v47, 95
  %v256 = vpop.permute.xlu0 %255
  %257 = vrot.lane.b32.xlu0 %v48, 95
  %v258 = vpop.permute.xlu0 %257
  %259 = vrot.lane.b32.xlu0 %v49, 95
  %v260 = vpop.permute.xlu0 %259
  %261 = vrot.lane.b32.xlu0 %v50, 95
  %v262 = vpop.permute.xlu0 %261
  %263 = vrot.lane.b32.xlu0 %v51, 95
  %v264 = vpop.permute.xlu0 %263
  %265 = vrot.lane.b32.xlu0 %v52, 95
  %v266 = vpop.permute.xlu0 %265
  %267 = vrot.lane.b32.xlu0 %v53, 95
  %v268 = vpop.permute.xlu0 %267
  %269 = vrot.lane.b32.xlu0 %v54, 95
  %v270 = vpop.permute.xlu0 %269
  %271 = vrot.lane.b32.xlu0 %v55, 95
  %v272 = vpop.permute.xlu0 %271
  %273 = vrot.lane.b32.xlu0 %v56, 95
  %v274 = vpop.permute.xlu0 %273
  %275 = vrot.lane.b32.xlu0 %v57, 95
  %v276 = vpop.permute.xlu0 %275
  %vm277 = vcmask 777216
  %v278 = vsel %vm277, %v246, %v248
  %v279 = vsel %vm277, %v248, %v250
  %v280 = vsel %vm277, %v250, %v252
  %v281 = vsel %vm277, %v252, %v254
  %v282 = vsel %vm277, %v254, %v256
  %v283 = vsel %vm277, %v256, %v258
  %v284 = vsel %vm277, %v258, %v260
  %v285 = vsel %vm277, %v262, %v264
  %v286 = vsel %vm277, %v264, %v266
  %v287 = vsel %vm277, %v266, %v268
  %v288 = vsel %vm277, %v268, %v270
  %v289 = vsel %vm277, %v270, %v272
  %v290 = vsel %vm277, %v272, %v274
  %v291 = vsel %vm277, %v274, %v276
  %306 = vrot.lane.b32.xlu0 %v42, 94
  %v307 = vpop.permute.xlu0 %306
  %308 = vrot.lane.b32.xlu0 %v43, 94
  %v309 = vpop.permute.xlu0 %308
  %310 = vrot.lane.b32.xlu0 %v44, 94
  %v311 = vpop.permute.xlu0 %310
  %312 = vrot.lane.b32.xlu0 %v45, 94
  %v313 = vpop.permute.xlu0 %312
  %314 = vrot.lane.b32.xlu0 %v46, 94
  %v315 = vpop.permute.xlu0 %314
  %316 = vrot.lane.b32.xlu0 %v47, 94
  %v317 = vpop.permute.xlu0 %316
  %318 = vrot.lane.b32.xlu0 %v48, 94
  %v319 = vpop.permute.xlu0 %318
  %320 = vrot.lane.b32.xlu0 %v49, 94
  %v321 = vpop.permute.xlu0 %320
  %322 = vrot.lane.b32.xlu0 %v50, 94
  %v323 = vpop.permute.xlu0 %322
  %324 = vrot.lane.b32.xlu0 %v51, 94
  %v325 = vpop.permute.xlu0 %324
  %326 = vrot.lane.b32.xlu0 %v52, 94
  %v327 = vpop.permute.xlu0 %326
  %328 = vrot.lane.b32.xlu0 %v53, 94
  %v329 = vpop.permute.xlu0 %328
  %330 = vrot.lane.b32.xlu0 %v54, 94
  %v331 = vpop.permute.xlu0 %330
  %332 = vrot.lane.b32.xlu0 %v55, 94
  %v333 = vpop.permute.xlu0 %332
  %334 = vrot.lane.b32.xlu0 %v56, 94
  %v335 = vpop.permute.xlu0 %334
  %336 = vrot.lane.b32.xlu0 %v57, 94
  %v337 = vpop.permute.xlu0 %336
  %vm338 = vcmask 769024
  %v339 = vsel %vm338, %v307, %v309
  %v340 = vsel %vm338, %v309, %v311
  %v341 = vsel %vm338, %v311, %v313
  %v342 = vsel %vm338, %v313, %v315
  %v343 = vsel %vm338, %v315, %v317
  %v344 = vsel %vm338, %v317, %v319
  %v345 = vsel %vm338, %v319, %v321
  %v346 = vsel %vm338, %v323, %v325
  %v347 = vsel %vm338, %v325, %v327
  %v348 = vsel %vm338, %v327, %v329
  %v349 = vsel %vm338, %v329, %v331
  %v350 = vsel %vm338, %v331, %v333
  %v351 = vsel %vm338, %v333, %v335
  %v352 = vsel %vm338, %v335, %v337
  %367 = vrot.lane.b32.xlu0 %v42, 64
  %v368 = vpop.permute.xlu0 %367
  %369 = vrot.lane.b32.xlu0 %v43, 64
  %v370 = vpop.permute.xlu0 %369
  %371 = vrot.lane.b32.xlu0 %v44, 64
  %v372 = vpop.permute.xlu0 %371
  %373 = vrot.lane.b32.xlu0 %v45, 64
  %v374 = vpop.permute.xlu0 %373
  %375 = vrot.lane.b32.xlu0 %v46, 64
  %v376 = vpop.permute.xlu0 %375
  %377 = vrot.lane.b32.xlu0 %v47, 64
  %v378 = vpop.permute.xlu0 %377
  %379 = vrot.lane.b32.xlu0 %v48, 64
  %v380 = vpop.permute.xlu0 %379
  %381 = vrot.lane.b32.xlu0 %v49, 64
  %v382 = vpop.permute.xlu0 %381
  %383 = vrot.lane.b32.xlu0 %v50, 64
  %v384 = vpop.permute.xlu0 %383
  %385 = vrot.lane.b32.xlu0 %v51, 64
  %v386 = vpop.permute.xlu0 %385
  %387 = vrot.lane.b32.xlu0 %v52, 64
  %v388 = vpop.permute.xlu0 %387
  %389 = vrot.lane.b32.xlu0 %v53, 64
  %v390 = vpop.permute.xlu0 %389
  %391 = vrot.lane.b32.xlu0 %v54, 64
  %v392 = vpop.permute.xlu0 %391
  %393 = vrot.lane.b32.xlu0 %v55, 64
  %v394 = vpop.permute.xlu0 %393
  %395 = vrot.lane.b32.xlu0 %v56, 64
  %v396 = vpop.permute.xlu0 %395
  %397 = vrot.lane.b32.xlu0 %v57, 64
  %v398 = vpop.permute.xlu0 %397
  %vm399 = vcmask 523264
  %v400 = vsel %vm399, %v368, %v370
  %v401 = vsel %vm399, %v370, %v372
  %v402 = vsel %vm399, %v372, %v374
  %v403 = vsel %vm399, %v374, %v376
  %v404 = vsel %vm399, %v376, %v378
  %v405 = vsel %vm399, %v378, %v380
  %v406 = vsel %vm399, %v380, %v382
  %v407 = vsel %vm399, %v384, %v386
  %v408 = vsel %vm399, %v386, %v388
  %v409 = vsel %vm399, %v388, %v390
  %v410 = vsel %vm399, %v390, %v392
  %v411 = vsel %vm399, %v392, %v394
  %v412 = vsel %vm399, %v394, %v396
  %v413 = vsel %vm399, %v396, %v398
  %428 = vrot.lane.b32.xlu0 %v42, 63
  %v429 = vpop.permute.xlu0 %428
  %430 = vrot.lane.b32.xlu0 %v43, 63
  %v431 = vpop.permute.xlu0 %430
  %432 = vrot.lane.b32.xlu0 %v44, 63
  %v433 = vpop.permute.xlu0 %432
  %434 = vrot.lane.b32.xlu0 %v45, 63
  %v435 = vpop.permute.xlu0 %434
  %436 = vrot.lane.b32.xlu0 %v46, 63
  %v437 = vpop.permute.xlu0 %436
  %438 = vrot.lane.b32.xlu0 %v47, 63
  %v439 = vpop.permute.xlu0 %438
  %440 = vrot.lane.b32.xlu0 %v48, 63
  %v441 = vpop.permute.xlu0 %440
  %442 = vrot.lane.b32.xlu0 %v49, 63
  %v443 = vpop.permute.xlu0 %442
  %444 = vrot.lane.b32.xlu0 %v50, 63
  %v445 = vpop.permute.xlu0 %444
  %446 = vrot.lane.b32.xlu0 %v51, 63
  %v447 = vpop.permute.xlu0 %446
  %448 = vrot.lane.b32.xlu0 %v52, 63
  %v449 = vpop.permute.xlu0 %448
  %450 = vrot.lane.b32.xlu0 %v53, 63
  %v451 = vpop.permute.xlu0 %450
  %452 = vrot.lane.b32.xlu0 %v54, 63
  %v453 = vpop.permute.xlu0 %452
  %454 = vrot.lane.b32.xlu0 %v55, 63
  %v455 = vpop.permute.xlu0 %454
  %456 = vrot.lane.b32.xlu0 %v56, 63
  %v457 = vpop.permute.xlu0 %456
  %458 = vrot.lane.b32.xlu0 %v57, 63
  %v459 = vpop.permute.xlu0 %458
  %vm460 = vcmask 515072
  %v461 = vsel %vm460, %v429, %v431
  %v462 = vsel %vm460, %v431, %v433
  %v463 = vsel %vm460, %v433, %v435
  %v464 = vsel %vm460, %v435, %v437
  %v465 = vsel %vm460, %v437, %v439
  %v466 = vsel %vm460, %v439, %v441
  %v467 = vsel %vm460, %v441, %v443
  %v468 = vsel %vm460, %v445, %v447
  %v469 = vsel %vm460, %v447, %v449
  %v470 = vsel %vm460, %v449, %v451
  %v471 = vsel %vm460, %v451, %v453
  %v472 = vsel %vm460, %v453, %v455
  %v473 = vsel %vm460, %v455, %v457
  %v474 = vsel %vm460, %v457, %v459
  %489 = vrot.lane.b32.xlu0 %v42, 62
  %v490 = vpop.permute.xlu0 %489
  %491 = vrot.lane.b32.xlu0 %v43, 62
  %v492 = vpop.permute.xlu0 %491
  %493 = vrot.lane.b32.xlu0 %v44, 62
  %v494 = vpop.permute.xlu0 %493
  %495 = vrot.lane.b32.xlu0 %v45, 62
  %v496 = vpop.permute.xlu0 %495
  %497 = vrot.lane.b32.xlu0 %v46, 62
  %v498 = vpop.permute.xlu0 %497
  %499 = vrot.lane.b32.xlu0 %v47, 62
  %v500 = vpop.permute.xlu0 %499
  %501 = vrot.lane.b32.xlu0 %v48, 62
  %v502 = vpop.permute.xlu0 %501
  %503 = vrot.lane.b32.xlu0 %v49, 62
  %v504 = vpop.permute.xlu0 %503
  %505 = vrot.lane.b32.xlu0 %v50, 62
  %v506 = vpop.permute.xlu0 %505
  %507 = vrot.lane.b32.xlu0 %v51, 62
  %v508 = vpop.permute.xlu0 %507
  %509 = vrot.lane.b32.xlu0 %v52, 62
  %v510 = vpop.permute.xlu0 %509
  %511 = vrot.lane.b32.xlu0 %v53, 62
  %v512 = vpop.permute.xlu0 %511
  %513 = vrot.lane.b32.xlu0 %v54, 62
  %v514 = vpop.permute.xlu0 %513
  %515 = vrot.lane.b32.xlu0 %v55, 62
  %v516 = vpop.permute.xlu0 %515
  %517 = vrot.lane.b32.xlu0 %v56, 62
  %v518 = vpop.permute.xlu0 %517
  %519 = vrot.lane.b32.xlu0 %v57, 62
  %v520 = vpop.permute.xlu0 %519
  %vm521 = vcmask 506880
  %v522 = vsel %vm521, %v490, %v492
  %v523 = vsel %vm521, %v492, %v494
  %v524 = vsel %vm521, %v494, %v496
  %v525 = vsel %vm521, %v496, %v498
  %v526 = vsel %vm521, %v498, %v500
  %v527 = vsel %vm521, %v500, %v502
  %v528 = vsel %vm521, %v502, %v504
  %v529 = vsel %vm521, %v506, %v508
  %v530 = vsel %vm521, %v508, %v510
  %v531 = vsel %vm521, %v510, %v512
  %v532 = vsel %vm521, %v512, %v514
  %v533 = vsel %vm521, %v514, %v516
  %v534 = vsel %vm521, %v516, %v518
  %v535 = vsel %vm521, %v518, %v520
  %v550 = vld [vmem:[%s1] sm:$0xff]
  %v551 = vld [vmem:[%s1 + $0x8] sm:$0xff]
  %v552 = vld [vmem:[%s1 + $0x10] sm:$0xff]
  %v553 = vld [vmem:[%s1 + $0x18] sm:$0xff]
  %v554 = vld [vmem:[%s1 + $0x20] sm:$0xff]
  %v555 = vld [vmem:[%s1 + $0x28] sm:$0xff]
  %v556 = vld [vmem:[%s1 + $0x30] sm:$0xff]
  %v557 = vld [vmem:[%s1 + $0x38] sm:$0xff]
  %v558 = vld [vmem:[%s1 + $0x40] sm:$0xff]
  %v559 = vld [vmem:[%s1 + $0x48] sm:$0xff]
  %v560 = vld [vmem:[%s1 + $0x50] sm:$0xff]
  %v561 = vld [vmem:[%s1 + $0x58] sm:$0xff]
  %v562 = vpack.c.bf16 %v50, %v42
  %v563 = vpack.c.bf16 %v51, %v43
  %v564 = vpack.c.bf16 %v52, %v44
  %v565 = vpack.c.bf16 %v53, %v45
  %v566 = vpack.c.bf16 %v54, %v46
  %v567 = vpack.c.bf16 %v55, %v47
  %v568 = vpack.c.bf16 %v56, %v48
  %v569 = vpack.c.bf16 %v107, %v101
  %v570 = vpack.c.bf16 %v108, %v102
  %v571 = vpack.c.bf16 %v109, %v103
  %v572 = vpack.c.bf16 %v110, %v104
  %v573 = vpack.c.bf16 %v111, %v105
  %v574 = vpack.c.bf16 %v112, %v106
  %v575 = vpack.c.bf16 %v99, %v85
  %v576 = vpack.c.bf16 %v162, %v156
  %v577 = vpack.c.bf16 %v163, %v157
  %v578 = vpack.c.bf16 %v164, %v158
  %v579 = vpack.c.bf16 %v165, %v159
  %v580 = vpack.c.bf16 %v166, %v160
  %v581 = vpack.c.bf16 %v167, %v161
  %v582 = vpack.c.bf16 %v154, %v140
  %v583 = vpack.c.bf16 %v224, %v217
  %v584 = vpack.c.bf16 %v225, %v218
  %v585 = vpack.c.bf16 %v226, %v219
  %v586 = vpack.c.bf16 %v227, %v220
  %v587 = vpack.c.bf16 %v228, %v221
  %v588 = vpack.c.bf16 %v229, %v222
  %v589 = vpack.c.bf16 %v230, %v223
  %v590 = vpack.c.bf16 %v285, %v278
  %v591 = vpack.c.bf16 %v286, %v279
  %v592 = vpack.c.bf16 %v287, %v280
  %v593 = vpack.c.bf16 %v288, %v281
  %v594 = vpack.c.bf16 %v289, %v282
  %v595 = vpack.c.bf16 %v290, %v283
  %v596 = vpack.c.bf16 %v291, %v284
  %v597 = vpack.c.bf16 %v346, %v339
  %v598 = vpack.c.bf16 %v347, %v340
  %v599 = vpack.c.bf16 %v348, %v341
  %v600 = vpack.c.bf16 %v349, %v342
  %v601 = vpack.c.bf16 %v350, %v343
  %v602 = vpack.c.bf16 %v351, %v344
  %v603 = vpack.c.bf16 %v352, %v345
  %v604 = vpack.c.bf16 %v407, %v400
  %v605 = vpack.c.bf16 %v408, %v401
  %v606 = vpack.c.bf16 %v409, %v402
  %v607 = vpack.c.bf16 %v410, %v403
  %v608 = vpack.c.bf16 %v411, %v404
  %v609 = vpack.c.bf16 %v412, %v405
  %v610 = vpack.c.bf16 %v413, %v406
  %v611 = vpack.c.bf16 %v468, %v461
  %v612 = vpack.c.bf16 %v469, %v462
  %v613 = vpack.c.bf16 %v470, %v463
  %v614 = vpack.c.bf16 %v471, %v464
  %v615 = vpack.c.bf16 %v472, %v465
  %v616 = vpack.c.bf16 %v473, %v466
  %v617 = vpack.c.bf16 %v474, %v467
  %v618 = vpack.c.bf16 %v529, %v522
  %v619 = vpack.c.bf16 %v530, %v523
  %v620 = vpack.c.bf16 %v531, %v524
  %v621 = vpack.c.bf16 %v532, %v525
  %v622 = vpack.c.bf16 %v533, %v526
  %v623 = vpack.c.bf16 %v534, %v527
  %v624 = vpack.c.bf16 %v535, %v528
  %v625 = vld [vmem:[%s2] sm:$0xff]
  %v626 = vld [vmem:[%s2 + $0x8] sm:$0xff]
  %v627 = vld [vmem:[%s2 + $0x10] sm:$0xff]
  %v628 = vld [vmem:[%s2 + $0x18] sm:$0xff]
  %v629 = vld [vmem:[%s2 + $0x20] sm:$0xff]
  %v630 = vld [vmem:[%s2 + $0x28] sm:$0xff]
  %v631 = vld [vmem:[%s2 + $0x30] sm:$0xff]
  %v632 = vld [vmem:[%s2 + $0x38] sm:$0xff]
  %v633 = vld [vmem:[%s2 + $0x40] sm:$0xff]
  %v634 = vld [vmem:[%s2 + $0x48] sm:$0xff]
  %v635 = vld [vmem:[%s2 + $0x50] sm:$0xff]
  %v636 = vld [vmem:[%s2 + $0x58] sm:$0xff]
  %638 = vset.pattern.permute.xlu0 0
  %639 = vperm.xlu0 %638, %v625
  %v640 = vpop.permute.xlu0 %639
  %643 = vset.pattern.permute.xlu0 0
  %644 = vperm.xlu0 %643, %v626
  %v645 = vpop.permute.xlu0 %644
  %648 = vset.pattern.permute.xlu0 0
  %649 = vperm.xlu0 %648, %v627
  %v650 = vpop.permute.xlu0 %649
  %653 = vset.pattern.permute.xlu0 0
  %654 = vperm.xlu0 %653, %v628
  %v655 = vpop.permute.xlu0 %654
  %658 = vset.pattern.permute.xlu0 0
  %659 = vperm.xlu0 %658, %v629
  %v660 = vpop.permute.xlu0 %659
  %663 = vset.pattern.permute.xlu0 0
  %664 = vperm.xlu0 %663, %v630
  %v665 = vpop.permute.xlu0 %664
  %668 = vset.pattern.permute.xlu0 0
  %669 = vperm.xlu0 %668, %v631
  %v670 = vpop.permute.xlu0 %669
  %673 = vset.pattern.permute.xlu0 0
  %674 = vperm.xlu0 %673, %v632
  %v675 = vpop.permute.xlu0 %674
  %678 = vset.pattern.permute.xlu0 0
  %679 = vperm.xlu0 %678, %v633
  %v680 = vpop.permute.xlu0 %679
  %683 = vset.pattern.permute.xlu0 0
  %684 = vperm.xlu0 %683, %v634
  %v685 = vpop.permute.xlu0 %684
  %688 = vset.pattern.permute.xlu0 0
  %689 = vperm.xlu0 %688, %v635
  %v690 = vpop.permute.xlu0 %689
  %693 = vset.pattern.permute.xlu0 0
  %694 = vperm.xlu0 %693, %v636
  %v695 = vpop.permute.xlu0 %694
  %v709 = vunpack.c.l.b16 %v550
  %v710 = vunpack.c.h.b16 %v550
  %v711 = vunpack.c.l.b16 %v551
  %v712 = vunpack.c.h.b16 %v551
  %v713 = vunpack.c.l.b16 %v552
  %v714 = vunpack.c.h.b16 %v552
  %v715 = vunpack.c.l.b16 %v553
  %v716 = vunpack.c.h.b16 %v553
  %v717 = vunpack.c.l.b16 %v554
  %v718 = vunpack.c.h.b16 %v554
  %v719 = vunpack.c.l.b16 %v555
  %v720 = vunpack.c.h.b16 %v555
  %v721 = vunpack.c.l.b16 %v556
  %v722 = vunpack.c.h.b16 %v556
  %v723 = vunpack.c.l.b16 %v557
  %v724 = vunpack.c.h.b16 %v557
  %v725 = vunpack.c.l.b16 %v558
  %v726 = vunpack.c.h.b16 %v558
  %v727 = vunpack.c.l.b16 %v559
  %v728 = vunpack.c.h.b16 %v559
  %v729 = vunpack.c.l.b16 %v560
  %v730 = vunpack.c.h.b16 %v560
  %v731 = vunpack.c.l.b16 %v561
  %v732 = vunpack.c.h.b16 %v561
  %v733 = vpack.c.b16 %v711, %v709
  %v734 = vpack.c.b16 %v712, %v710
  %v735 = vpack.c.b16 %v715, %v713
  %v736 = vpack.c.b16 %v716, %v714
  %v737 = vpack.c.b16 %v719, %v717
  %v738 = vpack.c.b16 %v720, %v718
  %v739 = vpack.c.b16 %v723, %v721
  %v740 = vpack.c.b16 %v724, %v722
  %v741 = vpack.c.b16 %v727, %v725
  %v742 = vpack.c.b16 %v728, %v726
  %v743 = vpack.c.b16 %v731, %v729
  %v744 = vpack.c.b16 %v732, %v730
  %vm751 = vcmask 130048
  %v753 = vsel %vm751, %v734, 0
  %v756 = vsel %vm751, %v736, 0
  %v759 = vsel %vm751, %v738, 0
  %v762 = vsel %vm751, %v740, 0
  %v765 = vsel %vm751, %v742, 0
  %v768 = vsel %vm751, %v744, 0
  %770 = vmatprep.subr.bf16.mxu0 %v563
  %771 = vmatpush1.bf16.msra.mxu0 %v562
  %772 = vmatprep.subr.bf16.mxu0 %v570
  %773 = vmatpush1.bf16.msra.mxu0 %v569
  %774 = vmatprep.subr.bf16.mxu0 %v577
  %775 = vmatpush1.bf16.msra.mxu0 %v576
  %776 = vmatprep.subr.bf16.mxu0 %v584
  %777 = vmatpush1.bf16.msra.mxu0 %v583
  %778 = vmatprep.subr.bf16.mxu0 %v591
  %779 = vmatpush1.bf16.msra.mxu0 %v590
  %780 = vmatprep.subr.bf16.mxu0 %v598
  %781 = vmatpush1.bf16.msra.mxu0 %v597
  %782 = vmatprep.subr.bf16.mxu0 %v605
  %783 = vmatpush1.bf16.msra.mxu0 %v604
  %784 = vmatprep.subr.bf16.mxu0 %v612
  %785 = vmatpush1.bf16.msra.mxu0 %v611
  %786 = vmatprep.subr.bf16.mxu0 %v619
  %787 = vmatpush1.bf16.msra.mxu0 %v618
  %788 = vmatprep.subr.bf16.mxu0 0
  %789 = vmatpush1.bf16.msra.mxu0 0
  %790 = vmatprep.subr.bf16.mxu0 0
  %791 = vmatpush1.bf16.msra.mxu0 0
  %792 = vmatprep.subr.bf16.mxu0 0
  %793 = vmatpush1.bf16.msra.mxu0 0
  %794 = vmatprep.subr.bf16.mxu0 0
  %795 = vmatpush1.bf16.msra.mxu0 0
  %796 = vmatprep.subr.bf16.mxu0 0
  %797 = vmatpush1.bf16.msra.mxu0 0
  %798 = vmatprep.subr.bf16.mxu0 0
  %799 = vmatpush1.bf16.msra.mxu0 0
  %800 = vmatprep.subr.bf16.mxu0 0
  %801 = vmatpush1.bf16.msra.mxu0 0
  %802 = vmatprep.mubr.bf16.mxu0 %v753
  %803 = vmatmul.mubr.bf16.gmra.mrb[0].mxu0 %v733
  %v804 = vpop.f32.mrb[0].mxu0
  %v805 = vadd.f32 %v640, %v804
  %v806 = vpop.f32.mrb[0].mxu0
  %v807 = vadd.f32 %v640, %v806
  %v808 = vpop.f32.mrb[0].mxu0
  %v809 = vadd.f32 %v645, %v808
  %v810 = vpop.f32.mrb[0].mxu0
  %v811 = vadd.f32 %v645, %v810
  %812 = vmatprep.mubr.bf16.mxu0 %v756
  %813 = vmatmul.mubr.bf16.gmra.mrb[0].mxu0 %v735
  %v814 = vpop.f32.mrb[0].mxu0
  %v815 = vadd.f32 %v650, %v814
  %v816 = vpop.f32.mrb[0].mxu0
  %v817 = vadd.f32 %v650, %v816
  %v818 = vpop.f32.mrb[0].mxu0
  %v819 = vadd.f32 %v655, %v818
  %v820 = vpop.f32.mrb[0].mxu0
  %v821 = vadd.f32 %v655, %v820
  %822 = vmatprep.mubr.bf16.mxu0 %v759
  %823 = vmatmul.mubr.bf16.gmra.mrb[0].mxu0 %v737
  %v824 = vpop.f32.mrb[0].mxu0
  %v825 = vadd.f32 %v660, %v824
  %v826 = vpop.f32.mrb[0].mxu0
  %v827 = vadd.f32 %v660, %v826
  %v828 = vpop.f32.mrb[0].mxu0
  %v829 = vadd.f32 %v665, %v828
  %v830 = vpop.f32.mrb[0].mxu0
  %v831 = vadd.f32 %v665, %v830
  %832 = vmatprep.mubr.bf16.mxu0 %v762
  %833 = vmatmul.mubr.bf16.gmra.mrb[0].mxu0 %v739
  %v834 = vpop.f32.mrb[0].mxu0
  %v835 = vadd.f32 %v670, %v834
  %v836 = vpop.f32.mrb[0].mxu0
  %v837 = vadd.f32 %v670, %v836
  %v838 = vpop.f32.mrb[0].mxu0
  %v839 = vadd.f32 %v675, %v838
  %v840 = vpop.f32.mrb[0].mxu0
  %v841 = vadd.f32 %v675, %v840
  %842 = vmatprep.mubr.bf16.mxu0 %v765
  %843 = vmatmul.mubr.bf16.gmra.mrb[0].mxu0 %v741
  %v844 = vpop.f32.mrb[0].mxu0
  %v845 = vadd.f32 %v680, %v844
  %v846 = vpop.f32.mrb[0].mxu0
  %v847 = vadd.f32 %v680, %v846
  %v848 = vpop.f32.mrb[0].mxu0
  %v849 = vadd.f32 %v685, %v848
  %v850 = vpop.f32.mrb[0].mxu0
  %v851 = vadd.f32 %v685, %v850
  %852 = vmatprep.mubr.bf16.mxu0 %v768
  %853 = vmatmul.mubr.bf16.gmra.mrb[0].mxu0 %v743
  %v854 = vpop.f32.mrb[0].mxu0
  %v855 = vadd.f32 %v690, %v854
  %v856 = vpop.f32.mrb[0].mxu0
  %v857 = vadd.f32 %v690, %v856
  %v858 = vpop.f32.mrb[0].mxu0
  %v859 = vadd.f32 %v695, %v858
  %v860 = vpop.f32.mrb[0].mxu0
  %v861 = vadd.f32 %v695, %v860
  %862 = vdwg.mxu0
  %863 = vmatprep.subr.bf16.mxu0 %v565
  %864 = vmatpush1.bf16.msra.mxu0 %v564
  %865 = vmatprep.subr.bf16.mxu0 %v572
  %866 = vmatpush1.bf16.msra.mxu0 %v571
  %867 = vmatprep.subr.bf16.mxu0 %v579
  %868 = vmatpush1.bf16.msra.mxu0 %v578
  %869 = vmatprep.subr.bf16.mxu0 %v586
  %870 = vmatpush1.bf16.msra.mxu0 %v585
  %871 = vmatprep.subr.bf16.mxu0 %v593
  %872 = vmatpush1.bf16.msra.mxu0 %v592
  %873 = vmatprep.subr.bf16.mxu0 %v600
  %874 = vmatpush1.bf16.msra.mxu0 %v599
  %875 = vmatprep.subr.bf16.mxu0 %v607
  %876 = vmatpush1.bf16.msra.mxu0 %v606
  %877 = vmatprep.subr.bf16.mxu0 %v614
  %878 = vmatpush1.bf16.msra.mxu0 %v613
  %879 = vmatprep.subr.bf16.mxu0 %v621
  %880 = vmatpush1.bf16.msra.mxu0 %v620
  %881 = vmatprep.subr.bf16.mxu0 0
  %882 = vmatpush1.bf16.msra.mxu0 0
  %883 = vmatprep.subr.bf16.mxu0 0
  %884 = vmatpush1.bf16.msra.mxu0 0
  %885 = vmatprep.subr.bf16.mxu0 0
  %886 = vmatpush1.bf16.msra.mxu0 0
  %887 = vmatprep.subr.bf16.mxu0 0
  %888 = vmatpush1.bf16.msra.mxu0 0
  %889 = vmatprep.subr.bf16.mxu0 0
  %890 = vmatpush1.bf16.msra.mxu0 0
  %891 = vmatprep.subr.bf16.mxu0 0
  %892 = vmatpush1.bf16.msra.mxu0 0
  %893 = vmatprep.subr.bf16.mxu0 0
  %894 = vmatpush1.bf16.msra.mxu0 0
  %895 = vmatprep.mubr.bf16.mxu0 %v753
  %896 = vmatmul.mubr.bf16.gmra.mrb[0].mxu0 %v733
  %v897 = vpop.f32.mrb[0].mxu0
  %v898 = vadd.f32 %v640, %v897
  %v899 = vpop.f32.mrb[0].mxu0
  %v900 = vadd.f32 %v640, %v899
  %v901 = vpop.f32.mrb[0].mxu0
  %v902 = vadd.f32 %v645, %v901
  %v903 = vpop.f32.mrb[0].mxu0
  %v904 = vadd.f32 %v645, %v903
  %905 = vmatprep.mubr.bf16.mxu0 %v756
  %906 = vmatmul.mubr.bf16.gmra.mrb[0].mxu0 %v735
  %v907 = vpop.f32.mrb[0].mxu0
  %v908 = vadd.f32 %v650, %v907
  %v909 = vpop.f32.mrb[0].mxu0
  %v910 = vadd.f32 %v650, %v909
  %v911 = vpop.f32.mrb[0].mxu0
  %v912 = vadd.f32 %v655, %v911
  %v913 = vpop.f32.mrb[0].mxu0
  %v914 = vadd.f32 %v655, %v913
  %915 = vmatprep.mubr.bf16.mxu0 %v759
  %916 = vmatmul.mubr.bf16.gmra.mrb[0].mxu0 %v737
  %v917 = vpop.f32.mrb[0].mxu0
  %v918 = vadd.f32 %v660, %v917
  %v919 = vpop.f32.mrb[0].mxu0
  %v920 = vadd.f32 %v660, %v919
  %v921 = vpop.f32.mrb[0].mxu0
  %v922 = vadd.f32 %v665, %v921
  %v923 = vpop.f32.mrb[0].mxu0
  %v924 = vadd.f32 %v665, %v923
  %925 = vmatprep.mubr.bf16.mxu0 %v762
  %926 = vmatmul.mubr.bf16.gmra.mrb[0].mxu0 %v739
  %v927 = vpop.f32.mrb[0].mxu0
  %v928 = vadd.f32 %v670, %v927
  %v929 = vpop.f32.mrb[0].mxu0
  %v930 = vadd.f32 %v670, %v929
  %v931 = vpop.f32.mrb[0].mxu0
  %v932 = vadd.f32 %v675, %v931
  %v933 = vpop.f32.mrb[0].mxu0
  %v934 = vadd.f32 %v675, %v933
  %935 = vmatprep.mubr.bf16.mxu0 %v765
  %936 = vmatmul.mubr.bf16.gmra.mrb[0].mxu0 %v741
  %v937 = vpop.f32.mrb[0].mxu0
  %v938 = vadd.f32 %v680, %v937
  %v939 = vpop.f32.mrb[0].mxu0
  %v940 = vadd.f32 %v680, %v939
  %v941 = vpop.f32.mrb[0].mxu0
  %v942 = vadd.f32 %v685, %v941
  %v943 = vpop.f32.mrb[0].mxu0
  %v944 = vadd.f32 %v685, %v943
  %945 = vmatprep.mubr.bf16.mxu0 %v768
  %946 = vmatmul.mubr.bf16.gmra.mrb[0].mxu0 %v743
  %v947 = vpop.f32.mrb[0].mxu0
  %v948 = vadd.f32 %v690, %v947
  %v949 = vpop.f32.mrb[0].mxu0
  %v950 = vadd.f32 %v690, %v949
  %v951 = vpop.f32.mrb[0].mxu0
  %v952 = vadd.f32 %v695, %v951
  %v953 = vpop.f32.mrb[0].mxu0
  %v954 = vadd.f32 %v695, %v953
  %955 = vdwg.mxu0
  %956 = vmatprep.subr.bf16.mxu0 %v567
  %957 = vmatpush1.bf16.msra.mxu0 %v566
  %958 = vmatprep.subr.bf16.mxu0 %v574
  %959 = vmatpush1.bf16.msra.mxu0 %v573
  %960 = vmatprep.subr.bf16.mxu0 %v581
  %961 = vmatpush1.bf16.msra.mxu0 %v580
  %962 = vmatprep.subr.bf16.mxu0 %v588
  %963 = vmatpush1.bf16.msra.mxu0 %v587
  %964 = vmatprep.subr.bf16.mxu0 %v595
  %965 = vmatpush1.bf16.msra.mxu0 %v594
  %966 = vmatprep.subr.bf16.mxu0 %v602
  %967 = vmatpush1.bf16.msra.mxu0 %v601
  %968 = vmatprep.subr.bf16.mxu0 %v609
  %969 = vmatpush1.bf16.msra.mxu0 %v608
  %970 = vmatprep.subr.bf16.mxu0 %v616
  %971 = vmatpush1.bf16.msra.mxu0 %v615
  %972 = vmatprep.subr.bf16.mxu0 %v623
  %973 = vmatpush1.bf16.msra.mxu0 %v622
  %974 = vmatprep.subr.bf16.mxu0 0
  %975 = vmatpush1.bf16.msra.mxu0 0
  %976 = vmatprep.subr.bf16.mxu0 0
  %977 = vmatpush1.bf16.msra.mxu0 0
  %978 = vmatprep.subr.bf16.mxu0 0
  %979 = vmatpush1.bf16.msra.mxu0 0
  %980 = vmatprep.subr.bf16.mxu0 0
  %981 = vmatpush1.bf16.msra.mxu0 0
  %982 = vmatprep.subr.bf16.mxu0 0
  %983 = vmatpush1.bf16.msra.mxu0 0
  %984 = vmatprep.subr.bf16.mxu0 0
  %985 = vmatpush1.bf16.msra.mxu0 0
  %986 = vmatprep.subr.bf16.mxu0 0
  %987 = vmatpush1.bf16.msra.mxu0 0
  %988 = vmatprep.mubr.bf16.mxu0 %v753
  %989 = vmatmul.mubr.bf16.gmra.mrb[0].mxu0 %v733
  %v990 = vpop.f32.mrb[0].mxu0
  %v991 = vadd.f32 %v640, %v990
  %v992 = vpop.f32.mrb[0].mxu0
  %v993 = vadd.f32 %v640, %v992
  %v994 = vpop.f32.mrb[0].mxu0
  %v995 = vadd.f32 %v645, %v994
  %v996 = vpop.f32.mrb[0].mxu0
  %v997 = vadd.f32 %v645, %v996
  %998 = vmatprep.mubr.bf16.mxu0 %v756
  %999 = vmatmul.mubr.bf16.gmra.mrb[0].mxu0 %v735
  %v1000 = vpop.f32.mrb[0].mxu0
  %v1001 = vadd.f32 %v650, %v1000
  %v1002 = vpop.f32.mrb[0].mxu0
  %v1003 = vadd.f32 %v650, %v1002
  %v1004 = vpop.f32.mrb[0].mxu0
  %v1005 = vadd.f32 %v655, %v1004
  %v1006 = vpop.f32.mrb[0].mxu0
  %v1007 = vadd.f32 %v655, %v1006
  %1008 = vmatprep.mubr.bf16.mxu0 %v759
  %1009 = vmatmul.mubr.bf16.gmra.mrb[0].mxu0 %v737
  %v1010 = vpop.f32.mrb[0].mxu0
  %v1011 = vadd.f32 %v660, %v1010
  %v1012 = vpop.f32.mrb[0].mxu0
  %v1013 = vadd.f32 %v660, %v1012
  %v1014 = vpop.f32.mrb[0].mxu0
  %v1015 = vadd.f32 %v665, %v1014
  %v1016 = vpop.f32.mrb[0].mxu0
  %v1017 = vadd.f32 %v665, %v1016
  %1018 = vmatprep.mubr.bf16.mxu0 %v762
  %1019 = vmatmul.mubr.bf16.gmra.mrb[0].mxu0 %v739
  %v1020 = vpop.f32.mrb[0].mxu0
  %v1021 = vadd.f32 %v670, %v1020
  %v1022 = vpop.f32.mrb[0].mxu0
  %v1023 = vadd.f32 %v670, %v1022
  %v1024 = vpop.f32.mrb[0].mxu0
  %v1025 = vadd.f32 %v675, %v1024
  %v1026 = vpop.f32.mrb[0].mxu0
  %v1027 = vadd.f32 %v675, %v1026
  %1028 = vmatprep.mubr.bf16.mxu0 %v765
  %1029 = vmatmul.mubr.bf16.gmra.mrb[0].mxu0 %v741
  %v1030 = vpop.f32.mrb[0].mxu0
  %v1031 = vadd.f32 %v680, %v1030
  %v1032 = vpop.f32.mrb[0].mxu0
  %v1033 = vadd.f32 %v680, %v1032
  %v1034 = vpop.f32.mrb[0].mxu0
  %v1035 = vadd.f32 %v685, %v1034
  %v1036 = vpop.f32.mrb[0].mxu0
  %v1037 = vadd.f32 %v685, %v1036
  %1038 = vmatprep.mubr.bf16.mxu0 %v768
  %1039 = vmatmul.mubr.bf16.gmra.mrb[0].mxu0 %v743
  %v1040 = vpop.f32.mrb[0].mxu0
  %v1041 = vadd.f32 %v690, %v1040
  %v1042 = vpop.f32.mrb[0].mxu0
  %v1043 = vadd.f32 %v690, %v1042
  %v1044 = vpop.f32.mrb[0].mxu0
  %v1045 = vadd.f32 %v695, %v1044
  %v1046 = vpop.f32.mrb[0].mxu0
  %v1047 = vadd.f32 %v695, %v1046
  %1048 = vdwg.mxu0
  %1049 = vmatprep.subr.bf16.mxu0 0
  %1050 = vmatpush1.bf16.msra.mxu0 %v568
  %1051 = vmatprep.subr.bf16.mxu0 0
  %1052 = vmatpush1.bf16.msra.mxu0 %v575
  %1053 = vmatprep.subr.bf16.mxu0 0
  %1054 = vmatpush1.bf16.msra.mxu0 %v582
  %1055 = vmatprep.subr.bf16.mxu0 0
  %1056 = vmatpush1.bf16.msra.mxu0 %v589
  %1057 = vmatprep.subr.bf16.mxu0 0
  %1058 = vmatpush1.bf16.msra.mxu0 %v596
  %1059 = vmatprep.subr.bf16.mxu0 0
  %1060 = vmatpush1.bf16.msra.mxu0 %v603
  %1061 = vmatprep.subr.bf16.mxu0 0
  %1062 = vmatpush1.bf16.msra.mxu0 %v610
  %1063 = vmatprep.subr.bf16.mxu0 0
  %1064 = vmatpush1.bf16.msra.mxu0 %v617
  %1065 = vmatprep.subr.bf16.mxu0 0
  %1066 = vmatpush1.bf16.msra.mxu0 %v624
  %1067 = vmatprep.subr.bf16.mxu0 0
  %1068 = vmatpush1.bf16.msra.mxu0 0
  %1069 = vmatprep.subr.bf16.mxu0 0
  %1070 = vmatpush1.bf16.msra.mxu0 0
  %1071 = vmatprep.subr.bf16.mxu0 0
  %1072 = vmatpush1.bf16.msra.mxu0 0
  %1073 = vmatprep.subr.bf16.mxu0 0
  %1074 = vmatpush1.bf16.msra.mxu0 0
  %1075 = vmatprep.subr.bf16.mxu0 0
  %1076 = vmatpush1.bf16.msra.mxu0 0
  %1077 = vmatprep.subr.bf16.mxu0 0
  %1078 = vmatpush1.bf16.msra.mxu0 0
  %1079 = vmatprep.subr.bf16.mxu0 0
  %1080 = vmatpush1.bf16.msra.mxu0 0
  %1081 = vmatprep.mubr.bf16.mxu0 %v753
  %1082 = vmatmul.mubr.bf16.gmra.mrb[0].mxu0 %v733
  %v1083 = vpop.f32.mrb[0].mxu0
  %v1084 = vadd.f32 %v640, %v1083
  %v1085 = vpop.f32.mrb[0].mxu0
  %v1086 = vpop.f32.mrb[0].mxu0
  %v1087 = vadd.f32 %v645, %v1086
  %v1088 = vpop.f32.mrb[0].mxu0
  %1089 = vmatprep.mubr.bf16.mxu0 %v756
  %1090 = vmatmul.mubr.bf16.gmra.mrb[0].mxu0 %v735
  %v1091 = vpop.f32.mrb[0].mxu0
  %v1092 = vadd.f32 %v650, %v1091
  %v1093 = vpop.f32.mrb[0].mxu0
  %v1094 = vpop.f32.mrb[0].mxu0
  %v1095 = vadd.f32 %v655, %v1094
  %v1096 = vpop.f32.mrb[0].mxu0
  %1097 = vmatprep.mubr.bf16.mxu0 %v759
  %1098 = vmatmul.mubr.bf16.gmra.mrb[0].mxu0 %v737
  %v1099 = vpop.f32.mrb[0].mxu0
  %v1100 = vadd.f32 %v660, %v1099
  %v1101 = vpop.f32.mrb[0].mxu0
  %v1102 = vpop.f32.mrb[0].mxu0
  %v1103 = vadd.f32 %v665, %v1102
  %v1104 = vpop.f32.mrb[0].mxu0
  %1105 = vmatprep.mubr.bf16.mxu0 %v762
  %1106 = vmatmul.mubr.bf16.gmra.mrb[0].mxu0 %v739
  %v1107 = vpop.f32.mrb[0].mxu0
  %v1108 = vadd.f32 %v670, %v1107
  %v1109 = vpop.f32.mrb[0].mxu0
  %v1110 = vpop.f32.mrb[0].mxu0
  %v1111 = vadd.f32 %v675, %v1110
  %v1112 = vpop.f32.mrb[0].mxu0
  %1113 = vmatprep.mubr.bf16.mxu0 %v765
  %1114 = vmatmul.mubr.bf16.gmra.mrb[0].mxu0 %v741
  %v1115 = vpop.f32.mrb[0].mxu0
  %v1116 = vadd.f32 %v680, %v1115
  %v1117 = vpop.f32.mrb[0].mxu0
  %v1118 = vpop.f32.mrb[0].mxu0
  %v1119 = vadd.f32 %v685, %v1118
  %v1120 = vpop.f32.mrb[0].mxu0
  %1121 = vmatprep.mubr.bf16.mxu0 %v768
  %1122 = vmatmul.mubr.bf16.gmra.mrb[0].mxu0 %v743
  %v1123 = vpop.f32.mrb[0].mxu0
  %v1124 = vadd.f32 %v690, %v1123
  %v1125 = vpop.f32.mrb[0].mxu0
  %v1126 = vpop.f32.mrb[0].mxu0
  %v1127 = vadd.f32 %v695, %v1126
  %v1128 = vpop.f32.mrb[0].mxu0
  %1129 = vdwg.mxu0
  %v1130 = vmax.f32 %v805, 0.0
  %v1131 = vmax.f32 %v807, 0.0
  %v1132 = vmax.f32 %v898, 0.0
  %v1133 = vmax.f32 %v900, 0.0
  %v1134 = vmax.f32 %v991, 0.0
  %v1135 = vmax.f32 %v993, 0.0
  %v1136 = vmax.f32 %v1084, 0.0
  %v1137 = vmax.f32 %v809, 0.0
  %v1138 = vmax.f32 %v811, 0.0
  %v1139 = vmax.f32 %v902, 0.0
  %v1140 = vmax.f32 %v904, 0.0
  %v1141 = vmax.f32 %v995, 0.0
  %v1142 = vmax.f32 %v997, 0.0
  %v1143 = vmax.f32 %v1087, 0.0
  %v1144 = vmax.f32 %v815, 0.0
  %v1145 = vmax.f32 %v817, 0.0
  %v1146 = vmax.f32 %v908, 0.0
  %v1147 = vmax.f32 %v910, 0.0
  %v1148 = vmax.f32 %v1001, 0.0
  %v1149 = vmax.f32 %v1003, 0.0
  %v1150 = vmax.f32 %v1092, 0.0
  %v1151 = vmax.f32 %v819, 0.0
  %v1152 = vmax.f32 %v821, 0.0
  %v1153 = vmax.f32 %v912, 0.0
  %v1154 = vmax.f32 %v914, 0.0
  %v1155 = vmax.f32 %v1005, 0.0
  %v1156 = vmax.f32 %v1007, 0.0
  %v1157 = vmax.f32 %v1095, 0.0
  %v1158 = vmax.f32 %v825, 0.0
  %v1159 = vmax.f32 %v827, 0.0
  %v1160 = vmax.f32 %v918, 0.0
  %v1161 = vmax.f32 %v920, 0.0
  %v1162 = vmax.f32 %v1011, 0.0
  %v1163 = vmax.f32 %v1013, 0.0
  %v1164 = vmax.f32 %v1100, 0.0
  %v1165 = vmax.f32 %v829, 0.0
  %v1166 = vmax.f32 %v831, 0.0
  %v1167 = vmax.f32 %v922, 0.0
  %v1168 = vmax.f32 %v924, 0.0
  %v1169 = vmax.f32 %v1015, 0.0
  %v1170 = vmax.f32 %v1017, 0.0
  %v1171 = vmax.f32 %v1103, 0.0
  %v1172 = vmax.f32 %v835, 0.0
  %v1173 = vmax.f32 %v837, 0.0
  %v1174 = vmax.f32 %v928, 0.0
  %v1175 = vmax.f32 %v930, 0.0
  %v1176 = vmax.f32 %v1021, 0.0
  %v1177 = vmax.f32 %v1023, 0.0
  %v1178 = vmax.f32 %v1108, 0.0
  %v1179 = vmax.f32 %v839, 0.0
  %v1180 = vmax.f32 %v841, 0.0
  %v1181 = vmax.f32 %v932, 0.0
  %v1182 = vmax.f32 %v934, 0.0
  %v1183 = vmax.f32 %v1025, 0.0
  %v1184 = vmax.f32 %v1027, 0.0
  %v1185 = vmax.f32 %v1111, 0.0
  %v1186 = vmax.f32 %v845, 0.0
  %v1187 = vmax.f32 %v847, 0.0
  %v1188 = vmax.f32 %v938, 0.0
  %v1189 = vmax.f32 %v940, 0.0
  %v1190 = vmax.f32 %v1031, 0.0
  %v1191 = vmax.f32 %v1033, 0.0
  %v1192 = vmax.f32 %v1116, 0.0
  %v1193 = vmax.f32 %v849, 0.0
  %v1194 = vmax.f32 %v851, 0.0
  %v1195 = vmax.f32 %v942, 0.0
  %v1196 = vmax.f32 %v944, 0.0
  %v1197 = vmax.f32 %v1035, 0.0
  %v1198 = vmax.f32 %v1037, 0.0
  %v1199 = vmax.f32 %v1119, 0.0
  %v1200 = vmax.f32 %v855, 0.0
  %v1201 = vmax.f32 %v857, 0.0
  %v1202 = vmax.f32 %v948, 0.0
  %v1203 = vmax.f32 %v950, 0.0
  %v1204 = vmax.f32 %v1041, 0.0
  %v1205 = vmax.f32 %v1043, 0.0
  %v1206 = vmax.f32 %v1124, 0.0
  %v1207 = vmax.f32 %v859, 0.0
  %v1208 = vmax.f32 %v861, 0.0
  %v1209 = vmax.f32 %v952, 0.0
  %v1210 = vmax.f32 %v954, 0.0
  %v1211 = vmax.f32 %v1045, 0.0
  %v1212 = vmax.f32 %v1047, 0.0
  %v1213 = vmax.f32 %v1127, 0.0
  %v1214 = vpack.c.bf16 %v1137, %v1130
  %v1215 = vpack.c.bf16 %v1138, %v1131
  %v1216 = vpack.c.bf16 %v1139, %v1132
  %v1217 = vpack.c.bf16 %v1140, %v1133
  %v1218 = vpack.c.bf16 %v1141, %v1134
  %v1219 = vpack.c.bf16 %v1142, %v1135
  %v1220 = vpack.c.bf16 %v1143, %v1136
  %v1221 = vpack.c.bf16 %v1151, %v1144
  %v1222 = vpack.c.bf16 %v1152, %v1145
  %v1223 = vpack.c.bf16 %v1153, %v1146
  %v1224 = vpack.c.bf16 %v1154, %v1147
  %v1225 = vpack.c.bf16 %v1155, %v1148
  %v1226 = vpack.c.bf16 %v1156, %v1149
  %v1227 = vpack.c.bf16 %v1157, %v1150
  %v1228 = vpack.c.bf16 %v1165, %v1158
  %v1229 = vpack.c.bf16 %v1166, %v1159
  %v1230 = vpack.c.bf16 %v1167, %v1160
  %v1231 = vpack.c.bf16 %v1168, %v1161
  %v1232 = vpack.c.bf16 %v1169, %v1162
  %v1233 = vpack.c.bf16 %v1170, %v1163
  %v1234 = vpack.c.bf16 %v1171, %v1164
  %v1235 = vpack.c.bf16 %v1179, %v1172
  %v1236 = vpack.c.bf16 %v1180, %v1173
  %v1237 = vpack.c.bf16 %v1181, %v1174
  %v1238 = vpack.c.bf16 %v1182, %v1175
  %v1239 = vpack.c.bf16 %v1183, %v1176
  %v1240 = vpack.c.bf16 %v1184, %v1177
  %v1241 = vpack.c.bf16 %v1185, %v1178
  %v1242 = vpack.c.bf16 %v1193, %v1186
  %v1243 = vpack.c.bf16 %v1194, %v1187
  %v1244 = vpack.c.bf16 %v1195, %v1188
  %v1245 = vpack.c.bf16 %v1196, %v1189
  %v1246 = vpack.c.bf16 %v1197, %v1190
  %v1247 = vpack.c.bf16 %v1198, %v1191
  %v1248 = vpack.c.bf16 %v1199, %v1192
  %v1249 = vpack.c.bf16 %v1207, %v1200
  %v1250 = vpack.c.bf16 %v1208, %v1201
  %v1251 = vpack.c.bf16 %v1209, %v1202
  %v1252 = vpack.c.bf16 %v1210, %v1203
  %v1253 = vpack.c.bf16 %v1211, %v1204
  %v1254 = vpack.c.bf16 %v1212, %v1205
  %v1255 = vpack.c.bf16 %v1213, %v1206
  %v1256 = vld [vmem:[%s3] sm:$0xff]
  %v1257 = vld [vmem:[%s3 + $0x8] sm:$0xff]
  %v1258 = vld [vmem:[%s3 + $0x10] sm:$0xff]
  %v1259 = vld [vmem:[%s3 + $0x18] sm:$0xff]
  %v1260 = vld [vmem:[%s3 + $0x20] sm:$0xff]
  %v1261 = vld [vmem:[%s3 + $0x28] sm:$0xff]
  %v1262 = vld [vmem:[%s3 + $0x30] sm:$0xff]
  %v1263 = vld [vmem:[%s3 + $0x38] sm:$0xff]
  %v1264 = vld [vmem:[%s3 + $0x40] sm:$0xff]
  %v1265 = vld [vmem:[%s3 + $0x48] sm:$0xff]
  %v1266 = vld [vmem:[%s3 + $0x50] sm:$0xff]
  %v1267 = vld [vmem:[%s3 + $0x58] sm:$0xff]
  %v1268 = vld [vmem:[%s3 + $0x60] sm:$0xff]
  %v1269 = vld [vmem:[%s3 + $0x68] sm:$0xff]
  %v1270 = vld [vmem:[%s3 + $0x70] sm:$0xff]
  %v1271 = vld [vmem:[%s3 + $0x78] sm:$0xff]
  %v1272 = vld [vmem:[%s3 + $0x80] sm:$0xff]
  %v1273 = vld [vmem:[%s3 + $0x88] sm:$0xff]
  %v1274 = vld [vmem:[%s3 + $0x90] sm:$0xff]
  %v1275 = vld [vmem:[%s3 + $0x98] sm:$0xff]
  %v1276 = vld [vmem:[%s3 + $0xa0] sm:$0xff]
  %v1277 = vld [vmem:[%s3 + $0xa8] sm:$0xff]
  %v1278 = vld [vmem:[%s3 + $0xb0] sm:$0xff]
  %v1279 = vld [vmem:[%s3 + $0xb8] sm:$0xff]
  %v1280 = vld [vmem:[%s3 + $0xc0] sm:$0xff]
  %v1281 = vld [vmem:[%s3 + $0xc8] sm:$0xff]
  %v1282 = vld [vmem:[%s3 + $0xd0] sm:$0xff]
  %v1283 = vld [vmem:[%s3 + $0xd8] sm:$0xff]
  %v1284 = vld [vmem:[%s3 + $0xe0] sm:$0xff]
  %v1285 = vld [vmem:[%s3 + $0xe8] sm:$0xff]
  %v1286 = vld [vmem:[%s3 + $0xf0] sm:$0xff]
  %v1287 = vld [vmem:[%s3 + $0xf8] sm:$0xff]
  %v1288 = vld [vmem:[%s3 + $0x100] sm:$0xff]
  %v1289 = vld [vmem:[%s3 + $0x108] sm:$0xff]
  %v1290 = vld [vmem:[%s3 + $0x110] sm:$0xff]
  %v1291 = vld [vmem:[%s3 + $0x118] sm:$0xff]
  %v1292 = vld [vmem:[%s3 + $0x120] sm:$0xff]
  %v1293 = vld [vmem:[%s3 + $0x128] sm:$0xff]
  %v1294 = vld [vmem:[%s3 + $0x130] sm:$0xff]
  %v1295 = vld [vmem:[%s3 + $0x138] sm:$0xff]
  %v1296 = vld [vmem:[%s3 + $0x140] sm:$0xff]
  %v1297 = vld [vmem:[%s3 + $0x148] sm:$0xff]
  %v1298 = vld [vmem:[%s3 + $0x150] sm:$0xff]
  %v1299 = vld [vmem:[%s3 + $0x158] sm:$0xff]
  %v1300 = vld [vmem:[%s3 + $0x160] sm:$0xff]
  %v1301 = vld [vmem:[%s3 + $0x168] sm:$0xff]
  %v1302 = vld [vmem:[%s3 + $0x170] sm:$0xff]
  %v1303 = vld [vmem:[%s3 + $0x178] sm:$0xff]
  %v1304 = vld [vmem:[%s3 + $0x180] sm:$0xff]
  %v1305 = vld [vmem:[%s3 + $0x188] sm:$0xff]
  %v1306 = vld [vmem:[%s3 + $0x190] sm:$0xff]
  %v1307 = vld [vmem:[%s3 + $0x198] sm:$0xff]
  %v1308 = vld [vmem:[%s3 + $0x1a0] sm:$0xff]
  %v1309 = vld [vmem:[%s3 + $0x1a8] sm:$0xff]
  %v1310 = vld [vmem:[%s3 + $0x1b0] sm:$0xff]
  %v1311 = vld [vmem:[%s3 + $0x1b8] sm:$0xff]
  %v1312 = vld [vmem:[%s3 + $0x1c0] sm:$0xff]
  %v1313 = vld [vmem:[%s3 + $0x1c8] sm:$0xff]
  %v1314 = vld [vmem:[%s3 + $0x1d0] sm:$0xff]
  %v1315 = vld [vmem:[%s3 + $0x1d8] sm:$0xff]
  %v1316 = vld [vmem:[%s3 + $0x1e0] sm:$0xff]
  %v1317 = vld [vmem:[%s3 + $0x1e8] sm:$0xff]
  %v1318 = vld [vmem:[%s3 + $0x1f0] sm:$0xff]
  %v1319 = vld [vmem:[%s3 + $0x1f8] sm:$0xff]
  %v1320 = vld [vmem:[%s3 + $0x200] sm:$0xff]
  %v1321 = vld [vmem:[%s3 + $0x208] sm:$0xff]
  %v1322 = vld [vmem:[%s3 + $0x210] sm:$0xff]
  %v1323 = vld [vmem:[%s3 + $0x218] sm:$0xff]
  %v1324 = vld [vmem:[%s3 + $0x220] sm:$0xff]
  %v1325 = vld [vmem:[%s3 + $0x228] sm:$0xff]
  %v1326 = vld [vmem:[%s3 + $0x230] sm:$0xff]
  %v1327 = vld [vmem:[%s3 + $0x238] sm:$0xff]
  %v1328 = vld [vmem:[%s3 + $0x240] sm:$0xff]
  %v1329 = vld [vmem:[%s3 + $0x248] sm:$0xff]
  %v1330 = vld [vmem:[%s3 + $0x250] sm:$0xff]
  %v1331 = vld [vmem:[%s3 + $0x258] sm:$0xff]
  %v1332 = vld [vmem:[%s3 + $0x260] sm:$0xff]
  %v1333 = vld [vmem:[%s3 + $0x268] sm:$0xff]
  %v1334 = vld [vmem:[%s3 + $0x270] sm:$0xff]
  %v1335 = vld [vmem:[%s3 + $0x278] sm:$0xff]
  %v1336 = vld [vmem:[%s3 + $0x280] sm:$0xff]
  %v1337 = vld [vmem:[%s3 + $0x288] sm:$0xff]
  %v1338 = vld [vmem:[%s3 + $0x290] sm:$0xff]
  %v1339 = vld [vmem:[%s3 + $0x298] sm:$0xff]
  %v1340 = vld [vmem:[%s3 + $0x2a0] sm:$0xff]
  %v1341 = vld [vmem:[%s3 + $0x2a8] sm:$0xff]
  %v1342 = vld [vmem:[%s3 + $0x2b0] sm:$0xff]
  %v1343 = vld [vmem:[%s3 + $0x2b8] sm:$0xff]
  %v1344 = vld [vmem:[%s3 + $0x2c0] sm:$0xff]
  %v1345 = vld [vmem:[%s3 + $0x2c8] sm:$0xff]
  %v1346 = vld [vmem:[%s3 + $0x2d0] sm:$0xff]
  %v1347 = vld [vmem:[%s3 + $0x2d8] sm:$0xff]
  %v1348 = vld [vmem:[%s3 + $0x2e0] sm:$0xff]
  %v1349 = vld [vmem:[%s3 + $0x2e8] sm:$0xff]
  %v1350 = vld [vmem:[%s3 + $0x2f0] sm:$0xff]
  %v1351 = vld [vmem:[%s3 + $0x2f8] sm:$0xff]
  %v1352 = vld [vmem:[%s3 + $0x300] sm:$0xff]
  %v1353 = vld [vmem:[%s3 + $0x308] sm:$0xff]
  %v1354 = vld [vmem:[%s3 + $0x310] sm:$0xff]
  %v1355 = vld [vmem:[%s3 + $0x318] sm:$0xff]
  %v1356 = vld [vmem:[%s3 + $0x320] sm:$0xff]
  %v1357 = vld [vmem:[%s3 + $0x328] sm:$0xff]
  %v1358 = vld [vmem:[%s3 + $0x330] sm:$0xff]
  %v1359 = vld [vmem:[%s3 + $0x338] sm:$0xff]
  %v1360 = vld [vmem:[%s3 + $0x340] sm:$0xff]
  %v1361 = vld [vmem:[%s3 + $0x348] sm:$0xff]
  %v1362 = vld [vmem:[%s3 + $0x350] sm:$0xff]
  %v1363 = vld [vmem:[%s3 + $0x358] sm:$0xff]
  %v1364 = vld [vmem:[%s3 + $0x360] sm:$0xff]
  %v1365 = vld [vmem:[%s3 + $0x368] sm:$0xff]
  %v1366 = vld [vmem:[%s3 + $0x370] sm:$0xff]
  %v1367 = vld [vmem:[%s3 + $0x378] sm:$0x33]
  %v1480 = vunpack.c.l.b16 %v1256
  %v1481 = vunpack.c.h.b16 %v1256
  %v1482 = vunpack.c.l.b16 %v1257
  %v1483 = vunpack.c.h.b16 %v1257
  %v1484 = vunpack.c.l.b16 %v1258
  %v1485 = vunpack.c.h.b16 %v1258
  %v1486 = vunpack.c.l.b16 %v1259
  %v1487 = vunpack.c.h.b16 %v1259
  %v1488 = vunpack.c.l.b16 %v1260
  %v1489 = vunpack.c.h.b16 %v1260
  %v1490 = vunpack.c.l.b16 %v1261
  %v1491 = vunpack.c.h.b16 %v1261
  %v1492 = vunpack.c.l.b16 %v1262
  %v1493 = vunpack.c.h.b16 %v1262
  %v1494 = vunpack.c.l.b16 %v1263
  %v1495 = vunpack.c.h.b16 %v1263
  %v1496 = vunpack.c.l.b16 %v1264
  %v1497 = vunpack.c.h.b16 %v1264
  %v1498 = vunpack.c.l.b16 %v1265
  %v1499 = vunpack.c.h.b16 %v1265
  %v1500 = vunpack.c.l.b16 %v1266
  %v1501 = vunpack.c.h.b16 %v1266
  %v1502 = vunpack.c.l.b16 %v1267
  %v1503 = vunpack.c.h.b16 %v1267
  %v1504 = vunpack.c.l.b16 %v1268
  %v1505 = vunpack.c.h.b16 %v1268
  %v1506 = vunpack.c.l.b16 %v1269
  %v1507 = vunpack.c.h.b16 %v1269
  %v1508 = vunpack.c.l.b16 %v1270
  %v1509 = vunpack.c.h.b16 %v1270
  %v1510 = vunpack.c.l.b16 %v1271
  %v1511 = vunpack.c.h.b16 %v1271
  %v1512 = vunpack.c.l.b16 %v1272
  %v1513 = vunpack.c.h.b16 %v1272
  %v1514 = vunpack.c.l.b16 %v1273
  %v1515 = vunpack.c.h.b16 %v1273
  %v1516 = vunpack.c.l.b16 %v1274
  %v1517 = vunpack.c.h.b16 %v1274
  %v1518 = vunpack.c.l.b16 %v1275
  %v1519 = vunpack.c.h.b16 %v1275
  %v1520 = vunpack.c.l.b16 %v1276
  %v1521 = vunpack.c.h.b16 %v1276
  %v1522 = vunpack.c.l.b16 %v1277
  %v1523 = vunpack.c.h.b16 %v1277
  %v1524 = vunpack.c.l.b16 %v1278
  %v1525 = vunpack.c.h.b16 %v1278
  %v1526 = vunpack.c.l.b16 %v1279
  %v1527 = vunpack.c.h.b16 %v1279
  %v1528 = vunpack.c.l.b16 %v1280
  %v1529 = vunpack.c.h.b16 %v1280
  %v1530 = vunpack.c.l.b16 %v1281
  %v1531 = vunpack.c.h.b16 %v1281
  %v1532 = vunpack.c.l.b16 %v1282
  %v1533 = vunpack.c.h.b16 %v1282
  %v1534 = vunpack.c.l.b16 %v1283
  %v1535 = vunpack.c.h.b16 %v1283
  %v1536 = vunpack.c.l.b16 %v1284
  %v1537 = vunpack.c.h.b16 %v1284
  %v1538 = vunpack.c.l.b16 %v1285
  %v1539 = vunpack.c.h.b16 %v1285
  %v1540 = vunpack.c.l.b16 %v1286
  %v1541 = vunpack.c.h.b16 %v1286
  %v1542 = vunpack.c.l.b16 %v1287
  %v1543 = vunpack.c.h.b16 %v1287
  %v1544 = vunpack.c.l.b16 %v1288
  %v1545 = vunpack.c.h.b16 %v1288
  %v1546 = vunpack.c.l.b16 %v1289
  %v1547 = vunpack.c.h.b16 %v1289
  %v1548 = vunpack.c.l.b16 %v1290
  %v1549 = vunpack.c.h.b16 %v1290
  %v1550 = vunpack.c.l.b16 %v1291
  %v1551 = vunpack.c.h.b16 %v1291
  %v1552 = vunpack.c.l.b16 %v1292
  %v1553 = vunpack.c.h.b16 %v1292
  %v1554 = vunpack.c.l.b16 %v1293
  %v1555 = vunpack.c.h.b16 %v1293
  %v1556 = vunpack.c.l.b16 %v1294
  %v1557 = vunpack.c.h.b16 %v1294
  %v1558 = vunpack.c.l.b16 %v1295
  %v1559 = vunpack.c.h.b16 %v1295
  %v1560 = vunpack.c.l.b16 %v1296
  %v1561 = vunpack.c.h.b16 %v1296
  %v1562 = vunpack.c.l.b16 %v1297
  %v1563 = vunpack.c.h.b16 %v1297
  %v1564 = vunpack.c.l.b16 %v1298
  %v1565 = vunpack.c.h.b16 %v1298
  %v1566 = vunpack.c.l.b16 %v1299
  %v1567 = vunpack.c.h.b16 %v1299
  %v1568 = vunpack.c.l.b16 %v1300
  %v1569 = vunpack.c.h.b16 %v1300
  %v1570 = vunpack.c.l.b16 %v1301
  %v1571 = vunpack.c.h.b16 %v1301
  %v1572 = vunpack.c.l.b16 %v1302
  %v1573 = vunpack.c.h.b16 %v1302
  %v1574 = vunpack.c.l.b16 %v1303
  %v1575 = vunpack.c.h.b16 %v1303
  %v1576 = vunpack.c.l.b16 %v1304
  %v1577 = vunpack.c.h.b16 %v1304
  %v1578 = vunpack.c.l.b16 %v1305
  %v1579 = vunpack.c.h.b16 %v1305
  %v1580 = vunpack.c.l.b16 %v1306
  %v1581 = vunpack.c.h.b16 %v1306
  %v1582 = vunpack.c.l.b16 %v1307
  %v1583 = vunpack.c.h.b16 %v1307
  %v1584 = vunpack.c.l.b16 %v1308
  %v1585 = vunpack.c.h.b16 %v1308
  %v1586 = vunpack.c.l.b16 %v1309
  %v1587 = vunpack.c.h.b16 %v1309
  %v1588 = vunpack.c.l.b16 %v1310
  %v1589 = vunpack.c.h.b16 %v1310
  %v1590 = vunpack.c.l.b16 %v1311
  %v1591 = vunpack.c.h.b16 %v1311
  %v1592 = vunpack.c.l.b16 %v1312
  %v1593 = vunpack.c.h.b16 %v1312
  %v1594 = vunpack.c.l.b16 %v1313
  %v1595 = vunpack.c.h.b16 %v1313
  %v1596 = vunpack.c.l.b16 %v1314
  %v1597 = vunpack.c.h.b16 %v1314
  %v1598 = vunpack.c.l.b16 %v1315
  %v1599 = vunpack.c.h.b16 %v1315
  %v1600 = vunpack.c.l.b16 %v1316
  %v1601 = vunpack.c.h.b16 %v1316
  %v1602 = vunpack.c.l.b16 %v1317
  %v1603 = vunpack.c.h.b16 %v1317
  %v1604 = vunpack.c.l.b16 %v1318
  %v1605 = vunpack.c.h.b16 %v1318
  %v1606 = vunpack.c.l.b16 %v1319
  %v1607 = vunpack.c.h.b16 %v1319
  %v1608 = vunpack.c.l.b16 %v1320
  %v1609 = vunpack.c.h.b16 %v1320
  %v1610 = vunpack.c.l.b16 %v1321
  %v1611 = vunpack.c.h.b16 %v1321
  %v1612 = vunpack.c.l.b16 %v1322
  %v1613 = vunpack.c.h.b16 %v1322
  %v1614 = vunpack.c.l.b16 %v1323
  %v1615 = vunpack.c.h.b16 %v1323
  %v1616 = vunpack.c.l.b16 %v1324
  %v1617 = vunpack.c.h.b16 %v1324
  %v1618 = vunpack.c.l.b16 %v1325
  %v1619 = vunpack.c.h.b16 %v1325
  %v1620 = vunpack.c.l.b16 %v1326
  %v1621 = vunpack.c.h.b16 %v1326
  %v1622 = vunpack.c.l.b16 %v1327
  %v1623 = vunpack.c.h.b16 %v1327
  %v1624 = vunpack.c.l.b16 %v1328
  %v1625 = vunpack.c.h.b16 %v1328
  %v1626 = vunpack.c.l.b16 %v1329
  %v1627 = vunpack.c.h.b16 %v1329
  %v1628 = vunpack.c.l.b16 %v1330
  %v1629 = vunpack.c.h.b16 %v1330
  %v1630 = vunpack.c.l.b16 %v1331
  %v1631 = vunpack.c.h.b16 %v1331
  %v1632 = vunpack.c.l.b16 %v1332
  %v1633 = vunpack.c.h.b16 %v1332
  %v1634 = vunpack.c.l.b16 %v1333
  %v1635 = vunpack.c.h.b16 %v1333
  %v1636 = vunpack.c.l.b16 %v1334
  %v1637 = vunpack.c.h.b16 %v1334
  %v1638 = vunpack.c.l.b16 %v1335
  %v1639 = vunpack.c.h.b16 %v1335
  %v1640 = vunpack.c.l.b16 %v1336
  %v1641 = vunpack.c.h.b16 %v1336
  %v1642 = vunpack.c.l.b16 %v1337
  %v1643 = vunpack.c.h.b16 %v1337
  %v1644 = vunpack.c.l.b16 %v1338
  %v1645 = vunpack.c.h.b16 %v1338
  %v1646 = vunpack.c.l.b16 %v1339
  %v1647 = vunpack.c.h.b16 %v1339
  %v1648 = vunpack.c.l.b16 %v1340
  %v1649 = vunpack.c.h.b16 %v1340
  %v1650 = vunpack.c.l.b16 %v1341
  %v1651 = vunpack.c.h.b16 %v1341
  %v1652 = vunpack.c.l.b16 %v1342
  %v1653 = vunpack.c.h.b16 %v1342
  %v1654 = vunpack.c.l.b16 %v1343
  %v1655 = vunpack.c.h.b16 %v1343
  %v1656 = vunpack.c.l.b16 %v1344
  %v1657 = vunpack.c.h.b16 %v1344
  %v1658 = vunpack.c.l.b16 %v1345
  %v1659 = vunpack.c.h.b16 %v1345
  %v1660 = vunpack.c.l.b16 %v1346
  %v1661 = vunpack.c.h.b16 %v1346
  %v1662 = vunpack.c.l.b16 %v1347
  %v1663 = vunpack.c.h.b16 %v1347
  %v1664 = vunpack.c.l.b16 %v1348
  %v1665 = vunpack.c.h.b16 %v1348
  %v1666 = vunpack.c.l.b16 %v1349
  %v1667 = vunpack.c.h.b16 %v1349
  %v1668 = vunpack.c.l.b16 %v1350
  %v1669 = vunpack.c.h.b16 %v1350
  %v1670 = vunpack.c.l.b16 %v1351
  %v1671 = vunpack.c.h.b16 %v1351
  %v1672 = vunpack.c.l.b16 %v1352
  %v1673 = vunpack.c.h.b16 %v1352
  %v1674 = vunpack.c.l.b16 %v1353
  %v1675 = vunpack.c.h.b16 %v1353
  %v1676 = vunpack.c.l.b16 %v1354
  %v1677 = vunpack.c.h.b16 %v1354
  %v1678 = vunpack.c.l.b16 %v1355
  %v1679 = vunpack.c.h.b16 %v1355
  %v1680 = vunpack.c.l.b16 %v1356
  %v1681 = vunpack.c.h.b16 %v1356
  %v1682 = vunpack.c.l.b16 %v1357
  %v1683 = vunpack.c.h.b16 %v1357
  %v1684 = vunpack.c.l.b16 %v1358
  %v1685 = vunpack.c.h.b16 %v1358
  %v1686 = vunpack.c.l.b16 %v1359
  %v1687 = vunpack.c.h.b16 %v1359
  %v1688 = vunpack.c.l.b16 %v1360
  %v1689 = vunpack.c.h.b16 %v1360
  %v1690 = vunpack.c.l.b16 %v1361
  %v1691 = vunpack.c.h.b16 %v1361
  %v1692 = vunpack.c.l.b16 %v1362
  %v1693 = vunpack.c.h.b16 %v1362
  %v1694 = vunpack.c.l.b16 %v1363
  %v1695 = vunpack.c.h.b16 %v1363
  %v1696 = vunpack.c.l.b16 %v1364
  %v1697 = vunpack.c.h.b16 %v1364
  %v1698 = vunpack.c.l.b16 %v1365
  %v1699 = vunpack.c.h.b16 %v1365
  %v1700 = vunpack.c.l.b16 %v1366
  %v1701 = vunpack.c.h.b16 %v1366
  %v1702 = vunpack.c.l.b16 %v1367
  %v1703 = vunpack.c.h.b16 %v1367
  %v1704 = vpack.c.b16 %v1482, %v1480
  %v1705 = vpack.c.b16 %v1483, %v1481
  %v1706 = vpack.c.b16 %v1486, %v1484
  %v1707 = vpack.c.b16 %v1487, %v1485
  %v1708 = vpack.c.b16 %v1490, %v1488
  %v1709 = vpack.c.b16 %v1491, %v1489
  %v1710 = vpack.c.b16 %v1494, %v1492
  %v1711 = vpack.c.b16 %v1495, %v1493
  %v1712 = vpack.c.b16 %v1498, %v1496
  %v1713 = vpack.c.b16 %v1499, %v1497
  %v1714 = vpack.c.b16 %v1502, %v1500
  %v1715 = vpack.c.b16 %v1503, %v1501
  %v1716 = vpack.c.b16 %v1506, %v1504
  %v1717 = vpack.c.b16 %v1507, %v1505
  %v1718 = vpack.c.b16 %v1510, %v1508
  %v1719 = vpack.c.b16 %v1511, %v1509
  %v1720 = vpack.c.b16 %v1514, %v1512
  %v1721 = vpack.c.b16 %v1515, %v1513
  %v1722 = vpack.c.b16 %v1518, %v1516
  %v1723 = vpack.c.b16 %v1519, %v1517
  %v1724 = vpack.c.b16 %v1522, %v1520
  %v1725 = vpack.c.b16 %v1523, %v1521
  %v1726 = vpack.c.b16 %v1526, %v1524
  %v1727 = vpack.c.b16 %v1527, %v1525
  %v1728 = vpack.c.b16 %v1530, %v1528
  %v1729 = vpack.c.b16 %v1531, %v1529
  %v1730 = vpack.c.b16 %v1534, %v1532
  %v1731 = vpack.c.b16 %v1535, %v1533
  %v1732 = vpack.c.b16 %v1538, %v1536
  %v1733 = vpack.c.b16 %v1539, %v1537
  %v1734 = vpack.c.b16 %v1542, %v1540
  %v1735 = vpack.c.b16 %v1543, %v1541
  %v1736 = vpack.c.b16 %v1546, %v1544
  %v1737 = vpack.c.b16 %v1547, %v1545
  %v1738 = vpack.c.b16 %v1550, %v1548
  %v1739 = vpack.c.b16 %v1551, %v1549
  %v1740 = vpack.c.b16 %v1554, %v1552
  %v1741 = vpack.c.b16 %v1555, %v1553
  %v1742 = vpack.c.b16 %v1558, %v1556
  %v1743 = vpack.c.b16 %v1559, %v1557
  %v1744 = vpack.c.b16 %v1562, %v1560
  %v1745 = vpack.c.b16 %v1563, %v1561
  %v1746 = vpack.c.b16 %v1566, %v1564
  %v1747 = vpack.c.b16 %v1567, %v1565
  %v1748 = vpack.c.b16 %v1570, %v1568
  %v1749 = vpack.c.b16 %v1571, %v1569
  %v1750 = vpack.c.b16 %v1574, %v1572
  %v1751 = vpack.c.b16 %v1575, %v1573
  %v1752 = vpack.c.b16 %v1578, %v1576
  %v1753 = vpack.c.b16 %v1579, %v1577
  %v1754 = vpack.c.b16 %v1582, %v1580
  %v1755 = vpack.c.b16 %v1583, %v1581
  %v1756 = vpack.c.b16 %v1586, %v1584
  %v1757 = vpack.c.b16 %v1587, %v1585
  %v1758 = vpack.c.b16 %v1590, %v1588
  %v1759 = vpack.c.b16 %v1591, %v1589
  %v1760 = vpack.c.b16 %v1594, %v1592
  %v1761 = vpack.c.b16 %v1595, %v1593
  %v1762 = vpack.c.b16 %v1598, %v1596
  %v1763 = vpack.c.b16 %v1599, %v1597
  %v1764 = vpack.c.b16 %v1602, %v1600
  %v1765 = vpack.c.b16 %v1603, %v1601
  %v1766 = vpack.c.b16 %v1606, %v1604
  %v1767 = vpack.c.b16 %v1607, %v1605
  %v1768 = vpack.c.b16 %v1610, %v1608
  %v1769 = vpack.c.b16 %v1611, %v1609
  %v1770 = vpack.c.b16 %v1614, %v1612
  %v1771 = vpack.c.b16 %v1615, %v1613
  %v1772 = vpack.c.b16 %v1618, %v1616
  %v1773 = vpack.c.b16 %v1619, %v1617
  %v1774 = vpack.c.b16 %v1622, %v1620
  %v1775 = vpack.c.b16 %v1623, %v1621
  %v1776 = vpack.c.b16 %v1626, %v1624
  %v1777 = vpack.c.b16 %v1627, %v1625
  %v1778 = vpack.c.b16 %v1630, %v1628
  %v1779 = vpack.c.b16 %v1631, %v1629
  %v1780 = vpack.c.b16 %v1634, %v1632
  %v1781 = vpack.c.b16 %v1635, %v1633
  %v1782 = vpack.c.b16 %v1638, %v1636
  %v1783 = vpack.c.b16 %v1639, %v1637
  %v1784 = vpack.c.b16 %v1642, %v1640
  %v1785 = vpack.c.b16 %v1643, %v1641
  %v1786 = vpack.c.b16 %v1646, %v1644
  %v1787 = vpack.c.b16 %v1647, %v1645
  %v1788 = vpack.c.b16 %v1650, %v1648
  %v1789 = vpack.c.b16 %v1651, %v1649
  %v1790 = vpack.c.b16 %v1654, %v1652
  %v1791 = vpack.c.b16 %v1655, %v1653
  %v1792 = vpack.c.b16 %v1658, %v1656
  %v1793 = vpack.c.b16 %v1659, %v1657
  %v1794 = vpack.c.b16 %v1662, %v1660
  %v1795 = vpack.c.b16 %v1663, %v1661
  %v1796 = vpack.c.b16 %v1666, %v1664
  %v1797 = vpack.c.b16 %v1667, %v1665
  %v1798 = vpack.c.b16 %v1670, %v1668
  %v1799 = vpack.c.b16 %v1671, %v1669
  %v1800 = vpack.c.b16 %v1674, %v1672
  %v1801 = vpack.c.b16 %v1675, %v1673
  %v1802 = vpack.c.b16 %v1678, %v1676
  %v1803 = vpack.c.b16 %v1679, %v1677
  %v1804 = vpack.c.b16 %v1682, %v1680
  %v1805 = vpack.c.b16 %v1683, %v1681
  %v1806 = vpack.c.b16 %v1686, %v1684
  %v1807 = vpack.c.b16 %v1687, %v1685
  %v1808 = vpack.c.b16 %v1690, %v1688
  %v1809 = vpack.c.b16 %v1691, %v1689
  %v1810 = vpack.c.b16 %v1694, %v1692
  %v1811 = vpack.c.b16 %v1695, %v1693
  %v1812 = vpack.c.b16 %v1698, %v1696
  %v1813 = vpack.c.b16 %v1699, %v1697
  %v1814 = vpack.c.b16 %v1702, %v1700
  %v1815 = vpack.c.b16 %v1703, %v1701
  %vm1926 = vcmask 1014784
  %v1928 = vsel %vm1926, %v1220, 0
  %v1931 = vsel %vm1926, %v1227, 0
  %v1934 = vsel %vm1926, %v1234, 0
  %v1937 = vsel %vm1926, %v1241, 0
  %v1940 = vsel %vm1926, %v1248, 0
  %v1943 = vsel %vm1926, %v1255, 0
  %vm1945 = vcmask 1045504
  %v1947 = vsel %vm1945, %v1814, 0
  %v1950 = vsel %vm1945, %v1815, 0
  %1952 = vmatprep.subr.bf16.mxu0 %v1705
  %1953 = vmatpush1.bf16.msra.mxu0 %v1704
  %1954 = vmatprep.subr.bf16.mxu0 %v1707
  %1955 = vmatpush1.bf16.msra.mxu0 %v1706
  %1956 = vmatprep.subr.bf16.mxu0 %v1709
  %1957 = vmatpush1.bf16.msra.mxu0 %v1708
  %1958 = vmatprep.subr.bf16.mxu0 %v1711
  %1959 = vmatpush1.bf16.msra.mxu0 %v1710
  %1960 = vmatprep.subr.bf16.mxu0 %v1713
  %1961 = vmatpush1.bf16.msra.mxu0 %v1712
  %1962 = vmatprep.subr.bf16.mxu0 %v1715
  %1963 = vmatpush1.bf16.msra.mxu0 %v1714
  %1964 = vmatprep.subr.bf16.mxu0 %v1717
  %1965 = vmatpush1.bf16.msra.mxu0 %v1716
  %1966 = vmatprep.subr.bf16.mxu0 %v1719
  %1967 = vmatpush1.bf16.msra.mxu0 %v1718
  %1968 = vmatprep.subr.bf16.mxu0 %v1721
  %1969 = vmatpush1.bf16.msra.mxu0 %v1720
  %1970 = vmatprep.subr.bf16.mxu0 %v1723
  %1971 = vmatpush1.bf16.msra.mxu0 %v1722
  %1972 = vmatprep.subr.bf16.mxu0 %v1725
  %1973 = vmatpush1.bf16.msra.mxu0 %v1724
  %1974 = vmatprep.subr.bf16.mxu0 %v1727
  %1975 = vmatpush1.bf16.msra.mxu0 %v1726
  %1976 = vmatprep.subr.bf16.mxu0 %v1729
  %1977 = vmatpush1.bf16.msra.mxu0 %v1728
  %1978 = vmatprep.subr.bf16.mxu0 %v1731
  %1979 = vmatpush1.bf16.msra.mxu0 %v1730
  %1980 = vmatprep.subr.bf16.mxu0 %v1733
  %1981 = vmatpush1.bf16.msra.mxu0 %v1732
  %1982 = vmatprep.subr.bf16.mxu0 %v1735
  %1983 = vmatpush1.bf16.msra.mxu0 %v1734
  %1984 = vmatprep.mubr.bf16.mxu0 %v1215
  %1985 = vmatmul.mubr.bf16.gmra.mrb[0].mxu0 %v1214
  %v1986 = vpop.f32.mrb[0].mxu0
  %v1987 = vadd.f32 0.0, %v1986
  %v1988 = vpop.f32.mrb[0].mxu0
  %v1989 = vadd.f32 0.0, %v1988
  %v1990 = vpop.f32.mrb[0].mxu0
  %v1991 = vadd.f32 0.0, %v1990
  %v1992 = vpop.f32.mrb[0].mxu0
  %v1993 = vadd.f32 0.0, %v1992
  %1994 = vmatprep.mubr.bf16.mxu0 %v1222
  %1995 = vmatmul.mubr.bf16.gmra.mrb[0].mxu0 %v1221
  %v1996 = vpop.f32.mrb[0].mxu0
  %v1997 = vadd.f32 0.0, %v1996
  %v1998 = vpop.f32.mrb[0].mxu0
  %v1999 = vadd.f32 0.0, %v1998
  %v2000 = vpop.f32.mrb[0].mxu0
  %v2001 = vadd.f32 0.0, %v2000
  %v2002 = vpop.f32.mrb[0].mxu0
  %v2003 = vadd.f32 0.0, %v2002
  %2004 = vmatprep.mubr.bf16.mxu0 %v1229
  %2005 = vmatmul.mubr.bf16.gmra.mrb[0].mxu0 %v1228
  %v2006 = vpop.f32.mrb[0].mxu0
  %v2007 = vadd.f32 0.0, %v2006
  %v2008 = vpop.f32.mrb[0].mxu0
  %v2009 = vadd.f32 0.0, %v2008
  %v2010 = vpop.f32.mrb[0].mxu0
  %v2011 = vadd.f32 0.0, %v2010
  %v2012 = vpop.f32.mrb[0].mxu0
  %v2013 = vadd.f32 0.0, %v2012
  %2014 = vmatprep.mubr.bf16.mxu0 %v1236
  %2015 = vmatmul.mubr.bf16.gmra.mrb[0].mxu0 %v1235
  %v2016 = vpop.f32.mrb[0].mxu0
  %v2017 = vadd.f32 0.0, %v2016
  %v2018 = vpop.f32.mrb[0].mxu0
  %v2019 = vadd.f32 0.0, %v2018
  %v2020 = vpop.f32.mrb[0].mxu0
  %v2021 = vadd.f32 0.0, %v2020
  %v2022 = vpop.f32.mrb[0].mxu0
  %v2023 = vadd.f32 0.0, %v2022
  %2024 = vmatprep.mubr.bf16.mxu0 %v1243
  %2025 = vmatmul.mubr.bf16.gmra.mrb[0].mxu0 %v1242
  %v2026 = vpop.f32.mrb[0].mxu0
  %v2027 = vadd.f32 0.0, %v2026
  %v2028 = vpop.f32.mrb[0].mxu0
  %v2029 = vadd.f32 0.0, %v2028
  %v2030 = vpop.f32.mrb[0].mxu0
  %v2031 = vadd.f32 0.0, %v2030
  %v2032 = vpop.f32.mrb[0].mxu0
  %v2033 = vadd.f32 0.0, %v2032
  %2034 = vmatprep.mubr.bf16.mxu0 %v1250
  %2035 = vmatmul.mubr.bf16.gmra.mrb[0].mxu0 %v1249
  %v2036 = vpop.f32.mrb[0].mxu0
  %v2037 = vadd.f32 0.0, %v2036
  %v2038 = vpop.f32.mrb[0].mxu0
  %v2039 = vadd.f32 0.0, %v2038
  %v2040 = vpop.f32.mrb[0].mxu0
  %v2041 = vadd.f32 0.0, %v2040
  %v2042 = vpop.f32.mrb[0].mxu0
  %v2043 = vadd.f32 0.0, %v2042
  %2044 = vdwg.mxu0
  %2045 = vmatprep.subr.bf16.mxu0 %v1737
  %2046 = vmatpush1.bf16.msra.mxu0 %v1736
  %2047 = vmatprep.subr.bf16.mxu0 %v1739
  %2048 = vmatpush1.bf16.msra.mxu0 %v1738
  %2049 = vmatprep.subr.bf16.mxu0 %v1741
  %2050 = vmatpush1.bf16.msra.mxu0 %v1740
  %2051 = vmatprep.subr.bf16.mxu0 %v1743
  %2052 = vmatpush1.bf16.msra.mxu0 %v1742
  %2053 = vmatprep.subr.bf16.mxu0 %v1745
  %2054 = vmatpush1.bf16.msra.mxu0 %v1744
  %2055 = vmatprep.subr.bf16.mxu0 %v1747
  %2056 = vmatpush1.bf16.msra.mxu0 %v1746
  %2057 = vmatprep.subr.bf16.mxu0 %v1749
  %2058 = vmatpush1.bf16.msra.mxu0 %v1748
  %2059 = vmatprep.subr.bf16.mxu0 %v1751
  %2060 = vmatpush1.bf16.msra.mxu0 %v1750
  %2061 = vmatprep.subr.bf16.mxu0 %v1753
  %2062 = vmatpush1.bf16.msra.mxu0 %v1752
  %2063 = vmatprep.subr.bf16.mxu0 %v1755
  %2064 = vmatpush1.bf16.msra.mxu0 %v1754
  %2065 = vmatprep.subr.bf16.mxu0 %v1757
  %2066 = vmatpush1.bf16.msra.mxu0 %v1756
  %2067 = vmatprep.subr.bf16.mxu0 %v1759
  %2068 = vmatpush1.bf16.msra.mxu0 %v1758
  %2069 = vmatprep.subr.bf16.mxu0 %v1761
  %2070 = vmatpush1.bf16.msra.mxu0 %v1760
  %2071 = vmatprep.subr.bf16.mxu0 %v1763
  %2072 = vmatpush1.bf16.msra.mxu0 %v1762
  %2073 = vmatprep.subr.bf16.mxu0 %v1765
  %2074 = vmatpush1.bf16.msra.mxu0 %v1764
  %2075 = vmatprep.subr.bf16.mxu0 %v1767
  %2076 = vmatpush1.bf16.msra.mxu0 %v1766
  %2077 = vmatprep.mubr.bf16.mxu0 %v1217
  %2078 = vmatmul.mubr.bf16.gmra.mrb[0].mxu0 %v1216
  %v2079 = vpop.f32.mrb[0].mxu0
  %v2080 = vadd.f32 %v1987, %v2079
  %v2081 = vpop.f32.mrb[0].mxu0
  %v2082 = vadd.f32 %v1989, %v2081
  %v2083 = vpop.f32.mrb[0].mxu0
  %v2084 = vadd.f32 %v1991, %v2083
  %v2085 = vpop.f32.mrb[0].mxu0
  %v2086 = vadd.f32 %v1993, %v2085
  %2087 = vmatprep.mubr.bf16.mxu0 %v1224
  %2088 = vmatmul.mubr.bf16.gmra.mrb[0].mxu0 %v1223
  %v2089 = vpop.f32.mrb[0].mxu0
  %v2090 = vadd.f32 %v1997, %v2089
  %v2091 = vpop.f32.mrb[0].mxu0
  %v2092 = vadd.f32 %v1999, %v2091
  %v2093 = vpop.f32.mrb[0].mxu0
  %v2094 = vadd.f32 %v2001, %v2093
  %v2095 = vpop.f32.mrb[0].mxu0
  %v2096 = vadd.f32 %v2003, %v2095
  %2097 = vmatprep.mubr.bf16.mxu0 %v1231
  %2098 = vmatmul.mubr.bf16.gmra.mrb[0].mxu0 %v1230
  %v2099 = vpop.f32.mrb[0].mxu0
  %v2100 = vadd.f32 %v2007, %v2099
  %v2101 = vpop.f32.mrb[0].mxu0
  %v2102 = vadd.f32 %v2009, %v2101
  %v2103 = vpop.f32.mrb[0].mxu0
  %v2104 = vadd.f32 %v2011, %v2103
  %v2105 = vpop.f32.mrb[0].mxu0
  %v2106 = vadd.f32 %v2013, %v2105
  %2107 = vmatprep.mubr.bf16.mxu0 %v1238
  %2108 = vmatmul.mubr.bf16.gmra.mrb[0].mxu0 %v1237
  %v2109 = vpop.f32.mrb[0].mxu0
  %v2110 = vadd.f32 %v2017, %v2109
  %v2111 = vpop.f32.mrb[0].mxu0
  %v2112 = vadd.f32 %v2019, %v2111
  %v2113 = vpop.f32.mrb[0].mxu0
  %v2114 = vadd.f32 %v2021, %v2113
  %v2115 = vpop.f32.mrb[0].mxu0
  %v2116 = vadd.f32 %v2023, %v2115
  %2117 = vmatprep.mubr.bf16.mxu0 %v1245
  %2118 = vmatmul.mubr.bf16.gmra.mrb[0].mxu0 %v1244
  %v2119 = vpop.f32.mrb[0].mxu0
  %v2120 = vadd.f32 %v2027, %v2119
  %v2121 = vpop.f32.mrb[0].mxu0
  %v2122 = vadd.f32 %v2029, %v2121
  %v2123 = vpop.f32.mrb[0].mxu0
  %v2124 = vadd.f32 %v2031, %v2123
  %v2125 = vpop.f32.mrb[0].mxu0
  %v2126 = vadd.f32 %v2033, %v2125
  %2127 = vmatprep.mubr.bf16.mxu0 %v1252
  %2128 = vmatmul.mubr.bf16.gmra.mrb[0].mxu0 %v1251
  %v2129 = vpop.f32.mrb[0].mxu0
  %v2130 = vadd.f32 %v2037, %v2129
  %v2131 = vpop.f32.mrb[0].mxu0
  %v2132 = vadd.f32 %v2039, %v2131
  %v2133 = vpop.f32.mrb[0].mxu0
  %v2134 = vadd.f32 %v2041, %v2133
  %v2135 = vpop.f32.mrb[0].mxu0
  %v2136 = vadd.f32 %v2043, %v2135
  %2137 = vdwg.mxu0
  %2138 = vmatprep.subr.bf16.mxu0 %v1769
  %2139 = vmatpush1.bf16.msra.mxu0 %v1768
  %2140 = vmatprep.subr.bf16.mxu0 %v1771
  %2141 = vmatpush1.bf16.msra.mxu0 %v1770
  %2142 = vmatprep.subr.bf16.mxu0 %v1773
  %2143 = vmatpush1.bf16.msra.mxu0 %v1772
  %2144 = vmatprep.subr.bf16.mxu0 %v1775
  %2145 = vmatpush1.bf16.msra.mxu0 %v1774
  %2146 = vmatprep.subr.bf16.mxu0 %v1777
  %2147 = vmatpush1.bf16.msra.mxu0 %v1776
  %2148 = vmatprep.subr.bf16.mxu0 %v1779
  %2149 = vmatpush1.bf16.msra.mxu0 %v1778
  %2150 = vmatprep.subr.bf16.mxu0 %v1781
  %2151 = vmatpush1.bf16.msra.mxu0 %v1780
  %2152 = vmatprep.subr.bf16.mxu0 %v1783
  %2153 = vmatpush1.bf16.msra.mxu0 %v1782
  %2154 = vmatprep.subr.bf16.mxu0 %v1785
  %2155 = vmatpush1.bf16.msra.mxu0 %v1784
  %2156 = vmatprep.subr.bf16.mxu0 %v1787
  %2157 = vmatpush1.bf16.msra.mxu0 %v1786
  %2158 = vmatprep.subr.bf16.mxu0 %v1789
  %2159 = vmatpush1.bf16.msra.mxu0 %v1788
  %2160 = vmatprep.subr.bf16.mxu0 %v1791
  %2161 = vmatpush1.bf16.msra.mxu0 %v1790
  %2162 = vmatprep.subr.bf16.mxu0 %v1793
  %2163 = vmatpush1.bf16.msra.mxu0 %v1792
  %2164 = vmatprep.subr.bf16.mxu0 %v1795
  %2165 = vmatpush1.bf16.msra.mxu0 %v1794
  %2166 = vmatprep.subr.bf16.mxu0 %v1797
  %2167 = vmatpush1.bf16.msra.mxu0 %v1796
  %2168 = vmatprep.subr.bf16.mxu0 %v1799
  %2169 = vmatpush1.bf16.msra.mxu0 %v1798
  %2170 = vmatprep.mubr.bf16.mxu0 %v1219
  %2171 = vmatmul.mubr.bf16.gmra.mrb[0].mxu0 %v1218
  %v2172 = vpop.f32.mrb[0].mxu0
  %v2173 = vadd.f32 %v2080, %v2172
  %v2174 = vpop.f32.mrb[0].mxu0
  %v2175 = vadd.f32 %v2082, %v2174
  %v2176 = vpop.f32.mrb[0].mxu0
  %v2177 = vadd.f32 %v2084, %v2176
  %v2178 = vpop.f32.mrb[0].mxu0
  %v2179 = vadd.f32 %v2086, %v2178
  %2180 = vmatprep.mubr.bf16.mxu0 %v1226
  %2181 = vmatmul.mubr.bf16.gmra.mrb[0].mxu0 %v1225
  %v2182 = vpop.f32.mrb[0].mxu0
  %v2183 = vadd.f32 %v2090, %v2182
  %v2184 = vpop.f32.mrb[0].mxu0
  %v2185 = vadd.f32 %v2092, %v2184
  %v2186 = vpop.f32.mrb[0].mxu0
  %v2187 = vadd.f32 %v2094, %v2186
  %v2188 = vpop.f32.mrb[0].mxu0
  %v2189 = vadd.f32 %v2096, %v2188
  %2190 = vmatprep.mubr.bf16.mxu0 %v1233
  %2191 = vmatmul.mubr.bf16.gmra.mrb[0].mxu0 %v1232
  %v2192 = vpop.f32.mrb[0].mxu0
  %v2193 = vadd.f32 %v2100, %v2192
  %v2194 = vpop.f32.mrb[0].mxu0
  %v2195 = vadd.f32 %v2102, %v2194
  %v2196 = vpop.f32.mrb[0].mxu0
  %v2197 = vadd.f32 %v2104, %v2196
  %v2198 = vpop.f32.mrb[0].mxu0
  %v2199 = vadd.f32 %v2106, %v2198
  %2200 = vmatprep.mubr.bf16.mxu0 %v1240
  %2201 = vmatmul.mubr.bf16.gmra.mrb[0].mxu0 %v1239
  %v2202 = vpop.f32.mrb[0].mxu0
  %v2203 = vadd.f32 %v2110, %v2202
  %v2204 = vpop.f32.mrb[0].mxu0
  %v2205 = vadd.f32 %v2112, %v2204
  %v2206 = vpop.f32.mrb[0].mxu0
  %v2207 = vadd.f32 %v2114, %v2206
  %v2208 = vpop.f32.mrb[0].mxu0
  %v2209 = vadd.f32 %v2116, %v2208
  %2210 = vmatprep.mubr.bf16.mxu0 %v1247
  %2211 = vmatmul.mubr.bf16.gmra.mrb[0].mxu0 %v1246
  %v2212 = vpop.f32.mrb[0].mxu0
  %v2213 = vadd.f32 %v2120, %v2212
  %v2214 = vpop.f32.mrb[0].mxu0
  %v2215 = vadd.f32 %v2122, %v2214
  %v2216 = vpop.f32.mrb[0].mxu0
  %v2217 = vadd.f32 %v2124, %v2216
  %v2218 = vpop.f32.mrb[0].mxu0
  %v2219 = vadd.f32 %v2126, %v2218
  %2220 = vmatprep.mubr.bf16.mxu0 %v1254
  %2221 = vmatmul.mubr.bf16.gmra.mrb[0].mxu0 %v1253
  %v2222 = vpop.f32.mrb[0].mxu0
  %v2223 = vadd.f32 %v2130, %v2222
  %v2224 = vpop.f32.mrb[0].mxu0
  %v2225 = vadd.f32 %v2132, %v2224
  %v2226 = vpop.f32.mrb[0].mxu0
  %v2227 = vadd.f32 %v2134, %v2226
  %v2228 = vpop.f32.mrb[0].mxu0
  %v2229 = vadd.f32 %v2136, %v2228
  %2230 = vdwg.mxu0
  %2231 = vmatprep.subr.bf16.mxu0 %v1801
  %2232 = vmatpush1.bf16.msra.mxu0 %v1800
  %2233 = vmatprep.subr.bf16.mxu0 %v1803
  %2234 = vmatpush1.bf16.msra.mxu0 %v1802
  %2235 = vmatprep.subr.bf16.mxu0 %v1805
  %2236 = vmatpush1.bf16.msra.mxu0 %v1804
  %2237 = vmatprep.subr.bf16.mxu0 %v1807
  %2238 = vmatpush1.bf16.msra.mxu0 %v1806
  %2239 = vmatprep.subr.bf16.mxu0 %v1809
  %2240 = vmatpush1.bf16.msra.mxu0 %v1808
  %2241 = vmatprep.subr.bf16.mxu0 %v1811
  %2242 = vmatpush1.bf16.msra.mxu0 %v1810
  %2243 = vmatprep.subr.bf16.mxu0 %v1813
  %2244 = vmatpush1.bf16.msra.mxu0 %v1812
  %2245 = vmatprep.subr.bf16.mxu0 %v1950
  %2246 = vmatpush1.bf16.msra.mxu0 %v1947
  %2247 = vmatprep.subr.bf16.mxu0 0
  %2248 = vmatpush1.bf16.msra.mxu0 0
  %2249 = vmatprep.subr.bf16.mxu0 0
  %2250 = vmatpush1.bf16.msra.mxu0 0
  %2251 = vmatprep.subr.bf16.mxu0 0
  %2252 = vmatpush1.bf16.msra.mxu0 0
  %2253 = vmatprep.subr.bf16.mxu0 0
  %2254 = vmatpush1.bf16.msra.mxu0 0
  %2255 = vmatprep.subr.bf16.mxu0 0
  %2256 = vmatpush1.bf16.msra.mxu0 0
  %2257 = vmatprep.subr.bf16.mxu0 0
  %2258 = vmatpush1.bf16.msra.mxu0 0
  %2259 = vmatprep.subr.bf16.mxu0 0
  %2260 = vmatpush1.bf16.msra.mxu0 0
  %2261 = vmatprep.subr.bf16.mxu0 0
  %2262 = vmatpush1.bf16.msra.mxu0 0
  %2263 = vmatprep.mubr.bf16.mxu0 0
  %2264 = vmatmul.mubr.bf16.gmra.mrb[0].mxu0 %v1928
  %v2265 = vpop.f32.mrb[0].mxu0
  %v2266 = vadd.f32 %v2173, %v2265
  %v2267 = vpop.f32.mrb[0].mxu0
  %v2268 = vadd.f32 %v2175, %v2267
  %v2269 = vpop.f32.mrb[0].mxu0
  %v2270 = vadd.f32 %v2177, %v2269
  %v2271 = vpop.f32.mrb[0].mxu0
  %v2272 = vadd.f32 %v2179, %v2271
  %2273 = vmatprep.mubr.bf16.mxu0 0
  %2274 = vmatmul.mubr.bf16.gmra.mrb[0].mxu0 %v1931
  %v2275 = vpop.f32.mrb[0].mxu0
  %v2276 = vadd.f32 %v2183, %v2275
  %v2277 = vpop.f32.mrb[0].mxu0
  %v2278 = vadd.f32 %v2185, %v2277
  %v2279 = vpop.f32.mrb[0].mxu0
  %v2280 = vadd.f32 %v2187, %v2279
  %v2281 = vpop.f32.mrb[0].mxu0
  %v2282 = vadd.f32 %v2189, %v2281
  %2283 = vmatprep.mubr.bf16.mxu0 0
  %2284 = vmatmul.mubr.bf16.gmra.mrb[0].mxu0 %v1934
  %v2285 = vpop.f32.mrb[0].mxu0
  %v2286 = vadd.f32 %v2193, %v2285
  %v2287 = vpop.f32.mrb[0].mxu0
  %v2288 = vadd.f32 %v2195, %v2287
  %v2289 = vpop.f32.mrb[0].mxu0
  %v2290 = vadd.f32 %v2197, %v2289
  %v2291 = vpop.f32.mrb[0].mxu0
  %v2292 = vadd.f32 %v2199, %v2291
  %2293 = vmatprep.mubr.bf16.mxu0 0
  %2294 = vmatmul.mubr.bf16.gmra.mrb[0].mxu0 %v1937
  %v2295 = vpop.f32.mrb[0].mxu0
  %v2296 = vadd.f32 %v2203, %v2295
  %v2297 = vpop.f32.mrb[0].mxu0
  %v2298 = vadd.f32 %v2205, %v2297
  %v2299 = vpop.f32.mrb[0].mxu0
  %v2300 = vadd.f32 %v2207, %v2299
  %v2301 = vpop.f32.mrb[0].mxu0
  %v2302 = vadd.f32 %v2209, %v2301
  %2303 = vmatprep.mubr.bf16.mxu0 0
  %2304 = vmatmul.mubr.bf16.gmra.mrb[0].mxu0 %v1940
  %v2305 = vpop.f32.mrb[0].mxu0
  %v2306 = vadd.f32 %v2213, %v2305
  %v2307 = vpop.f32.mrb[0].mxu0
  %v2308 = vadd.f32 %v2215, %v2307
  %v2309 = vpop.f32.mrb[0].mxu0
  %v2310 = vadd.f32 %v2217, %v2309
  %v2311 = vpop.f32.mrb[0].mxu0
  %v2312 = vadd.f32 %v2219, %v2311
  %2313 = vmatprep.mubr.bf16.mxu0 0
  %2314 = vmatmul.mubr.bf16.gmra.mrb[0].mxu0 %v1943
  %v2315 = vpop.f32.mrb[0].mxu0
  %v2316 = vadd.f32 %v2223, %v2315
  %v2317 = vpop.f32.mrb[0].mxu0
  %v2318 = vadd.f32 %v2225, %v2317
  %v2319 = vpop.f32.mrb[0].mxu0
  %v2320 = vadd.f32 %v2227, %v2319
  %v2321 = vpop.f32.mrb[0].mxu0
  %v2322 = vadd.f32 %v2229, %v2321
  %2323 = vdwg.mxu0
  %2348 = vrot.lane.b32.xlu0 %v2266, 127
  %v2349 = vpop.permute.xlu0 %2348
  %2350 = vrot.lane.b32.xlu0 %v2268, 127
  %v2351 = vpop.permute.xlu0 %2350
  %2352 = vrot.lane.b32.xlu0 %v2270, 127
  %v2353 = vpop.permute.xlu0 %2352
  %2354 = vrot.lane.b32.xlu0 %v2272, 127
  %v2355 = vpop.permute.xlu0 %2354
  %2356 = vrot.lane.b32.xlu0 %v2276, 127
  %v2357 = vpop.permute.xlu0 %2356
  %2358 = vrot.lane.b32.xlu0 %v2278, 127
  %v2359 = vpop.permute.xlu0 %2358
  %2360 = vrot.lane.b32.xlu0 %v2280, 127
  %v2361 = vpop.permute.xlu0 %2360
  %2362 = vrot.lane.b32.xlu0 %v2282, 127
  %v2363 = vpop.permute.xlu0 %2362
  %2364 = vrot.lane.b32.xlu0 %v2286, 127
  %v2365 = vpop.permute.xlu0 %2364
  %2366 = vrot.lane.b32.xlu0 %v2288, 127
  %v2367 = vpop.permute.xlu0 %2366
  %2368 = vrot.lane.b32.xlu0 %v2290, 127
  %v2369 = vpop.permute.xlu0 %2368
  %2370 = vrot.lane.b32.xlu0 %v2292, 127
  %v2371 = vpop.permute.xlu0 %2370
  %2372 = vrot.lane.b32.xlu0 %v2296, 127
  %v2373 = vpop.permute.xlu0 %2372
  %2374 = vrot.lane.b32.xlu0 %v2298, 127
  %v2375 = vpop.permute.xlu0 %2374
  %2376 = vrot.lane.b32.xlu0 %v2300, 127
  %v2377 = vpop.permute.xlu0 %2376
  %2378 = vrot.lane.b32.xlu0 %v2302, 127
  %v2379 = vpop.permute.xlu0 %2378
  %2380 = vrot.lane.b32.xlu0 %v2306, 127
  %v2381 = vpop.permute.xlu0 %2380
  %2382 = vrot.lane.b32.xlu0 %v2308, 127
  %v2383 = vpop.permute.xlu0 %2382
  %2384 = vrot.lane.b32.xlu0 %v2310, 127
  %v2385 = vpop.permute.xlu0 %2384
  %2386 = vrot.lane.b32.xlu0 %v2312, 127
  %v2387 = vpop.permute.xlu0 %2386
  %2388 = vrot.lane.b32.xlu0 %v2316, 127
  %v2389 = vpop.permute.xlu0 %2388
  %2390 = vrot.lane.b32.xlu0 %v2318, 127
  %v2391 = vpop.permute.xlu0 %2390
  %2392 = vrot.lane.b32.xlu0 %v2320, 127
  %v2393 = vpop.permute.xlu0 %2392
  %2394 = vrot.lane.b32.xlu0 %v2322, 127
  %v2395 = vpop.permute.xlu0 %2394
  %v2396 = vsel %vm100, %v2349, %v2351
  %v2397 = vsel %vm100, %v2353, %v2355
  %v2398 = vsel %vm100, %v2357, %v2359
  %v2399 = vsel %vm100, %v2361, %v2363
  %v2400 = vsel %vm100, %v2365, %v2367
  %v2401 = vsel %vm100, %v2369, %v2371
  %v2402 = vsel %vm100, %v2373, %v2375
  %v2403 = vsel %vm100, %v2377, %v2379
  %v2404 = vsel %vm100, %v2381, %v2383
  %v2405 = vsel %vm100, %v2385, %v2387
  %v2406 = vsel %vm100, %v2389, %v2391
  %v2407 = vsel %vm100, %v2393, %v2395
  %2432 = vrot.lane.b32.xlu0 %v2266, 126
  %v2433 = vpop.permute.xlu0 %2432
  %2434 = vrot.lane.b32.xlu0 %v2268, 126
  %v2435 = vpop.permute.xlu0 %2434
  %2436 = vrot.lane.b32.xlu0 %v2270, 126
  %v2437 = vpop.permute.xlu0 %2436
  %2438 = vrot.lane.b32.xlu0 %v2272, 126
  %v2439 = vpop.permute.xlu0 %2438
  %2440 = vrot.lane.b32.xlu0 %v2276, 126
  %v2441 = vpop.permute.xlu0 %2440
  %2442 = vrot.lane.b32.xlu0 %v2278, 126
  %v2443 = vpop.permute.xlu0 %2442
  %2444 = vrot.lane.b32.xlu0 %v2280, 126
  %v2445 = vpop.permute.xlu0 %2444
  %2446 = vrot.lane.b32.xlu0 %v2282, 126
  %v2447 = vpop.permute.xlu0 %2446
  %2448 = vrot.lane.b32.xlu0 %v2286, 126
  %v2449 = vpop.permute.xlu0 %2448
  %2450 = vrot.lane.b32.xlu0 %v2288, 126
  %v2451 = vpop.permute.xlu0 %2450
  %2452 = vrot.lane.b32.xlu0 %v2290, 126
  %v2453 = vpop.permute.xlu0 %2452
  %2454 = vrot.lane.b32.xlu0 %v2292, 126
  %v2455 = vpop.permute.xlu0 %2454
  %2456 = vrot.lane.b32.xlu0 %v2296, 126
  %v2457 = vpop.permute.xlu0 %2456
  %2458 = vrot.lane.b32.xlu0 %v2298, 126
  %v2459 = vpop.permute.xlu0 %2458
  %2460 = vrot.lane.b32.xlu0 %v2300, 126
  %v2461 = vpop.permute.xlu0 %2460
  %2462 = vrot.lane.b32.xlu0 %v2302, 126
  %v2463 = vpop.permute.xlu0 %2462
  %2464 = vrot.lane.b32.xlu0 %v2306, 126
  %v2465 = vpop.permute.xlu0 %2464
  %2466 = vrot.lane.b32.xlu0 %v2308, 126
  %v2467 = vpop.permute.xlu0 %2466
  %2468 = vrot.lane.b32.xlu0 %v2310, 126
  %v2469 = vpop.permute.xlu0 %2468
  %2470 = vrot.lane.b32.xlu0 %v2312, 126
  %v2471 = vpop.permute.xlu0 %2470
  %2472 = vrot.lane.b32.xlu0 %v2316, 126
  %v2473 = vpop.permute.xlu0 %2472
  %2474 = vrot.lane.b32.xlu0 %v2318, 126
  %v2475 = vpop.permute.xlu0 %2474
  %2476 = vrot.lane.b32.xlu0 %v2320, 126
  %v2477 = vpop.permute.xlu0 %2476
  %2478 = vrot.lane.b32.xlu0 %v2322, 126
  %v2479 = vpop.permute.xlu0 %2478
  %v2480 = vsel %vm155, %v2433, %v2435
  %v2481 = vsel %vm155, %v2437, %v2439
  %v2482 = vsel %vm155, %v2441, %v2443
  %v2483 = vsel %vm155, %v2445, %v2447
  %v2484 = vsel %vm155, %v2449, %v2451
  %v2485 = vsel %vm155, %v2453, %v2455
  %v2486 = vsel %vm155, %v2457, %v2459
  %v2487 = vsel %vm155, %v2461, %v2463
  %v2488 = vsel %vm155, %v2465, %v2467
  %v2489 = vsel %vm155, %v2469, %v2471
  %v2490 = vsel %vm155, %v2473, %v2475
  %v2491 = vsel %vm155, %v2477, %v2479
  %2516 = vrot.lane.b32.xlu0 %v2266, 112
  %v2517 = vpop.permute.xlu0 %2516
  %2518 = vrot.lane.b32.xlu0 %v2268, 112
  %v2519 = vpop.permute.xlu0 %2518
  %2520 = vrot.lane.b32.xlu0 %v2270, 112
  %v2521 = vpop.permute.xlu0 %2520
  %2522 = vrot.lane.b32.xlu0 %v2272, 112
  %v2523 = vpop.permute.xlu0 %2522
  %2524 = vrot.lane.b32.xlu0 %v2276, 112
  %v2525 = vpop.permute.xlu0 %2524
  %2526 = vrot.lane.b32.xlu0 %v2278, 112
  %v2527 = vpop.permute.xlu0 %2526
  %2528 = vrot.lane.b32.xlu0 %v2280, 112
  %v2529 = vpop.permute.xlu0 %2528
  %2530 = vrot.lane.b32.xlu0 %v2282, 112
  %v2531 = vpop.permute.xlu0 %2530
  %2532 = vrot.lane.b32.xlu0 %v2286, 112
  %v2533 = vpop.permute.xlu0 %2532
  %2534 = vrot.lane.b32.xlu0 %v2288, 112
  %v2535 = vpop.permute.xlu0 %2534
  %2536 = vrot.lane.b32.xlu0 %v2290, 112
  %v2537 = vpop.permute.xlu0 %2536
  %2538 = vrot.lane.b32.xlu0 %v2292, 112
  %v2539 = vpop.permute.xlu0 %2538
  %2540 = vrot.lane.b32.xlu0 %v2296, 112
  %v2541 = vpop.permute.xlu0 %2540
  %2542 = vrot.lane.b32.xlu0 %v2298, 112
  %v2543 = vpop.permute.xlu0 %2542
  %2544 = vrot.lane.b32.xlu0 %v2300, 112
  %v2545 = vpop.permute.xlu0 %2544
  %2546 = vrot.lane.b32.xlu0 %v2302, 112
  %v2547 = vpop.permute.xlu0 %2546
  %2548 = vrot.lane.b32.xlu0 %v2306, 112
  %v2549 = vpop.permute.xlu0 %2548
  %2550 = vrot.lane.b32.xlu0 %v2308, 112
  %v2551 = vpop.permute.xlu0 %2550
  %2552 = vrot.lane.b32.xlu0 %v2310, 112
  %v2553 = vpop.permute.xlu0 %2552
  %2554 = vrot.lane.b32.xlu0 %v2312, 112
  %v2555 = vpop.permute.xlu0 %2554
  %2556 = vrot.lane.b32.xlu0 %v2316, 112
  %v2557 = vpop.permute.xlu0 %2556
  %2558 = vrot.lane.b32.xlu0 %v2318, 112
  %v2559 = vpop.permute.xlu0 %2558
  %2560 = vrot.lane.b32.xlu0 %v2320, 112
  %v2561 = vpop.permute.xlu0 %2560
  %2562 = vrot.lane.b32.xlu0 %v2322, 112
  %v2563 = vpop.permute.xlu0 %2562
  %vm2564 = vcmask 916480
  %v2565 = vsel %vm2564, %v2517, %v2519
  %v2566 = vsel %vm2564, %v2521, %v2523
  %v2567 = vsel %vm2564, %v2525, %v2527
  %v2568 = vsel %vm2564, %v2529, %v2531
  %v2569 = vsel %vm2564, %v2533, %v2535
  %v2570 = vsel %vm2564, %v2537, %v2539
  %v2571 = vsel %vm2564, %v2541, %v2543
  %v2572 = vsel %vm2564, %v2545, %v2547
  %v2573 = vsel %vm2564, %v2549, %v2551
  %v2574 = vsel %vm2564, %v2553, %v2555
  %v2575 = vsel %vm2564, %v2557, %v2559
  %v2576 = vsel %vm2564, %v2561, %v2563
  %2601 = vrot.lane.b32.xlu0 %v2266, 111
  %v2602 = vpop.permute.xlu0 %2601
  %2603 = vrot.lane.b32.xlu0 %v2268, 111
  %v2604 = vpop.permute.xlu0 %2603
  %2605 = vrot.lane.b32.xlu0 %v2270, 111
  %v2606 = vpop.permute.xlu0 %2605
  %2607 = vrot.lane.b32.xlu0 %v2272, 111
  %v2608 = vpop.permute.xlu0 %2607
  %2609 = vrot.lane.b32.xlu0 %v2276, 111
  %v2610 = vpop.permute.xlu0 %2609
  %2611 = vrot.lane.b32.xlu0 %v2278, 111
  %v2612 = vpop.permute.xlu0 %2611
  %2613 = vrot.lane.b32.xlu0 %v2280, 111
  %v2614 = vpop.permute.xlu0 %2613
  %2615 = vrot.lane.b32.xlu0 %v2282, 111
  %v2616 = vpop.permute.xlu0 %2615
  %2617 = vrot.lane.b32.xlu0 %v2286, 111
  %v2618 = vpop.permute.xlu0 %2617
  %2619 = vrot.lane.b32.xlu0 %v2288, 111
  %v2620 = vpop.permute.xlu0 %2619
  %2621 = vrot.lane.b32.xlu0 %v2290, 111
  %v2622 = vpop.permute.xlu0 %2621
  %2623 = vrot.lane.b32.xlu0 %v2292, 111
  %v2624 = vpop.permute.xlu0 %2623
  %2625 = vrot.lane.b32.xlu0 %v2296, 111
  %v2626 = vpop.permute.xlu0 %2625
  %2627 = vrot.lane.b32.xlu0 %v2298, 111
  %v2628 = vpop.permute.xlu0 %2627
  %2629 = vrot.lane.b32.xlu0 %v2300, 111
  %v2630 = vpop.permute.xlu0 %2629
  %2631 = vrot.lane.b32.xlu0 %v2302, 111
  %v2632 = vpop.permute.xlu0 %2631
  %2633 = vrot.lane.b32.xlu0 %v2306, 111
  %v2634 = vpop.permute.xlu0 %2633
  %2635 = vrot.lane.b32.xlu0 %v2308, 111
  %v2636 = vpop.permute.xlu0 %2635
  %2637 = vrot.lane.b32.xlu0 %v2310, 111
  %v2638 = vpop.permute.xlu0 %2637
  %2639 = vrot.lane.b32.xlu0 %v2312, 111
  %v2640 = vpop.permute.xlu0 %2639
  %2641 = vrot.lane.b32.xlu0 %v2316, 111
  %v2642 = vpop.permute.xlu0 %2641
  %2643 = vrot.lane.b32.xlu0 %v2318, 111
  %v2644 = vpop.permute.xlu0 %2643
  %2645 = vrot.lane.b32.xlu0 %v2320, 111
  %v2646 = vpop.permute.xlu0 %2645
  %2647 = vrot.lane.b32.xlu0 %v2322, 111
  %v2648 = vpop.permute.xlu0 %2647
  %vm2649 = vcmask 908288
  %v2650 = vsel %vm2649, %v2602, %v2604
  %v2651 = vsel %vm2649, %v2606, %v2608
  %v2652 = vsel %vm2649, %v2610, %v2612
  %v2653 = vsel %vm2649, %v2614, %v2616
  %v2654 = vsel %vm2649, %v2618, %v2620
  %v2655 = vsel %vm2649, %v2622, %v2624
  %v2656 = vsel %vm2649, %v2626, %v2628
  %v2657 = vsel %vm2649, %v2630, %v2632
  %v2658 = vsel %vm2649, %v2634, %v2636
  %v2659 = vsel %vm2649, %v2638, %v2640
  %v2660 = vsel %vm2649, %v2642, %v2644
  %v2661 = vsel %vm2649, %v2646, %v2648
  %2686 = vrot.lane.b32.xlu0 %v2266, 110
  %v2687 = vpop.permute.xlu0 %2686
  %2688 = vrot.lane.b32.xlu0 %v2268, 110
  %v2689 = vpop.permute.xlu0 %2688
  %2690 = vrot.lane.b32.xlu0 %v2270, 110
  %v2691 = vpop.permute.xlu0 %2690
  %2692 = vrot.lane.b32.xlu0 %v2272, 110
  %v2693 = vpop.permute.xlu0 %2692
  %2694 = vrot.lane.b32.xlu0 %v2276, 110
  %v2695 = vpop.permute.xlu0 %2694
  %2696 = vrot.lane.b32.xlu0 %v2278, 110
  %v2697 = vpop.permute.xlu0 %2696
  %2698 = vrot.lane.b32.xlu0 %v2280, 110
  %v2699 = vpop.permute.xlu0 %2698
  %2700 = vrot.lane.b32.xlu0 %v2282, 110
  %v2701 = vpop.permute.xlu0 %2700
  %2702 = vrot.lane.b32.xlu0 %v2286, 110
  %v2703 = vpop.permute.xlu0 %2702
  %2704 = vrot.lane.b32.xlu0 %v2288, 110
  %v2705 = vpop.permute.xlu0 %2704
  %2706 = vrot.lane.b32.xlu0 %v2290, 110
  %v2707 = vpop.permute.xlu0 %2706
  %2708 = vrot.lane.b32.xlu0 %v2292, 110
  %v2709 = vpop.permute.xlu0 %2708
  %2710 = vrot.lane.b32.xlu0 %v2296, 110
  %v2711 = vpop.permute.xlu0 %2710
  %2712 = vrot.lane.b32.xlu0 %v2298, 110
  %v2713 = vpop.permute.xlu0 %2712
  %2714 = vrot.lane.b32.xlu0 %v2300, 110
  %v2715 = vpop.permute.xlu0 %2714
  %2716 = vrot.lane.b32.xlu0 %v2302, 110
  %v2717 = vpop.permute.xlu0 %2716
  %2718 = vrot.lane.b32.xlu0 %v2306, 110
  %v2719 = vpop.permute.xlu0 %2718
  %2720 = vrot.lane.b32.xlu0 %v2308, 110
  %v2721 = vpop.permute.xlu0 %2720
  %2722 = vrot.lane.b32.xlu0 %v2310, 110
  %v2723 = vpop.permute.xlu0 %2722
  %2724 = vrot.lane.b32.xlu0 %v2312, 110
  %v2725 = vpop.permute.xlu0 %2724
  %2726 = vrot.lane.b32.xlu0 %v2316, 110
  %v2727 = vpop.permute.xlu0 %2726
  %2728 = vrot.lane.b32.xlu0 %v2318, 110
  %v2729 = vpop.permute.xlu0 %2728
  %2730 = vrot.lane.b32.xlu0 %v2320, 110
  %v2731 = vpop.permute.xlu0 %2730
  %2732 = vrot.lane.b32.xlu0 %v2322, 110
  %v2733 = vpop.permute.xlu0 %2732
  %vm2734 = vcmask 900096
  %v2735 = vsel %vm2734, %v2687, %v2689
  %v2736 = vsel %vm2734, %v2691, %v2693
  %v2737 = vsel %vm2734, %v2695, %v2697
  %v2738 = vsel %vm2734, %v2699, %v2701
  %v2739 = vsel %vm2734, %v2703, %v2705
  %v2740 = vsel %vm2734, %v2707, %v2709
  %v2741 = vsel %vm2734, %v2711, %v2713
  %v2742 = vsel %vm2734, %v2715, %v2717
  %v2743 = vsel %vm2734, %v2719, %v2721
  %v2744 = vsel %vm2734, %v2723, %v2725
  %v2745 = vsel %vm2734, %v2727, %v2729
  %v2746 = vsel %vm2734, %v2731, %v2733
  %2771 = vrot.lane.b32.xlu0 %v2266, 96
  %v2772 = vpop.permute.xlu0 %2771
  %2773 = vrot.lane.b32.xlu0 %v2268, 96
  %v2774 = vpop.permute.xlu0 %2773
  %2775 = vrot.lane.b32.xlu0 %v2270, 96
  %v2776 = vpop.permute.xlu0 %2775
  %2777 = vrot.lane.b32.xlu0 %v2272, 96
  %v2778 = vpop.permute.xlu0 %2777
  %2779 = vrot.lane.b32.xlu0 %v2276, 96
  %v2780 = vpop.permute.xlu0 %2779
  %2781 = vrot.lane.b32.xlu0 %v2278, 96
  %v2782 = vpop.permute.xlu0 %2781
  %2783 = vrot.lane.b32.xlu0 %v2280, 96
  %v2784 = vpop.permute.xlu0 %2783
  %2785 = vrot.lane.b32.xlu0 %v2282, 96
  %v2786 = vpop.permute.xlu0 %2785
  %2787 = vrot.lane.b32.xlu0 %v2286, 96
  %v2788 = vpop.permute.xlu0 %2787
  %2789 = vrot.lane.b32.xlu0 %v2288, 96
  %v2790 = vpop.permute.xlu0 %2789
  %2791 = vrot.lane.b32.xlu0 %v2290, 96
  %v2792 = vpop.permute.xlu0 %2791
  %2793 = vrot.lane.b32.xlu0 %v2292, 96
  %v2794 = vpop.permute.xlu0 %2793
  %2795 = vrot.lane.b32.xlu0 %v2296, 96
  %v2796 = vpop.permute.xlu0 %2795
  %2797 = vrot.lane.b32.xlu0 %v2298, 96
  %v2798 = vpop.permute.xlu0 %2797
  %2799 = vrot.lane.b32.xlu0 %v2300, 96
  %v2800 = vpop.permute.xlu0 %2799
  %2801 = vrot.lane.b32.xlu0 %v2302, 96
  %v2802 = vpop.permute.xlu0 %2801
  %2803 = vrot.lane.b32.xlu0 %v2306, 96
  %v2804 = vpop.permute.xlu0 %2803
  %2805 = vrot.lane.b32.xlu0 %v2308, 96
  %v2806 = vpop.permute.xlu0 %2805
  %2807 = vrot.lane.b32.xlu0 %v2310, 96
  %v2808 = vpop.permute.xlu0 %2807
  %2809 = vrot.lane.b32.xlu0 %v2312, 96
  %v2810 = vpop.permute.xlu0 %2809
  %2811 = vrot.lane.b32.xlu0 %v2316, 96
  %v2812 = vpop.permute.xlu0 %2811
  %2813 = vrot.lane.b32.xlu0 %v2318, 96
  %v2814 = vpop.permute.xlu0 %2813
  %2815 = vrot.lane.b32.xlu0 %v2320, 96
  %v2816 = vpop.permute.xlu0 %2815
  %2817 = vrot.lane.b32.xlu0 %v2322, 96
  %v2818 = vpop.permute.xlu0 %2817
  %v2819 = vsel %vm216, %v2772, %v2774
  %v2820 = vsel %vm216, %v2776, %v2778
  %v2821 = vsel %vm216, %v2780, %v2782
  %v2822 = vsel %vm216, %v2784, %v2786
  %v2823 = vsel %vm216, %v2788, %v2790
  %v2824 = vsel %vm216, %v2792, %v2794
  %v2825 = vsel %vm216, %v2796, %v2798
  %v2826 = vsel %vm216, %v2800, %v2802
  %v2827 = vsel %vm216, %v2804, %v2806
  %v2828 = vsel %vm216, %v2808, %v2810
  %v2829 = vsel %vm216, %v2812, %v2814
  %v2830 = vsel %vm216, %v2816, %v2818
  %2855 = vrot.lane.b32.xlu0 %v2266, 95
  %v2856 = vpop.permute.xlu0 %2855
  %2857 = vrot.lane.b32.xlu0 %v2268, 95
  %v2858 = vpop.permute.xlu0 %2857
  %2859 = vrot.lane.b32.xlu0 %v2270, 95
  %v2860 = vpop.permute.xlu0 %2859
  %2861 = vrot.lane.b32.xlu0 %v2272, 95
  %v2862 = vpop.permute.xlu0 %2861
  %2863 = vrot.lane.b32.xlu0 %v2276, 95
  %v2864 = vpop.permute.xlu0 %2863
  %2865 = vrot.lane.b32.xlu0 %v2278, 95
  %v2866 = vpop.permute.xlu0 %2865
  %2867 = vrot.lane.b32.xlu0 %v2280, 95
  %v2868 = vpop.permute.xlu0 %2867
  %2869 = vrot.lane.b32.xlu0 %v2282, 95
  %v2870 = vpop.permute.xlu0 %2869
  %2871 = vrot.lane.b32.xlu0 %v2286, 95
  %v2872 = vpop.permute.xlu0 %2871
  %2873 = vrot.lane.b32.xlu0 %v2288, 95
  %v2874 = vpop.permute.xlu0 %2873
  %2875 = vrot.lane.b32.xlu0 %v2290, 95
  %v2876 = vpop.permute.xlu0 %2875
  %2877 = vrot.lane.b32.xlu0 %v2292, 95
  %v2878 = vpop.permute.xlu0 %2877
  %2879 = vrot.lane.b32.xlu0 %v2296, 95
  %v2880 = vpop.permute.xlu0 %2879
  %2881 = vrot.lane.b32.xlu0 %v2298, 95
  %v2882 = vpop.permute.xlu0 %2881
  %2883 = vrot.lane.b32.xlu0 %v2300, 95
  %v2884 = vpop.permute.xlu0 %2883
  %2885 = vrot.lane.b32.xlu0 %v2302, 95
  %v2886 = vpop.permute.xlu0 %2885
  %2887 = vrot.lane.b32.xlu0 %v2306, 95
  %v2888 = vpop.permute.xlu0 %2887
  %2889 = vrot.lane.b32.xlu0 %v2308, 95
  %v2890 = vpop.permute.xlu0 %2889
  %2891 = vrot.lane.b32.xlu0 %v2310, 95
  %v2892 = vpop.permute.xlu0 %2891
  %2893 = vrot.lane.b32.xlu0 %v2312, 95
  %v2894 = vpop.permute.xlu0 %2893
  %2895 = vrot.lane.b32.xlu0 %v2316, 95
  %v2896 = vpop.permute.xlu0 %2895
  %2897 = vrot.lane.b32.xlu0 %v2318, 95
  %v2898 = vpop.permute.xlu0 %2897
  %2899 = vrot.lane.b32.xlu0 %v2320, 95
  %v2900 = vpop.permute.xlu0 %2899
  %2901 = vrot.lane.b32.xlu0 %v2322, 95
  %v2902 = vpop.permute.xlu0 %2901
  %v2903 = vsel %vm277, %v2856, %v2858
  %v2904 = vsel %vm277, %v2860, %v2862
  %v2905 = vsel %vm277, %v2864, %v2866
  %v2906 = vsel %vm277, %v2868, %v2870
  %v2907 = vsel %vm277, %v2872, %v2874
  %v2908 = vsel %vm277, %v2876, %v2878
  %v2909 = vsel %vm277, %v2880, %v2882
  %v2910 = vsel %vm277, %v2884, %v2886
  %v2911 = vsel %vm277, %v2888, %v2890
  %v2912 = vsel %vm277, %v2892, %v2894
  %v2913 = vsel %vm277, %v2896, %v2898
  %v2914 = vsel %vm277, %v2900, %v2902
  %2939 = vrot.lane.b32.xlu0 %v2266, 94
  %v2940 = vpop.permute.xlu0 %2939
  %2941 = vrot.lane.b32.xlu0 %v2268, 94
  %v2942 = vpop.permute.xlu0 %2941
  %2943 = vrot.lane.b32.xlu0 %v2270, 94
  %v2944 = vpop.permute.xlu0 %2943
  %2945 = vrot.lane.b32.xlu0 %v2272, 94
  %v2946 = vpop.permute.xlu0 %2945
  %2947 = vrot.lane.b32.xlu0 %v2276, 94
  %v2948 = vpop.permute.xlu0 %2947
  %2949 = vrot.lane.b32.xlu0 %v2278, 94
  %v2950 = vpop.permute.xlu0 %2949
  %2951 = vrot.lane.b32.xlu0 %v2280, 94
  %v2952 = vpop.permute.xlu0 %2951
  %2953 = vrot.lane.b32.xlu0 %v2282, 94
  %v2954 = vpop.permute.xlu0 %2953
  %2955 = vrot.lane.b32.xlu0 %v2286, 94
  %v2956 = vpop.permute.xlu0 %2955
  %2957 = vrot.lane.b32.xlu0 %v2288, 94
  %v2958 = vpop.permute.xlu0 %2957
  %2959 = vrot.lane.b32.xlu0 %v2290, 94
  %v2960 = vpop.permute.xlu0 %2959
  %2961 = vrot.lane.b32.xlu0 %v2292, 94
  %v2962 = vpop.permute.xlu0 %2961
  %2963 = vrot.lane.b32.xlu0 %v2296, 94
  %v2964 = vpop.permute.xlu0 %2963
  %2965 = vrot.lane.b32.xlu0 %v2298, 94
  %v2966 = vpop.permute.xlu0 %2965
  %2967 = vrot.lane.b32.xlu0 %v2300, 94
  %v2968 = vpop.permute.xlu0 %2967
  %2969 = vrot.lane.b32.xlu0 %v2302, 94
  %v2970 = vpop.permute.xlu0 %2969
  %2971 = vrot.lane.b32.xlu0 %v2306, 94
  %v2972 = vpop.permute.xlu0 %2971
  %2973 = vrot.lane.b32.xlu0 %v2308, 94
  %v2974 = vpop.permute.xlu0 %2973
  %2975 = vrot.lane.b32.xlu0 %v2310, 94
  %v2976 = vpop.permute.xlu0 %2975
  %2977 = vrot.lane.b32.xlu0 %v2312, 94
  %v2978 = vpop.permute.xlu0 %2977
  %2979 = vrot.lane.b32.xlu0 %v2316, 94
  %v2980 = vpop.permute.xlu0 %2979
  %2981 = vrot.lane.b32.xlu0 %v2318, 94
  %v2982 = vpop.permute.xlu0 %2981
  %2983 = vrot.lane.b32.xlu0 %v2320, 94
  %v2984 = vpop.permute.xlu0 %2983
  %2985 = vrot.lane.b32.xlu0 %v2322, 94
  %v2986 = vpop.permute.xlu0 %2985
  %v2987 = vsel %vm338, %v2940, %v2942
  %v2988 = vsel %vm338, %v2944, %v2946
  %v2989 = vsel %vm338, %v2948, %v2950
  %v2990 = vsel %vm338, %v2952, %v2954
  %v2991 = vsel %vm338, %v2956, %v2958
  %v2992 = vsel %vm338, %v2960, %v2962
  %v2993 = vsel %vm338, %v2964, %v2966
  %v2994 = vsel %vm338, %v2968, %v2970
  %v2995 = vsel %vm338, %v2972, %v2974
  %v2996 = vsel %vm338, %v2976, %v2978
  %v2997 = vsel %vm338, %v2980, %v2982
  %v2998 = vsel %vm338, %v2984, %v2986
  %v3023 = vld [vmem:[%s4] sm:$0xff]
  %v3024 = vld [vmem:[%s4 + $0x8] sm:$0xff]
  %v3025 = vld [vmem:[%s4 + $0x10] sm:$0xff]
  %v3026 = vld [vmem:[%s4 + $0x18] sm:$0xf]
  %v3027 = vld [vmem:[%s4 + $0x1c] sm:$0xff]
  %v3028 = vld [vmem:[%s4 + $0x24] sm:$0xff]
  %v3029 = vld [vmem:[%s4 + $0x2c] sm:$0xff]
  %v3030 = vld [vmem:[%s4 + $0x34] sm:$0xf]
  %v3031 = vld [vmem:[%s4 + $0x38] sm:$0xff]
  %v3032 = vld [vmem:[%s4 + $0x40] sm:$0xff]
  %v3033 = vld [vmem:[%s4 + $0x48] sm:$0xff]
  %v3034 = vld [vmem:[%s4 + $0x50] sm:$0xf]
  %v3035 = vld [vmem:[%s4 + $0x54] sm:$0xff]
  %v3036 = vld [vmem:[%s4 + $0x5c] sm:$0xff]
  %v3037 = vld [vmem:[%s4 + $0x64] sm:$0xff]
  %v3038 = vld [vmem:[%s4 + $0x6c] sm:$0xf]
  %v3039 = vld [vmem:[%s4 + $0x70] sm:$0xff]
  %v3040 = vld [vmem:[%s4 + $0x78] sm:$0xff]
  %v3041 = vld [vmem:[%s4 + $0x80] sm:$0xff]
  %v3042 = vld [vmem:[%s4 + $0x88] sm:$0xf]
  %v3043 = vld [vmem:[%s4 + $0x8c] sm:$0xff]
  %v3044 = vld [vmem:[%s4 + $0x94] sm:$0xff]
  %v3045 = vld [vmem:[%s4 + $0x9c] sm:$0xff]
  %v3046 = vld [vmem:[%s4 + $0xa4] sm:$0xf]
  %v3047 = vld [vmem:[%s4 + $0xa8] sm:$0xff]
  %v3048 = vld [vmem:[%s4 + $0xb0] sm:$0xff]
  %v3049 = vld [vmem:[%s4 + $0xb8] sm:$0xff]
  %v3050 = vld [vmem:[%s4 + $0xc0] sm:$0xf]
  %v3051 = vld [vmem:[%s4 + $0xc4] sm:$0xff]
  %v3052 = vld [vmem:[%s4 + $0xcc] sm:$0xff]
  %v3053 = vld [vmem:[%s4 + $0xd4] sm:$0xff]
  %v3054 = vld [vmem:[%s4 + $0xdc] sm:$0xf]
  %v3055 = vld [vmem:[%s4 + $0xe0] sm:$0xff]
  %v3056 = vld [vmem:[%s4 + $0xe8] sm:$0xff]
  %v3057 = vld [vmem:[%s4 + $0xf0] sm:$0xff]
  %v3058 = vld [vmem:[%s4 + $0xf8] sm:$0xf]
  %v3059 = vld [vmem:[%s4 + $0xfc] sm:$0xff]
  %v3060 = vld [vmem:[%s4 + $0x104] sm:$0xff]
  %v3061 = vld [vmem:[%s4 + $0x10c] sm:$0xff]
  %v3062 = vld [vmem:[%s4 + $0x114] sm:$0xf]
  %v3063 = vld [vmem:[%s4 + $0x118] sm:$0xff]
  %v3064 = vld [vmem:[%s4 + $0x120] sm:$0xff]
  %v3065 = vld [vmem:[%s4 + $0x128] sm:$0xff]
  %v3066 = vld [vmem:[%s4 + $0x130] sm:$0xf]
  %v3067 = vld [vmem:[%s4 + $0x134] sm:$0xff]
  %v3068 = vld [vmem:[%s4 + $0x13c] sm:$0xff]
  %v3069 = vld [vmem:[%s4 + $0x144] sm:$0xff]
  %v3070 = vld [vmem:[%s4 + $0x14c] sm:$0xf]
  %v3071 = vld [vmem:[%s4 + $0x150] sm:$0xff]
  %v3072 = vld [vmem:[%s4 + $0x158] sm:$0xff]
  %v3073 = vld [vmem:[%s4 + $0x160] sm:$0xff]
  %v3074 = vld [vmem:[%s4 + $0x168] sm:$0xf]
  %v3075 = vld [vmem:[%s4 + $0x16c] sm:$0xff]
  %v3076 = vld [vmem:[%s4 + $0x174] sm:$0xff]
  %v3077 = vld [vmem:[%s4 + $0x17c] sm:$0xff]
  %v3078 = vld [vmem:[%s4 + $0x184] sm:$0xf]
  %v3079 = vld [vmem:[%s4 + $0x188] sm:$0xff]
  %v3080 = vld [vmem:[%s4 + $0x190] sm:$0xff]
  %v3081 = vld [vmem:[%s4 + $0x198] sm:$0xff]
  %v3082 = vld [vmem:[%s4 + $0x1a0] sm:$0xf]
  %v3083 = vld [vmem:[%s4 + $0x1a4] sm:$0xff]
  %v3084 = vld [vmem:[%s4 + $0x1ac] sm:$0xff]
  %v3085 = vld [vmem:[%s4 + $0x1b4] sm:$0xff]
  %v3086 = vld [vmem:[%s4 + $0x1bc] sm:$0xf]
  %v3087 = vld [vmem:[%s4 + $0x1c0] sm:$0xff]
  %v3088 = vld [vmem:[%s4 + $0x1c8] sm:$0xff]
  %v3089 = vld [vmem:[%s4 + $0x1d0] sm:$0xff]
  %v3090 = vld [vmem:[%s4 + $0x1d8] sm:$0xf]
  %v3091 = vld [vmem:[%s4 + $0x1dc] sm:$0xff]
  %v3092 = vld [vmem:[%s4 + $0x1e4] sm:$0xff]
  %v3093 = vld [vmem:[%s4 + $0x1ec] sm:$0xff]
  %v3094 = vld [vmem:[%s4 + $0x1f4] sm:$0xf]
  %v3095 = vld [vmem:[%s4 + $0x1f8] sm:$0xff]
  %v3096 = vld [vmem:[%s4 + $0x200] sm:$0xff]
  %v3097 = vld [vmem:[%s4 + $0x208] sm:$0xff]
  %v3098 = vld [vmem:[%s4 + $0x210] sm:$0xf]
  %v3099 = vld [vmem:[%s4 + $0x214] sm:$0xff]
  %v3100 = vld [vmem:[%s4 + $0x21c] sm:$0xff]
  %v3101 = vld [vmem:[%s4 + $0x224] sm:$0xff]
  %v3102 = vld [vmem:[%s4 + $0x22c] sm:$0xf]
  %v3103 = vld [vmem:[%s4 + $0x230] sm:$0xff]
  %v3104 = vld [vmem:[%s4 + $0x238] sm:$0xff]
  %v3105 = vld [vmem:[%s4 + $0x240] sm:$0xff]
  %v3106 = vld [vmem:[%s4 + $0x248] sm:$0xf]
  %v3107 = vld [vmem:[%s4 + $0x24c] sm:$0xff]
  %v3108 = vld [vmem:[%s4 + $0x254] sm:$0xff]
  %v3109 = vld [vmem:[%s4 + $0x25c] sm:$0xff]
  %v3110 = vld [vmem:[%s4 + $0x264] sm:$0xf]
  %v3111 = vld [vmem:[%s4 + $0x268] sm:$0xff]
  %v3112 = vld [vmem:[%s4 + $0x270] sm:$0xff]
  %v3113 = vld [vmem:[%s4 + $0x278] sm:$0xff]
  %v3114 = vld [vmem:[%s4 + $0x280] sm:$0xf]
  %v3115 = vld [vmem:[%s4 + $0x284] sm:$0xff]
  %v3116 = vld [vmem:[%s4 + $0x28c] sm:$0xff]
  %v3117 = vld [vmem:[%s4 + $0x294] sm:$0xff]
  %v3118 = vld [vmem:[%s4 + $0x29c] sm:$0xf]
  %v3119 = vld [vmem:[%s4 + $0x2a0] sm:$0xff]
  %v3120 = vld [vmem:[%s4 + $0x2a8] sm:$0xff]
  %v3121 = vld [vmem:[%s4 + $0x2b0] sm:$0xff]
  %v3122 = vld [vmem:[%s4 + $0x2b8] sm:$0xf]
  %v3123 = vld [vmem:[%s4 + $0x2bc] sm:$0xff]
  %v3124 = vld [vmem:[%s4 + $0x2c4] sm:$0xff]
  %v3125 = vld [vmem:[%s4 + $0x2cc] sm:$0xff]
  %v3126 = vld [vmem:[%s4 + $0x2d4] sm:$0xf]
  %v3127 = vld [vmem:[%s4 + $0x2d8] sm:$0xff]
  %v3128 = vld [vmem:[%s4 + $0x2e0] sm:$0xff]
  %v3129 = vld [vmem:[%s4 + $0x2e8] sm:$0xff]
  %v3130 = vld [vmem:[%s4 + $0x2f0] sm:$0xf]
  %v3131 = vld [vmem:[%s4 + $0x2f4] sm:$0xff]
  %v3132 = vld [vmem:[%s4 + $0x2fc] sm:$0xff]
  %v3133 = vld [vmem:[%s4 + $0x304] sm:$0xff]
  %v3134 = vld [vmem:[%s4 + $0x30c] sm:$0xf]
  %v3135 = vld [vmem:[%s4 + $0x310] sm:$0xff]
  %v3136 = vld [vmem:[%s4 + $0x318] sm:$0xff]
  %v3137 = vld [vmem:[%s4 + $0x320] sm:$0xff]
  %v3138 = vld [vmem:[%s4 + $0x328] sm:$0xf]
  %v3139 = vld [vmem:[%s4 + $0x32c] sm:$0xff]
  %v3140 = vld [vmem:[%s4 + $0x334] sm:$0xff]
  %v3141 = vld [vmem:[%s4 + $0x33c] sm:$0xff]
  %v3142 = vld [vmem:[%s4 + $0x344] sm:$0xf]
  %v3143 = vld [vmem:[%s4 + $0x348] sm:$0xff]
  %v3144 = vld [vmem:[%s4 + $0x350] sm:$0xff]
  %v3145 = vld [vmem:[%s4 + $0x358] sm:$0xff]
  %v3146 = vld [vmem:[%s4 + $0x360] sm:$0xf]
  %v3147 = vld [vmem:[%s4 + $0x364] sm:$0xff]
  %v3148 = vld [vmem:[%s4 + $0x36c] sm:$0xff]
  %v3149 = vld [vmem:[%s4 + $0x374] sm:$0xff]
  %v3150 = vld [vmem:[%s4 + $0x37c] sm:$0xf]
  %v3151 = vpack.c.bf16 %v2270, %v2266
  %v3152 = vpack.c.bf16 %v2272, %v2268
  %v3153 = vpack.c.bf16 %v2280, %v2276
  %v3154 = vpack.c.bf16 %v2282, %v2278
  %v3155 = vpack.c.bf16 %v2290, %v2286
  %v3156 = vpack.c.bf16 %v2292, %v2288
  %v3157 = vpack.c.bf16 %v2300, %v2296
  %v3158 = vpack.c.bf16 %v2302, %v2298
  %v3159 = vpack.c.bf16 %v2310, %v2306
  %v3160 = vpack.c.bf16 %v2312, %v2308
  %v3161 = vpack.c.bf16 %v2320, %v2316
  %v3162 = vpack.c.bf16 %v2322, %v2318
  %v3163 = vpack.c.bf16 %v2397, %v2396
  %v3164 = vpack.c.bf16 %v2355, %v2351
  %v3165 = vpack.c.bf16 %v2399, %v2398
  %v3166 = vpack.c.bf16 %v2363, %v2359
  %v3167 = vpack.c.bf16 %v2401, %v2400
  %v3168 = vpack.c.bf16 %v2371, %v2367
  %v3169 = vpack.c.bf16 %v2403, %v2402
  %v3170 = vpack.c.bf16 %v2379, %v2375
  %v3171 = vpack.c.bf16 %v2405, %v2404
  %v3172 = vpack.c.bf16 %v2387, %v2383
  %v3173 = vpack.c.bf16 %v2407, %v2406
  %v3174 = vpack.c.bf16 %v2395, %v2391
  %v3175 = vpack.c.bf16 %v2481, %v2480
  %v3176 = vpack.c.bf16 %v2439, %v2435
  %v3177 = vpack.c.bf16 %v2483, %v2482
  %v3178 = vpack.c.bf16 %v2447, %v2443
  %v3179 = vpack.c.bf16 %v2485, %v2484
  %v3180 = vpack.c.bf16 %v2455, %v2451
  %v3181 = vpack.c.bf16 %v2487, %v2486
  %v3182 = vpack.c.bf16 %v2463, %v2459
  %v3183 = vpack.c.bf16 %v2489, %v2488
  %v3184 = vpack.c.bf16 %v2471, %v2467
  %v3185 = vpack.c.bf16 %v2491, %v2490
  %v3186 = vpack.c.bf16 %v2479, %v2475
  %v3187 = vpack.c.bf16 %v2566, %v2565
  %v3188 = vpack.c.bf16 %v2523, %v2519
  %v3189 = vpack.c.bf16 %v2568, %v2567
  %v3190 = vpack.c.bf16 %v2531, %v2527
  %v3191 = vpack.c.bf16 %v2570, %v2569
  %v3192 = vpack.c.bf16 %v2539, %v2535
  %v3193 = vpack.c.bf16 %v2572, %v2571
  %v3194 = vpack.c.bf16 %v2547, %v2543
  %v3195 = vpack.c.bf16 %v2574, %v2573
  %v3196 = vpack.c.bf16 %v2555, %v2551
  %v3197 = vpack.c.bf16 %v2576, %v2575
  %v3198 = vpack.c.bf16 %v2563, %v2559
  %v3199 = vpack.c.bf16 %v2651, %v2650
  %v3200 = vpack.c.bf16 %v2608, %v2604
  %v3201 = vpack.c.bf16 %v2653, %v2652
  %v3202 = vpack.c.bf16 %v2616, %v2612
  %v3203 = vpack.c.bf16 %v2655, %v2654
  %v3204 = vpack.c.bf16 %v2624, %v2620
  %v3205 = vpack.c.bf16 %v2657, %v2656
  %v3206 = vpack.c.bf16 %v2632, %v2628
  %v3207 = vpack.c.bf16 %v2659, %v2658
  %v3208 = vpack.c.bf16 %v2640, %v2636
  %v3209 = vpack.c.bf16 %v2661, %v2660
  %v3210 = vpack.c.bf16 %v2648, %v2644
  %v3211 = vpack.c.bf16 %v2736, %v2735
  %v3212 = vpack.c.bf16 %v2693, %v2689
  %v3213 = vpack.c.bf16 %v2738, %v2737
  %v3214 = vpack.c.bf16 %v2701, %v2697
  %v3215 = vpack.c.bf16 %v2740, %v2739
  %v3216 = vpack.c.bf16 %v2709, %v2705
  %v3217 = vpack.c.bf16 %v2742, %v2741
  %v3218 = vpack.c.bf16 %v2717, %v2713
  %v3219 = vpack.c.bf16 %v2744, %v2743
  %v3220 = vpack.c.bf16 %v2725, %v2721
  %v3221 = vpack.c.bf16 %v2746, %v2745
  %v3222 = vpack.c.bf16 %v2733, %v2729
  %v3223 = vpack.c.bf16 %v2820, %v2819
  %v3224 = vpack.c.bf16 %v2778, %v2774
  %v3225 = vpack.c.bf16 %v2822, %v2821
  %v3226 = vpack.c.bf16 %v2786, %v2782
  %v3227 = vpack.c.bf16 %v2824, %v2823
  %v3228 = vpack.c.bf16 %v2794, %v2790
  %v3229 = vpack.c.bf16 %v2826, %v2825
  %v3230 = vpack.c.bf16 %v2802, %v2798
  %v3231 = vpack.c.bf16 %v2828, %v2827
  %v3232 = vpack.c.bf16 %v2810, %v2806
  %v3233 = vpack.c.bf16 %v2830, %v2829
  %v3234 = vpack.c.bf16 %v2818, %v2814
  %v3235 = vpack.c.bf16 %v2904, %v2903
  %v3236 = vpack.c.bf16 %v2862, %v2858
  %v3237 = vpack.c.bf16 %v2906, %v2905
  %v3238 = vpack.c.bf16 %v2870, %v2866
  %v3239 = vpack.c.bf16 %v2908, %v2907
  %v3240 = vpack.c.bf16 %v2878, %v2874
  %v3241 = vpack.c.bf16 %v2910, %v2909
  %v3242 = vpack.c.bf16 %v2886, %v2882
  %v3243 = vpack.c.bf16 %v2912, %v2911
  %v3244 = vpack.c.bf16 %v2894, %v2890
  %v3245 = vpack.c.bf16 %v2914, %v2913
  %v3246 = vpack.c.bf16 %v2902, %v2898
  %v3247 = vpack.c.bf16 %v2988, %v2987
  %v3248 = vpack.c.bf16 %v2946, %v2942
  %v3249 = vpack.c.bf16 %v2990, %v2989
  %v3250 = vpack.c.bf16 %v2954, %v2950
  %v3251 = vpack.c.bf16 %v2992, %v2991
  %v3252 = vpack.c.bf16 %v2962, %v2958
  %v3253 = vpack.c.bf16 %v2994, %v2993
  %v3254 = vpack.c.bf16 %v2970, %v2966
  %v3255 = vpack.c.bf16 %v2996, %v2995
  %v3256 = vpack.c.bf16 %v2978, %v2974
  %v3257 = vpack.c.bf16 %v2998, %v2997
  %v3258 = vpack.c.bf16 %v2986, %v2982
  %v3259 = vld [vmem:[%s5] sm:$0xff]
  %v3260 = vld [vmem:[%s5 + $0x8] sm:$0xff]
  %v3261 = vld [vmem:[%s5 + $0x10] sm:$0xff]
  %v3262 = vld [vmem:[%s5 + $0x18] sm:$0xff]
  %v3263 = vld [vmem:[%s5 + $0x20] sm:$0xff]
  %v3264 = vld [vmem:[%s5 + $0x28] sm:$0xff]
  %v3265 = vld [vmem:[%s5 + $0x30] sm:$0xff]
  %v3266 = vld [vmem:[%s5 + $0x38] sm:$0xff]
  %v3267 = vld [vmem:[%s5 + $0x40] sm:$0xff]
  %v3268 = vld [vmem:[%s5 + $0x48] sm:$0xff]
  %v3269 = vld [vmem:[%s5 + $0x50] sm:$0xff]
  %v3270 = vld [vmem:[%s5 + $0x58] sm:$0xff]
  %v3271 = vld [vmem:[%s5 + $0x60] sm:$0xff]
  %v3272 = vld [vmem:[%s5 + $0x68] sm:$0xff]
  %v3273 = vld [vmem:[%s5 + $0x70] sm:$0xff]
  %v3274 = vld [vmem:[%s5 + $0x78] sm:$0xff]
  %v3275 = vld [vmem:[%s5 + $0x80] sm:$0xff]
  %v3276 = vld [vmem:[%s5 + $0x88] sm:$0xff]
  %v3277 = vld [vmem:[%s5 + $0x90] sm:$0xff]
  %v3278 = vld [vmem:[%s5 + $0x98] sm:$0xff]
  %v3279 = vld [vmem:[%s5 + $0xa0] sm:$0xff]
  %v3280 = vld [vmem:[%s5 + $0xa8] sm:$0xff]
  %v3281 = vld [vmem:[%s5 + $0xb0] sm:$0xff]
  %v3282 = vld [vmem:[%s5 + $0xb8] sm:$0xff]
  %v3283 = vld [vmem:[%s5 + $0xc0] sm:$0xff]
  %v3284 = vld [vmem:[%s5 + $0xc8] sm:$0xff]
  %v3285 = vld [vmem:[%s5 + $0xd0] sm:$0xff]
  %v3286 = vld [vmem:[%s5 + $0xd8] sm:$0xff]
  %v3287 = vld [vmem:[%s5 + $0xe0] sm:$0xff]
  %v3288 = vld [vmem:[%s5 + $0xe8] sm:$0xff]
  %v3289 = vld [vmem:[%s5 + $0xf0] sm:$0xff]
  %v3290 = vld [vmem:[%s5 + $0xf8] sm:$0xff]
  %3292 = vset.pattern.permute.xlu0 0
  %3293 = vperm.xlu0 %3292, %v3259
  %v3294 = vpop.permute.xlu0 %3293
  %3297 = vset.pattern.permute.xlu0 0
  %3298 = vperm.xlu0 %3297, %v3260
  %v3299 = vpop.permute.xlu0 %3298
  %3302 = vset.pattern.permute.xlu0 0
  %3303 = vperm.xlu0 %3302, %v3261
  %v3304 = vpop.permute.xlu0 %3303
  %3307 = vset.pattern.permute.xlu0 0
  %3308 = vperm.xlu0 %3307, %v3262
  %v3309 = vpop.permute.xlu0 %3308
  %3312 = vset.pattern.permute.xlu0 0
  %3313 = vperm.xlu0 %3312, %v3263
  %v3314 = vpop.permute.xlu0 %3313
  %3317 = vset.pattern.permute.xlu0 0
  %3318 = vperm.xlu0 %3317, %v3264
  %v3319 = vpop.permute.xlu0 %3318
  %3322 = vset.pattern.permute.xlu0 0
  %3323 = vperm.xlu0 %3322, %v3265
  %v3324 = vpop.permute.xlu0 %3323
  %3327 = vset.pattern.permute.xlu0 0
  %3328 = vperm.xlu0 %3327, %v3266
  %v3329 = vpop.permute.xlu0 %3328
  %3332 = vset.pattern.permute.xlu0 0
  %3333 = vperm.xlu0 %3332, %v3267
  %v3334 = vpop.permute.xlu0 %3333
  %3337 = vset.pattern.permute.xlu0 0
  %3338 = vperm.xlu0 %3337, %v3268
  %v3339 = vpop.permute.xlu0 %3338
  %3342 = vset.pattern.permute.xlu0 0
  %3343 = vperm.xlu0 %3342, %v3269
  %v3344 = vpop.permute.xlu0 %3343
  %3347 = vset.pattern.permute.xlu0 0
  %3348 = vperm.xlu0 %3347, %v3270
  %v3349 = vpop.permute.xlu0 %3348
  %3352 = vset.pattern.permute.xlu0 0
  %3353 = vperm.xlu0 %3352, %v3271
  %v3354 = vpop.permute.xlu0 %3353
  %3357 = vset.pattern.permute.xlu0 0
  %3358 = vperm.xlu0 %3357, %v3272
  %v3359 = vpop.permute.xlu0 %3358
  %3362 = vset.pattern.permute.xlu0 0
  %3363 = vperm.xlu0 %3362, %v3273
  %v3364 = vpop.permute.xlu0 %3363
  %3367 = vset.pattern.permute.xlu0 0
  %3368 = vperm.xlu0 %3367, %v3274
  %v3369 = vpop.permute.xlu0 %3368
  %3372 = vset.pattern.permute.xlu0 0
  %3373 = vperm.xlu0 %3372, %v3275
  %v3374 = vpop.permute.xlu0 %3373
  %3377 = vset.pattern.permute.xlu0 0
  %3378 = vperm.xlu0 %3377, %v3276
  %v3379 = vpop.permute.xlu0 %3378
  %3382 = vset.pattern.permute.xlu0 0
  %3383 = vperm.xlu0 %3382, %v3277
  %v3384 = vpop.permute.xlu0 %3383
  %3387 = vset.pattern.permute.xlu0 0
  %3388 = vperm.xlu0 %3387, %v3278
  %v3389 = vpop.permute.xlu0 %3388
  %3392 = vset.pattern.permute.xlu0 0
  %3393 = vperm.xlu0 %3392, %v3279
  %v3394 = vpop.permute.xlu0 %3393
  %3397 = vset.pattern.permute.xlu0 0
  %3398 = vperm.xlu0 %3397, %v3280
  %v3399 = vpop.permute.xlu0 %3398
  %3402 = vset.pattern.permute.xlu0 0
  %3403 = vperm.xlu0 %3402, %v3281
  %v3404 = vpop.permute.xlu0 %3403
  %3407 = vset.pattern.permute.xlu0 0
  %3408 = vperm.xlu0 %3407, %v3282
  %v3409 = vpop.permute.xlu0 %3408
  %3412 = vset.pattern.permute.xlu0 0
  %3413 = vperm.xlu0 %3412, %v3283
  %v3414 = vpop.permute.xlu0 %3413
  %3417 = vset.pattern.permute.xlu0 0
  %3418 = vperm.xlu0 %3417, %v3284
  %v3419 = vpop.permute.xlu0 %3418
  %3422 = vset.pattern.permute.xlu0 0
  %3423 = vperm.xlu0 %3422, %v3285
  %v3424 = vpop.permute.xlu0 %3423
  %3427 = vset.pattern.permute.xlu0 0
  %3428 = vperm.xlu0 %3427, %v3286
  %v3429 = vpop.permute.xlu0 %3428
  %3432 = vset.pattern.permute.xlu0 0
  %3433 = vperm.xlu0 %3432, %v3287
  %v3434 = vpop.permute.xlu0 %3433
  %3437 = vset.pattern.permute.xlu0 0
  %3438 = vperm.xlu0 %3437, %v3288
  %v3439 = vpop.permute.xlu0 %3438
  %3442 = vset.pattern.permute.xlu0 0
  %3443 = vperm.xlu0 %3442, %v3289
  %v3444 = vpop.permute.xlu0 %3443
  %3447 = vset.pattern.permute.xlu0 0
  %3448 = vperm.xlu0 %3447, %v3290
  %v3449 = vpop.permute.xlu0 %3448
  %v3579 = vunpack.c.l.b16 %v3023
  %v3580 = vunpack.c.h.b16 %v3023
  %v3581 = vunpack.c.l.b16 %v3024
  %v3582 = vunpack.c.h.b16 %v3024
  %v3583 = vunpack.c.l.b16 %v3025
  %v3584 = vunpack.c.h.b16 %v3025
  %v3585 = vunpack.c.l.b16 %v3026
  %v3586 = vunpack.c.l.b16 %v3027
  %v3587 = vunpack.c.h.b16 %v3027
  %v3588 = vunpack.c.l.b16 %v3028
  %v3589 = vunpack.c.h.b16 %v3028
  %v3590 = vunpack.c.l.b16 %v3029
  %v3591 = vunpack.c.h.b16 %v3029
  %v3592 = vunpack.c.l.b16 %v3030
  %v3593 = vunpack.c.l.b16 %v3031
  %v3594 = vunpack.c.h.b16 %v3031
  %v3595 = vunpack.c.l.b16 %v3032
  %v3596 = vunpack.c.h.b16 %v3032
  %v3597 = vunpack.c.l.b16 %v3033
  %v3598 = vunpack.c.h.b16 %v3033
  %v3599 = vunpack.c.l.b16 %v3034
  %v3600 = vunpack.c.l.b16 %v3035
  %v3601 = vunpack.c.h.b16 %v3035
  %v3602 = vunpack.c.l.b16 %v3036
  %v3603 = vunpack.c.h.b16 %v3036
  %v3604 = vunpack.c.l.b16 %v3037
  %v3605 = vunpack.c.h.b16 %v3037
  %v3606 = vunpack.c.l.b16 %v3038
  %v3607 = vunpack.c.l.b16 %v3039
  %v3608 = vunpack.c.h.b16 %v3039
  %v3609 = vunpack.c.l.b16 %v3040
  %v3610 = vunpack.c.h.b16 %v3040
  %v3611 = vunpack.c.l.b16 %v3041
  %v3612 = vunpack.c.h.b16 %v3041
  %v3613 = vunpack.c.l.b16 %v3042
  %v3614 = vunpack.c.l.b16 %v3043
  %v3615 = vunpack.c.h.b16 %v3043
  %v3616 = vunpack.c.l.b16 %v3044
  %v3617 = vunpack.c.h.b16 %v3044
  %v3618 = vunpack.c.l.b16 %v3045
  %v3619 = vunpack.c.h.b16 %v3045
  %v3620 = vunpack.c.l.b16 %v3046
  %v3621 = vunpack.c.l.b16 %v3047
  %v3622 = vunpack.c.h.b16 %v3047
  %v3623 = vunpack.c.l.b16 %v3048
  %v3624 = vunpack.c.h.b16 %v3048
  %v3625 = vunpack.c.l.b16 %v3049
  %v3626 = vunpack.c.h.b16 %v3049
  %v3627 = vunpack.c.l.b16 %v3050
  %v3628 = vunpack.c.l.b16 %v3051
  %v3629 = vunpack.c.h.b16 %v3051
  %v3630 = vunpack.c.l.b16 %v3052
  %v3631 = vunpack.c.h.b16 %v3052
  %v3632 = vunpack.c.l.b16 %v3053
  %v3633 = vunpack.c.h.b16 %v3053
  %v3634 = vunpack.c.l.b16 %v3054
  %v3635 = vunpack.c.l.b16 %v3055
  %v3636 = vunpack.c.h.b16 %v3055
  %v3637 = vunpack.c.l.b16 %v3056
  %v3638 = vunpack.c.h.b16 %v3056
  %v3639 = vunpack.c.l.b16 %v3057
  %v3640 = vunpack.c.h.b16 %v3057
  %v3641 = vunpack.c.l.b16 %v3058
  %v3642 = vunpack.c.l.b16 %v3059
  %v3643 = vunpack.c.h.b16 %v3059
  %v3644 = vunpack.c.l.b16 %v3060
  %v3645 = vunpack.c.h.b16 %v3060
  %v3646 = vunpack.c.l.b16 %v3061
  %v3647 = vunpack.c.h.b16 %v3061
  %v3648 = vunpack.c.l.b16 %v3062
  %v3649 = vunpack.c.l.b16 %v3063
  %v3650 = vunpack.c.h.b16 %v3063
  %v3651 = vunpack.c.l.b16 %v3064
  %v3652 = vunpack.c.h.b16 %v3064
  %v3653 = vunpack.c.l.b16 %v3065
  %v3654 = vunpack.c.h.b16 %v3065
  %v3655 = vunpack.c.l.b16 %v3066
  %v3656 = vunpack.c.l.b16 %v3067
  %v3657 = vunpack.c.h.b16 %v3067
  %v3658 = vunpack.c.l.b16 %v3068
  %v3659 = vunpack.c.h.b16 %v3068
  %v3660 = vunpack.c.l.b16 %v3069
  %v3661 = vunpack.c.h.b16 %v3069
  %v3662 = vunpack.c.l.b16 %v3070
  %v3663 = vunpack.c.l.b16 %v3071
  %v3664 = vunpack.c.h.b16 %v3071
  %v3665 = vunpack.c.l.b16 %v3072
  %v3666 = vunpack.c.h.b16 %v3072
  %v3667 = vunpack.c.l.b16 %v3073
  %v3668 = vunpack.c.h.b16 %v3073
  %v3669 = vunpack.c.l.b16 %v3074
  %v3670 = vunpack.c.l.b16 %v3075
  %v3671 = vunpack.c.h.b16 %v3075
  %v3672 = vunpack.c.l.b16 %v3076
  %v3673 = vunpack.c.h.b16 %v3076
  %v3674 = vunpack.c.l.b16 %v3077
  %v3675 = vunpack.c.h.b16 %v3077
  %v3676 = vunpack.c.l.b16 %v3078
  %v3677 = vunpack.c.l.b16 %v3079
  %v3678 = vunpack.c.h.b16 %v3079
  %v3679 = vunpack.c.l.b16 %v3080
  %v3680 = vunpack.c.h.b16 %v3080
  %v3681 = vunpack.c.l.b16 %v3081
  %v3682 = vunpack.c.h.b16 %v3081
  %v3683 = vunpack.c.l.b16 %v3082
  %v3684 = vunpack.c.l.b16 %v3083
  %v3685 = vunpack.c.h.b16 %v3083
  %v3686 = vunpack.c.l.b16 %v3084
  %v3687 = vunpack.c.h.b16 %v3084
  %v3688 = vunpack.c.l.b16 %v3085
  %v3689 = vunpack.c.h.b16 %v3085
  %v3690 = vunpack.c.l.b16 %v3086
  %v3691 = vunpack.c.l.b16 %v3087
  %v3692 = vunpack.c.h.b16 %v3087
  %v3693 = vunpack.c.l.b16 %v3088
  %v3694 = vunpack.c.h.b16 %v3088
  %v3695 = vunpack.c.l.b16 %v3089
  %v3696 = vunpack.c.h.b16 %v3089
  %v3697 = vunpack.c.l.b16 %v3090
  %v3698 = vunpack.c.l.b16 %v3091
  %v3699 = vunpack.c.h.b16 %v3091
  %v3700 = vunpack.c.l.b16 %v3092
  %v3701 = vunpack.c.h.b16 %v3092
  %v3702 = vunpack.c.l.b16 %v3093
  %v3703 = vunpack.c.h.b16 %v3093
  %v3704 = vunpack.c.l.b16 %v3094
  %v3705 = vunpack.c.l.b16 %v3095
  %v3706 = vunpack.c.h.b16 %v3095
  %v3707 = vunpack.c.l.b16 %v3096
  %v3708 = vunpack.c.h.b16 %v3096
  %v3709 = vunpack.c.l.b16 %v3097
  %v3710 = vunpack.c.h.b16 %v3097
  %v3711 = vunpack.c.l.b16 %v3098
  %v3712 = vunpack.c.l.b16 %v3099
  %v3713 = vunpack.c.h.b16 %v3099
  %v3714 = vunpack.c.l.b16 %v3100
  %v3715 = vunpack.c.h.b16 %v3100
  %v3716 = vunpack.c.l.b16 %v3101
  %v3717 = vunpack.c.h.b16 %v3101
  %v3718 = vunpack.c.l.b16 %v3102
  %v3719 = vunpack.c.l.b16 %v3103
  %v3720 = vunpack.c.h.b16 %v3103
  %v3721 = vunpack.c.l.b16 %v3104
  %v3722 = vunpack.c.h.b16 %v3104
  %v3723 = vunpack.c.l.b16 %v3105
  %v3724 = vunpack.c.h.b16 %v3105
  %v3725 = vunpack.c.l.b16 %v3106
  %v3726 = vunpack.c.l.b16 %v3107
  %v3727 = vunpack.c.h.b16 %v3107
  %v3728 = vunpack.c.l.b16 %v3108
  %v3729 = vunpack.c.h.b16 %v3108
  %v3730 = vunpack.c.l.b16 %v3109
  %v3731 = vunpack.c.h.b16 %v3109
  %v3732 = vunpack.c.l.b16 %v3110
  %v3733 = vunpack.c.l.b16 %v3111
  %v3734 = vunpack.c.h.b16 %v3111
  %v3735 = vunpack.c.l.b16 %v3112
  %v3736 = vunpack.c.h.b16 %v3112
  %v3737 = vunpack.c.l.b16 %v3113
  %v3738 = vunpack.c.h.b16 %v3113
  %v3739 = vunpack.c.l.b16 %v3114
  %v3740 = vunpack.c.l.b16 %v3115
  %v3741 = vunpack.c.h.b16 %v3115
  %v3742 = vunpack.c.l.b16 %v3116
  %v3743 = vunpack.c.h.b16 %v3116
  %v3744 = vunpack.c.l.b16 %v3117
  %v3745 = vunpack.c.h.b16 %v3117
  %v3746 = vunpack.c.l.b16 %v3118
  %v3747 = vunpack.c.l.b16 %v3119
  %v3748 = vunpack.c.h.b16 %v3119
  %v3749 = vunpack.c.l.b16 %v3120
  %v3750 = vunpack.c.h.b16 %v3120
  %v3751 = vunpack.c.l.b16 %v3121
  %v3752 = vunpack.c.h.b16 %v3121
  %v3753 = vunpack.c.l.b16 %v3122
  %v3754 = vunpack.c.l.b16 %v3123
  %v3755 = vunpack.c.h.b16 %v3123
  %v3756 = vunpack.c.l.b16 %v3124
  %v3757 = vunpack.c.h.b16 %v3124
  %v3758 = vunpack.c.l.b16 %v3125
  %v3759 = vunpack.c.h.b16 %v3125
  %v3760 = vunpack.c.l.b16 %v3126
  %v3761 = vunpack.c.l.b16 %v3127
  %v3762 = vunpack.c.h.b16 %v3127
  %v3763 = vunpack.c.l.b16 %v3128
  %v3764 = vunpack.c.h.b16 %v3128
  %v3765 = vunpack.c.l.b16 %v3129
  %v3766 = vunpack.c.h.b16 %v3129
  %v3767 = vunpack.c.l.b16 %v3130
  %v3768 = vunpack.c.l.b16 %v3131
  %v3769 = vunpack.c.h.b16 %v3131
  %v3770 = vunpack.c.l.b16 %v3132
  %v3771 = vunpack.c.h.b16 %v3132
  %v3772 = vunpack.c.l.b16 %v3133
  %v3773 = vunpack.c.h.b16 %v3133
  %v3774 = vunpack.c.l.b16 %v3134
  %v3775 = vunpack.c.l.b16 %v3135
  %v3776 = vunpack.c.h.b16 %v3135
  %v3777 = vunpack.c.l.b16 %v3136
  %v3778 = vunpack.c.h.b16 %v3136
  %v3779 = vunpack.c.l.b16 %v3137
  %v3780 = vunpack.c.h.b16 %v3137
  %v3781 = vunpack.c.l.b16 %v3138
  %v3782 = vunpack.c.l.b16 %v3139
  %v3783 = vunpack.c.h.b16 %v3139
  %v3784 = vunpack.c.l.b16 %v3140
  %v3785 = vunpack.c.h.b16 %v3140
  %v3786 = vunpack.c.l.b16 %v3141
  %v3787 = vunpack.c.h.b16 %v3141
  %v3788 = vunpack.c.l.b16 %v3142
  %v3789 = vunpack.c.l.b16 %v3143
  %v3790 = vunpack.c.h.b16 %v3143
  %v3791 = vunpack.c.l.b16 %v3144
  %v3792 = vunpack.c.h.b16 %v3144
  %v3793 = vunpack.c.l.b16 %v3145
  %v3794 = vunpack.c.h.b16 %v3145
  %v3795 = vunpack.c.l.b16 %v3146
  %v3796 = vunpack.c.l.b16 %v3147
  %v3797 = vunpack.c.h.b16 %v3147
  %v3798 = vunpack.c.l.b16 %v3148
  %v3799 = vunpack.c.h.b16 %v3148
  %v3800 = vunpack.c.l.b16 %v3149
  %v3801 = vunpack.c.h.b16 %v3149
  %v3802 = vunpack.c.l.b16 %v3150
  %v3803 = vpack.c.b16 %v3586, %v3579
  %v3804 = vpack.c.b16 %v3587, %v3580
  %v3805 = vpack.c.b16 %v3588, %v3581
  %v3806 = vpack.c.b16 %v3589, %v3582
  %v3807 = vpack.c.b16 %v3590, %v3583
  %v3808 = vpack.c.b16 %v3591, %v3584
  %v3809 = vpack.c.b16 %v3592, %v3585
  %v3810 = vpack.c.b16 %v3600, %v3593
  %v3811 = vpack.c.b16 %v3601, %v3594
  %v3812 = vpack.c.b16 %v3602, %v3595
  %v3813 = vpack.c.b16 %v3603, %v3596
  %v3814 = vpack.c.b16 %v3604, %v3597
  %v3815 = vpack.c.b16 %v3605, %v3598
  %v3816 = vpack.c.b16 %v3606, %v3599
  %v3817 = vpack.c.b16 %v3614, %v3607
  %v3818 = vpack.c.b16 %v3615, %v3608
  %v3819 = vpack.c.b16 %v3616, %v3609
  %v3820 = vpack.c.b16 %v3617, %v3610
  %v3821 = vpack.c.b16 %v3618, %v3611
  %v3822 = vpack.c.b16 %v3619, %v3612
  %v3823 = vpack.c.b16 %v3620, %v3613
  %v3824 = vpack.c.b16 %v3628, %v3621
  %v3825 = vpack.c.b16 %v3629, %v3622
  %v3826 = vpack.c.b16 %v3630, %v3623
  %v3827 = vpack.c.b16 %v3631, %v3624
  %v3828 = vpack.c.b16 %v3632, %v3625
  %v3829 = vpack.c.b16 %v3633, %v3626
  %v3830 = vpack.c.b16 %v3634, %v3627
  %v3831 = vpack.c.b16 %v3642, %v3635
  %v3832 = vpack.c.b16 %v3643, %v3636
  %v3833 = vpack.c.b16 %v3644, %v3637
  %v3834 = vpack.c.b16 %v3645, %v3638
  %v3835 = vpack.c.b16 %v3646, %v3639
  %v3836 = vpack.c.b16 %v3647, %v3640
  %v3837 = vpack.c.b16 %v3648, %v3641
  %v3838 = vpack.c.b16 %v3656, %v3649
  %v3839 = vpack.c.b16 %v3657, %v3650
  %v3840 = vpack.c.b16 %v3658, %v3651
  %v3841 = vpack.c.b16 %v3659, %v3652
  %v3842 = vpack.c.b16 %v3660, %v3653
  %v3843 = vpack.c.b16 %v3661, %v3654
  %v3844 = vpack.c.b16 %v3662, %v3655
  %v3845 = vpack.c.b16 %v3670, %v3663
  %v3846 = vpack.c.b16 %v3671, %v3664
  %v3847 = vpack.c.b16 %v3672, %v3665
  %v3848 = vpack.c.b16 %v3673, %v3666
  %v3849 = vpack.c.b16 %v3674, %v3667
  %v3850 = vpack.c.b16 %v3675, %v3668
  %v3851 = vpack.c.b16 %v3676, %v3669
  %v3852 = vpack.c.b16 %v3684, %v3677
  %v3853 = vpack.c.b16 %v3685, %v3678
  %v3854 = vpack.c.b16 %v3686, %v3679
  %v3855 = vpack.c.b16 %v3687, %v3680
  %v3856 = vpack.c.b16 %v3688, %v3681
  %v3857 = vpack.c.b16 %v3689, %v3682
  %v3858 = vpack.c.b16 %v3690, %v3683
  %v3859 = vpack.c.b16 %v3698, %v3691
  %v3860 = vpack.c.b16 %v3699, %v3692
  %v3861 = vpack.c.b16 %v3700, %v3693
  %v3862 = vpack.c.b16 %v3701, %v3694
  %v3863 = vpack.c.b16 %v3702, %v3695
  %v3864 = vpack.c.b16 %v3703, %v3696
  %v3865 = vpack.c.b16 %v3704, %v3697
  %v3866 = vpack.c.b16 %v3712, %v3705
  %v3867 = vpack.c.b16 %v3713, %v3706
  %v3868 = vpack.c.b16 %v3714, %v3707
  %v3869 = vpack.c.b16 %v3715, %v3708
  %v3870 = vpack.c.b16 %v3716, %v3709
  %v3871 = vpack.c.b16 %v3717, %v3710
  %v3872 = vpack.c.b16 %v3718, %v3711
  %v3873 = vpack.c.b16 %v3726, %v3719
  %v3874 = vpack.c.b16 %v3727, %v3720
  %v3875 = vpack.c.b16 %v3728, %v3721
  %v3876 = vpack.c.b16 %v3729, %v3722
  %v3877 = vpack.c.b16 %v3730, %v3723
  %v3878 = vpack.c.b16 %v3731, %v3724
  %v3879 = vpack.c.b16 %v3732, %v3725
  %v3880 = vpack.c.b16 %v3740, %v3733
  %v3881 = vpack.c.b16 %v3741, %v3734
  %v3882 = vpack.c.b16 %v3742, %v3735
  %v3883 = vpack.c.b16 %v3743, %v3736
  %v3884 = vpack.c.b16 %v3744, %v3737
  %v3885 = vpack.c.b16 %v3745, %v3738
  %v3886 = vpack.c.b16 %v3746, %v3739
  %v3887 = vpack.c.b16 %v3754, %v3747
  %v3888 = vpack.c.b16 %v3755, %v3748
  %v3889 = vpack.c.b16 %v3756, %v3749
  %v3890 = vpack.c.b16 %v3757, %v3750
  %v3891 = vpack.c.b16 %v3758, %v3751
  %v3892 = vpack.c.b16 %v3759, %v3752
  %v3893 = vpack.c.b16 %v3760, %v3753
  %v3894 = vpack.c.b16 %v3768, %v3761
  %v3895 = vpack.c.b16 %v3769, %v3762
  %v3896 = vpack.c.b16 %v3770, %v3763
  %v3897 = vpack.c.b16 %v3771, %v3764
  %v3898 = vpack.c.b16 %v3772, %v3765
  %v3899 = vpack.c.b16 %v3773, %v3766
  %v3900 = vpack.c.b16 %v3774, %v3767
  %v3901 = vpack.c.b16 %v3782, %v3775
  %v3902 = vpack.c.b16 %v3783, %v3776
  %v3903 = vpack.c.b16 %v3784, %v3777
  %v3904 = vpack.c.b16 %v3785, %v3778
  %v3905 = vpack.c.b16 %v3786, %v3779
  %v3906 = vpack.c.b16 %v3787, %v3780
  %v3907 = vpack.c.b16 %v3788, %v3781
  %v3908 = vpack.c.b16 %v3796, %v3789
  %v3909 = vpack.c.b16 %v3797, %v3790
  %v3910 = vpack.c.b16 %v3798, %v3791
  %v3911 = vpack.c.b16 %v3799, %v3792
  %v3912 = vpack.c.b16 %v3800, %v3793
  %v3913 = vpack.c.b16 %v3801, %v3794
  %v3914 = vpack.c.b16 %v3802, %v3795
  %v4012 = vsel %vm216, %v3809, 0
  %v4015 = vsel %vm216, %v3816, 0
  %v4018 = vsel %vm216, %v3823, 0
  %v4021 = vsel %vm216, %v3830, 0
  %v4024 = vsel %vm216, %v3837, 0
  %v4027 = vsel %vm216, %v3844, 0
  %v4030 = vsel %vm216, %v3851, 0
  %v4033 = vsel %vm216, %v3858, 0
  %v4036 = vsel %vm216, %v3865, 0
  %v4039 = vsel %vm216, %v3872, 0
  %v4042 = vsel %vm216, %v3879, 0
  %v4045 = vsel %vm216, %v3886, 0
  %v4048 = vsel %vm216, %v3893, 0
  %v4051 = vsel %vm216, %v3900, 0
  %v4054 = vsel %vm216, %v3907, 0
  %v4057 = vsel %vm216, %v3914, 0
  %4059 = vmatprep.subr.bf16.mxu0 %v3152
  %4060 = vmatpush1.bf16.msra.mxu0 %v3151
  %4061 = vmatprep.subr.bf16.mxu0 %v3154
  %4062 = vmatpush1.bf16.msra.mxu0 %v3153
  %4063 = vmatprep.subr.bf16.mxu0 %v3156
  %4064 = vmatpush1.bf16.msra.mxu0 %v3155
  %4065 = vmatprep.subr.bf16.mxu0 %v3158
  %4066 = vmatpush1.bf16.msra.mxu0 %v3157
  %4067 = vmatprep.subr.bf16.mxu0 %v3160
  %4068 = vmatpush1.bf16.msra.mxu0 %v3159
  %4069 = vmatprep.subr.bf16.mxu0 %v3162
  %4070 = vmatpush1.bf16.msra.mxu0 %v3161
  %4071 = vmatprep.subr.bf16.mxu0 %v3164
  %4072 = vmatpush1.bf16.msra.mxu0 %v3163
  %4073 = vmatprep.subr.bf16.mxu0 %v3166
  %4074 = vmatpush1.bf16.msra.mxu0 %v3165
  %4075 = vmatprep.subr.bf16.mxu0 %v3168
  %4076 = vmatpush1.bf16.msra.mxu0 %v3167
  %4077 = vmatprep.subr.bf16.mxu0 %v3170
  %4078 = vmatpush1.bf16.msra.mxu0 %v3169
  %4079 = vmatprep.subr.bf16.mxu0 %v3172
  %4080 = vmatpush1.bf16.msra.mxu0 %v3171
  %4081 = vmatprep.subr.bf16.mxu0 %v3174
  %4082 = vmatpush1.bf16.msra.mxu0 %v3173
  %4083 = vmatprep.subr.bf16.mxu0 %v3176
  %4084 = vmatpush1.bf16.msra.mxu0 %v3175
  %4085 = vmatprep.subr.bf16.mxu0 %v3178
  %4086 = vmatpush1.bf16.msra.mxu0 %v3177
  %4087 = vmatprep.subr.bf16.mxu0 %v3180
  %4088 = vmatpush1.bf16.msra.mxu0 %v3179
  %4089 = vmatprep.subr.bf16.mxu0 %v3182
  %4090 = vmatpush1.bf16.msra.mxu0 %v3181
  %4091 = vmatprep.mubr.bf16.mxu0 %v3804
  %4092 = vmatmul.mubr.bf16.gmra.mrb[0].mxu0 %v3803
  %v4093 = vpop.f32.mrb[0].mxu0
  %v4094 = vadd.f32 %v3294, %v4093
  %v4095 = vpop.f32.mrb[0].mxu0
  %v4096 = vadd.f32 %v3294, %v4095
  %v4097 = vpop.f32.mrb[0].mxu0
  %v4098 = vadd.f32 %v3299, %v4097
  %v4099 = vpop.f32.mrb[0].mxu0
  %v4100 = vadd.f32 %v3299, %v4099
  %4101 = vmatprep.mubr.bf16.mxu0 %v3811
  %4102 = vmatmul.mubr.bf16.gmra.mrb[0].mxu0 %v3810
  %v4103 = vpop.f32.mrb[0].mxu0
  %v4104 = vadd.f32 %v3304, %v4103
  %v4105 = vpop.f32.mrb[0].mxu0
  %v4106 = vadd.f32 %v3304, %v4105
  %v4107 = vpop.f32.mrb[0].mxu0
  %v4108 = vadd.f32 %v3309, %v4107
  %v4109 = vpop.f32.mrb[0].mxu0
  %v4110 = vadd.f32 %v3309, %v4109
  %4111 = vmatprep.mubr.bf16.mxu0 %v3818
  %4112 = vmatmul.mubr.bf16.gmra.mrb[0].mxu0 %v3817
  %v4113 = vpop.f32.mrb[0].mxu0
  %v4114 = vadd.f32 %v3314, %v4113
  %v4115 = vpop.f32.mrb[0].mxu0
  %v4116 = vadd.f32 %v3314, %v4115
  %v4117 = vpop.f32.mrb[0].mxu0
  %v4118 = vadd.f32 %v3319, %v4117
  %v4119 = vpop.f32.mrb[0].mxu0
  %v4120 = vadd.f32 %v3319, %v4119
  %4121 = vmatprep.mubr.bf16.mxu0 %v3825
  %4122 = vmatmul.mubr.bf16.gmra.mrb[0].mxu0 %v3824
  %v4123 = vpop.f32.mrb[0].mxu0
  %v4124 = vadd.f32 %v3324, %v4123
  %v4125 = vpop.f32.mrb[0].mxu0
  %v4126 = vadd.f32 %v3324, %v4125
  %v4127 = vpop.f32.mrb[0].mxu0
  %v4128 = vadd.f32 %v3329, %v4127
  %v4129 = vpop.f32.mrb[0].mxu0
  %v4130 = vadd.f32 %v3329, %v4129
  %4131 = vmatprep.mubr.bf16.mxu0 %v3832
  %4132 = vmatmul.mubr.bf16.gmra.mrb[0].mxu0 %v3831
  %v4133 = vpop.f32.mrb[0].mxu0
  %v4134 = vadd.f32 %v3334, %v4133
  %v4135 = vpop.f32.mrb[0].mxu0
  %v4136 = vadd.f32 %v3334, %v4135
  %v4137 = vpop.f32.mrb[0].mxu0
  %v4138 = vadd.f32 %v3339, %v4137
  %v4139 = vpop.f32.mrb[0].mxu0
  %v4140 = vadd.f32 %v3339, %v4139
  %4141 = vmatprep.mubr.bf16.mxu0 %v3839
  %4142 = vmatmul.mubr.bf16.gmra.mrb[0].mxu0 %v3838
  %v4143 = vpop.f32.mrb[0].mxu0
  %v4144 = vadd.f32 %v3344, %v4143
  %v4145 = vpop.f32.mrb[0].mxu0
  %v4146 = vadd.f32 %v3344, %v4145
  %v4147 = vpop.f32.mrb[0].mxu0
  %v4148 = vadd.f32 %v3349, %v4147
  %v4149 = vpop.f32.mrb[0].mxu0
  %v4150 = vadd.f32 %v3349, %v4149
  %4151 = vmatprep.mubr.bf16.mxu0 %v3846
  %4152 = vmatmul.mubr.bf16.gmra.mrb[0].mxu0 %v3845
  %v4153 = vpop.f32.mrb[0].mxu0
  %v4154 = vadd.f32 %v3354, %v4153
  %v4155 = vpop.f32.mrb[0].mxu0
  %v4156 = vadd.f32 %v3354, %v4155
  %v4157 = vpop.f32.mrb[0].mxu0
  %v4158 = vadd.f32 %v3359, %v4157
  %v4159 = vpop.f32.mrb[0].mxu0
  %v4160 = vadd.f32 %v3359, %v4159
  %4161 = vmatprep.mubr.bf16.mxu0 %v3853
  %4162 = vmatmul.mubr.bf16.gmra.mrb[0].mxu0 %v3852
  %v4163 = vpop.f32.mrb[0].mxu0
  %v4164 = vadd.f32 %v3364, %v4163
  %v4165 = vpop.f32.mrb[0].mxu0
  %v4166 = vadd.f32 %v3364, %v4165
  %v4167 = vpop.f32.mrb[0].mxu0
  %v4168 = vadd.f32 %v3369, %v4167
  %v4169 = vpop.f32.mrb[0].mxu0
  %v4170 = vadd.f32 %v3369, %v4169
  %4171 = vmatprep.mubr.bf16.mxu0 %v3860
  %4172 = vmatmul.mubr.bf16.gmra.mrb[0].mxu0 %v3859
  %v4173 = vpop.f32.mrb[0].mxu0
  %v4174 = vadd.f32 %v3374, %v4173
  %v4175 = vpop.f32.mrb[0].mxu0
  %v4176 = vadd.f32 %v3374, %v4175
  %v4177 = vpop.f32.mrb[0].mxu0
  %v4178 = vadd.f32 %v3379, %v4177
  %v4179 = vpop.f32.mrb[0].mxu0
  %v4180 = vadd.f32 %v3379, %v4179
  %4181 = vmatprep.mubr.bf16.mxu0 %v3867
  %4182 = vmatmul.mubr.bf16.gmra.mrb[0].mxu0 %v3866
  %v4183 = vpop.f32.mrb[0].mxu0
  %v4184 = vadd.f32 %v3384, %v4183
  %v4185 = vpop.f32.mrb[0].mxu0
  %v4186 = vadd.f32 %v3384, %v4185
  %v4187 = vpop.f32.mrb[0].mxu0
  %v4188 = vadd.f32 %v3389, %v4187
  %v4189 = vpop.f32.mrb[0].mxu0
  %v4190 = vadd.f32 %v3389, %v4189
  %4191 = vmatprep.mubr.bf16.mxu0 %v3874
  %4192 = vmatmul.mubr.bf16.gmra.mrb[0].mxu0 %v3873
  %v4193 = vpop.f32.mrb[0].mxu0
  %v4194 = vadd.f32 %v3394, %v4193
  %v4195 = vpop.f32.mrb[0].mxu0
  %v4196 = vadd.f32 %v3394, %v4195
  %v4197 = vpop.f32.mrb[0].mxu0
  %v4198 = vadd.f32 %v3399, %v4197
  %v4199 = vpop.f32.mrb[0].mxu0
  %v4200 = vadd.f32 %v3399, %v4199
  %4201 = vmatprep.mubr.bf16.mxu0 %v3881
  %4202 = vmatmul.mubr.bf16.gmra.mrb[0].mxu0 %v3880
  %v4203 = vpop.f32.mrb[0].mxu0
  %v4204 = vadd.f32 %v3404, %v4203
  %v4205 = vpop.f32.mrb[0].mxu0
  %v4206 = vadd.f32 %v3404, %v4205
  %v4207 = vpop.f32.mrb[0].mxu0
  %v4208 = vadd.f32 %v3409, %v4207
  %v4209 = vpop.f32.mrb[0].mxu0
  %v4210 = vadd.f32 %v3409, %v4209
  %4211 = vmatprep.mubr.bf16.mxu0 %v3888
  %4212 = vmatmul.mubr.bf16.gmra.mrb[0].mxu0 %v3887
  %v4213 = vpop.f32.mrb[0].mxu0
  %v4214 = vadd.f32 %v3414, %v4213
  %v4215 = vpop.f32.mrb[0].mxu0
  %v4216 = vadd.f32 %v3414, %v4215
  %v4217 = vpop.f32.mrb[0].mxu0
  %v4218 = vadd.f32 %v3419, %v4217
  %v4219 = vpop.f32.mrb[0].mxu0
  %v4220 = vadd.f32 %v3419, %v4219
  %4221 = vmatprep.mubr.bf16.mxu0 %v3895
  %4222 = vmatmul.mubr.bf16.gmra.mrb[0].mxu0 %v3894
  %v4223 = vpop.f32.mrb[0].mxu0
  %v4224 = vadd.f32 %v3424, %v4223
  %v4225 = vpop.f32.mrb[0].mxu0
  %v4226 = vadd.f32 %v3424, %v4225
  %v4227 = vpop.f32.mrb[0].mxu0
  %v4228 = vadd.f32 %v3429, %v4227
  %v4229 = vpop.f32.mrb[0].mxu0
  %v4230 = vadd.f32 %v3429, %v4229
  %4231 = vmatprep.mubr.bf16.mxu0 %v3902
  %4232 = vmatmul.mubr.bf16.gmra.mrb[0].mxu0 %v3901
  %v4233 = vpop.f32.mrb[0].mxu0
  %v4234 = vadd.f32 %v3434, %v4233
  %v4235 = vpop.f32.mrb[0].mxu0
  %v4236 = vadd.f32 %v3434, %v4235
  %v4237 = vpop.f32.mrb[0].mxu0
  %v4238 = vadd.f32 %v3439, %v4237
  %v4239 = vpop.f32.mrb[0].mxu0
  %v4240 = vadd.f32 %v3439, %v4239
  %4241 = vmatprep.mubr.bf16.mxu0 %v3909
  %4242 = vmatmul.mubr.bf16.gmra.mrb[0].mxu0 %v3908
  %v4243 = vpop.f32.mrb[0].mxu0
  %v4244 = vadd.f32 %v3444, %v4243
  %v4245 = vpop.f32.mrb[0].mxu0
  %v4246 = vadd.f32 %v3444, %v4245
  %v4247 = vpop.f32.mrb[0].mxu0
  %v4248 = vadd.f32 %v3449, %v4247
  %v4249 = vpop.f32.mrb[0].mxu0
  %v4250 = vadd.f32 %v3449, %v4249
  %4251 = vdwg.mxu0
  %4252 = vmatprep.subr.bf16.mxu0 %v3184
  %4253 = vmatpush1.bf16.msra.mxu0 %v3183
  %4254 = vmatprep.subr.bf16.mxu0 %v3186
  %4255 = vmatpush1.bf16.msra.mxu0 %v3185
  %4256 = vmatprep.subr.bf16.mxu0 %v3188
  %4257 = vmatpush1.bf16.msra.mxu0 %v3187
  %4258 = vmatprep.subr.bf16.mxu0 %v3190
  %4259 = vmatpush1.bf16.msra.mxu0 %v3189
  %4260 = vmatprep.subr.bf16.mxu0 %v3192
  %4261 = vmatpush1.bf16.msra.mxu0 %v3191
  %4262 = vmatprep.subr.bf16.mxu0 %v3194
  %4263 = vmatpush1.bf16.msra.mxu0 %v3193
  %4264 = vmatprep.subr.bf16.mxu0 %v3196
  %4265 = vmatpush1.bf16.msra.mxu0 %v3195
  %4266 = vmatprep.subr.bf16.mxu0 %v3198
  %4267 = vmatpush1.bf16.msra.mxu0 %v3197
  %4268 = vmatprep.subr.bf16.mxu0 %v3200
  %4269 = vmatpush1.bf16.msra.mxu0 %v3199
  %4270 = vmatprep.subr.bf16.mxu0 %v3202
  %4271 = vmatpush1.bf16.msra.mxu0 %v3201
  %4272 = vmatprep.subr.bf16.mxu0 %v3204
  %4273 = vmatpush1.bf16.msra.mxu0 %v3203
  %4274 = vmatprep.subr.bf16.mxu0 %v3206
  %4275 = vmatpush1.bf16.msra.mxu0 %v3205
  %4276 = vmatprep.subr.bf16.mxu0 %v3208
  %4277 = vmatpush1.bf16.msra.mxu0 %v3207
  %4278 = vmatprep.subr.bf16.mxu0 %v3210
  %4279 = vmatpush1.bf16.msra.mxu0 %v3209
  %4280 = vmatprep.subr.bf16.mxu0 %v3212
  %4281 = vmatpush1.bf16.msra.mxu0 %v3211
  %4282 = vmatprep.subr.bf16.mxu0 %v3214
  %4283 = vmatpush1.bf16.msra.mxu0 %v3213
  %4284 = vmatprep.mubr.bf16.mxu0 %v3806
  %4285 = vmatmul.mubr.bf16.gmra.mrb[0].mxu0 %v3805
  %v4286 = vpop.f32.mrb[0].mxu0
  %v4287 = vadd.f32 %v4094, %v4286
  %v4288 = vpop.f32.mrb[0].mxu0
  %v4289 = vadd.f32 %v4096, %v4288
  %v4290 = vpop.f32.mrb[0].mxu0
  %v4291 = vadd.f32 %v4098, %v4290
  %v4292 = vpop.f32.mrb[0].mxu0
  %v4293 = vadd.f32 %v4100, %v4292
  %4294 = vmatprep.mubr.bf16.mxu0 %v3813
  %4295 = vmatmul.mubr.bf16.gmra.mrb[0].mxu0 %v3812
  %v4296 = vpop.f32.mrb[0].mxu0
  %v4297 = vadd.f32 %v4104, %v4296
  %v4298 = vpop.f32.mrb[0].mxu0
  %v4299 = vadd.f32 %v4106, %v4298
  %v4300 = vpop.f32.mrb[0].mxu0
  %v4301 = vadd.f32 %v4108, %v4300
  %v4302 = vpop.f32.mrb[0].mxu0
  %v4303 = vadd.f32 %v4110, %v4302
  %4304 = vmatprep.mubr.bf16.mxu0 %v3820
  %4305 = vmatmul.mubr.bf16.gmra.mrb[0].mxu0 %v3819
  %v4306 = vpop.f32.mrb[0].mxu0
  %v4307 = vadd.f32 %v4114, %v4306
  %v4308 = vpop.f32.mrb[0].mxu0
  %v4309 = vadd.f32 %v4116, %v4308
  %v4310 = vpop.f32.mrb[0].mxu0
  %v4311 = vadd.f32 %v4118, %v4310
  %v4312 = vpop.f32.mrb[0].mxu0
  %v4313 = vadd.f32 %v4120, %v4312
  %4314 = vmatprep.mubr.bf16.mxu0 %v3827
  %4315 = vmatmul.mubr.bf16.gmra.mrb[0].mxu0 %v3826
  %v4316 = vpop.f32.mrb[0].mxu0
  %v4317 = vadd.f32 %v4124, %v4316
  %v4318 = vpop.f32.mrb[0].mxu0
  %v4319 = vadd.f32 %v4126, %v4318
  %v4320 = vpop.f32.mrb[0].mxu0
  %v4321 = vadd.f32 %v4128, %v4320
  %v4322 = vpop.f32.mrb[0].mxu0
  %v4323 = vadd.f32 %v4130, %v4322
  %4324 = vmatprep.mubr.bf16.mxu0 %v3834
  %4325 = vmatmul.mubr.bf16.gmra.mrb[0].mxu0 %v3833
  %v4326 = vpop.f32.mrb[0].mxu0
  %v4327 = vadd.f32 %v4134, %v4326
  %v4328 = vpop.f32.mrb[0].mxu0
  %v4329 = vadd.f32 %v4136, %v4328
  %v4330 = vpop.f32.mrb[0].mxu0
  %v4331 = vadd.f32 %v4138, %v4330
  %v4332 = vpop.f32.mrb[0].mxu0
  %v4333 = vadd.f32 %v4140, %v4332
  %4334 = vmatprep.mubr.bf16.mxu0 %v3841
  %4335 = vmatmul.mubr.bf16.gmra.mrb[0].mxu0 %v3840
  %v4336 = vpop.f32.mrb[0].mxu0
  %v4337 = vadd.f32 %v4144, %v4336
  %v4338 = vpop.f32.mrb[0].mxu0
  %v4339 = vadd.f32 %v4146, %v4338
  %v4340 = vpop.f32.mrb[0].mxu0
  %v4341 = vadd.f32 %v4148, %v4340
  %v4342 = vpop.f32.mrb[0].mxu0
  %v4343 = vadd.f32 %v4150, %v4342
  %4344 = vmatprep.mubr.bf16.mxu0 %v3848
  %4345 = vmatmul.mubr.bf16.gmra.mrb[0].mxu0 %v3847
  %v4346 = vpop.f32.mrb[0].mxu0
  %v4347 = vadd.f32 %v4154, %v4346
  %v4348 = vpop.f32.mrb[0].mxu0
  %v4349 = vadd.f32 %v4156, %v4348
  %v4350 = vpop.f32.mrb[0].mxu0
  %v4351 = vadd.f32 %v4158, %v4350
  %v4352 = vpop.f32.mrb[0].mxu0
  %v4353 = vadd.f32 %v4160, %v4352
  %4354 = vmatprep.mubr.bf16.mxu0 %v3855
  %4355 = vmatmul.mubr.bf16.gmra.mrb[0].mxu0 %v3854
  %v4356 = vpop.f32.mrb[0].mxu0
  %v4357 = vadd.f32 %v4164, %v4356
  %v4358 = vpop.f32.mrb[0].mxu0
  %v4359 = vadd.f32 %v4166, %v4358
  %v4360 = vpop.f32.mrb[0].mxu0
  %v4361 = vadd.f32 %v4168, %v4360
  %v4362 = vpop.f32.mrb[0].mxu0
  %v4363 = vadd.f32 %v4170, %v4362
  %4364 = vmatprep.mubr.bf16.mxu0 %v3862
  %4365 = vmatmul.mubr.bf16.gmra.mrb[0].mxu0 %v3861
  %v4366 = vpop.f32.mrb[0].mxu0
  %v4367 = vadd.f32 %v4174, %v4366
  %v4368 = vpop.f32.mrb[0].mxu0
  %v4369 = vadd.f32 %v4176, %v4368
  %v4370 = vpop.f32.mrb[0].mxu0
  %v4371 = vadd.f32 %v4178, %v4370
  %v4372 = vpop.f32.mrb[0].mxu0
  %v4373 = vadd.f32 %v4180, %v4372
  %4374 = vmatprep.mubr.bf16.mxu0 %v3869
  %4375 = vmatmul.mubr.bf16.gmra.mrb[0].mxu0 %v3868
  %v4376 = vpop.f32.mrb[0].mxu0
  %v4377 = vadd.f32 %v4184, %v4376
  %v4378 = vpop.f32.mrb[0].mxu0
  %v4379 = vadd.f32 %v4186, %v4378
  %v4380 = vpop.f32.mrb[0].mxu0
  %v4381 = vadd.f32 %v4188, %v4380
  %v4382 = vpop.f32.mrb[0].mxu0
  %v4383 = vadd.f32 %v4190, %v4382
  %4384 = vmatprep.mubr.bf16.mxu0 %v3876
  %4385 = vmatmul.mubr.bf16.gmra.mrb[0].mxu0 %v3875
  %v4386 = vpop.f32.mrb[0].mxu0
  %v4387 = vadd.f32 %v4194, %v4386
  %v4388 = vpop.f32.mrb[0].mxu0
  %v4389 = vadd.f32 %v4196, %v4388
  %v4390 = vpop.f32.mrb[0].mxu0
  %v4391 = vadd.f32 %v4198, %v4390
  %v4392 = vpop.f32.mrb[0].mxu0
  %v4393 = vadd.f32 %v4200, %v4392
  %4394 = vmatprep.mubr.bf16.mxu0 %v3883
  %4395 = vmatmul.mubr.bf16.gmra.mrb[0].mxu0 %v3882
  %v4396 = vpop.f32.mrb[0].mxu0
  %v4397 = vadd.f32 %v4204, %v4396
  %v4398 = vpop.f32.mrb[0].mxu0
  %v4399 = vadd.f32 %v4206, %v4398
  %v4400 = vpop.f32.mrb[0].mxu0
  %v4401 = vadd.f32 %v4208, %v4400
  %v4402 = vpop.f32.mrb[0].mxu0
  %v4403 = vadd.f32 %v4210, %v4402
  %4404 = vmatprep.mubr.bf16.mxu0 %v3890
  %4405 = vmatmul.mubr.bf16.gmra.mrb[0].mxu0 %v3889
  %v4406 = vpop.f32.mrb[0].mxu0
  %v4407 = vadd.f32 %v4214, %v4406
  %v4408 = vpop.f32.mrb[0].mxu0
  %v4409 = vadd.f32 %v4216, %v4408
  %v4410 = vpop.f32.mrb[0].mxu0
  %v4411 = vadd.f32 %v4218, %v4410
  %v4412 = vpop.f32.mrb[0].mxu0
  %v4413 = vadd.f32 %v4220, %v4412
  %4414 = vmatprep.mubr.bf16.mxu0 %v3897
  %4415 = vmatmul.mubr.bf16.gmra.mrb[0].mxu0 %v3896
  %v4416 = vpop.f32.mrb[0].mxu0
  %v4417 = vadd.f32 %v4224, %v4416
  %v4418 = vpop.f32.mrb[0].mxu0
  %v4419 = vadd.f32 %v4226, %v4418
  %v4420 = vpop.f32.mrb[0].mxu0
  %v4421 = vadd.f32 %v4228, %v4420
  %v4422 = vpop.f32.mrb[0].mxu0
  %v4423 = vadd.f32 %v4230, %v4422
  %4424 = vmatprep.mubr.bf16.mxu0 %v3904
  %4425 = vmatmul.mubr.bf16.gmra.mrb[0].mxu0 %v3903
  %v4426 = vpop.f32.mrb[0].mxu0
  %v4427 = vadd.f32 %v4234, %v4426
  %v4428 = vpop.f32.mrb[0].mxu0
  %v4429 = vadd.f32 %v4236, %v4428
  %v4430 = vpop.f32.mrb[0].mxu0
  %v4431 = vadd.f32 %v4238, %v4430
  %v4432 = vpop.f32.mrb[0].mxu0
  %v4433 = vadd.f32 %v4240, %v4432
  %4434 = vmatprep.mubr.bf16.mxu0 %v3911
  %4435 = vmatmul.mubr.bf16.gmra.mrb[0].mxu0 %v3910
  %v4436 = vpop.f32.mrb[0].mxu0
  %v4437 = vadd.f32 %v4244, %v4436
  %v4438 = vpop.f32.mrb[0].mxu0
  %v4439 = vadd.f32 %v4246, %v4438
  %v4440 = vpop.f32.mrb[0].mxu0
  %v4441 = vadd.f32 %v4248, %v4440
  %v4442 = vpop.f32.mrb[0].mxu0
  %v4443 = vadd.f32 %v4250, %v4442
  %4444 = vdwg.mxu0
  %4445 = vmatprep.subr.bf16.mxu0 %v3216
  %4446 = vmatpush1.bf16.msra.mxu0 %v3215
  %4447 = vmatprep.subr.bf16.mxu0 %v3218
  %4448 = vmatpush1.bf16.msra.mxu0 %v3217
  %4449 = vmatprep.subr.bf16.mxu0 %v3220
  %4450 = vmatpush1.bf16.msra.mxu0 %v3219
  %4451 = vmatprep.subr.bf16.mxu0 %v3222
  %4452 = vmatpush1.bf16.msra.mxu0 %v3221
  %4453 = vmatprep.subr.bf16.mxu0 %v3224
  %4454 = vmatpush1.bf16.msra.mxu0 %v3223
  %4455 = vmatprep.subr.bf16.mxu0 %v3226
  %4456 = vmatpush1.bf16.msra.mxu0 %v3225
  %4457 = vmatprep.subr.bf16.mxu0 %v3228
  %4458 = vmatpush1.bf16.msra.mxu0 %v3227
  %4459 = vmatprep.subr.bf16.mxu0 %v3230
  %4460 = vmatpush1.bf16.msra.mxu0 %v3229
  %4461 = vmatprep.subr.bf16.mxu0 %v3232
  %4462 = vmatpush1.bf16.msra.mxu0 %v3231
  %4463 = vmatprep.subr.bf16.mxu0 %v3234
  %4464 = vmatpush1.bf16.msra.mxu0 %v3233
  %4465 = vmatprep.subr.bf16.mxu0 %v3236
  %4466 = vmatpush1.bf16.msra.mxu0 %v3235
  %4467 = vmatprep.subr.bf16.mxu0 %v3238
  %4468 = vmatpush1.bf16.msra.mxu0 %v3237
  %4469 = vmatprep.subr.bf16.mxu0 %v3240
  %4470 = vmatpush1.bf16.msra.mxu0 %v3239
  %4471 = vmatprep.subr.bf16.mxu0 %v3242
  %4472 = vmatpush1.bf16.msra.mxu0 %v3241
  %4473 = vmatprep.subr.bf16.mxu0 %v3244
  %4474 = vmatpush1.bf16.msra.mxu0 %v3243
  %4475 = vmatprep.subr.bf16.mxu0 %v3246
  %4476 = vmatpush1.bf16.msra.mxu0 %v3245
  %4477 = vmatprep.mubr.bf16.mxu0 %v3808
  %4478 = vmatmul.mubr.bf16.gmra.mrb[0].mxu0 %v3807
  %v4479 = vpop.f32.mrb[0].mxu0
  %v4480 = vadd.f32 %v4287, %v4479
  %v4481 = vpop.f32.mrb[0].mxu0
  %v4482 = vadd.f32 %v4289, %v4481
  %v4483 = vpop.f32.mrb[0].mxu0
  %v4484 = vadd.f32 %v4291, %v4483
  %v4485 = vpop.f32.mrb[0].mxu0
  %v4486 = vadd.f32 %v4293, %v4485
  %4487 = vmatprep.mubr.bf16.mxu0 %v3815
  %4488 = vmatmul.mubr.bf16.gmra.mrb[0].mxu0 %v3814
  %v4489 = vpop.f32.mrb[0].mxu0
  %v4490 = vadd.f32 %v4297, %v4489
  %v4491 = vpop.f32.mrb[0].mxu0
  %v4492 = vadd.f32 %v4299, %v4491
  %v4493 = vpop.f32.mrb[0].mxu0
  %v4494 = vadd.f32 %v4301, %v4493
  %v4495 = vpop.f32.mrb[0].mxu0
  %v4496 = vadd.f32 %v4303, %v4495
  %4497 = vmatprep.mubr.bf16.mxu0 %v3822
  %4498 = vmatmul.mubr.bf16.gmra.mrb[0].mxu0 %v3821
  %v4499 = vpop.f32.mrb[0].mxu0
  %v4500 = vadd.f32 %v4307, %v4499
  %v4501 = vpop.f32.mrb[0].mxu0
  %v4502 = vadd.f32 %v4309, %v4501
  %v4503 = vpop.f32.mrb[0].mxu0
  %v4504 = vadd.f32 %v4311, %v4503
  %v4505 = vpop.f32.mrb[0].mxu0
  %v4506 = vadd.f32 %v4313, %v4505
  %4507 = vmatprep.mubr.bf16.mxu0 %v3829
  %4508 = vmatmul.mubr.bf16.gmra.mrb[0].mxu0 %v3828
  %v4509 = vpop.f32.mrb[0].mxu0
  %v4510 = vadd.f32 %v4317, %v4509
  %v4511 = vpop.f32.mrb[0].mxu0
  %v4512 = vadd.f32 %v4319, %v4511
  %v4513 = vpop.f32.mrb[0].mxu0
  %v4514 = vadd.f32 %v4321, %v4513
  %v4515 = vpop.f32.mrb[0].mxu0
  %v4516 = vadd.f32 %v4323, %v4515
  %4517 = vmatprep.mubr.bf16.mxu0 %v3836
  %4518 = vmatmul.mubr.bf16.gmra.mrb[0].mxu0 %v3835
  %v4519 = vpop.f32.mrb[0].mxu0
  %v4520 = vadd.f32 %v4327, %v4519
  %v4521 = vpop.f32.mrb[0].mxu0
  %v4522 = vadd.f32 %v4329, %v4521
  %v4523 = vpop.f32.mrb[0].mxu0
  %v4524 = vadd.f32 %v4331, %v4523
  %v4525 = vpop.f32.mrb[0].mxu0
  %v4526 = vadd.f32 %v4333, %v4525
  %4527 = vmatprep.mubr.bf16.mxu0 %v3843
  %4528 = vmatmul.mubr.bf16.gmra.mrb[0].mxu0 %v3842
  %v4529 = vpop.f32.mrb[0].mxu0
  %v4530 = vadd.f32 %v4337, %v4529
  %v4531 = vpop.f32.mrb[0].mxu0
  %v4532 = vadd.f32 %v4339, %v4531
  %v4533 = vpop.f32.mrb[0].mxu0
  %v4534 = vadd.f32 %v4341, %v4533
  %v4535 = vpop.f32.mrb[0].mxu0
  %v4536 = vadd.f32 %v4343, %v4535
  %4537 = vmatprep.mubr.bf16.mxu0 %v3850
  %4538 = vmatmul.mubr.bf16.gmra.mrb[0].mxu0 %v3849
  %v4539 = vpop.f32.mrb[0].mxu0
  %v4540 = vadd.f32 %v4347, %v4539
  %v4541 = vpop.f32.mrb[0].mxu0
  %v4542 = vadd.f32 %v4349, %v4541
  %v4543 = vpop.f32.mrb[0].mxu0
  %v4544 = vadd.f32 %v4351, %v4543
  %v4545 = vpop.f32.mrb[0].mxu0
  %v4546 = vadd.f32 %v4353, %v4545
  %4547 = vmatprep.mubr.bf16.mxu0 %v3857
  %4548 = vmatmul.mubr.bf16.gmra.mrb[0].mxu0 %v3856
  %v4549 = vpop.f32.mrb[0].mxu0
  %v4550 = vadd.f32 %v4357, %v4549
  %v4551 = vpop.f32.mrb[0].mxu0
  %v4552 = vadd.f32 %v4359, %v4551
  %v4553 = vpop.f32.mrb[0].mxu0
  %v4554 = vadd.f32 %v4361, %v4553
  %v4555 = vpop.f32.mrb[0].mxu0
  %v4556 = vadd.f32 %v4363, %v4555
  %4557 = vmatprep.mubr.bf16.mxu0 %v3864
  %4558 = vmatmul.mubr.bf16.gmra.mrb[0].mxu0 %v3863
  %v4559 = vpop.f32.mrb[0].mxu0
  %v4560 = vadd.f32 %v4367, %v4559
  %v4561 = vpop.f32.mrb[0].mxu0
  %v4562 = vadd.f32 %v4369, %v4561
  %v4563 = vpop.f32.mrb[0].mxu0
  %v4564 = vadd.f32 %v4371, %v4563
  %v4565 = vpop.f32.mrb[0].mxu0
  %v4566 = vadd.f32 %v4373, %v4565
  %4567 = vmatprep.mubr.bf16.mxu0 %v3871
  %4568 = vmatmul.mubr.bf16.gmra.mrb[0].mxu0 %v3870
  %v4569 = vpop.f32.mrb[0].mxu0
  %v4570 = vadd.f32 %v4377, %v4569
  %v4571 = vpop.f32.mrb[0].mxu0
  %v4572 = vadd.f32 %v4379, %v4571
  %v4573 = vpop.f32.mrb[0].mxu0
  %v4574 = vadd.f32 %v4381, %v4573
  %v4575 = vpop.f32.mrb[0].mxu0
  %v4576 = vadd.f32 %v4383, %v4575
  %4577 = vmatprep.mubr.bf16.mxu0 %v3878
  %4578 = vmatmul.mubr.bf16.gmra.mrb[0].mxu0 %v3877
  %v4579 = vpop.f32.mrb[0].mxu0
  %v4580 = vadd.f32 %v4387, %v4579
  %v4581 = vpop.f32.mrb[0].mxu0
  %v4582 = vadd.f32 %v4389, %v4581
  %v4583 = vpop.f32.mrb[0].mxu0
  %v4584 = vadd.f32 %v4391, %v4583
  %v4585 = vpop.f32.mrb[0].mxu0
  %v4586 = vadd.f32 %v4393, %v4585
  %4587 = vmatprep.mubr.bf16.mxu0 %v3885
  %4588 = vmatmul.mubr.bf16.gmra.mrb[0].mxu0 %v3884
  %v4589 = vpop.f32.mrb[0].mxu0
  %v4590 = vadd.f32 %v4397, %v4589
  %v4591 = vpop.f32.mrb[0].mxu0
  %v4592 = vadd.f32 %v4399, %v4591
  %v4593 = vpop.f32.mrb[0].mxu0
  %v4594 = vadd.f32 %v4401, %v4593
  %v4595 = vpop.f32.mrb[0].mxu0
  %v4596 = vadd.f32 %v4403, %v4595
  %4597 = vmatprep.mubr.bf16.mxu0 %v3892
  %4598 = vmatmul.mubr.bf16.gmra.mrb[0].mxu0 %v3891
  %v4599 = vpop.f32.mrb[0].mxu0
  %v4600 = vadd.f32 %v4407, %v4599
  %v4601 = vpop.f32.mrb[0].mxu0
  %v4602 = vadd.f32 %v4409, %v4601
  %v4603 = vpop.f32.mrb[0].mxu0
  %v4604 = vadd.f32 %v4411, %v4603
  %v4605 = vpop.f32.mrb[0].mxu0
  %v4606 = vadd.f32 %v4413, %v4605
  %4607 = vmatprep.mubr.bf16.mxu0 %v3899
  %4608 = vmatmul.mubr.bf16.gmra.mrb[0].mxu0 %v3898
  %v4609 = vpop.f32.mrb[0].mxu0
  %v4610 = vadd.f32 %v4417, %v4609
  %v4611 = vpop.f32.mrb[0].mxu0
  %v4612 = vadd.f32 %v4419, %v4611
  %v4613 = vpop.f32.mrb[0].mxu0
  %v4614 = vadd.f32 %v4421, %v4613
  %v4615 = vpop.f32.mrb[0].mxu0
  %v4616 = vadd.f32 %v4423, %v4615
  %4617 = vmatprep.mubr.bf16.mxu0 %v3906
  %4618 = vmatmul.mubr.bf16.gmra.mrb[0].mxu0 %v3905
  %v4619 = vpop.f32.mrb[0].mxu0
  %v4620 = vadd.f32 %v4427, %v4619
  %v4621 = vpop.f32.mrb[0].mxu0
  %v4622 = vadd.f32 %v4429, %v4621
  %v4623 = vpop.f32.mrb[0].mxu0
  %v4624 = vadd.f32 %v4431, %v4623
  %v4625 = vpop.f32.mrb[0].mxu0
  %v4626 = vadd.f32 %v4433, %v4625
  %4627 = vmatprep.mubr.bf16.mxu0 %v3913
  %4628 = vmatmul.mubr.bf16.gmra.mrb[0].mxu0 %v3912
  %v4629 = vpop.f32.mrb[0].mxu0
  %v4630 = vadd.f32 %v4437, %v4629
  %v4631 = vpop.f32.mrb[0].mxu0
  %v4632 = vadd.f32 %v4439, %v4631
  %v4633 = vpop.f32.mrb[0].mxu0
  %v4634 = vadd.f32 %v4441, %v4633
  %v4635 = vpop.f32.mrb[0].mxu0
  %v4636 = vadd.f32 %v4443, %v4635
  %4637 = vdwg.mxu0
  %4638 = vmatprep.subr.bf16.mxu0 %v3248
  %4639 = vmatpush1.bf16.msra.mxu0 %v3247
  %4640 = vmatprep.subr.bf16.mxu0 %v3250
  %4641 = vmatpush1.bf16.msra.mxu0 %v3249
  %4642 = vmatprep.subr.bf16.mxu0 %v3252
  %4643 = vmatpush1.bf16.msra.mxu0 %v3251
  %4644 = vmatprep.subr.bf16.mxu0 %v3254
  %4645 = vmatpush1.bf16.msra.mxu0 %v3253
  %4646 = vmatprep.subr.bf16.mxu0 %v3256
  %4647 = vmatpush1.bf16.msra.mxu0 %v3255
  %4648 = vmatprep.subr.bf16.mxu0 %v3258
  %4649 = vmatpush1.bf16.msra.mxu0 %v3257
  %4650 = vmatprep.subr.bf16.mxu0 0
  %4651 = vmatpush1.bf16.msra.mxu0 0
  %4652 = vmatprep.subr.bf16.mxu0 0
  %4653 = vmatpush1.bf16.msra.mxu0 0
  %4654 = vmatprep.subr.bf16.mxu0 0
  %4655 = vmatpush1.bf16.msra.mxu0 0
  %4656 = vmatprep.subr.bf16.mxu0 0
  %4657 = vmatpush1.bf16.msra.mxu0 0
  %4658 = vmatprep.subr.bf16.mxu0 0
  %4659 = vmatpush1.bf16.msra.mxu0 0
  %4660 = vmatprep.subr.bf16.mxu0 0
  %4661 = vmatpush1.bf16.msra.mxu0 0
  %4662 = vmatprep.subr.bf16.mxu0 0
  %4663 = vmatpush1.bf16.msra.mxu0 0
  %4664 = vmatprep.subr.bf16.mxu0 0
  %4665 = vmatpush1.bf16.msra.mxu0 0
  %4666 = vmatprep.subr.bf16.mxu0 0
  %4667 = vmatpush1.bf16.msra.mxu0 0
  %4668 = vmatprep.subr.bf16.mxu0 0
  %4669 = vmatpush1.bf16.msra.mxu0 0
  %4670 = vmatprep.mubr.bf16.mxu0 0
  %4671 = vmatmul.mubr.bf16.gmra.mrb[0].mxu0 %v4012
  %v4672 = vpop.f32.mrb[0].mxu0
  %v4673 = vadd.f32 %v4480, %v4672
  %v4674 = vpop.f32.mrb[0].mxu0
  %v4675 = vadd.f32 %v4482, %v4674
  %v4676 = vpop.f32.mrb[0].mxu0
  %v4677 = vadd.f32 %v4484, %v4676
  %v4678 = vpop.f32.mrb[0].mxu0
  %v4679 = vadd.f32 %v4486, %v4678
  %4680 = vmatprep.mubr.bf16.mxu0 0
  %4681 = vmatmul.mubr.bf16.gmra.mrb[0].mxu0 %v4015
  %v4682 = vpop.f32.mrb[0].mxu0
  %v4683 = vadd.f32 %v4490, %v4682
  %v4684 = vpop.f32.mrb[0].mxu0
  %v4685 = vadd.f32 %v4492, %v4684
  %v4686 = vpop.f32.mrb[0].mxu0
  %v4687 = vadd.f32 %v4494, %v4686
  %v4688 = vpop.f32.mrb[0].mxu0
  %v4689 = vadd.f32 %v4496, %v4688
  %4690 = vmatprep.mubr.bf16.mxu0 0
  %4691 = vmatmul.mubr.bf16.gmra.mrb[0].mxu0 %v4018
  %v4692 = vpop.f32.mrb[0].mxu0
  %v4693 = vadd.f32 %v4500, %v4692
  %v4694 = vpop.f32.mrb[0].mxu0
  %v4695 = vadd.f32 %v4502, %v4694
  %v4696 = vpop.f32.mrb[0].mxu0
  %v4697 = vadd.f32 %v4504, %v4696
  %v4698 = vpop.f32.mrb[0].mxu0
  %v4699 = vadd.f32 %v4506, %v4698
  %4700 = vmatprep.mubr.bf16.mxu0 0
  %4701 = vmatmul.mubr.bf16.gmra.mrb[0].mxu0 %v4021
  %v4702 = vpop.f32.mrb[0].mxu0
  %v4703 = vadd.f32 %v4510, %v4702
  %v4704 = vpop.f32.mrb[0].mxu0
  %v4705 = vadd.f32 %v4512, %v4704
  %v4706 = vpop.f32.mrb[0].mxu0
  %v4707 = vadd.f32 %v4514, %v4706
  %v4708 = vpop.f32.mrb[0].mxu0
  %v4709 = vadd.f32 %v4516, %v4708
  %4710 = vmatprep.mubr.bf16.mxu0 0
  %4711 = vmatmul.mubr.bf16.gmra.mrb[0].mxu0 %v4024
  %v4712 = vpop.f32.mrb[0].mxu0
  %v4713 = vadd.f32 %v4520, %v4712
  %v4714 = vpop.f32.mrb[0].mxu0
  %v4715 = vadd.f32 %v4522, %v4714
  %v4716 = vpop.f32.mrb[0].mxu0
  %v4717 = vadd.f32 %v4524, %v4716
  %v4718 = vpop.f32.mrb[0].mxu0
  %v4719 = vadd.f32 %v4526, %v4718
  %4720 = vmatprep.mubr.bf16.mxu0 0
  %4721 = vmatmul.mubr.bf16.gmra.mrb[0].mxu0 %v4027
  %v4722 = vpop.f32.mrb[0].mxu0
  %v4723 = vadd.f32 %v4530, %v4722
  %v4724 = vpop.f32.mrb[0].mxu0
  %v4725 = vadd.f32 %v4532, %v4724
  %v4726 = vpop.f32.mrb[0].mxu0
  %v4727 = vadd.f32 %v4534, %v4726
  %v4728 = vpop.f32.mrb[0].mxu0
  %v4729 = vadd.f32 %v4536, %v4728
  %4730 = vmatprep.mubr.bf16.mxu0 0
  %4731 = vmatmul.mubr.bf16.gmra.mrb[0].mxu0 %v4030
  %v4732 = vpop.f32.mrb[0].mxu0
  %v4733 = vadd.f32 %v4540, %v4732
  %v4734 = vpop.f32.mrb[0].mxu0
  %v4735 = vadd.f32 %v4542, %v4734
  %v4736 = vpop.f32.mrb[0].mxu0
  %v4737 = vadd.f32 %v4544, %v4736
  %v4738 = vpop.f32.mrb[0].mxu0
  %v4739 = vadd.f32 %v4546, %v4738
  %4740 = vmatprep.mubr.bf16.mxu0 0
  %4741 = vmatmul.mubr.bf16.gmra.mrb[0].mxu0 %v4033
  %v4742 = vpop.f32.mrb[0].mxu0
  %v4743 = vadd.f32 %v4550, %v4742
  %v4744 = vpop.f32.mrb[0].mxu0
  %v4745 = vadd.f32 %v4552, %v4744
  %v4746 = vpop.f32.mrb[0].mxu0
  %v4747 = vadd.f32 %v4554, %v4746
  %v4748 = vpop.f32.mrb[0].mxu0
  %v4749 = vadd.f32 %v4556, %v4748
  %4750 = vmatprep.mubr.bf16.mxu0 0
  %4751 = vmatmul.mubr.bf16.gmra.mrb[0].mxu0 %v4036
  %v4752 = vpop.f32.mrb[0].mxu0
  %v4753 = vadd.f32 %v4560, %v4752
  %v4754 = vpop.f32.mrb[0].mxu0
  %v4755 = vadd.f32 %v4562, %v4754
  %v4756 = vpop.f32.mrb[0].mxu0
  %v4757 = vadd.f32 %v4564, %v4756
  %v4758 = vpop.f32.mrb[0].mxu0
  %v4759 = vadd.f32 %v4566, %v4758
  %4760 = vmatprep.mubr.bf16.mxu0 0
  %4761 = vmatmul.mubr.bf16.gmra.mrb[0].mxu0 %v4039
  %v4762 = vpop.f32.mrb[0].mxu0
  %v4763 = vadd.f32 %v4570, %v4762
  %v4764 = vpop.f32.mrb[0].mxu0
  %v4765 = vadd.f32 %v4572, %v4764
  %v4766 = vpop.f32.mrb[0].mxu0
  %v4767 = vadd.f32 %v4574, %v4766
  %v4768 = vpop.f32.mrb[0].mxu0
  %v4769 = vadd.f32 %v4576, %v4768
  %4770 = vmatprep.mubr.bf16.mxu0 0
  %4771 = vmatmul.mubr.bf16.gmra.mrb[0].mxu0 %v4042
  %v4772 = vpop.f32.mrb[0].mxu0
  %v4773 = vadd.f32 %v4580, %v4772
  %v4774 = vpop.f32.mrb[0].mxu0
  %v4775 = vadd.f32 %v4582, %v4774
  %v4776 = vpop.f32.mrb[0].mxu0
  %v4777 = vadd.f32 %v4584, %v4776
  %v4778 = vpop.f32.mrb[0].mxu0
  %v4779 = vadd.f32 %v4586, %v4778
  %4780 = vmatprep.mubr.bf16.mxu0 0
  %4781 = vmatmul.mubr.bf16.gmra.mrb[0].mxu0 %v4045
  %v4782 = vpop.f32.mrb[0].mxu0
  %v4783 = vadd.f32 %v4590, %v4782
  %v4784 = vpop.f32.mrb[0].mxu0
  %v4785 = vadd.f32 %v4592, %v4784
  %v4786 = vpop.f32.mrb[0].mxu0
  %v4787 = vadd.f32 %v4594, %v4786
  %v4788 = vpop.f32.mrb[0].mxu0
  %v4789 = vadd.f32 %v4596, %v4788
  %4790 = vmatprep.mubr.bf16.mxu0 0
  %4791 = vmatmul.mubr.bf16.gmra.mrb[0].mxu0 %v4048
  %v4792 = vpop.f32.mrb[0].mxu0
  %v4793 = vadd.f32 %v4600, %v4792
  %v4794 = vpop.f32.mrb[0].mxu0
  %v4795 = vadd.f32 %v4602, %v4794
  %v4796 = vpop.f32.mrb[0].mxu0
  %v4797 = vadd.f32 %v4604, %v4796
  %v4798 = vpop.f32.mrb[0].mxu0
  %v4799 = vadd.f32 %v4606, %v4798
  %4800 = vmatprep.mubr.bf16.mxu0 0
  %4801 = vmatmul.mubr.bf16.gmra.mrb[0].mxu0 %v4051
  %v4802 = vpop.f32.mrb[0].mxu0
  %v4803 = vadd.f32 %v4610, %v4802
  %v4804 = vpop.f32.mrb[0].mxu0
  %v4805 = vadd.f32 %v4612, %v4804
  %v4806 = vpop.f32.mrb[0].mxu0
  %v4807 = vadd.f32 %v4614, %v4806
  %v4808 = vpop.f32.mrb[0].mxu0
  %v4809 = vadd.f32 %v4616, %v4808
  %4810 = vmatprep.mubr.bf16.mxu0 0
  %4811 = vmatmul.mubr.bf16.gmra.mrb[0].mxu0 %v4054
  %v4812 = vpop.f32.mrb[0].mxu0
  %v4813 = vadd.f32 %v4620, %v4812
  %v4814 = vpop.f32.mrb[0].mxu0
  %v4815 = vadd.f32 %v4622, %v4814
  %v4816 = vpop.f32.mrb[0].mxu0
  %v4817 = vadd.f32 %v4624, %v4816
  %v4818 = vpop.f32.mrb[0].mxu0
  %v4819 = vadd.f32 %v4626, %v4818
  %4820 = vmatprep.mubr.bf16.mxu0 0
  %4821 = vmatmul.mubr.bf16.gmra.mrb[0].mxu0 %v4057
  %v4822 = vpop.f32.mrb[0].mxu0
  %v4823 = vadd.f32 %v4630, %v4822
  %v4824 = vpop.f32.mrb[0].mxu0
  %v4825 = vadd.f32 %v4632, %v4824
  %v4826 = vpop.f32.mrb[0].mxu0
  %v4827 = vadd.f32 %v4634, %v4826
  %v4828 = vpop.f32.mrb[0].mxu0
  %v4829 = vadd.f32 %v4636, %v4828
  %4830 = vdwg.mxu0
  %v4831 = vmax.f32 %v4673, 0.0
  %v4832 = vmax.f32 %v4675, 0.0
  %v4833 = vmax.f32 %v4677, 0.0
  %v4834 = vmax.f32 %v4679, 0.0
  %v4835 = vmax.f32 %v4683, 0.0
  %v4836 = vmax.f32 %v4685, 0.0
  %v4837 = vmax.f32 %v4687, 0.0
  %v4838 = vmax.f32 %v4689, 0.0
  %v4839 = vmax.f32 %v4693, 0.0
  %v4840 = vmax.f32 %v4695, 0.0
  %v4841 = vmax.f32 %v4697, 0.0
  %v4842 = vmax.f32 %v4699, 0.0
  %v4843 = vmax.f32 %v4703, 0.0
  %v4844 = vmax.f32 %v4705, 0.0
  %v4845 = vmax.f32 %v4707, 0.0
  %v4846 = vmax.f32 %v4709, 0.0
  %v4847 = vmax.f32 %v4713, 0.0
  %v4848 = vmax.f32 %v4715, 0.0
  %v4849 = vmax.f32 %v4717, 0.0
  %v4850 = vmax.f32 %v4719, 0.0
  %v4851 = vmax.f32 %v4723, 0.0
  %v4852 = vmax.f32 %v4725, 0.0
  %v4853 = vmax.f32 %v4727, 0.0
  %v4854 = vmax.f32 %v4729, 0.0
  %v4855 = vmax.f32 %v4733, 0.0
  %v4856 = vmax.f32 %v4735, 0.0
  %v4857 = vmax.f32 %v4737, 0.0
  %v4858 = vmax.f32 %v4739, 0.0
  %v4859 = vmax.f32 %v4743, 0.0
  %v4860 = vmax.f32 %v4745, 0.0
  %v4861 = vmax.f32 %v4747, 0.0
  %v4862 = vmax.f32 %v4749, 0.0
  %v4863 = vmax.f32 %v4753, 0.0
  %v4864 = vmax.f32 %v4755, 0.0
  %v4865 = vmax.f32 %v4757, 0.0
  %v4866 = vmax.f32 %v4759, 0.0
  %v4867 = vmax.f32 %v4763, 0.0
  %v4868 = vmax.f32 %v4765, 0.0
  %v4869 = vmax.f32 %v4767, 0.0
  %v4870 = vmax.f32 %v4769, 0.0
  %v4871 = vmax.f32 %v4773, 0.0
  %v4872 = vmax.f32 %v4775, 0.0
  %v4873 = vmax.f32 %v4777, 0.0
  %v4874 = vmax.f32 %v4779, 0.0
  %v4875 = vmax.f32 %v4783, 0.0
  %v4876 = vmax.f32 %v4785, 0.0
  %v4877 = vmax.f32 %v4787, 0.0
  %v4878 = vmax.f32 %v4789, 0.0
  %v4879 = vmax.f32 %v4793, 0.0
  %v4880 = vmax.f32 %v4795, 0.0
  %v4881 = vmax.f32 %v4797, 0.0
  %v4882 = vmax.f32 %v4799, 0.0
  %v4883 = vmax.f32 %v4803, 0.0
  %v4884 = vmax.f32 %v4805, 0.0
  %v4885 = vmax.f32 %v4807, 0.0
  %v4886 = vmax.f32 %v4809, 0.0
  %v4887 = vmax.f32 %v4813, 0.0
  %v4888 = vmax.f32 %v4815, 0.0
  %v4889 = vmax.f32 %v4817, 0.0
  %v4890 = vmax.f32 %v4819, 0.0
  %v4891 = vmax.f32 %v4823, 0.0
  %v4892 = vmax.f32 %v4825, 0.0
  %v4893 = vmax.f32 %v4827, 0.0
  %v4894 = vmax.f32 %v4829, 0.0
  %v4895 = vpack.c.bf16 %v4833, %v4831
  %v4896 = vpack.c.bf16 %v4834, %v4832
  %v4897 = vpack.c.bf16 %v4837, %v4835
  %v4898 = vpack.c.bf16 %v4838, %v4836
  %v4899 = vpack.c.bf16 %v4841, %v4839
  %v4900 = vpack.c.bf16 %v4842, %v4840
  %v4901 = vpack.c.bf16 %v4845, %v4843
  %v4902 = vpack.c.bf16 %v4846, %v4844
  %v4903 = vpack.c.bf16 %v4849, %v4847
  %v4904 = vpack.c.bf16 %v4850, %v4848
  %v4905 = vpack.c.bf16 %v4853, %v4851
  %v4906 = vpack.c.bf16 %v4854, %v4852
  %v4907 = vpack.c.bf16 %v4857, %v4855
  %v4908 = vpack.c.bf16 %v4858, %v4856
  %v4909 = vpack.c.bf16 %v4861, %v4859
  %v4910 = vpack.c.bf16 %v4862, %v4860
  %v4911 = vpack.c.bf16 %v4865, %v4863
  %v4912 = vpack.c.bf16 %v4866, %v4864
  %v4913 = vpack.c.bf16 %v4869, %v4867
  %v4914 = vpack.c.bf16 %v4870, %v4868
  %v4915 = vpack.c.bf16 %v4873, %v4871
  %v4916 = vpack.c.bf16 %v4874, %v4872
  %v4917 = vpack.c.bf16 %v4877, %v4875
  %v4918 = vpack.c.bf16 %v4878, %v4876
  %v4919 = vpack.c.bf16 %v4881, %v4879
  %v4920 = vpack.c.bf16 %v4882, %v4880
  %v4921 = vpack.c.bf16 %v4885, %v4883
  %v4922 = vpack.c.bf16 %v4886, %v4884
  %v4923 = vpack.c.bf16 %v4889, %v4887
  %v4924 = vpack.c.bf16 %v4890, %v4888
  %v4925 = vpack.c.bf16 %v4893, %v4891
  %v4926 = vpack.c.bf16 %v4894, %v4892
  %v4927 = vld [vmem:[%s7] sm:$0x1]
  %v4928 = vld [vmem:[%s6] sm:$0xf]
  %v4929 = vld [vmem:[%s6 + $0x4] sm:$0xf]
  %v4930 = vld [vmem:[%s6 + $0x8] sm:$0xf]
  %v4931 = vld [vmem:[%s6 + $0xc] sm:$0xf]
  %v4932 = vld [vmem:[%s6 + $0x10] sm:$0xf]
  %v4933 = vld [vmem:[%s6 + $0x14] sm:$0xf]
  %v4934 = vld [vmem:[%s6 + $0x18] sm:$0xf]
  %v4935 = vld [vmem:[%s6 + $0x1c] sm:$0xf]
  %v4936 = vld [vmem:[%s6 + $0x20] sm:$0xf]
  %v4937 = vld [vmem:[%s6 + $0x24] sm:$0xf]
  %v4938 = vld [vmem:[%s6 + $0x28] sm:$0xf]
  %v4939 = vld [vmem:[%s6 + $0x2c] sm:$0xf]
  %v4940 = vld [vmem:[%s6 + $0x30] sm:$0xf]
  %v4941 = vld [vmem:[%s6 + $0x34] sm:$0xf]
  %v4942 = vld [vmem:[%s6 + $0x38] sm:$0xf]
  %v4943 = vld [vmem:[%s6 + $0x3c] sm:$0xf]
  %v4944 = vld [vmem:[%s6 + $0x40] sm:$0xf]
  %v4945 = vld [vmem:[%s6 + $0x44] sm:$0xf]
  %v4946 = vld [vmem:[%s6 + $0x48] sm:$0xf]
  %v4947 = vld [vmem:[%s6 + $0x4c] sm:$0xf]
  %v4948 = vld [vmem:[%s6 + $0x50] sm:$0xf]
  %v4949 = vld [vmem:[%s6 + $0x54] sm:$0xf]
  %v4950 = vld [vmem:[%s6 + $0x58] sm:$0xf]
  %v4951 = vld [vmem:[%s6 + $0x5c] sm:$0xf]
  %v4952 = vld [vmem:[%s6 + $0x60] sm:$0xf]
  %v4953 = vld [vmem:[%s6 + $0x64] sm:$0xf]
  %v4954 = vld [vmem:[%s6 + $0x68] sm:$0xf]
  %v4955 = vld [vmem:[%s6 + $0x6c] sm:$0x7]
  %v4984 = vunpack.c.l.b16 %v4928
  %v4985 = vunpack.c.l.b16 %v4929
  %v4986 = vunpack.c.l.b16 %v4930
  %v4987 = vunpack.c.l.b16 %v4931
  %v4988 = vunpack.c.l.b16 %v4932
  %v4989 = vunpack.c.l.b16 %v4933
  %v4990 = vunpack.c.l.b16 %v4934
  %v4991 = vunpack.c.l.b16 %v4935
  %v4992 = vunpack.c.l.b16 %v4936
  %v4993 = vunpack.c.l.b16 %v4937
  %v4994 = vunpack.c.l.b16 %v4938
  %v4995 = vunpack.c.l.b16 %v4939
  %v4996 = vunpack.c.l.b16 %v4940
  %v4997 = vunpack.c.l.b16 %v4941
  %v4998 = vunpack.c.l.b16 %v4942
  %v4999 = vunpack.c.l.b16 %v4943
  %v5000 = vunpack.c.l.b16 %v4944
  %v5001 = vunpack.c.l.b16 %v4945
  %v5002 = vunpack.c.l.b16 %v4946
  %v5003 = vunpack.c.l.b16 %v4947
  %v5004 = vunpack.c.l.b16 %v4948
  %v5005 = vunpack.c.l.b16 %v4949
  %v5006 = vunpack.c.l.b16 %v4950
  %v5007 = vunpack.c.l.b16 %v4951
  %v5008 = vunpack.c.l.b16 %v4952
  %v5009 = vunpack.c.l.b16 %v4953
  %v5010 = vunpack.c.l.b16 %v4954
  %v5011 = vunpack.c.l.b16 %v4955
  %v5012 = vpack.c.b16 %v4985, %v4984
  %v5013 = vpack.c.b16 %v4987, %v4986
  %v5014 = vpack.c.b16 %v4989, %v4988
  %v5015 = vpack.c.b16 %v4991, %v4990
  %v5016 = vpack.c.b16 %v4993, %v4992
  %v5017 = vpack.c.b16 %v4995, %v4994
  %v5018 = vpack.c.b16 %v4997, %v4996
  %v5019 = vpack.c.b16 %v4999, %v4998
  %v5020 = vpack.c.b16 %v5001, %v5000
  %v5021 = vpack.c.b16 %v5003, %v5002
  %v5022 = vpack.c.b16 %v5005, %v5004
  %v5023 = vpack.c.b16 %v5007, %v5006
  %v5024 = vpack.c.b16 %v5009, %v5008
  %v5025 = vpack.c.b16 %v5011, %v5010
  %v5040 = vsel %vm338, %v4896, 0
  %vm5042 = vcmask 1046528
  %v5044 = vsel %vm5042, %v5025, 0
  %5046 = vmatprep.subr.bf16.mxu0 0
  %5047 = vmatpush1.bf16.msra.mxu0 %v5012
  %5048 = vmatprep.subr.bf16.mxu0 0
  %5049 = vmatpush1.bf16.msra.mxu0 %v5013
  %5050 = vmatprep.subr.bf16.mxu0 0
  %5051 = vmatpush1.bf16.msra.mxu0 %v5014
  %5052 = vmatprep.subr.bf16.mxu0 0
  %5053 = vmatpush1.bf16.msra.mxu0 %v5015
  %5054 = vmatprep.subr.bf16.mxu0 0
  %5055 = vmatpush1.bf16.msra.mxu0 %v5016
  %5056 = vmatprep.subr.bf16.mxu0 0
  %5057 = vmatpush1.bf16.msra.mxu0 %v5017
  %5058 = vmatprep.subr.bf16.mxu0 0
  %5059 = vmatpush1.bf16.msra.mxu0 %v5018
  %5060 = vmatprep.subr.bf16.mxu0 0
  %5061 = vmatpush1.bf16.msra.mxu0 %v5019
  %5062 = vmatprep.subr.bf16.mxu0 0
  %5063 = vmatpush1.bf16.msra.mxu0 %v5020
  %5064 = vmatprep.subr.bf16.mxu0 0
  %5065 = vmatpush1.bf16.msra.mxu0 %v5021
  %5066 = vmatprep.subr.bf16.mxu0 0
  %5067 = vmatpush1.bf16.msra.mxu0 %v5022
  %5068 = vmatprep.subr.bf16.mxu0 0
  %5069 = vmatpush1.bf16.msra.mxu0 %v5023
  %5070 = vmatprep.subr.bf16.mxu0 0
  %5071 = vmatpush1.bf16.msra.mxu0 %v5024
  %5072 = vmatprep.subr.bf16.mxu0 0
  %5073 = vmatpush1.bf16.msra.mxu0 %v5044
  %5074 = vmatprep.subr.bf16.mxu0 0
  %5075 = vmatpush1.bf16.msra.mxu0 0
  %5076 = vmatprep.subr.bf16.mxu0 0
  %5077 = vmatpush1.bf16.msra.mxu0 0
  %5078 = vmatprep.mubr.bf16.mxu0 %v5040
  %5079 = vmatmul.mubr.bf16.gmra.mrb[0].mxu0 %v4895
  %v5080 = vpop.f32.mrb[0].mxu0
  %v5081 = vadd.f32 0.0, %v5080
  %v5082 = vpop.f32.mrb[0].mxu0
  %v5083 = vpop.f32.mrb[0].mxu0
  %v5084 = vadd.f32 0.0, %v5083
  %v5085 = vpop.f32.mrb[0].mxu0
  %5086 = vdwg.mxu0
  %v5088 = vlaneseq
  %v5089 = vshrl.u32 %v5088, 7
  %v5090 = vsub.s32 0, %v5089
  %v5091 = vrot.slane %v4927, %v5090
  %v5093 = vadd.f32 %v5091, %v5081
  %v5094 = vadd.f32 %v5091, %v5084
  %v5095 = vld [vmem:[%s6 + $0x6c] sm:$0x8]
  %v5096 = vld [vmem:[%s6 + $0x70] sm:$0xf]
  %v5097 = vld [vmem:[%s6 + $0x74] sm:$0xf]
  %v5098 = vld [vmem:[%s6 + $0x78] sm:$0xf]
  %v5099 = vld [vmem:[%s6 + $0x7c] sm:$0xf]
  %v5100 = vld [vmem:[%s6 + $0x80] sm:$0xf]
  %v5101 = vld [vmem:[%s6 + $0x84] sm:$0xf]
  %v5102 = vld [vmem:[%s6 + $0x88] sm:$0xf]
  %v5103 = vld [vmem:[%s6 + $0x8c] sm:$0xf]
  %v5104 = vld [vmem:[%s6 + $0x90] sm:$0xf]
  %v5105 = vld [vmem:[%s6 + $0x94] sm:$0xf]
  %v5106 = vld [vmem:[%s6 + $0x98] sm:$0xf]
  %v5107 = vld [vmem:[%s6 + $0x9c] sm:$0xf]
  %v5108 = vld [vmem:[%s6 + $0xa0] sm:$0xf]
  %v5109 = vld [vmem:[%s6 + $0xa4] sm:$0xf]
  %v5110 = vld [vmem:[%s6 + $0xa8] sm:$0xf]
  %v5111 = vld [vmem:[%s6 + $0xac] sm:$0xf]
  %v5112 = vld [vmem:[%s6 + $0xb0] sm:$0xf]
  %v5113 = vld [vmem:[%s6 + $0xb4] sm:$0xf]
  %v5114 = vld [vmem:[%s6 + $0xb8] sm:$0xf]
  %v5115 = vld [vmem:[%s6 + $0xbc] sm:$0xf]
  %v5116 = vld [vmem:[%s6 + $0xc0] sm:$0xf]
  %v5117 = vld [vmem:[%s6 + $0xc4] sm:$0xf]
  %v5118 = vld [vmem:[%s6 + $0xc8] sm:$0xf]
  %v5119 = vld [vmem:[%s6 + $0xcc] sm:$0xf]
  %v5120 = vld [vmem:[%s6 + $0xd0] sm:$0xf]
  %v5121 = vld [vmem:[%s6 + $0xd4] sm:$0xf]
  %v5122 = vld [vmem:[%s6 + $0xd8] sm:$0xf]
  %v5123 = vld [vmem:[%s6 + $0xdc] sm:$0x3]
  %v5153 = vunpack.c.l.b16 %v5095
  %v5154 = vunpack.c.l.b16 %v5096
  %v5155 = vunpack.c.l.b16 %v5097
  %v5156 = vunpack.c.l.b16 %v5098
  %v5157 = vunpack.c.l.b16 %v5099
  %v5158 = vunpack.c.l.b16 %v5100
  %v5159 = vunpack.c.l.b16 %v5101
  %v5160 = vunpack.c.l.b16 %v5102
  %v5161 = vunpack.c.l.b16 %v5103
  %v5162 = vunpack.c.l.b16 %v5104
  %v5163 = vunpack.c.l.b16 %v5105
  %v5164 = vunpack.c.l.b16 %v5106
  %v5165 = vunpack.c.l.b16 %v5107
  %v5166 = vunpack.c.l.b16 %v5108
  %v5167 = vunpack.c.l.b16 %v5109
  %v5168 = vunpack.c.l.b16 %v5110
  %v5169 = vunpack.c.l.b16 %v5111
  %v5170 = vunpack.c.l.b16 %v5112
  %v5171 = vunpack.c.l.b16 %v5113
  %v5172 = vunpack.c.l.b16 %v5114
  %v5173 = vunpack.c.l.b16 %v5115
  %v5174 = vunpack.c.l.b16 %v5116
  %v5175 = vunpack.c.l.b16 %v5117
  %v5176 = vunpack.c.l.b16 %v5118
  %v5177 = vunpack.c.l.b16 %v5119
  %v5178 = vunpack.c.l.b16 %v5120
  %v5179 = vunpack.c.l.b16 %v5121
  %v5180 = vunpack.c.l.b16 %v5122
  %v5181 = vunpack.c.l.b16 %v5123
  %v5182 = vpack.c.b16 %v5154, %v5153
  %v5183 = vpack.c.b16 %v5156, %v5155
  %v5184 = vpack.c.b16 %v5158, %v5157
  %v5185 = vpack.c.b16 %v5160, %v5159
  %v5186 = vpack.c.b16 %v5162, %v5161
  %v5187 = vpack.c.b16 %v5164, %v5163
  %v5188 = vpack.c.b16 %v5166, %v5165
  %v5189 = vpack.c.b16 %v5168, %v5167
  %v5190 = vpack.c.b16 %v5170, %v5169
  %v5191 = vpack.c.b16 %v5172, %v5171
  %v5192 = vpack.c.b16 %v5174, %v5173
  %v5193 = vpack.c.b16 %v5176, %v5175
  %v5194 = vpack.c.b16 %v5178, %v5177
  %v5195 = vpack.c.b16 %v5180, %v5179
  %v5196 = vpack.c.b16 %v5181, %v5181
  %vm5197 = vcmask 1044480
  %v5198 = vrot.slane %v5182, 3
  %v5199 = vrot.slane %v5183, 3
  %v5200 = vsel %vm5197, %v5198, %v5199
  %v5201 = vrot.slane %v5184, 3
  %v5202 = vsel %vm5197, %v5199, %v5201
  %v5203 = vrot.slane %v5185, 3
  %v5204 = vsel %vm5197, %v5201, %v5203
  %v5205 = vrot.slane %v5186, 3
  %v5206 = vsel %vm5197, %v5203, %v5205
  %v5207 = vrot.slane %v5187, 3
  %v5208 = vsel %vm5197, %v5205, %v5207
  %v5209 = vrot.slane %v5188, 3
  %v5210 = vsel %vm5197, %v5207, %v5209
  %v5211 = vrot.slane %v5189, 3
  %v5212 = vsel %vm5197, %v5209, %v5211
  %v5213 = vrot.slane %v5190, 3
  %v5214 = vsel %vm5197, %v5211, %v5213
  %v5215 = vrot.slane %v5191, 3
  %v5216 = vsel %vm5197, %v5213, %v5215
  %v5217 = vrot.slane %v5192, 3
  %v5218 = vsel %vm5197, %v5215, %v5217
  %v5219 = vrot.slane %v5193, 3
  %v5220 = vsel %vm5197, %v5217, %v5219
  %v5221 = vrot.slane %v5194, 3
  %v5222 = vsel %vm5197, %v5219, %v5221
  %v5223 = vrot.slane %v5195, 3
  %v5224 = vsel %vm5197, %v5221, %v5223
  %v5225 = vrot.slane %v5196, 3
  %v5226 = vsel %vm5197, %v5223, %v5225
  %v5241 = vsel %vm338, %v4898, 0
  %v5244 = vsel %vm5042, %v5226, 0
  %5246 = vmatprep.subr.bf16.mxu0 0
  %5247 = vmatpush1.bf16.msra.mxu0 %v5200
  %5248 = vmatprep.subr.bf16.mxu0 0
  %5249 = vmatpush1.bf16.msra.mxu0 %v5202
  %5250 = vmatprep.subr.bf16.mxu0 0
  %5251 = vmatpush1.bf16.msra.mxu0 %v5204
  %5252 = vmatprep.subr.bf16.mxu0 0
  %5253 = vmatpush1.bf16.msra.mxu0 %v5206
  %5254 = vmatprep.subr.bf16.mxu0 0
  %5255 = vmatpush1.bf16.msra.mxu0 %v5208
  %5256 = vmatprep.subr.bf16.mxu0 0
  %5257 = vmatpush1.bf16.msra.mxu0 %v5210
  %5258 = vmatprep.subr.bf16.mxu0 0
  %5259 = vmatpush1.bf16.msra.mxu0 %v5212
  %5260 = vmatprep.subr.bf16.mxu0 0
  %5261 = vmatpush1.bf16.msra.mxu0 %v5214
  %5262 = vmatprep.subr.bf16.mxu0 0
  %5263 = vmatpush1.bf16.msra.mxu0 %v5216
  %5264 = vmatprep.subr.bf16.mxu0 0
  %5265 = vmatpush1.bf16.msra.mxu0 %v5218
  %5266 = vmatprep.subr.bf16.mxu0 0
  %5267 = vmatpush1.bf16.msra.mxu0 %v5220
  %5268 = vmatprep.subr.bf16.mxu0 0
  %5269 = vmatpush1.bf16.msra.mxu0 %v5222
  %5270 = vmatprep.subr.bf16.mxu0 0
  %5271 = vmatpush1.bf16.msra.mxu0 %v5224
  %5272 = vmatprep.subr.bf16.mxu0 0
  %5273 = vmatpush1.bf16.msra.mxu0 %v5244
  %5274 = vmatprep.subr.bf16.mxu0 0
  %5275 = vmatpush1.bf16.msra.mxu0 0
  %5276 = vmatprep.subr.bf16.mxu0 0
  %5277 = vmatpush1.bf16.msra.mxu0 0
  %5278 = vmatprep.mubr.bf16.mxu0 %v5241
  %5279 = vmatmul.mubr.bf16.gmra.mrb[0].mxu0 %v4897
  %v5280 = vpop.f32.mrb[0].mxu0
  %v5281 = vadd.f32 0.0, %v5280
  %v5282 = vpop.f32.mrb[0].mxu0
  %v5283 = vpop.f32.mrb[0].mxu0
  %v5284 = vadd.f32 0.0, %v5283
  %v5285 = vpop.f32.mrb[0].mxu0
  %5286 = vdwg.mxu0
  %v5287 = vadd.f32 %v5093, %v5281
  %v5288 = vadd.f32 %v5094, %v5284
  %v5289 = vld [vmem:[%s6 + $0xdc] sm:$0xc]
  %v5290 = vld [vmem:[%s6 + $0xe0] sm:$0xf]
  %v5291 = vld [vmem:[%s6 + $0xe4] sm:$0xf]
  %v5292 = vld [vmem:[%s6 + $0xe8] sm:$0xf]
  %v5293 = vld [vmem:[%s6 + $0xec] sm:$0xf]
  %v5294 = vld [vmem:[%s6 + $0xf0] sm:$0xf]
  %v5295 = vld [vmem:[%s6 + $0xf4] sm:$0xf]
  %v5296 = vld [vmem:[%s6 + $0xf8] sm:$0xf]
  %v5297 = vld [vmem:[%s6 + $0xfc] sm:$0xf]
  %v5298 = vld [vmem:[%s6 + $0x100] sm:$0xf]
  %v5299 = vld [vmem:[%s6 + $0x104] sm:$0xf]
  %v5300 = vld [vmem:[%s6 + $0x108] sm:$0xf]
  %v5301 = vld [vmem:[%s6 + $0x10c] sm:$0xf]
  %v5302 = vld [vmem:[%s6 + $0x110] sm:$0xf]
  %v5303 = vld [vmem:[%s6 + $0x114] sm:$0xf]
  %v5304 = vld [vmem:[%s6 + $0x118] sm:$0xf]
  %v5305 = vld [vmem:[%s6 + $0x11c] sm:$0xf]
  %v5306 = vld [vmem:[%s6 + $0x120] sm:$0xf]
  %v5307 = vld [vmem:[%s6 + $0x124] sm:$0xf]
  %v5308 = vld [vmem:[%s6 + $0x128] sm:$0xf]
  %v5309 = vld [vmem:[%s6 + $0x12c] sm:$0xf]
  %v5310 = vld [vmem:[%s6 + $0x130] sm:$0xf]
  %v5311 = vld [vmem:[%s6 + $0x134] sm:$0xf]
  %v5312 = vld [vmem:[%s6 + $0x138] sm:$0xf]
  %v5313 = vld [vmem:[%s6 + $0x13c] sm:$0xf]
  %v5314 = vld [vmem:[%s6 + $0x140] sm:$0xf]
  %v5315 = vld [vmem:[%s6 + $0x144] sm:$0xf]
  %v5316 = vld [vmem:[%s6 + $0x148] sm:$0xf]
  %v5317 = vld [vmem:[%s6 + $0x14c] sm:$0x1]
  %v5347 = vunpack.c.l.b16 %v5289
  %v5348 = vunpack.c.l.b16 %v5290
  %v5349 = vunpack.c.l.b16 %v5291
  %v5350 = vunpack.c.l.b16 %v5292
  %v5351 = vunpack.c.l.b16 %v5293
  %v5352 = vunpack.c.l.b16 %v5294
  %v5353 = vunpack.c.l.b16 %v5295
  %v5354 = vunpack.c.l.b16 %v5296
  %v5355 = vunpack.c.l.b16 %v5297
  %v5356 = vunpack.c.l.b16 %v5298
  %v5357 = vunpack.c.l.b16 %v5299
  %v5358 = vunpack.c.l.b16 %v5300
  %v5359 = vunpack.c.l.b16 %v5301
  %v5360 = vunpack.c.l.b16 %v5302
  %v5361 = vunpack.c.l.b16 %v5303
  %v5362 = vunpack.c.l.b16 %v5304
  %v5363 = vunpack.c.l.b16 %v5305
  %v5364 = vunpack.c.l.b16 %v5306
  %v5365 = vunpack.c.l.b16 %v5307
  %v5366 = vunpack.c.l.b16 %v5308
  %v5367 = vunpack.c.l.b16 %v5309
  %v5368 = vunpack.c.l.b16 %v5310
  %v5369 = vunpack.c.l.b16 %v5311
  %v5370 = vunpack.c.l.b16 %v5312
  %v5371 = vunpack.c.l.b16 %v5313
  %v5372 = vunpack.c.l.b16 %v5314
  %v5373 = vunpack.c.l.b16 %v5315
  %v5374 = vunpack.c.l.b16 %v5316
  %v5375 = vunpack.c.l.b16 %v5317
  %v5376 = vpack.c.b16 %v5348, %v5347
  %v5377 = vpack.c.b16 %v5350, %v5349
  %v5378 = vpack.c.b16 %v5352, %v5351
  %v5379 = vpack.c.b16 %v5354, %v5353
  %v5380 = vpack.c.b16 %v5356, %v5355
  %v5381 = vpack.c.b16 %v5358, %v5357
  %v5382 = vpack.c.b16 %v5360, %v5359
  %v5383 = vpack.c.b16 %v5362, %v5361
  %v5384 = vpack.c.b16 %v5364, %v5363
  %v5385 = vpack.c.b16 %v5366, %v5365
  %v5386 = vpack.c.b16 %v5368, %v5367
  %v5387 = vpack.c.b16 %v5370, %v5369
  %v5388 = vpack.c.b16 %v5372, %v5371
  %v5389 = vpack.c.b16 %v5374, %v5373
  %v5390 = vpack.c.b16 %v5375, %v5375
  %vm5391 = vcmask 1045504
  %v5392 = vrot.slane %v5376, 2
  %v5393 = vrot.slane %v5377, 2
  %v5394 = vsel %vm5391, %v5392, %v5393
  %v5395 = vrot.slane %v5378, 2
  %v5396 = vsel %vm5391, %v5393, %v5395
  %v5397 = vrot.slane %v5379, 2
  %v5398 = vsel %vm5391, %v5395, %v5397
  %v5399 = vrot.slane %v5380, 2
  %v5400 = vsel %vm5391, %v5397, %v5399
  %v5401 = vrot.slane %v5381, 2
  %v5402 = vsel %vm5391, %v5399, %v5401
  %v5403 = vrot.slane %v5382, 2
  %v5404 = vsel %vm5391, %v5401, %v5403
  %v5405 = vrot.slane %v5383, 2
  %v5406 = vsel %vm5391, %v5403, %v5405
  %v5407 = vrot.slane %v5384, 2
  %v5408 = vsel %vm5391, %v5405, %v5407
  %v5409 = vrot.slane %v5385, 2
  %v5410 = vsel %vm5391, %v5407, %v5409
  %v5411 = vrot.slane %v5386, 2
  %v5412 = vsel %vm5391, %v5409, %v5411
  %v5413 = vrot.slane %v5387, 2
  %v5414 = vsel %vm5391, %v5411, %v5413
  %v5415 = vrot.slane %v5388, 2
  %v5416 = vsel %vm5391, %v5413, %v5415
  %v5417 = vrot.slane %v5389, 2
  %v5418 = vsel %vm5391, %v5415, %v5417
  %v5419 = vrot.slane %v5390, 2
  %v5420 = vsel %vm5391, %v5417, %v5419
  %v5435 = vsel %vm338, %v4900, 0
  %v5438 = vsel %vm5042, %v5420, 0
  %5440 = vmatprep.subr.bf16.mxu0 0
  %5441 = vmatpush1.bf16.msra.mxu0 %v5394
  %5442 = vmatprep.subr.bf16.mxu0 0
  %5443 = vmatpush1.bf16.msra.mxu0 %v5396
  %5444 = vmatprep.subr.bf16.mxu0 0
  %5445 = vmatpush1.bf16.msra.mxu0 %v5398
  %5446 = vmatprep.subr.bf16.mxu0 0
  %5447 = vmatpush1.bf16.msra.mxu0 %v5400
  %5448 = vmatprep.subr.bf16.mxu0 0
  %5449 = vmatpush1.bf16.msra.mxu0 %v5402
  %5450 = vmatprep.subr.bf16.mxu0 0
  %5451 = vmatpush1.bf16.msra.mxu0 %v5404
  %5452 = vmatprep.subr.bf16.mxu0 0
  %5453 = vmatpush1.bf16.msra.mxu0 %v5406
  %5454 = vmatprep.subr.bf16.mxu0 0
  %5455 = vmatpush1.bf16.msra.mxu0 %v5408
  %5456 = vmatprep.subr.bf16.mxu0 0
  %5457 = vmatpush1.bf16.msra.mxu0 %v5410
  %5458 = vmatprep.subr.bf16.mxu0 0
  %5459 = vmatpush1.bf16.msra.mxu0 %v5412
  %5460 = vmatprep.subr.bf16.mxu0 0
  %5461 = vmatpush1.bf16.msra.mxu0 %v5414
  %5462 = vmatprep.subr.bf16.mxu0 0
  %5463 = vmatpush1.bf16.msra.mxu0 %v5416
  %5464 = vmatprep.subr.bf16.mxu0 0
  %5465 = vmatpush1.bf16.msra.mxu0 %v5418
  %5466 = vmatprep.subr.bf16.mxu0 0
  %5467 = vmatpush1.bf16.msra.mxu0 %v5438
  %5468 = vmatprep.subr.bf16.mxu0 0
  %5469 = vmatpush1.bf16.msra.mxu0 0
  %5470 = vmatprep.subr.bf16.mxu0 0
  %5471 = vmatpush1.bf16.msra.mxu0 0
  %5472 = vmatprep.mubr.bf16.mxu0 %v5435
  %5473 = vmatmul.mubr.bf16.gmra.mrb[0].mxu0 %v4899
  %v5474 = vpop.f32.mrb[0].mxu0
  %v5475 = vadd.f32 0.0, %v5474
  %v5476 = vpop.f32.mrb[0].mxu0
  %v5477 = vpop.f32.mrb[0].mxu0
  %v5478 = vadd.f32 0.0, %v5477
  %v5479 = vpop.f32.mrb[0].mxu0
  %5480 = vdwg.mxu0
  %v5481 = vadd.f32 %v5287, %v5475
  %v5482 = vadd.f32 %v5288, %v5478
  %v5483 = vld [vmem:[%s6 + $0x14c] sm:$0xe]
  %v5484 = vld [vmem:[%s6 + $0x150] sm:$0xf]
  %v5485 = vld [vmem:[%s6 + $0x154] sm:$0xf]
  %v5486 = vld [vmem:[%s6 + $0x158] sm:$0xf]
  %v5487 = vld [vmem:[%s6 + $0x15c] sm:$0xf]
  %v5488 = vld [vmem:[%s6 + $0x160] sm:$0xf]
  %v5489 = vld [vmem:[%s6 + $0x164] sm:$0xf]
  %v5490 = vld [vmem:[%s6 + $0x168] sm:$0xf]
  %v5491 = vld [vmem:[%s6 + $0x16c] sm:$0xf]
  %v5492 = vld [vmem:[%s6 + $0x170] sm:$0xf]
  %v5493 = vld [vmem:[%s6 + $0x174] sm:$0xf]
  %v5494 = vld [vmem:[%s6 + $0x178] sm:$0xf]
  %v5495 = vld [vmem:[%s6 + $0x17c] sm:$0xf]
  %v5496 = vld [vmem:[%s6 + $0x180] sm:$0xf]
  %v5497 = vld [vmem:[%s6 + $0x184] sm:$0xf]
  %v5498 = vld [vmem:[%s6 + $0x188] sm:$0xf]
  %v5499 = vld [vmem:[%s6 + $0x18c] sm:$0xf]
  %v5500 = vld [vmem:[%s6 + $0x190] sm:$0xf]
  %v5501 = vld [vmem:[%s6 + $0x194] sm:$0xf]
  %v5502 = vld [vmem:[%s6 + $0x198] sm:$0xf]
  %v5503 = vld [vmem:[%s6 + $0x19c] sm:$0xf]
  %v5504 = vld [vmem:[%s6 + $0x1a0] sm:$0xf]
  %v5505 = vld [vmem:[%s6 + $0x1a4] sm:$0xf]
  %v5506 = vld [vmem:[%s6 + $0x1a8] sm:$0xf]
  %v5507 = vld [vmem:[%s6 + $0x1ac] sm:$0xf]
  %v5508 = vld [vmem:[%s6 + $0x1b0] sm:$0xf]
  %v5509 = vld [vmem:[%s6 + $0x1b4] sm:$0xf]
  %v5510 = vld [vmem:[%s6 + $0x1b8] sm:$0xf]
  %v5539 = vunpack.c.l.b16 %v5483
  %v5540 = vunpack.c.l.b16 %v5484
  %v5541 = vunpack.c.l.b16 %v5485
  %v5542 = vunpack.c.l.b16 %v5486
  %v5543 = vunpack.c.l.b16 %v5487
  %v5544 = vunpack.c.l.b16 %v5488
  %v5545 = vunpack.c.l.b16 %v5489
  %v5546 = vunpack.c.l.b16 %v5490
  %v5547 = vunpack.c.l.b16 %v5491
  %v5548 = vunpack.c.l.b16 %v5492
  %v5549 = vunpack.c.l.b16 %v5493
  %v5550 = vunpack.c.l.b16 %v5494
  %v5551 = vunpack.c.l.b16 %v5495
  %v5552 = vunpack.c.l.b16 %v5496
  %v5553 = vunpack.c.l.b16 %v5497
  %v5554 = vunpack.c.l.b16 %v5498
  %v5555 = vunpack.c.l.b16 %v5499
  %v5556 = vunpack.c.l.b16 %v5500
  %v5557 = vunpack.c.l.b16 %v5501
  %v5558 = vunpack.c.l.b16 %v5502
  %v5559 = vunpack.c.l.b16 %v5503
  %v5560 = vunpack.c.l.b16 %v5504
  %v5561 = vunpack.c.l.b16 %v5505
  %v5562 = vunpack.c.l.b16 %v5506
  %v5563 = vunpack.c.l.b16 %v5507
  %v5564 = vunpack.c.l.b16 %v5508
  %v5565 = vunpack.c.l.b16 %v5509
  %v5566 = vunpack.c.l.b16 %v5510
  %v5567 = vpack.c.b16 %v5540, %v5539
  %v5568 = vpack.c.b16 %v5542, %v5541
  %v5569 = vpack.c.b16 %v5544, %v5543
  %v5570 = vpack.c.b16 %v5546, %v5545
  %v5571 = vpack.c.b16 %v5548, %v5547
  %v5572 = vpack.c.b16 %v5550, %v5549
  %v5573 = vpack.c.b16 %v5552, %v5551
  %v5574 = vpack.c.b16 %v5554, %v5553
  %v5575 = vpack.c.b16 %v5556, %v5555
  %v5576 = vpack.c.b16 %v5558, %v5557
  %v5577 = vpack.c.b16 %v5560, %v5559
  %v5578 = vpack.c.b16 %v5562, %v5561
  %v5579 = vpack.c.b16 %v5564, %v5563
  %v5580 = vpack.c.b16 %v5566, %v5565
  %vm5581 = vcmask 1046528
  %v5582 = vrot.slane %v5567, 1
  %v5583 = vrot.slane %v5568, 1
  %v5584 = vsel %vm5581, %v5582, %v5583
  %v5585 = vrot.slane %v5569, 1
  %v5586 = vsel %vm5581, %v5583, %v5585
  %v5587 = vrot.slane %v5570, 1
  %v5588 = vsel %vm5581, %v5585, %v5587
  %v5589 = vrot.slane %v5571, 1
  %v5590 = vsel %vm5581, %v5587, %v5589
  %v5591 = vrot.slane %v5572, 1
  %v5592 = vsel %vm5581, %v5589, %v5591
  %v5593 = vrot.slane %v5573, 1
  %v5594 = vsel %vm5581, %v5591, %v5593
  %v5595 = vrot.slane %v5574, 1
  %v5596 = vsel %vm5581, %v5593, %v5595
  %v5597 = vrot.slane %v5575, 1
  %v5598 = vsel %vm5581, %v5595, %v5597
  %v5599 = vrot.slane %v5576, 1
  %v5600 = vsel %vm5581, %v5597, %v5599
  %v5601 = vrot.slane %v5577, 1
  %v5602 = vsel %vm5581, %v5599, %v5601
  %v5603 = vrot.slane %v5578, 1
  %v5604 = vsel %vm5581, %v5601, %v5603
  %v5605 = vrot.slane %v5579, 1
  %v5606 = vsel %vm5581, %v5603, %v5605
  %v5607 = vrot.slane %v5580, 1
  %v5608 = vsel %vm5581, %v5605, %v5607
  %v5623 = vsel %vm338, %v4902, 0
  %v5626 = vsel %vm5042, %v5607, 0
  %5628 = vmatprep.subr.bf16.mxu0 0
  %5629 = vmatpush1.bf16.msra.mxu0 %v5584
  %5630 = vmatprep.subr.bf16.mxu0 0
  %5631 = vmatpush1.bf16.msra.mxu0 %v5586
  %5632 = vmatprep.subr.bf16.mxu0 0
  %5633 = vmatpush1.bf16.msra.mxu0 %v5588
  %5634 = vmatprep.subr.bf16.mxu0 0
  %5635 = vmatpush1.bf16.msra.mxu0 %v5590
  %5636 = vmatprep.subr.bf16.mxu0 0
  %5637 = vmatpush1.bf16.msra.mxu0 %v5592
  %5638 = vmatprep.subr.bf16.mxu0 0
  %5639 = vmatpush1.bf16.msra.mxu0 %v5594
  %5640 = vmatprep.subr.bf16.mxu0 0
  %5641 = vmatpush1.bf16.msra.mxu0 %v5596
  %5642 = vmatprep.subr.bf16.mxu0 0
  %5643 = vmatpush1.bf16.msra.mxu0 %v5598
  %5644 = vmatprep.subr.bf16.mxu0 0
  %5645 = vmatpush1.bf16.msra.mxu0 %v5600
  %5646 = vmatprep.subr.bf16.mxu0 0
  %5647 = vmatpush1.bf16.msra.mxu0 %v5602
  %5648 = vmatprep.subr.bf16.mxu0 0
  %5649 = vmatpush1.bf16.msra.mxu0 %v5604
  %5650 = vmatprep.subr.bf16.mxu0 0
  %5651 = vmatpush1.bf16.msra.mxu0 %v5606
  %5652 = vmatprep.subr.bf16.mxu0 0
  %5653 = vmatpush1.bf16.msra.mxu0 %v5608
  %5654 = vmatprep.subr.bf16.mxu0 0
  %5655 = vmatpush1.bf16.msra.mxu0 %v5626
  %5656 = vmatprep.subr.bf16.mxu0 0
  %5657 = vmatpush1.bf16.msra.mxu0 0
  %5658 = vmatprep.subr.bf16.mxu0 0
  %5659 = vmatpush1.bf16.msra.mxu0 0
  %5660 = vmatprep.mubr.bf16.mxu0 %v5623
  %5661 = vmatmul.mubr.bf16.gmra.mrb[0].mxu0 %v4901
  %v5662 = vpop.f32.mrb[0].mxu0
  %v5663 = vadd.f32 0.0, %v5662
  %v5664 = vpop.f32.mrb[0].mxu0
  %v5665 = vpop.f32.mrb[0].mxu0
  %v5666 = vadd.f32 0.0, %v5665
  %v5667 = vpop.f32.mrb[0].mxu0
  %5668 = vdwg.mxu0
  %v5669 = vadd.f32 %v5481, %v5663
  %v5670 = vadd.f32 %v5482, %v5666
  %v5671 = vld [vmem:[%s6 + $0x1bc] sm:$0xf]
  %v5672 = vld [vmem:[%s6 + $0x1c0] sm:$0xf]
  %v5673 = vld [vmem:[%s6 + $0x1c4] sm:$0xf]
  %v5674 = vld [vmem:[%s6 + $0x1c8] sm:$0xf]
  %v5675 = vld [vmem:[%s6 + $0x1cc] sm:$0xf]
  %v5676 = vld [vmem:[%s6 + $0x1d0] sm:$0xf]
  %v5677 = vld [vmem:[%s6 + $0x1d4] sm:$0xf]
  %v5678 = vld [vmem:[%s6 + $0x1d8] sm:$0xf]
  %v5679 = vld [vmem:[%s6 + $0x1dc] sm:$0xf]
  %v5680 = vld [vmem:[%s6 + $0x1e0] sm:$0xf]
  %v5681 = vld [vmem:[%s6 + $0x1e4] sm:$0xf]
  %v5682 = vld [vmem:[%s6 + $0x1e8] sm:$0xf]
  %v5683 = vld [vmem:[%s6 + $0x1ec] sm:$0xf]
  %v5684 = vld [vmem:[%s6 + $0x1f0] sm:$0xf]
  %v5685 = vld [vmem:[%s6 + $0x1f4] sm:$0xf]
  %v5686 = vld [vmem:[%s6 + $0x1f8] sm:$0xf]
  %v5687 = vld [vmem:[%s6 + $0x1fc] sm:$0xf]
  %v5688 = vld [vmem:[%s6 + $0x200] sm:$0xf]
  %v5689 = vld [vmem:[%s6 + $0x204] sm:$0xf]
  %v5690 = vld [vmem:[%s6 + $0x208] sm:$0xf]
  %v5691 = vld [vmem:[%s6 + $0x20c] sm:$0xf]
  %v5692 = vld [vmem:[%s6 + $0x210] sm:$0xf]
  %v5693 = vld [vmem:[%s6 + $0x214] sm:$0xf]
  %v5694 = vld [vmem:[%s6 + $0x218] sm:$0xf]
  %v5695 = vld [vmem:[%s6 + $0x21c] sm:$0xf]
  %v5696 = vld [vmem:[%s6 + $0x220] sm:$0xf]
  %v5697 = vld [vmem:[%s6 + $0x224] sm:$0xf]
  %v5698 = vld [vmem:[%s6 + $0x228] sm:$0x7]
  %v5727 = vunpack.c.l.b16 %v5671
  %v5728 = vunpack.c.l.b16 %v5672
  %v5729 = vunpack.c.l.b16 %v5673
  %v5730 = vunpack.c.l.b16 %v5674
  %v5731 = vunpack.c.l.b16 %v5675
  %v5732 = vunpack.c.l.b16 %v5676
  %v5733 = vunpack.c.l.b16 %v5677
  %v5734 = vunpack.c.l.b16 %v5678
  %v5735 = vunpack.c.l.b16 %v5679
  %v5736 = vunpack.c.l.b16 %v5680
  %v5737 = vunpack.c.l.b16 %v5681
  %v5738 = vunpack.c.l.b16 %v5682
  %v5739 = vunpack.c.l.b16 %v5683
  %v5740 = vunpack.c.l.b16 %v5684
  %v5741 = vunpack.c.l.b16 %v5685
  %v5742 = vunpack.c.l.b16 %v5686
  %v5743 = vunpack.c.l.b16 %v5687
  %v5744 = vunpack.c.l.b16 %v5688
  %v5745 = vunpack.c.l.b16 %v5689
  %v5746 = vunpack.c.l.b16 %v5690
  %v5747 = vunpack.c.l.b16 %v5691
  %v5748 = vunpack.c.l.b16 %v5692
  %v5749 = vunpack.c.l.b16 %v5693
  %v5750 = vunpack.c.l.b16 %v5694
  %v5751 = vunpack.c.l.b16 %v5695
  %v5752 = vunpack.c.l.b16 %v5696
  %v5753 = vunpack.c.l.b16 %v5697
  %v5754 = vunpack.c.l.b16 %v5698
  %v5755 = vpack.c.b16 %v5728, %v5727
  %v5756 = vpack.c.b16 %v5730, %v5729
  %v5757 = vpack.c.b16 %v5732, %v5731
  %v5758 = vpack.c.b16 %v5734, %v5733
  %v5759 = vpack.c.b16 %v5736, %v5735
  %v5760 = vpack.c.b16 %v5738, %v5737
  %v5761 = vpack.c.b16 %v5740, %v5739
  %v5762 = vpack.c.b16 %v5742, %v5741
  %v5763 = vpack.c.b16 %v5744, %v5743
  %v5764 = vpack.c.b16 %v5746, %v5745
  %v5765 = vpack.c.b16 %v5748, %v5747
  %v5766 = vpack.c.b16 %v5750, %v5749
  %v5767 = vpack.c.b16 %v5752, %v5751
  %v5768 = vpack.c.b16 %v5754, %v5753
  %v5783 = vsel %vm338, %v4904, 0
  %v5786 = vsel %vm5042, %v5768, 0
  %5788 = vmatprep.subr.bf16.mxu0 0
  %5789 = vmatpush1.bf16.msra.mxu0 %v5755
  %5790 = vmatprep.subr.bf16.mxu0 0
  %5791 = vmatpush1.bf16.msra.mxu0 %v5756
  %5792 = vmatprep.subr.bf16.mxu0 0
  %5793 = vmatpush1.bf16.msra.mxu0 %v5757
  %5794 = vmatprep.subr.bf16.mxu0 0
  %5795 = vmatpush1.bf16.msra.mxu0 %v5758
  %5796 = vmatprep.subr.bf16.mxu0 0
  %5797 = vmatpush1.bf16.msra.mxu0 %v5759
  %5798 = vmatprep.subr.bf16.mxu0 0
  %5799 = vmatpush1.bf16.msra.mxu0 %v5760
  %5800 = vmatprep.subr.bf16.mxu0 0
  %5801 = vmatpush1.bf16.msra.mxu0 %v5761
  %5802 = vmatprep.subr.bf16.mxu0 0
  %5803 = vmatpush1.bf16.msra.mxu0 %v5762
  %5804 = vmatprep.subr.bf16.mxu0 0
  %5805 = vmatpush1.bf16.msra.mxu0 %v5763
  %5806 = vmatprep.subr.bf16.mxu0 0
  %5807 = vmatpush1.bf16.msra.mxu0 %v5764
  %5808 = vmatprep.subr.bf16.mxu0 0
  %5809 = vmatpush1.bf16.msra.mxu0 %v5765
  %5810 = vmatprep.subr.bf16.mxu0 0
  %5811 = vmatpush1.bf16.msra.mxu0 %v5766
  %5812 = vmatprep.subr.bf16.mxu0 0
  %5813 = vmatpush1.bf16.msra.mxu0 %v5767
  %5814 = vmatprep.subr.bf16.mxu0 0
  %5815 = vmatpush1.bf16.msra.mxu0 %v5786
  %5816 = vmatprep.subr.bf16.mxu0 0
  %5817 = vmatpush1.bf16.msra.mxu0 0
  %5818 = vmatprep.subr.bf16.mxu0 0
  %5819 = vmatpush1.bf16.msra.mxu0 0
  %5820 = vmatprep.mubr.bf16.mxu0 %v5783
  %5821 = vmatmul.mubr.bf16.gmra.mrb[0].mxu0 %v4903
  %v5822 = vpop.f32.mrb[0].mxu0
  %v5823 = vadd.f32 0.0, %v5822
  %v5824 = vpop.f32.mrb[0].mxu0
  %v5825 = vpop.f32.mrb[0].mxu0
  %v5826 = vadd.f32 0.0, %v5825
  %v5827 = vpop.f32.mrb[0].mxu0
  %5828 = vdwg.mxu0
  %v5829 = vadd.f32 %v5669, %v5823
  %v5830 = vadd.f32 %v5670, %v5826
  %v5831 = vld [vmem:[%s6 + $0x228] sm:$0x8]
  %v5832 = vld [vmem:[%s6 + $0x22c] sm:$0xf]
  %v5833 = vld [vmem:[%s6 + $0x230] sm:$0xf]
  %v5834 = vld [vmem:[%s6 + $0x234] sm:$0xf]
  %v5835 = vld [vmem:[%s6 + $0x238] sm:$0xf]
  %v5836 = vld [vmem:[%s6 + $0x23c] sm:$0xf]
  %v5837 = vld [vmem:[%s6 + $0x240] sm:$0xf]
  %v5838 = vld [vmem:[%s6 + $0x244] sm:$0xf]
  %v5839 = vld [vmem:[%s6 + $0x248] sm:$0xf]
  %v5840 = vld [vmem:[%s6 + $0x24c] sm:$0xf]
  %v5841 = vld [vmem:[%s6 + $0x250] sm:$0xf]
  %v5842 = vld [vmem:[%s6 + $0x254] sm:$0xf]
  %v5843 = vld [vmem:[%s6 + $0x258] sm:$0xf]
  %v5844 = vld [vmem:[%s6 + $0x25c] sm:$0xf]
  %v5845 = vld [vmem:[%s6 + $0x260] sm:$0xf]
  %v5846 = vld [vmem:[%s6 + $0x264] sm:$0xf]
  %v5847 = vld [vmem:[%s6 + $0x268] sm:$0xf]
  %v5848 = vld [vmem:[%s6 + $0x26c] sm:$0xf]
  %v5849 = vld [vmem:[%s6 + $0x270] sm:$0xf]
  %v5850 = vld [vmem:[%s6 + $0x274] sm:$0xf]
  %v5851 = vld [vmem:[%s6 + $0x278] sm:$0xf]
  %v5852 = vld [vmem:[%s6 + $0x27c] sm:$0xf]
  %v5853 = vld [vmem:[%s6 + $0x280] sm:$0xf]
  %v5854 = vld [vmem:[%s6 + $0x284] sm:$0xf]
  %v5855 = vld [vmem:[%s6 + $0x288] sm:$0xf]
  %v5856 = vld [vmem:[%s6 + $0x28c] sm:$0xf]
  %v5857 = vld [vmem:[%s6 + $0x290] sm:$0xf]
  %v5858 = vld [vmem:[%s6 + $0x294] sm:$0xf]
  %v5859 = vld [vmem:[%s6 + $0x298] sm:$0x3]
  %v5889 = vunpack.c.l.b16 %v5831
  %v5890 = vunpack.c.l.b16 %v5832
  %v5891 = vunpack.c.l.b16 %v5833
  %v5892 = vunpack.c.l.b16 %v5834
  %v5893 = vunpack.c.l.b16 %v5835
  %v5894 = vunpack.c.l.b16 %v5836
  %v5895 = vunpack.c.l.b16 %v5837
  %v5896 = vunpack.c.l.b16 %v5838
  %v5897 = vunpack.c.l.b16 %v5839
  %v5898 = vunpack.c.l.b16 %v5840
  %v5899 = vunpack.c.l.b16 %v5841
  %v5900 = vunpack.c.l.b16 %v5842
  %v5901 = vunpack.c.l.b16 %v5843
  %v5902 = vunpack.c.l.b16 %v5844
  %v5903 = vunpack.c.l.b16 %v5845
  %v5904 = vunpack.c.l.b16 %v5846
  %v5905 = vunpack.c.l.b16 %v5847
  %v5906 = vunpack.c.l.b16 %v5848
  %v5907 = vunpack.c.l.b16 %v5849
  %v5908 = vunpack.c.l.b16 %v5850
  %v5909 = vunpack.c.l.b16 %v5851
  %v5910 = vunpack.c.l.b16 %v5852
  %v5911 = vunpack.c.l.b16 %v5853
  %v5912 = vunpack.c.l.b16 %v5854
  %v5913 = vunpack.c.l.b16 %v5855
  %v5914 = vunpack.c.l.b16 %v5856
  %v5915 = vunpack.c.l.b16 %v5857
  %v5916 = vunpack.c.l.b16 %v5858
  %v5917 = vunpack.c.l.b16 %v5859
  %v5918 = vpack.c.b16 %v5890, %v5889
  %v5919 = vpack.c.b16 %v5892, %v5891
  %v5920 = vpack.c.b16 %v5894, %v5893
  %v5921 = vpack.c.b16 %v5896, %v5895
  %v5922 = vpack.c.b16 %v5898, %v5897
  %v5923 = vpack.c.b16 %v5900, %v5899
  %v5924 = vpack.c.b16 %v5902, %v5901
  %v5925 = vpack.c.b16 %v5904, %v5903
  %v5926 = vpack.c.b16 %v5906, %v5905
  %v5927 = vpack.c.b16 %v5908, %v5907
  %v5928 = vpack.c.b16 %v5910, %v5909
  %v5929 = vpack.c.b16 %v5912, %v5911
  %v5930 = vpack.c.b16 %v5914, %v5913
  %v5931 = vpack.c.b16 %v5916, %v5915
  %v5932 = vpack.c.b16 %v5917, %v5917
  %v5933 = vrot.slane %v5918, 3
  %v5934 = vrot.slane %v5919, 3
  %v5935 = vsel %vm5197, %v5933, %v5934
  %v5936 = vrot.slane %v5920, 3
  %v5937 = vsel %vm5197, %v5934, %v5936
  %v5938 = vrot.slane %v5921, 3
  %v5939 = vsel %vm5197, %v5936, %v5938
  %v5940 = vrot.slane %v5922, 3
  %v5941 = vsel %vm5197, %v5938, %v5940
  %v5942 = vrot.slane %v5923, 3
  %v5943 = vsel %vm5197, %v5940, %v5942
  %v5944 = vrot.slane %v5924, 3
  %v5945 = vsel %vm5197, %v5942, %v5944
  %v5946 = vrot.slane %v5925, 3
  %v5947 = vsel %vm5197, %v5944, %v5946
  %v5948 = vrot.slane %v5926, 3
  %v5949 = vsel %vm5197, %v5946, %v5948
  %v5950 = vrot.slane %v5927, 3
  %v5951 = vsel %vm5197, %v5948, %v5950
  %v5952 = vrot.slane %v5928, 3
  %v5953 = vsel %vm5197, %v5950, %v5952
  %v5954 = vrot.slane %v5929, 3
  %v5955 = vsel %vm5197, %v5952, %v5954
  %v5956 = vrot.slane %v5930, 3
  %v5957 = vsel %vm5197, %v5954, %v5956
  %v5958 = vrot.slane %v5931, 3
  %v5959 = vsel %vm5197, %v5956, %v5958
  %v5960 = vrot.slane %v5932, 3
  %v5961 = vsel %vm5197, %v5958, %v5960
  %v5976 = vsel %vm338, %v4906, 0
  %v5979 = vsel %vm5042, %v5961, 0
  %5981 = vmatprep.subr.bf16.mxu0 0
  %5982 = vmatpush1.bf16.msra.mxu0 %v5935
  %5983 = vmatprep.subr.bf16.mxu0 0
  %5984 = vmatpush1.bf16.msra.mxu0 %v5937
  %5985 = vmatprep.subr.bf16.mxu0 0
  %5986 = vmatpush1.bf16.msra.mxu0 %v5939
  %5987 = vmatprep.subr.bf16.mxu0 0
  %5988 = vmatpush1.bf16.msra.mxu0 %v5941
  %5989 = vmatprep.subr.bf16.mxu0 0
  %5990 = vmatpush1.bf16.msra.mxu0 %v5943
  %5991 = vmatprep.subr.bf16.mxu0 0
  %5992 = vmatpush1.bf16.msra.mxu0 %v5945
  %5993 = vmatprep.subr.bf16.mxu0 0
  %5994 = vmatpush1.bf16.msra.mxu0 %v5947
  %5995 = vmatprep.subr.bf16.mxu0 0
  %5996 = vmatpush1.bf16.msra.mxu0 %v5949
  %5997 = vmatprep.subr.bf16.mxu0 0
  %5998 = vmatpush1.bf16.msra.mxu0 %v5951
  %5999 = vmatprep.subr.bf16.mxu0 0
  %6000 = vmatpush1.bf16.msra.mxu0 %v5953
  %6001 = vmatprep.subr.bf16.mxu0 0
  %6002 = vmatpush1.bf16.msra.mxu0 %v5955
  %6003 = vmatprep.subr.bf16.mxu0 0
  %6004 = vmatpush1.bf16.msra.mxu0 %v5957
  %6005 = vmatprep.subr.bf16.mxu0 0
  %6006 = vmatpush1.bf16.msra.mxu0 %v5959
  %6007 = vmatprep.subr.bf16.mxu0 0
  %6008 = vmatpush1.bf16.msra.mxu0 %v5979
  %6009 = vmatprep.subr.bf16.mxu0 0
  %6010 = vmatpush1.bf16.msra.mxu0 0
  %6011 = vmatprep.subr.bf16.mxu0 0
  %6012 = vmatpush1.bf16.msra.mxu0 0
  %6013 = vmatprep.mubr.bf16.mxu0 %v5976
  %6014 = vmatmul.mubr.bf16.gmra.mrb[0].mxu0 %v4905
  %v6015 = vpop.f32.mrb[0].mxu0
  %v6016 = vadd.f32 0.0, %v6015
  %v6017 = vpop.f32.mrb[0].mxu0
  %v6018 = vpop.f32.mrb[0].mxu0
  %v6019 = vadd.f32 0.0, %v6018
  %v6020 = vpop.f32.mrb[0].mxu0
  %6021 = vdwg.mxu0
  %v6022 = vadd.f32 %v5829, %v6016
  %v6023 = vadd.f32 %v5830, %v6019
  %v6024 = vld [vmem:[%s6 + $0x298] sm:$0xc]
  %v6025 = vld [vmem:[%s6 + $0x29c] sm:$0xf]
  %v6026 = vld [vmem:[%s6 + $0x2a0] sm:$0xf]
  %v6027 = vld [vmem:[%s6 + $0x2a4] sm:$0xf]
  %v6028 = vld [vmem:[%s6 + $0x2a8] sm:$0xf]
  %v6029 = vld [vmem:[%s6 + $0x2ac] sm:$0xf]
  %v6030 = vld [vmem:[%s6 + $0x2b0] sm:$0xf]
  %v6031 = vld [vmem:[%s6 + $0x2b4] sm:$0xf]
  %v6032 = vld [vmem:[%s6 + $0x2b8] sm:$0xf]
  %v6033 = vld [vmem:[%s6 + $0x2bc] sm:$0xf]
  %v6034 = vld [vmem:[%s6 + $0x2c0] sm:$0xf]
  %v6035 = vld [vmem:[%s6 + $0x2c4] sm:$0xf]
  %v6036 = vld [vmem:[%s6 + $0x2c8] sm:$0xf]
  %v6037 = vld [vmem:[%s6 + $0x2cc] sm:$0xf]
  %v6038 = vld [vmem:[%s6 + $0x2d0] sm:$0xf]
  %v6039 = vld [vmem:[%s6 + $0x2d4] sm:$0xf]
  %v6040 = vld [vmem:[%s6 + $0x2d8] sm:$0xf]
  %v6041 = vld [vmem:[%s6 + $0x2dc] sm:$0xf]
  %v6042 = vld [vmem:[%s6 + $0x2e0] sm:$0xf]
  %v6043 = vld [vmem:[%s6 + $0x2e4] sm:$0xf]
  %v6044 = vld [vmem:[%s6 + $0x2e8] sm:$0xf]
  %v6045 = vld [vmem:[%s6 + $0x2ec] sm:$0xf]
  %v6046 = vld [vmem:[%s6 + $0x2f0] sm:$0xf]
  %v6047 = vld [vmem:[%s6 + $0x2f4] sm:$0xf]
  %v6048 = vld [vmem:[%s6 + $0x2f8] sm:$0xf]
  %v6049 = vld [vmem:[%s6 + $0x2fc] sm:$0xf]
  %v6050 = vld [vmem:[%s6 + $0x300] sm:$0xf]
  %v6051 = vld [vmem:[%s6 + $0x304] sm:$0xf]
  %v6052 = vld [vmem:[%s6 + $0x308] sm:$0x1]
  %v6082 = vunpack.c.l.b16 %v6024
  %v6083 = vunpack.c.l.b16 %v6025
  %v6084 = vunpack.c.l.b16 %v6026
  %v6085 = vunpack.c.l.b16 %v6027
  %v6086 = vunpack.c.l.b16 %v6028
  %v6087 = vunpack.c.l.b16 %v6029
  %v6088 = vunpack.c.l.b16 %v6030
  %v6089 = vunpack.c.l.b16 %v6031
  %v6090 = vunpack.c.l.b16 %v6032
  %v6091 = vunpack.c.l.b16 %v6033
  %v6092 = vunpack.c.l.b16 %v6034
  %v6093 = vunpack.c.l.b16 %v6035
  %v6094 = vunpack.c.l.b16 %v6036
  %v6095 = vunpack.c.l.b16 %v6037
  %v6096 = vunpack.c.l.b16 %v6038
  %v6097 = vunpack.c.l.b16 %v6039
  %v6098 = vunpack.c.l.b16 %v6040
  %v6099 = vunpack.c.l.b16 %v6041
  %v6100 = vunpack.c.l.b16 %v6042
  %v6101 = vunpack.c.l.b16 %v6043
  %v6102 = vunpack.c.l.b16 %v6044
  %v6103 = vunpack.c.l.b16 %v6045
  %v6104 = vunpack.c.l.b16 %v6046
  %v6105 = vunpack.c.l.b16 %v6047
  %v6106 = vunpack.c.l.b16 %v6048
  %v6107 = vunpack.c.l.b16 %v6049
  %v6108 = vunpack.c.l.b16 %v6050
  %v6109 = vunpack.c.l.b16 %v6051
  %v6110 = vunpack.c.l.b16 %v6052
  %v6111 = vpack.c.b16 %v6083, %v6082
  %v6112 = vpack.c.b16 %v6085, %v6084
  %v6113 = vpack.c.b16 %v6087, %v6086
  %v6114 = vpack.c.b16 %v6089, %v6088
  %v6115 = vpack.c.b16 %v6091, %v6090
  %v6116 = vpack.c.b16 %v6093, %v6092
  %v6117 = vpack.c.b16 %v6095, %v6094
  %v6118 = vpack.c.b16 %v6097, %v6096
  %v6119 = vpack.c.b16 %v6099, %v6098
  %v6120 = vpack.c.b16 %v6101, %v6100
  %v6121 = vpack.c.b16 %v6103, %v6102
  %v6122 = vpack.c.b16 %v6105, %v6104
  %v6123 = vpack.c.b16 %v6107, %v6106
  %v6124 = vpack.c.b16 %v6109, %v6108
  %v6125 = vpack.c.b16 %v6110, %v6110
  %v6126 = vrot.slane %v6111, 2
  %v6127 = vrot.slane %v6112, 2
  %v6128 = vsel %vm5391, %v6126, %v6127
  %v6129 = vrot.slane %v6113, 2
  %v6130 = vsel %vm5391, %v6127, %v6129
  %v6131 = vrot.slane %v6114, 2
  %v6132 = vsel %vm5391, %v6129, %v6131
  %v6133 = vrot.slane %v6115, 2
  %v6134 = vsel %vm5391, %v6131, %v6133
  %v6135 = vrot.slane %v6116, 2
  %v6136 = vsel %vm5391, %v6133, %v6135
  %v6137 = vrot.slane %v6117, 2
  %v6138 = vsel %vm5391, %v6135, %v6137
  %v6139 = vrot.slane %v6118, 2
  %v6140 = vsel %vm5391, %v6137, %v6139
  %v6141 = vrot.slane %v6119, 2
  %v6142 = vsel %vm5391, %v6139, %v6141
  %v6143 = vrot.slane %v6120, 2
  %v6144 = vsel %vm5391, %v6141, %v6143
  %v6145 = vrot.slane %v6121, 2
  %v6146 = vsel %vm5391, %v6143, %v6145
  %v6147 = vrot.slane %v6122, 2
  %v6148 = vsel %vm5391, %v6145, %v6147
  %v6149 = vrot.slane %v6123, 2
  %v6150 = vsel %vm5391, %v6147, %v6149
  %v6151 = vrot.slane %v6124, 2
  %v6152 = vsel %vm5391, %v6149, %v6151
  %v6153 = vrot.slane %v6125, 2
  %v6154 = vsel %vm5391, %v6151, %v6153
  %v6169 = vsel %vm338, %v4908, 0
  %v6172 = vsel %vm5042, %v6154, 0
  %6174 = vmatprep.subr.bf16.mxu0 0
  %6175 = vmatpush1.bf16.msra.mxu0 %v6128
  %6176 = vmatprep.subr.bf16.mxu0 0
  %6177 = vmatpush1.bf16.msra.mxu0 %v6130
  %6178 = vmatprep.subr.bf16.mxu0 0
  %6179 = vmatpush1.bf16.msra.mxu0 %v6132
  %6180 = vmatprep.subr.bf16.mxu0 0
  %6181 = vmatpush1.bf16.msra.mxu0 %v6134
  %6182 = vmatprep.subr.bf16.mxu0 0
  %6183 = vmatpush1.bf16.msra.mxu0 %v6136
  %6184 = vmatprep.subr.bf16.mxu0 0
  %6185 = vmatpush1.bf16.msra.mxu0 %v6138
  %6186 = vmatprep.subr.bf16.mxu0 0
  %6187 = vmatpush1.bf16.msra.mxu0 %v6140
  %6188 = vmatprep.subr.bf16.mxu0 0
  %6189 = vmatpush1.bf16.msra.mxu0 %v6142
  %6190 = vmatprep.subr.bf16.mxu0 0
  %6191 = vmatpush1.bf16.msra.mxu0 %v6144
  %6192 = vmatprep.subr.bf16.mxu0 0
  %6193 = vmatpush1.bf16.msra.mxu0 %v6146
  %6194 = vmatprep.subr.bf16.mxu0 0
  %6195 = vmatpush1.bf16.msra.mxu0 %v6148
  %6196 = vmatprep.subr.bf16.mxu0 0
  %6197 = vmatpush1.bf16.msra.mxu0 %v6150
  %6198 = vmatprep.subr.bf16.mxu0 0
  %6199 = vmatpush1.bf16.msra.mxu0 %v6152
  %6200 = vmatprep.subr.bf16.mxu0 0
  %6201 = vmatpush1.bf16.msra.mxu0 %v6172
  %6202 = vmatprep.subr.bf16.mxu0 0
  %6203 = vmatpush1.bf16.msra.mxu0 0
  %6204 = vmatprep.subr.bf16.mxu0 0
  %6205 = vmatpush1.bf16.msra.mxu0 0
  %6206 = vmatprep.mubr.bf16.mxu0 %v6169
  %6207 = vmatmul.mubr.bf16.gmra.mrb[0].mxu0 %v4907
  %v6208 = vpop.f32.mrb[0].mxu0
  %v6209 = vadd.f32 0.0, %v6208
  %v6210 = vpop.f32.mrb[0].mxu0
  %v6211 = vpop.f32.mrb[0].mxu0
  %v6212 = vadd.f32 0.0, %v6211
  %v6213 = vpop.f32.mrb[0].mxu0
  %6214 = vdwg.mxu0
  %v6215 = vadd.f32 %v6022, %v6209
  %v6216 = vadd.f32 %v6023, %v6212
  %v6217 = vld [vmem:[%s6 + $0x308] sm:$0xe]
  %v6218 = vld [vmem:[%s6 + $0x30c] sm:$0xf]
  %v6219 = vld [vmem:[%s6 + $0x310] sm:$0xf]
  %v6220 = vld [vmem:[%s6 + $0x314] sm:$0xf]
  %v6221 = vld [vmem:[%s6 + $0x318] sm:$0xf]
  %v6222 = vld [vmem:[%s6 + $0x31c] sm:$0xf]
  %v6223 = vld [vmem:[%s6 + $0x320] sm:$0xf]
  %v6224 = vld [vmem:[%s6 + $0x324] sm:$0xf]
  %v6225 = vld [vmem:[%s6 + $0x328] sm:$0xf]
  %v6226 = vld [vmem:[%s6 + $0x32c] sm:$0xf]
  %v6227 = vld [vmem:[%s6 + $0x330] sm:$0xf]
  %v6228 = vld [vmem:[%s6 + $0x334] sm:$0xf]
  %v6229 = vld [vmem:[%s6 + $0x338] sm:$0xf]
  %v6230 = vld [vmem:[%s6 + $0x33c] sm:$0xf]
  %v6231 = vld [vmem:[%s6 + $0x340] sm:$0xf]
  %v6232 = vld [vmem:[%s6 + $0x344] sm:$0xf]
  %v6233 = vld [vmem:[%s6 + $0x348] sm:$0xf]
  %v6234 = vld [vmem:[%s6 + $0x34c] sm:$0xf]
  %v6235 = vld [vmem:[%s6 + $0x350] sm:$0xf]
  %v6236 = vld [vmem:[%s6 + $0x354] sm:$0xf]
  %v6237 = vld [vmem:[%s6 + $0x358] sm:$0xf]
  %v6238 = vld [vmem:[%s6 + $0x35c] sm:$0xf]
  %v6239 = vld [vmem:[%s6 + $0x360] sm:$0xf]
  %v6240 = vld [vmem:[%s6 + $0x364] sm:$0xf]
  %v6241 = vld [vmem:[%s6 + $0x368] sm:$0xf]
  %v6242 = vld [vmem:[%s6 + $0x36c] sm:$0xf]
  %v6243 = vld [vmem:[%s6 + $0x370] sm:$0xf]
  %v6244 = vld [vmem:[%s6 + $0x374] sm:$0xf]
  %v6273 = vunpack.c.l.b16 %v6217
  %v6274 = vunpack.c.l.b16 %v6218
  %v6275 = vunpack.c.l.b16 %v6219
  %v6276 = vunpack.c.l.b16 %v6220
  %v6277 = vunpack.c.l.b16 %v6221
  %v6278 = vunpack.c.l.b16 %v6222
  %v6279 = vunpack.c.l.b16 %v6223
  %v6280 = vunpack.c.l.b16 %v6224
  %v6281 = vunpack.c.l.b16 %v6225
  %v6282 = vunpack.c.l.b16 %v6226
  %v6283 = vunpack.c.l.b16 %v6227
  %v6284 = vunpack.c.l.b16 %v6228
  %v6285 = vunpack.c.l.b16 %v6229
  %v6286 = vunpack.c.l.b16 %v6230
  %v6287 = vunpack.c.l.b16 %v6231
  %v6288 = vunpack.c.l.b16 %v6232
  %v6289 = vunpack.c.l.b16 %v6233
  %v6290 = vunpack.c.l.b16 %v6234
  %v6291 = vunpack.c.l.b16 %v6235
  %v6292 = vunpack.c.l.b16 %v6236
  %v6293 = vunpack.c.l.b16 %v6237
  %v6294 = vunpack.c.l.b16 %v6238
  %v6295 = vunpack.c.l.b16 %v6239
  %v6296 = vunpack.c.l.b16 %v6240
  %v6297 = vunpack.c.l.b16 %v6241
  %v6298 = vunpack.c.l.b16 %v6242
  %v6299 = vunpack.c.l.b16 %v6243
  %v6300 = vunpack.c.l.b16 %v6244
  %v6301 = vpack.c.b16 %v6274, %v6273
  %v6302 = vpack.c.b16 %v6276, %v6275
  %v6303 = vpack.c.b16 %v6278, %v6277
  %v6304 = vpack.c.b16 %v6280, %v6279
  %v6305 = vpack.c.b16 %v6282, %v6281
  %v6306 = vpack.c.b16 %v6284, %v6283
  %v6307 = vpack.c.b16 %v6286, %v6285
  %v6308 = vpack.c.b16 %v6288, %v6287
  %v6309 = vpack.c.b16 %v6290, %v6289
  %v6310 = vpack.c.b16 %v6292, %v6291
  %v6311 = vpack.c.b16 %v6294, %v6293
  %v6312 = vpack.c.b16 %v6296, %v6295
  %v6313 = vpack.c.b16 %v6298, %v6297
  %v6314 = vpack.c.b16 %v6300, %v6299
  %v6315 = vrot.slane %v6301, 1
  %v6316 = vrot.slane %v6302, 1
  %v6317 = vsel %vm5581, %v6315, %v6316
  %v6318 = vrot.slane %v6303, 1
  %v6319 = vsel %vm5581, %v6316, %v6318
  %v6320 = vrot.slane %v6304, 1
  %v6321 = vsel %vm5581, %v6318, %v6320
  %v6322 = vrot.slane %v6305, 1
  %v6323 = vsel %vm5581, %v6320, %v6322
  %v6324 = vrot.slane %v6306, 1
  %v6325 = vsel %vm5581, %v6322, %v6324
  %v6326 = vrot.slane %v6307, 1
  %v6327 = vsel %vm5581, %v6324, %v6326
  %v6328 = vrot.slane %v6308, 1
  %v6329 = vsel %vm5581, %v6326, %v6328
  %v6330 = vrot.slane %v6309, 1
  %v6331 = vsel %vm5581, %v6328, %v6330
  %v6332 = vrot.slane %v6310, 1
  %v6333 = vsel %vm5581, %v6330, %v6332
  %v6334 = vrot.slane %v6311, 1
  %v6335 = vsel %vm5581, %v6332, %v6334
  %v6336 = vrot.slane %v6312, 1
  %v6337 = vsel %vm5581, %v6334, %v6336
  %v6338 = vrot.slane %v6313, 1
  %v6339 = vsel %vm5581, %v6336, %v6338
  %v6340 = vrot.slane %v6314, 1
  %v6341 = vsel %vm5581, %v6338, %v6340
  %v6356 = vsel %vm338, %v4910, 0
  %v6359 = vsel %vm5042, %v6340, 0
  %6361 = vmatprep.subr.bf16.mxu0 0
  %6362 = vmatpush1.bf16.msra.mxu0 %v6317
  %6363 = vmatprep.subr.bf16.mxu0 0
  %6364 = vmatpush1.bf16.msra.mxu0 %v6319
  %6365 = vmatprep.subr.bf16.mxu0 0
  %6366 = vmatpush1.bf16.msra.mxu0 %v6321
  %6367 = vmatprep.subr.bf16.mxu0 0
  %6368 = vmatpush1.bf16.msra.mxu0 %v6323
  %6369 = vmatprep.subr.bf16.mxu0 0
  %6370 = vmatpush1.bf16.msra.mxu0 %v6325
  %6371 = vmatprep.subr.bf16.mxu0 0
  %6372 = vmatpush1.bf16.msra.mxu0 %v6327
  %6373 = vmatprep.subr.bf16.mxu0 0
  %6374 = vmatpush1.bf16.msra.mxu0 %v6329
  %6375 = vmatprep.subr.bf16.mxu0 0
  %6376 = vmatpush1.bf16.msra.mxu0 %v6331
  %6377 = vmatprep.subr.bf16.mxu0 0
  %6378 = vmatpush1.bf16.msra.mxu0 %v6333
  %6379 = vmatprep.subr.bf16.mxu0 0
  %6380 = vmatpush1.bf16.msra.mxu0 %v6335
  %6381 = vmatprep.subr.bf16.mxu0 0
  %6382 = vmatpush1.bf16.msra.mxu0 %v6337
  %6383 = vmatprep.subr.bf16.mxu0 0
  %6384 = vmatpush1.bf16.msra.mxu0 %v6339
  %6385 = vmatprep.subr.bf16.mxu0 0
  %6386 = vmatpush1.bf16.msra.mxu0 %v6341
  %6387 = vmatprep.subr.bf16.mxu0 0
  %6388 = vmatpush1.bf16.msra.mxu0 %v6359
  %6389 = vmatprep.subr.bf16.mxu0 0
  %6390 = vmatpush1.bf16.msra.mxu0 0
  %6391 = vmatprep.subr.bf16.mxu0 0
  %6392 = vmatpush1.bf16.msra.mxu0 0
  %6393 = vmatprep.mubr.bf16.mxu0 %v6356
  %6394 = vmatmul.mubr.bf16.gmra.mrb[0].mxu0 %v4909
  %v6395 = vpop.f32.mrb[0].mxu0
  %v6396 = vadd.f32 0.0, %v6395
  %v6397 = vpop.f32.mrb[0].mxu0
  %v6398 = vpop.f32.mrb[0].mxu0
  %v6399 = vadd.f32 0.0, %v6398
  %v6400 = vpop.f32.mrb[0].mxu0
  %6401 = vdwg.mxu0
  %v6402 = vadd.f32 %v6215, %v6396
  %v6403 = vadd.f32 %v6216, %v6399
  %v6404 = vld [vmem:[%s6 + $0x378] sm:$0xf]
  %v6405 = vld [vmem:[%s6 + $0x37c] sm:$0xf]
  %v6406 = vld [vmem:[%s6 + $0x380] sm:$0xf]
  %v6407 = vld [vmem:[%s6 + $0x384] sm:$0xf]
  %v6408 = vld [vmem:[%s6 + $0x388] sm:$0xf]
  %v6409 = vld [vmem:[%s6 + $0x38c] sm:$0xf]
  %v6410 = vld [vmem:[%s6 + $0x390] sm:$0xf]
  %v6411 = vld [vmem:[%s6 + $0x394] sm:$0xf]
  %v6412 = vld [vmem:[%s6 + $0x398] sm:$0xf]
  %v6413 = vld [vmem:[%s6 + $0x39c] sm:$0xf]
  %v6414 = vld [vmem:[%s6 + $0x3a0] sm:$0xf]
  %v6415 = vld [vmem:[%s6 + $0x3a4] sm:$0xf]
  %v6416 = vld [vmem:[%s6 + $0x3a8] sm:$0xf]
  %v6417 = vld [vmem:[%s6 + $0x3ac] sm:$0xf]
  %v6418 = vld [vmem:[%s6 + $0x3b0] sm:$0xf]
  %v6419 = vld [vmem:[%s6 + $0x3b4] sm:$0xf]
  %v6420 = vld [vmem:[%s6 + $0x3b8] sm:$0xf]
  %v6421 = vld [vmem:[%s6 + $0x3bc] sm:$0xf]
  %v6422 = vld [vmem:[%s6 + $0x3c0] sm:$0xf]
  %v6423 = vld [vmem:[%s6 + $0x3c4] sm:$0xf]
  %v6424 = vld [vmem:[%s6 + $0x3c8] sm:$0xf]
  %v6425 = vld [vmem:[%s6 + $0x3cc] sm:$0xf]
  %v6426 = vld [vmem:[%s6 + $0x3d0] sm:$0xf]
  %v6427 = vld [vmem:[%s6 + $0x3d4] sm:$0xf]
  %v6428 = vld [vmem:[%s6 + $0x3d8] sm:$0xf]
  %v6429 = vld [vmem:[%s6 + $0x3dc] sm:$0xf]
  %v6430 = vld [vmem:[%s6 + $0x3e0] sm:$0xf]
  %v6431 = vld [vmem:[%s6 + $0x3e4] sm:$0x7]
  %v6460 = vunpack.c.l.b16 %v6404
  %v6461 = vunpack.c.l.b16 %v6405
  %v6462 = vunpack.c.l.b16 %v6406
  %v6463 = vunpack.c.l.b16 %v6407
  %v6464 = vunpack.c.l.b16 %v6408
  %v6465 = vunpack.c.l.b16 %v6409
  %v6466 = vunpack.c.l.b16 %v6410
  %v6467 = vunpack.c.l.b16 %v6411
  %v6468 = vunpack.c.l.b16 %v6412
  %v6469 = vunpack.c.l.b16 %v6413
  %v6470 = vunpack.c.l.b16 %v6414
  %v6471 = vunpack.c.l.b16 %v6415
  %v6472 = vunpack.c.l.b16 %v6416
  %v6473 = vunpack.c.l.b16 %v6417
  %v6474 = vunpack.c.l.b16 %v6418
  %v6475 = vunpack.c.l.b16 %v6419
  %v6476 = vunpack.c.l.b16 %v6420
  %v6477 = vunpack.c.l.b16 %v6421
  %v6478 = vunpack.c.l.b16 %v6422
  %v6479 = vunpack.c.l.b16 %v6423
  %v6480 = vunpack.c.l.b16 %v6424
  %v6481 = vunpack.c.l.b16 %v6425
  %v6482 = vunpack.c.l.b16 %v6426
  %v6483 = vunpack.c.l.b16 %v6427
  %v6484 = vunpack.c.l.b16 %v6428
  %v6485 = vunpack.c.l.b16 %v6429
  %v6486 = vunpack.c.l.b16 %v6430
  %v6487 = vunpack.c.l.b16 %v6431
  %v6488 = vpack.c.b16 %v6461, %v6460
  %v6489 = vpack.c.b16 %v6463, %v6462
  %v6490 = vpack.c.b16 %v6465, %v6464
  %v6491 = vpack.c.b16 %v6467, %v6466
  %v6492 = vpack.c.b16 %v6469, %v6468
  %v6493 = vpack.c.b16 %v6471, %v6470
  %v6494 = vpack.c.b16 %v6473, %v6472
  %v6495 = vpack.c.b16 %v6475, %v6474
  %v6496 = vpack.c.b16 %v6477, %v6476
  %v6497 = vpack.c.b16 %v6479, %v6478
  %v6498 = vpack.c.b16 %v6481, %v6480
  %v6499 = vpack.c.b16 %v6483, %v6482
  %v6500 = vpack.c.b16 %v6485, %v6484
  %v6501 = vpack.c.b16 %v6487, %v6486
  %v6516 = vsel %vm338, %v4912, 0
  %v6519 = vsel %vm5042, %v6501, 0
  %6521 = vmatprep.subr.bf16.mxu0 0
  %6522 = vmatpush1.bf16.msra.mxu0 %v6488
  %6523 = vmatprep.subr.bf16.mxu0 0
  %6524 = vmatpush1.bf16.msra.mxu0 %v6489
  %6525 = vmatprep.subr.bf16.mxu0 0
  %6526 = vmatpush1.bf16.msra.mxu0 %v6490
  %6527 = vmatprep.subr.bf16.mxu0 0
  %6528 = vmatpush1.bf16.msra.mxu0 %v6491
  %6529 = vmatprep.subr.bf16.mxu0 0
  %6530 = vmatpush1.bf16.msra.mxu0 %v6492
  %6531 = vmatprep.subr.bf16.mxu0 0
  %6532 = vmatpush1.bf16.msra.mxu0 %v6493
  %6533 = vmatprep.subr.bf16.mxu0 0
  %6534 = vmatpush1.bf16.msra.mxu0 %v6494
  %6535 = vmatprep.subr.bf16.mxu0 0
  %6536 = vmatpush1.bf16.msra.mxu0 %v6495
  %6537 = vmatprep.subr.bf16.mxu0 0
  %6538 = vmatpush1.bf16.msra.mxu0 %v6496
  %6539 = vmatprep.subr.bf16.mxu0 0
  %6540 = vmatpush1.bf16.msra.mxu0 %v6497
  %6541 = vmatprep.subr.bf16.mxu0 0
  %6542 = vmatpush1.bf16.msra.mxu0 %v6498
  %6543 = vmatprep.subr.bf16.mxu0 0
  %6544 = vmatpush1.bf16.msra.mxu0 %v6499
  %6545 = vmatprep.subr.bf16.mxu0 0
  %6546 = vmatpush1.bf16.msra.mxu0 %v6500
  %6547 = vmatprep.subr.bf16.mxu0 0
  %6548 = vmatpush1.bf16.msra.mxu0 %v6519
  %6549 = vmatprep.subr.bf16.mxu0 0
  %6550 = vmatpush1.bf16.msra.mxu0 0
  %6551 = vmatprep.subr.bf16.mxu0 0
  %6552 = vmatpush1.bf16.msra.mxu0 0
  %6553 = vmatprep.mubr.bf16.mxu0 %v6516
  %6554 = vmatmul.mubr.bf16.gmra.mrb[0].mxu0 %v4911
  %v6555 = vpop.f32.mrb[0].mxu0
  %v6556 = vadd.f32 0.0, %v6555
  %v6557 = vpop.f32.mrb[0].mxu0
  %v6558 = vpop.f32.mrb[0].mxu0
  %v6559 = vadd.f32 0.0, %v6558
  %v6560 = vpop.f32.mrb[0].mxu0
  %6561 = vdwg.mxu0
  %v6562 = vadd.f32 %v6402, %v6556
  %v6563 = vadd.f32 %v6403, %v6559
  %v6564 = vld [vmem:[%s6 + $0x3e4] sm:$0x8]
  %v6565 = vld [vmem:[%s6 + $0x3e8] sm:$0xf]
  %v6566 = vld [vmem:[%s6 + $0x3ec] sm:$0xf]
  %v6567 = vld [vmem:[%s6 + $0x3f0] sm:$0xf]
  %v6568 = vld [vmem:[%s6 + $0x3f4] sm:$0xf]
  %v6569 = vld [vmem:[%s6 + $0x3f8] sm:$0xf]
  %v6570 = vld [vmem:[%s6 + $0x3fc] sm:$0xf]
  %v6571 = vld [vmem:[%s6 + $0x400] sm:$0xf]
  %v6572 = vld [vmem:[%s6 + $0x404] sm:$0xf]
  %v6573 = vld [vmem:[%s6 + $0x408] sm:$0xf]
  %v6574 = vld [vmem:[%s6 + $0x40c] sm:$0xf]
  %v6575 = vld [vmem:[%s6 + $0x410] sm:$0xf]
  %v6576 = vld [vmem:[%s6 + $0x414] sm:$0xf]
  %v6577 = vld [vmem:[%s6 + $0x418] sm:$0xf]
  %v6578 = vld [vmem:[%s6 + $0x41c] sm:$0xf]
  %v6579 = vld [vmem:[%s6 + $0x420] sm:$0xf]
  %v6580 = vld [vmem:[%s6 + $0x424] sm:$0xf]
  %v6581 = vld [vmem:[%s6 + $0x428] sm:$0xf]
  %v6582 = vld [vmem:[%s6 + $0x42c] sm:$0xf]
  %v6583 = vld [vmem:[%s6 + $0x430] sm:$0xf]
  %v6584 = vld [vmem:[%s6 + $0x434] sm:$0xf]
  %v6585 = vld [vmem:[%s6 + $0x438] sm:$0xf]
  %v6586 = vld [vmem:[%s6 + $0x43c] sm:$0xf]
  %v6587 = vld [vmem:[%s6 + $0x440] sm:$0xf]
  %v6588 = vld [vmem:[%s6 + $0x444] sm:$0xf]
  %v6589 = vld [vmem:[%s6 + $0x448] sm:$0xf]
  %v6590 = vld [vmem:[%s6 + $0x44c] sm:$0xf]
  %v6591 = vld [vmem:[%s6 + $0x450] sm:$0xf]
  %v6592 = vld [vmem:[%s6 + $0x454] sm:$0x3]
  %v6622 = vunpack.c.l.b16 %v6564
  %v6623 = vunpack.c.l.b16 %v6565
  %v6624 = vunpack.c.l.b16 %v6566
  %v6625 = vunpack.c.l.b16 %v6567
  %v6626 = vunpack.c.l.b16 %v6568
  %v6627 = vunpack.c.l.b16 %v6569
  %v6628 = vunpack.c.l.b16 %v6570
  %v6629 = vunpack.c.l.b16 %v6571
  %v6630 = vunpack.c.l.b16 %v6572
  %v6631 = vunpack.c.l.b16 %v6573
  %v6632 = vunpack.c.l.b16 %v6574
  %v6633 = vunpack.c.l.b16 %v6575
  %v6634 = vunpack.c.l.b16 %v6576
  %v6635 = vunpack.c.l.b16 %v6577
  %v6636 = vunpack.c.l.b16 %v6578
  %v6637 = vunpack.c.l.b16 %v6579
  %v6638 = vunpack.c.l.b16 %v6580
  %v6639 = vunpack.c.l.b16 %v6581
  %v6640 = vunpack.c.l.b16 %v6582
  %v6641 = vunpack.c.l.b16 %v6583
  %v6642 = vunpack.c.l.b16 %v6584
  %v6643 = vunpack.c.l.b16 %v6585
  %v6644 = vunpack.c.l.b16 %v6586
  %v6645 = vunpack.c.l.b16 %v6587
  %v6646 = vunpack.c.l.b16 %v6588
  %v6647 = vunpack.c.l.b16 %v6589
  %v6648 = vunpack.c.l.b16 %v6590
  %v6649 = vunpack.c.l.b16 %v6591
  %v6650 = vunpack.c.l.b16 %v6592
  %v6651 = vpack.c.b16 %v6623, %v6622
  %v6652 = vpack.c.b16 %v6625, %v6624
  %v6653 = vpack.c.b16 %v6627, %v6626
  %v6654 = vpack.c.b16 %v6629, %v6628
  %v6655 = vpack.c.b16 %v6631, %v6630
  %v6656 = vpack.c.b16 %v6633, %v6632
  %v6657 = vpack.c.b16 %v6635, %v6634
  %v6658 = vpack.c.b16 %v6637, %v6636
  %v6659 = vpack.c.b16 %v6639, %v6638
  %v6660 = vpack.c.b16 %v6641, %v6640
  %v6661 = vpack.c.b16 %v6643, %v6642
  %v6662 = vpack.c.b16 %v6645, %v6644
  %v6663 = vpack.c.b16 %v6647, %v6646
  %v6664 = vpack.c.b16 %v6649, %v6648
  %v6665 = vpack.c.b16 %v6650, %v6650
  %v6666 = vrot.slane %v6651, 3
  %v6667 = vrot.slane %v6652, 3
  %v6668 = vsel %vm5197, %v6666, %v6667
  %v6669 = vrot.slane %v6653, 3
  %v6670 = vsel %vm5197, %v6667, %v6669
  %v6671 = vrot.slane %v6654, 3
  %v6672 = vsel %vm5197, %v6669, %v6671
  %v6673 = vrot.slane %v6655, 3
  %v6674 = vsel %vm5197, %v6671, %v6673
  %v6675 = vrot.slane %v6656, 3
  %v6676 = vsel %vm5197, %v6673, %v6675
  %v6677 = vrot.slane %v6657, 3
  %v6678 = vsel %vm5197, %v6675, %v6677
  %v6679 = vrot.slane %v6658, 3
  %v6680 = vsel %vm5197, %v6677, %v6679
  %v6681 = vrot.slane %v6659, 3
  %v6682 = vsel %vm5197, %v6679, %v6681
  %v6683 = vrot.slane %v6660, 3
  %v6684 = vsel %vm5197, %v6681, %v6683
  %v6685 = vrot.slane %v6661, 3
  %v6686 = vsel %vm5197, %v6683, %v6685
  %v6687 = vrot.slane %v6662, 3
  %v6688 = vsel %vm5197, %v6685, %v6687
  %v6689 = vrot.slane %v6663, 3
  %v6690 = vsel %vm5197, %v6687, %v6689
  %v6691 = vrot.slane %v6664, 3
  %v6692 = vsel %vm5197, %v6689, %v6691
  %v6693 = vrot.slane %v6665, 3
  %v6694 = vsel %vm5197, %v6691, %v6693
  %v6709 = vsel %vm338, %v4914, 0
  %v6712 = vsel %vm5042, %v6694, 0
  %6714 = vmatprep.subr.bf16.mxu0 0
  %6715 = vmatpush1.bf16.msra.mxu0 %v6668
  %6716 = vmatprep.subr.bf16.mxu0 0
  %6717 = vmatpush1.bf16.msra.mxu0 %v6670
  %6718 = vmatprep.subr.bf16.mxu0 0
  %6719 = vmatpush1.bf16.msra.mxu0 %v6672
  %6720 = vmatprep.subr.bf16.mxu0 0
  %6721 = vmatpush1.bf16.msra.mxu0 %v6674
  %6722 = vmatprep.subr.bf16.mxu0 0
  %6723 = vmatpush1.bf16.msra.mxu0 %v6676
  %6724 = vmatprep.subr.bf16.mxu0 0
  %6725 = vmatpush1.bf16.msra.mxu0 %v6678
  %6726 = vmatprep.subr.bf16.mxu0 0
  %6727 = vmatpush1.bf16.msra.mxu0 %v6680
  %6728 = vmatprep.subr.bf16.mxu0 0
  %6729 = vmatpush1.bf16.msra.mxu0 %v6682
  %6730 = vmatprep.subr.bf16.mxu0 0
  %6731 = vmatpush1.bf16.msra.mxu0 %v6684
  %6732 = vmatprep.subr.bf16.mxu0 0
  %6733 = vmatpush1.bf16.msra.mxu0 %v6686
  %6734 = vmatprep.subr.bf16.mxu0 0
  %6735 = vmatpush1.bf16.msra.mxu0 %v6688
  %6736 = vmatprep.subr.bf16.mxu0 0
  %6737 = vmatpush1.bf16.msra.mxu0 %v6690
  %6738 = vmatprep.subr.bf16.mxu0 0
  %6739 = vmatpush1.bf16.msra.mxu0 %v6692
  %6740 = vmatprep.subr.bf16.mxu0 0
  %6741 = vmatpush1.bf16.msra.mxu0 %v6712
  %6742 = vmatprep.subr.bf16.mxu0 0
  %6743 = vmatpush1.bf16.msra.mxu0 0
  %6744 = vmatprep.subr.bf16.mxu0 0
  %6745 = vmatpush1.bf16.msra.mxu0 0
  %6746 = vmatprep.mubr.bf16.mxu0 %v6709
  %6747 = vmatmul.mubr.bf16.gmra.mrb[0].mxu0 %v4913
  %v6748 = vpop.f32.mrb[0].mxu0
  %v6749 = vadd.f32 0.0, %v6748
  %v6750 = vpop.f32.mrb[0].mxu0
  %v6751 = vpop.f32.mrb[0].mxu0
  %v6752 = vadd.f32 0.0, %v6751
  %v6753 = vpop.f32.mrb[0].mxu0
  %6754 = vdwg.mxu0
  %v6755 = vadd.f32 %v6562, %v6749
  %v6756 = vadd.f32 %v6563, %v6752
  %v6757 = vld [vmem:[%s6 + $0x454] sm:$0xc]
  %v6758 = vld [vmem:[%s6 + $0x458] sm:$0xf]
  %v6759 = vld [vmem:[%s6 + $0x45c] sm:$0xf]
  %v6760 = vld [vmem:[%s6 + $0x460] sm:$0xf]
  %v6761 = vld [vmem:[%s6 + $0x464] sm:$0xf]
  %v6762 = vld [vmem:[%s6 + $0x468] sm:$0xf]
  %v6763 = vld [vmem:[%s6 + $0x46c] sm:$0xf]
  %v6764 = vld [vmem:[%s6 + $0x470] sm:$0xf]
  %v6765 = vld [vmem:[%s6 + $0x474] sm:$0xf]
  %v6766 = vld [vmem:[%s6 + $0x478] sm:$0xf]
  %v6767 = vld [vmem:[%s6 + $0x47c] sm:$0xf]
  %v6768 = vld [vmem:[%s6 + $0x480] sm:$0xf]
  %v6769 = vld [vmem:[%s6 + $0x484] sm:$0xf]
  %v6770 = vld [vmem:[%s6 + $0x488] sm:$0xf]
  %v6771 = vld [vmem:[%s6 + $0x48c] sm:$0xf]
  %v6772 = vld [vmem:[%s6 + $0x490] sm:$0xf]
  %v6773 = vld [vmem:[%s6 + $0x494] sm:$0xf]
  %v6774 = vld [vmem:[%s6 + $0x498] sm:$0xf]
  %v6775 = vld [vmem:[%s6 + $0x49c] sm:$0xf]
  %v6776 = vld [vmem:[%s6 + $0x4a0] sm:$0xf]
  %v6777 = vld [vmem:[%s6 + $0x4a4] sm:$0xf]
  %v6778 = vld [vmem:[%s6 + $0x4a8] sm:$0xf]
  %v6779 = vld [vmem:[%s6 + $0x4ac] sm:$0xf]
  %v6780 = vld [vmem:[%s6 + $0x4b0] sm:$0xf]
  %v6781 = vld [vmem:[%s6 + $0x4b4] sm:$0xf]
  %v6782 = vld [vmem:[%s6 + $0x4b8] sm:$0xf]
  %v6783 = vld [vmem:[%s6 + $0x4bc] sm:$0xf]
  %v6784 = vld [vmem:[%s6 + $0x4c0] sm:$0xf]
  %v6785 = vld [vmem:[%s6 + $0x4c4] sm:$0x1]
  %v6815 = vunpack.c.l.b16 %v6757
  %v6816 = vunpack.c.l.b16 %v6758
  %v6817 = vunpack.c.l.b16 %v6759
  %v6818 = vunpack.c.l.b16 %v6760
  %v6819 = vunpack.c.l.b16 %v6761
  %v6820 = vunpack.c.l.b16 %v6762
  %v6821 = vunpack.c.l.b16 %v6763
  %v6822 = vunpack.c.l.b16 %v6764
  %v6823 = vunpack.c.l.b16 %v6765
  %v6824 = vunpack.c.l.b16 %v6766
  %v6825 = vunpack.c.l.b16 %v6767
  %v6826 = vunpack.c.l.b16 %v6768
  %v6827 = vunpack.c.l.b16 %v6769
  %v6828 = vunpack.c.l.b16 %v6770
  %v6829 = vunpack.c.l.b16 %v6771
  %v6830 = vunpack.c.l.b16 %v6772
  %v6831 = vunpack.c.l.b16 %v6773
  %v6832 = vunpack.c.l.b16 %v6774
  %v6833 = vunpack.c.l.b16 %v6775
  %v6834 = vunpack.c.l.b16 %v6776
  %v6835 = vunpack.c.l.b16 %v6777
  %v6836 = vunpack.c.l.b16 %v6778
  %v6837 = vunpack.c.l.b16 %v6779
  %v6838 = vunpack.c.l.b16 %v6780
  %v6839 = vunpack.c.l.b16 %v6781
  %v6840 = vunpack.c.l.b16 %v6782
  %v6841 = vunpack.c.l.b16 %v6783
  %v6842 = vunpack.c.l.b16 %v6784
  %v6843 = vunpack.c.l.b16 %v6785
  %v6844 = vpack.c.b16 %v6816, %v6815
  %v6845 = vpack.c.b16 %v6818, %v6817
  %v6846 = vpack.c.b16 %v6820, %v6819
  %v6847 = vpack.c.b16 %v6822, %v6821
  %v6848 = vpack.c.b16 %v6824, %v6823
  %v6849 = vpack.c.b16 %v6826, %v6825
  %v6850 = vpack.c.b16 %v6828, %v6827
  %v6851 = vpack.c.b16 %v6830, %v6829
  %v6852 = vpack.c.b16 %v6832, %v6831
  %v6853 = vpack.c.b16 %v6834, %v6833
  %v6854 = vpack.c.b16 %v6836, %v6835
  %v6855 = vpack.c.b16 %v6838, %v6837
  %v6856 = vpack.c.b16 %v6840, %v6839
  %v6857 = vpack.c.b16 %v6842, %v6841
  %v6858 = vpack.c.b16 %v6843, %v6843
  %v6859 = vrot.slane %v6844, 2
  %v6860 = vrot.slane %v6845, 2
  %v6861 = vsel %vm5391, %v6859, %v6860
  %v6862 = vrot.slane %v6846, 2
  %v6863 = vsel %vm5391, %v6860, %v6862
  %v6864 = vrot.slane %v6847, 2
  %v6865 = vsel %vm5391, %v6862, %v6864
  %v6866 = vrot.slane %v6848, 2
  %v6867 = vsel %vm5391, %v6864, %v6866
  %v6868 = vrot.slane %v6849, 2
  %v6869 = vsel %vm5391, %v6866, %v6868
  %v6870 = vrot.slane %v6850, 2
  %v6871 = vsel %vm5391, %v6868, %v6870
  %v6872 = vrot.slane %v6851, 2
  %v6873 = vsel %vm5391, %v6870, %v6872
  %v6874 = vrot.slane %v6852, 2
  %v6875 = vsel %vm5391, %v6872, %v6874
  %v6876 = vrot.slane %v6853, 2
  %v6877 = vsel %vm5391, %v6874, %v6876
  %v6878 = vrot.slane %v6854, 2
  %v6879 = vsel %vm5391, %v6876, %v6878
  %v6880 = vrot.slane %v6855, 2
  %v6881 = vsel %vm5391, %v6878, %v6880
  %v6882 = vrot.slane %v6856, 2
  %v6883 = vsel %vm5391, %v6880, %v6882
  %v6884 = vrot.slane %v6857, 2
  %v6885 = vsel %vm5391, %v6882, %v6884
  %v6886 = vrot.slane %v6858, 2
  %v6887 = vsel %vm5391, %v6884, %v6886
  %v6902 = vsel %vm338, %v4916, 0
  %v6905 = vsel %vm5042, %v6887, 0
  %6907 = vmatprep.subr.bf16.mxu0 0
  %6908 = vmatpush1.bf16.msra.mxu0 %v6861
  %6909 = vmatprep.subr.bf16.mxu0 0
  %6910 = vmatpush1.bf16.msra.mxu0 %v6863
  %6911 = vmatprep.subr.bf16.mxu0 0
  %6912 = vmatpush1.bf16.msra.mxu0 %v6865
  %6913 = vmatprep.subr.bf16.mxu0 0
  %6914 = vmatpush1.bf16.msra.mxu0 %v6867
  %6915 = vmatprep.subr.bf16.mxu0 0
  %6916 = vmatpush1.bf16.msra.mxu0 %v6869
  %6917 = vmatprep.subr.bf16.mxu0 0
  %6918 = vmatpush1.bf16.msra.mxu0 %v6871
  %6919 = vmatprep.subr.bf16.mxu0 0
  %6920 = vmatpush1.bf16.msra.mxu0 %v6873
  %6921 = vmatprep.subr.bf16.mxu0 0
  %6922 = vmatpush1.bf16.msra.mxu0 %v6875
  %6923 = vmatprep.subr.bf16.mxu0 0
  %6924 = vmatpush1.bf16.msra.mxu0 %v6877
  %6925 = vmatprep.subr.bf16.mxu0 0
  %6926 = vmatpush1.bf16.msra.mxu0 %v6879
  %6927 = vmatprep.subr.bf16.mxu0 0
  %6928 = vmatpush1.bf16.msra.mxu0 %v6881
  %6929 = vmatprep.subr.bf16.mxu0 0
  %6930 = vmatpush1.bf16.msra.mxu0 %v6883
  %6931 = vmatprep.subr.bf16.mxu0 0
  %6932 = vmatpush1.bf16.msra.mxu0 %v6885
  %6933 = vmatprep.subr.bf16.mxu0 0
  %6934 = vmatpush1.bf16.msra.mxu0 %v6905
  %6935 = vmatprep.subr.bf16.mxu0 0
  %6936 = vmatpush1.bf16.msra.mxu0 0
  %6937 = vmatprep.subr.bf16.mxu0 0
  %6938 = vmatpush1.bf16.msra.mxu0 0
  %6939 = vmatprep.mubr.bf16.mxu0 %v6902
  %6940 = vmatmul.mubr.bf16.gmra.mrb[0].mxu0 %v4915
  %v6941 = vpop.f32.mrb[0].mxu0
  %v6942 = vadd.f32 0.0, %v6941
  %v6943 = vpop.f32.mrb[0].mxu0
  %v6944 = vpop.f32.mrb[0].mxu0
  %v6945 = vadd.f32 0.0, %v6944
  %v6946 = vpop.f32.mrb[0].mxu0
  %6947 = vdwg.mxu0
  %v6948 = vadd.f32 %v6755, %v6942
  %v6949 = vadd.f32 %v6756, %v6945
  %v6950 = vld [vmem:[%s6 + $0x4c4] sm:$0xe]
  %v6951 = vld [vmem:[%s6 + $0x4c8] sm:$0xf]
  %v6952 = vld [vmem:[%s6 + $0x4cc] sm:$0xf]
  %v6953 = vld [vmem:[%s6 + $0x4d0] sm:$0xf]
  %v6954 = vld [vmem:[%s6 + $0x4d4] sm:$0xf]
  %v6955 = vld [vmem:[%s6 + $0x4d8] sm:$0xf]
  %v6956 = vld [vmem:[%s6 + $0x4dc] sm:$0xf]
  %v6957 = vld [vmem:[%s6 + $0x4e0] sm:$0xf]
  %v6958 = vld [vmem:[%s6 + $0x4e4] sm:$0xf]
  %v6959 = vld [vmem:[%s6 + $0x4e8] sm:$0xf]
  %v6960 = vld [vmem:[%s6 + $0x4ec] sm:$0xf]
  %v6961 = vld [vmem:[%s6 + $0x4f0] sm:$0xf]
  %v6962 = vld [vmem:[%s6 + $0x4f4] sm:$0xf]
  %v6963 = vld [vmem:[%s6 + $0x4f8] sm:$0xf]
  %v6964 = vld [vmem:[%s6 + $0x4fc] sm:$0xf]
  %v6965 = vld [vmem:[%s6 + $0x500] sm:$0xf]
  %v6966 = vld [vmem:[%s6 + $0x504] sm:$0xf]
  %v6967 = vld [vmem:[%s6 + $0x508] sm:$0xf]
  %v6968 = vld [vmem:[%s6 + $0x50c] sm:$0xf]
  %v6969 = vld [vmem:[%s6 + $0x510] sm:$0xf]
  %v6970 = vld [vmem:[%s6 + $0x514] sm:$0xf]
  %v6971 = vld [vmem:[%s6 + $0x518] sm:$0xf]
  %v6972 = vld [vmem:[%s6 + $0x51c] sm:$0xf]
  %v6973 = vld [vmem:[%s6 + $0x520] sm:$0xf]
  %v6974 = vld [vmem:[%s6 + $0x524] sm:$0xf]
  %v6975 = vld [vmem:[%s6 + $0x528] sm:$0xf]
  %v6976 = vld [vmem:[%s6 + $0x52c] sm:$0xf]
  %v6977 = vld [vmem:[%s6 + $0x530] sm:$0xf]
  %v7006 = vunpack.c.l.b16 %v6950
  %v7007 = vunpack.c.l.b16 %v6951
  %v7008 = vunpack.c.l.b16 %v6952
  %v7009 = vunpack.c.l.b16 %v6953
  %v7010 = vunpack.c.l.b16 %v6954
  %v7011 = vunpack.c.l.b16 %v6955
  %v7012 = vunpack.c.l.b16 %v6956
  %v7013 = vunpack.c.l.b16 %v6957
  %v7014 = vunpack.c.l.b16 %v6958
  %v7015 = vunpack.c.l.b16 %v6959
  %v7016 = vunpack.c.l.b16 %v6960
  %v7017 = vunpack.c.l.b16 %v6961
  %v7018 = vunpack.c.l.b16 %v6962
  %v7019 = vunpack.c.l.b16 %v6963
  %v7020 = vunpack.c.l.b16 %v6964
  %v7021 = vunpack.c.l.b16 %v6965
  %v7022 = vunpack.c.l.b16 %v6966
  %v7023 = vunpack.c.l.b16 %v6967
  %v7024 = vunpack.c.l.b16 %v6968
  %v7025 = vunpack.c.l.b16 %v6969
  %v7026 = vunpack.c.l.b16 %v6970
  %v7027 = vunpack.c.l.b16 %v6971
  %v7028 = vunpack.c.l.b16 %v6972
  %v7029 = vunpack.c.l.b16 %v6973
  %v7030 = vunpack.c.l.b16 %v6974
  %v7031 = vunpack.c.l.b16 %v6975
  %v7032 = vunpack.c.l.b16 %v6976
  %v7033 = vunpack.c.l.b16 %v6977
  %v7034 = vpack.c.b16 %v7007, %v7006
  %v7035 = vpack.c.b16 %v7009, %v7008
  %v7036 = vpack.c.b16 %v7011, %v7010
  %v7037 = vpack.c.b16 %v7013, %v7012
  %v7038 = vpack.c.b16 %v7015, %v7014
  %v7039 = vpack.c.b16 %v7017, %v7016
  %v7040 = vpack.c.b16 %v7019, %v7018
  %v7041 = vpack.c.b16 %v7021, %v7020
  %v7042 = vpack.c.b16 %v7023, %v7022
  %v7043 = vpack.c.b16 %v7025, %v7024
  %v7044 = vpack.c.b16 %v7027, %v7026
  %v7045 = vpack.c.b16 %v7029, %v7028
  %v7046 = vpack.c.b16 %v7031, %v7030
  %v7047 = vpack.c.b16 %v7033, %v7032
  %v7048 = vrot.slane %v7034, 1
  %v7049 = vrot.slane %v7035, 1
  %v7050 = vsel %vm5581, %v7048, %v7049
  %v7051 = vrot.slane %v7036, 1
  %v7052 = vsel %vm5581, %v7049, %v7051
  %v7053 = vrot.slane %v7037, 1
  %v7054 = vsel %vm5581, %v7051, %v7053
  %v7055 = vrot.slane %v7038, 1
  %v7056 = vsel %vm5581, %v7053, %v7055
  %v7057 = vrot.slane %v7039, 1
  %v7058 = vsel %vm5581, %v7055, %v7057
  %v7059 = vrot.slane %v7040, 1
  %v7060 = vsel %vm5581, %v7057, %v7059
  %v7061 = vrot.slane %v7041, 1
  %v7062 = vsel %vm5581, %v7059, %v7061
  %v7063 = vrot.slane %v7042, 1
  %v7064 = vsel %vm5581, %v7061, %v7063
  %v7065 = vrot.slane %v7043, 1
  %v7066 = vsel %vm5581, %v7063, %v7065
  %v7067 = vrot.slane %v7044, 1
  %v7068 = vsel %vm5581, %v7065, %v7067
  %v7069 = vrot.slane %v7045, 1
  %v7070 = vsel %vm5581, %v7067, %v7069
  %v7071 = vrot.slane %v7046, 1
  %v7072 = vsel %vm5581, %v7069, %v7071
  %v7073 = vrot.slane %v7047, 1
  %v7074 = vsel %vm5581, %v7071, %v7073
  %v7089 = vsel %vm338, %v4918, 0
  %v7092 = vsel %vm5042, %v7073, 0
  %7094 = vmatprep.subr.bf16.mxu0 0
  %7095 = vmatpush1.bf16.msra.mxu0 %v7050
  %7096 = vmatprep.subr.bf16.mxu0 0
  %7097 = vmatpush1.bf16.msra.mxu0 %v7052
  %7098 = vmatprep.subr.bf16.mxu0 0
  %7099 = vmatpush1.bf16.msra.mxu0 %v7054
  %7100 = vmatprep.subr.bf16.mxu0 0
  %7101 = vmatpush1.bf16.msra.mxu0 %v7056
  %7102 = vmatprep.subr.bf16.mxu0 0
  %7103 = vmatpush1.bf16.msra.mxu0 %v7058
  %7104 = vmatprep.subr.bf16.mxu0 0
  %7105 = vmatpush1.bf16.msra.mxu0 %v7060
  %7106 = vmatprep.subr.bf16.mxu0 0
  %7107 = vmatpush1.bf16.msra.mxu0 %v7062
  %7108 = vmatprep.subr.bf16.mxu0 0
  %7109 = vmatpush1.bf16.msra.mxu0 %v7064
  %7110 = vmatprep.subr.bf16.mxu0 0
  %7111 = vmatpush1.bf16.msra.mxu0 %v7066
  %7112 = vmatprep.subr.bf16.mxu0 0
  %7113 = vmatpush1.bf16.msra.mxu0 %v7068
  %7114 = vmatprep.subr.bf16.mxu0 0
  %7115 = vmatpush1.bf16.msra.mxu0 %v7070
  %7116 = vmatprep.subr.bf16.mxu0 0
  %7117 = vmatpush1.bf16.msra.mxu0 %v7072
  %7118 = vmatprep.subr.bf16.mxu0 0
  %7119 = vmatpush1.bf16.msra.mxu0 %v7074
  %7120 = vmatprep.subr.bf16.mxu0 0
  %7121 = vmatpush1.bf16.msra.mxu0 %v7092
  %7122 = vmatprep.subr.bf16.mxu0 0
  %7123 = vmatpush1.bf16.msra.mxu0 0
  %7124 = vmatprep.subr.bf16.mxu0 0
  %7125 = vmatpush1.bf16.msra.mxu0 0
  %7126 = vmatprep.mubr.bf16.mxu0 %v7089
  %7127 = vmatmul.mubr.bf16.gmra.mrb[0].mxu0 %v4917
  %v7128 = vpop.f32.mrb[0].mxu0
  %v7129 = vadd.f32 0.0, %v7128
  %v7130 = vpop.f32.mrb[0].mxu0
  %v7131 = vpop.f32.mrb[0].mxu0
  %v7132 = vadd.f32 0.0, %v7131
  %v7133 = vpop.f32.mrb[0].mxu0
  %7134 = vdwg.mxu0
  %v7135 = vadd.f32 %v6948, %v7129
  %v7136 = vadd.f32 %v6949, %v7132
  %v7137 = vld [vmem:[%s6 + $0x534] sm:$0xf]
  %v7138 = vld [vmem:[%s6 + $0x538] sm:$0xf]
  %v7139 = vld [vmem:[%s6 + $0x53c] sm:$0xf]
  %v7140 = vld [vmem:[%s6 + $0x540] sm:$0xf]
  %v7141 = vld [vmem:[%s6 + $0x544] sm:$0xf]
  %v7142 = vld [vmem:[%s6 + $0x548] sm:$0xf]
  %v7143 = vld [vmem:[%s6 + $0x54c] sm:$0xf]
  %v7144 = vld [vmem:[%s6 + $0x550] sm:$0xf]
  %v7145 = vld [vmem:[%s6 + $0x554] sm:$0xf]
  %v7146 = vld [vmem:[%s6 + $0x558] sm:$0xf]
  %v7147 = vld [vmem:[%s6 + $0x55c] sm:$0xf]
  %v7148 = vld [vmem:[%s6 + $0x560] sm:$0xf]
  %v7149 = vld [vmem:[%s6 + $0x564] sm:$0xf]
  %v7150 = vld [vmem:[%s6 + $0x568] sm:$0xf]
  %v7151 = vld [vmem:[%s6 + $0x56c] sm:$0xf]
  %v7152 = vld [vmem:[%s6 + $0x570] sm:$0xf]
  %v7153 = vld [vmem:[%s6 + $0x574] sm:$0xf]
  %v7154 = vld [vmem:[%s6 + $0x578] sm:$0xf]
  %v7155 = vld [vmem:[%s6 + $0x57c] sm:$0xf]
  %v7156 = vld [vmem:[%s6 + $0x580] sm:$0xf]
  %v7157 = vld [vmem:[%s6 + $0x584] sm:$0xf]
  %v7158 = vld [vmem:[%s6 + $0x588] sm:$0xf]
  %v7159 = vld [vmem:[%s6 + $0x58c] sm:$0xf]
  %v7160 = vld [vmem:[%s6 + $0x590] sm:$0xf]
  %v7161 = vld [vmem:[%s6 + $0x594] sm:$0xf]
  %v7162 = vld [vmem:[%s6 + $0x598] sm:$0xf]
  %v7163 = vld [vmem:[%s6 + $0x59c] sm:$0xf]
  %v7164 = vld [vmem:[%s6 + $0x5a0] sm:$0x7]
  %v7193 = vunpack.c.l.b16 %v7137
  %v7194 = vunpack.c.l.b16 %v7138
  %v7195 = vunpack.c.l.b16 %v7139
  %v7196 = vunpack.c.l.b16 %v7140
  %v7197 = vunpack.c.l.b16 %v7141
  %v7198 = vunpack.c.l.b16 %v7142
  %v7199 = vunpack.c.l.b16 %v7143
  %v7200 = vunpack.c.l.b16 %v7144
  %v7201 = vunpack.c.l.b16 %v7145
  %v7202 = vunpack.c.l.b16 %v7146
  %v7203 = vunpack.c.l.b16 %v7147
  %v7204 = vunpack.c.l.b16 %v7148
  %v7205 = vunpack.c.l.b16 %v7149
  %v7206 = vunpack.c.l.b16 %v7150
  %v7207 = vunpack.c.l.b16 %v7151
  %v7208 = vunpack.c.l.b16 %v7152
  %v7209 = vunpack.c.l.b16 %v7153
  %v7210 = vunpack.c.l.b16 %v7154
  %v7211 = vunpack.c.l.b16 %v7155
  %v7212 = vunpack.c.l.b16 %v7156
  %v7213 = vunpack.c.l.b16 %v7157
  %v7214 = vunpack.c.l.b16 %v7158
  %v7215 = vunpack.c.l.b16 %v7159
  %v7216 = vunpack.c.l.b16 %v7160
  %v7217 = vunpack.c.l.b16 %v7161
  %v7218 = vunpack.c.l.b16 %v7162
  %v7219 = vunpack.c.l.b16 %v7163
  %v7220 = vunpack.c.l.b16 %v7164
  %v7221 = vpack.c.b16 %v7194, %v7193
  %v7222 = vpack.c.b16 %v7196, %v7195
  %v7223 = vpack.c.b16 %v7198, %v7197
  %v7224 = vpack.c.b16 %v7200, %v7199
  %v7225 = vpack.c.b16 %v7202, %v7201
  %v7226 = vpack.c.b16 %v7204, %v7203
  %v7227 = vpack.c.b16 %v7206, %v7205
  %v7228 = vpack.c.b16 %v7208, %v7207
  %v7229 = vpack.c.b16 %v7210, %v7209
  %v7230 = vpack.c.b16 %v7212, %v7211
  %v7231 = vpack.c.b16 %v7214, %v7213
  %v7232 = vpack.c.b16 %v7216, %v7215
  %v7233 = vpack.c.b16 %v7218, %v7217
  %v7234 = vpack.c.b16 %v7220, %v7219
  %v7249 = vsel %vm338, %v4920, 0
  %v7252 = vsel %vm5042, %v7234, 0
  %7254 = vmatprep.subr.bf16.mxu0 0
  %7255 = vmatpush1.bf16.msra.mxu0 %v7221
  %7256 = vmatprep.subr.bf16.mxu0 0
  %7257 = vmatpush1.bf16.msra.mxu0 %v7222
  %7258 = vmatprep.subr.bf16.mxu0 0
  %7259 = vmatpush1.bf16.msra.mxu0 %v7223
  %7260 = vmatprep.subr.bf16.mxu0 0
  %7261 = vmatpush1.bf16.msra.mxu0 %v7224
  %7262 = vmatprep.subr.bf16.mxu0 0
  %7263 = vmatpush1.bf16.msra.mxu0 %v7225
  %7264 = vmatprep.subr.bf16.mxu0 0
  %7265 = vmatpush1.bf16.msra.mxu0 %v7226
  %7266 = vmatprep.subr.bf16.mxu0 0
  %7267 = vmatpush1.bf16.msra.mxu0 %v7227
  %7268 = vmatprep.subr.bf16.mxu0 0
  %7269 = vmatpush1.bf16.msra.mxu0 %v7228
  %7270 = vmatprep.subr.bf16.mxu0 0
  %7271 = vmatpush1.bf16.msra.mxu0 %v7229
  %7272 = vmatprep.subr.bf16.mxu0 0
  %7273 = vmatpush1.bf16.msra.mxu0 %v7230
  %7274 = vmatprep.subr.bf16.mxu0 0
  %7275 = vmatpush1.bf16.msra.mxu0 %v7231
  %7276 = vmatprep.subr.bf16.mxu0 0
  %7277 = vmatpush1.bf16.msra.mxu0 %v7232
  %7278 = vmatprep.subr.bf16.mxu0 0
  %7279 = vmatpush1.bf16.msra.mxu0 %v7233
  %7280 = vmatprep.subr.bf16.mxu0 0
  %7281 = vmatpush1.bf16.msra.mxu0 %v7252
  %7282 = vmatprep.subr.bf16.mxu0 0
  %7283 = vmatpush1.bf16.msra.mxu0 0
  %7284 = vmatprep.subr.bf16.mxu0 0
  %7285 = vmatpush1.bf16.msra.mxu0 0
  %7286 = vmatprep.mubr.bf16.mxu0 %v7249
  %7287 = vmatmul.mubr.bf16.gmra.mrb[0].mxu0 %v4919
  %v7288 = vpop.f32.mrb[0].mxu0
  %v7289 = vadd.f32 0.0, %v7288
  %v7290 = vpop.f32.mrb[0].mxu0
  %v7291 = vpop.f32.mrb[0].mxu0
  %v7292 = vadd.f32 0.0, %v7291
  %v7293 = vpop.f32.mrb[0].mxu0
  %7294 = vdwg.mxu0
  %v7295 = vadd.f32 %v7135, %v7289
  %v7296 = vadd.f32 %v7136, %v7292
  %v7297 = vld [vmem:[%s6 + $0x5a0] sm:$0x8]
  %v7298 = vld [vmem:[%s6 + $0x5a4] sm:$0xf]
  %v7299 = vld [vmem:[%s6 + $0x5a8] sm:$0xf]
  %v7300 = vld [vmem:[%s6 + $0x5ac] sm:$0xf]
  %v7301 = vld [vmem:[%s6 + $0x5b0] sm:$0xf]
  %v7302 = vld [vmem:[%s6 + $0x5b4] sm:$0xf]
  %v7303 = vld [vmem:[%s6 + $0x5b8] sm:$0xf]
  %v7304 = vld [vmem:[%s6 + $0x5bc] sm:$0xf]
  %v7305 = vld [vmem:[%s6 + $0x5c0] sm:$0xf]
  %v7306 = vld [vmem:[%s6 + $0x5c4] sm:$0xf]
  %v7307 = vld [vmem:[%s6 + $0x5c8] sm:$0xf]
  %v7308 = vld [vmem:[%s6 + $0x5cc] sm:$0xf]
  %v7309 = vld [vmem:[%s6 + $0x5d0] sm:$0xf]
  %v7310 = vld [vmem:[%s6 + $0x5d4] sm:$0xf]
  %v7311 = vld [vmem:[%s6 + $0x5d8] sm:$0xf]
  %v7312 = vld [vmem:[%s6 + $0x5dc] sm:$0xf]
  %v7313 = vld [vmem:[%s6 + $0x5e0] sm:$0xf]
  %v7314 = vld [vmem:[%s6 + $0x5e4] sm:$0xf]
  %v7315 = vld [vmem:[%s6 + $0x5e8] sm:$0xf]
  %v7316 = vld [vmem:[%s6 + $0x5ec] sm:$0xf]
  %v7317 = vld [vmem:[%s6 + $0x5f0] sm:$0xf]
  %v7318 = vld [vmem:[%s6 + $0x5f4] sm:$0xf]
  %v7319 = vld [vmem:[%s6 + $0x5f8] sm:$0xf]
  %v7320 = vld [vmem:[%s6 + $0x5fc] sm:$0xf]
  %v7321 = vld [vmem:[%s6 + $0x600] sm:$0xf]
  %v7322 = vld [vmem:[%s6 + $0x604] sm:$0xf]
  %v7323 = vld [vmem:[%s6 + $0x608] sm:$0xf]
  %v7324 = vld [vmem:[%s6 + $0x60c] sm:$0xf]
  %v7325 = vld [vmem:[%s6 + $0x610] sm:$0x3]
  %v7355 = vunpack.c.l.b16 %v7297
  %v7356 = vunpack.c.l.b16 %v7298
  %v7357 = vunpack.c.l.b16 %v7299
  %v7358 = vunpack.c.l.b16 %v7300
  %v7359 = vunpack.c.l.b16 %v7301
  %v7360 = vunpack.c.l.b16 %v7302
  %v7361 = vunpack.c.l.b16 %v7303
  %v7362 = vunpack.c.l.b16 %v7304
  %v7363 = vunpack.c.l.b16 %v7305
  %v7364 = vunpack.c.l.b16 %v7306
  %v7365 = vunpack.c.l.b16 %v7307
  %v7366 = vunpack.c.l.b16 %v7308
  %v7367 = vunpack.c.l.b16 %v7309
  %v7368 = vunpack.c.l.b16 %v7310
  %v7369 = vunpack.c.l.b16 %v7311
  %v7370 = vunpack.c.l.b16 %v7312
  %v7371 = vunpack.c.l.b16 %v7313
  %v7372 = vunpack.c.l.b16 %v7314
  %v7373 = vunpack.c.l.b16 %v7315
  %v7374 = vunpack.c.l.b16 %v7316
  %v7375 = vunpack.c.l.b16 %v7317
  %v7376 = vunpack.c.l.b16 %v7318
  %v7377 = vunpack.c.l.b16 %v7319
  %v7378 = vunpack.c.l.b16 %v7320
  %v7379 = vunpack.c.l.b16 %v7321
  %v7380 = vunpack.c.l.b16 %v7322
  %v7381 = vunpack.c.l.b16 %v7323
  %v7382 = vunpack.c.l.b16 %v7324
  %v7383 = vunpack.c.l.b16 %v7325
  %v7384 = vpack.c.b16 %v7356, %v7355
  %v7385 = vpack.c.b16 %v7358, %v7357
  %v7386 = vpack.c.b16 %v7360, %v7359
  %v7387 = vpack.c.b16 %v7362, %v7361
  %v7388 = vpack.c.b16 %v7364, %v7363
  %v7389 = vpack.c.b16 %v7366, %v7365
  %v7390 = vpack.c.b16 %v7368, %v7367
  %v7391 = vpack.c.b16 %v7370, %v7369
  %v7392 = vpack.c.b16 %v7372, %v7371
  %v7393 = vpack.c.b16 %v7374, %v7373
  %v7394 = vpack.c.b16 %v7376, %v7375
  %v7395 = vpack.c.b16 %v7378, %v7377
  %v7396 = vpack.c.b16 %v7380, %v7379
  %v7397 = vpack.c.b16 %v7382, %v7381
  %v7398 = vpack.c.b16 %v7383, %v7383
  %v7399 = vrot.slane %v7384, 3
  %v7400 = vrot.slane %v7385, 3
  %v7401 = vsel %vm5197, %v7399, %v7400
  %v7402 = vrot.slane %v7386, 3
  %v7403 = vsel %vm5197, %v7400, %v7402
  %v7404 = vrot.slane %v7387, 3
  %v7405 = vsel %vm5197, %v7402, %v7404
  %v7406 = vrot.slane %v7388, 3
  %v7407 = vsel %vm5197, %v7404, %v7406
  %v7408 = vrot.slane %v7389, 3
  %v7409 = vsel %vm5197, %v7406, %v7408
  %v7410 = vrot.slane %v7390, 3
  %v7411 = vsel %vm5197, %v7408, %v7410
  %v7412 = vrot.slane %v7391, 3
  %v7413 = vsel %vm5197, %v7410, %v7412
  %v7414 = vrot.slane %v7392, 3
  %v7415 = vsel %vm5197, %v7412, %v7414
  %v7416 = vrot.slane %v7393, 3
  %v7417 = vsel %vm5197, %v7414, %v7416
  %v7418 = vrot.slane %v7394, 3
  %v7419 = vsel %vm5197, %v7416, %v7418
  %v7420 = vrot.slane %v7395, 3
  %v7421 = vsel %vm5197, %v7418, %v7420
  %v7422 = vrot.slane %v7396, 3
  %v7423 = vsel %vm5197, %v7420, %v7422
  %v7424 = vrot.slane %v7397, 3
  %v7425 = vsel %vm5197, %v7422, %v7424
  %v7426 = vrot.slane %v7398, 3
  %v7427 = vsel %vm5197, %v7424, %v7426
  %v7442 = vsel %vm338, %v4922, 0
  %v7445 = vsel %vm5042, %v7427, 0
  %7447 = vmatprep.subr.bf16.mxu0 0
  %7448 = vmatpush1.bf16.msra.mxu0 %v7401
  %7449 = vmatprep.subr.bf16.mxu0 0
  %7450 = vmatpush1.bf16.msra.mxu0 %v7403
  %7451 = vmatprep.subr.bf16.mxu0 0
  %7452 = vmatpush1.bf16.msra.mxu0 %v7405
  %7453 = vmatprep.subr.bf16.mxu0 0
  %7454 = vmatpush1.bf16.msra.mxu0 %v7407
  %7455 = vmatprep.subr.bf16.mxu0 0
  %7456 = vmatpush1.bf16.msra.mxu0 %v7409
  %7457 = vmatprep.subr.bf16.mxu0 0
  %7458 = vmatpush1.bf16.msra.mxu0 %v7411
  %7459 = vmatprep.subr.bf16.mxu0 0
  %7460 = vmatpush1.bf16.msra.mxu0 %v7413
  %7461 = vmatprep.subr.bf16.mxu0 0
  %7462 = vmatpush1.bf16.msra.mxu0 %v7415
  %7463 = vmatprep.subr.bf16.mxu0 0
  %7464 = vmatpush1.bf16.msra.mxu0 %v7417
  %7465 = vmatprep.subr.bf16.mxu0 0
  %7466 = vmatpush1.bf16.msra.mxu0 %v7419
  %7467 = vmatprep.subr.bf16.mxu0 0
  %7468 = vmatpush1.bf16.msra.mxu0 %v7421
  %7469 = vmatprep.subr.bf16.mxu0 0
  %7470 = vmatpush1.bf16.msra.mxu0 %v7423
  %7471 = vmatprep.subr.bf16.mxu0 0
  %7472 = vmatpush1.bf16.msra.mxu0 %v7425
  %7473 = vmatprep.subr.bf16.mxu0 0
  %7474 = vmatpush1.bf16.msra.mxu0 %v7445
  %7475 = vmatprep.subr.bf16.mxu0 0
  %7476 = vmatpush1.bf16.msra.mxu0 0
  %7477 = vmatprep.subr.bf16.mxu0 0
  %7478 = vmatpush1.bf16.msra.mxu0 0
  %7479 = vmatprep.mubr.bf16.mxu0 %v7442
  %7480 = vmatmul.mubr.bf16.gmra.mrb[0].mxu0 %v4921
  %v7481 = vpop.f32.mrb[0].mxu0
  %v7482 = vadd.f32 0.0, %v7481
  %v7483 = vpop.f32.mrb[0].mxu0
  %v7484 = vpop.f32.mrb[0].mxu0
  %v7485 = vadd.f32 0.0, %v7484
  %v7486 = vpop.f32.mrb[0].mxu0
  %7487 = vdwg.mxu0
  %v7488 = vadd.f32 %v7295, %v7482
  %v7489 = vadd.f32 %v7296, %v7485
  %v7490 = vld [vmem:[%s6 + $0x610] sm:$0xc]
  %v7491 = vld [vmem:[%s6 + $0x614] sm:$0xf]
  %v7492 = vld [vmem:[%s6 + $0x618] sm:$0xf]
  %v7493 = vld [vmem:[%s6 + $0x61c] sm:$0xf]
  %v7494 = vld [vmem:[%s6 + $0x620] sm:$0xf]
  %v7495 = vld [vmem:[%s6 + $0x624] sm:$0xf]
  %v7496 = vld [vmem:[%s6 + $0x628] sm:$0xf]
  %v7497 = vld [vmem:[%s6 + $0x62c] sm:$0xf]
  %v7498 = vld [vmem:[%s6 + $0x630] sm:$0xf]
  %v7499 = vld [vmem:[%s6 + $0x634] sm:$0xf]
  %v7500 = vld [vmem:[%s6 + $0x638] sm:$0xf]
  %v7501 = vld [vmem:[%s6 + $0x63c] sm:$0xf]
  %v7502 = vld [vmem:[%s6 + $0x640] sm:$0xf]
  %v7503 = vld [vmem:[%s6 + $0x644] sm:$0xf]
  %v7504 = vld [vmem:[%s6 + $0x648] sm:$0xf]
  %v7505 = vld [vmem:[%s6 + $0x64c] sm:$0xf]
  %v7506 = vld [vmem:[%s6 + $0x650] sm:$0xf]
  %v7507 = vld [vmem:[%s6 + $0x654] sm:$0xf]
  %v7508 = vld [vmem:[%s6 + $0x658] sm:$0xf]
  %v7509 = vld [vmem:[%s6 + $0x65c] sm:$0xf]
  %v7510 = vld [vmem:[%s6 + $0x660] sm:$0xf]
  %v7511 = vld [vmem:[%s6 + $0x664] sm:$0xf]
  %v7512 = vld [vmem:[%s6 + $0x668] sm:$0xf]
  %v7513 = vld [vmem:[%s6 + $0x66c] sm:$0xf]
  %v7514 = vld [vmem:[%s6 + $0x670] sm:$0xf]
  %v7515 = vld [vmem:[%s6 + $0x674] sm:$0xf]
  %v7516 = vld [vmem:[%s6 + $0x678] sm:$0xf]
  %v7517 = vld [vmem:[%s6 + $0x67c] sm:$0xf]
  %v7518 = vld [vmem:[%s6 + $0x680] sm:$0x1]
  %v7548 = vunpack.c.l.b16 %v7490
  %v7549 = vunpack.c.l.b16 %v7491
  %v7550 = vunpack.c.l.b16 %v7492
  %v7551 = vunpack.c.l.b16 %v7493
  %v7552 = vunpack.c.l.b16 %v7494
  %v7553 = vunpack.c.l.b16 %v7495
  %v7554 = vunpack.c.l.b16 %v7496
  %v7555 = vunpack.c.l.b16 %v7497
  %v7556 = vunpack.c.l.b16 %v7498
  %v7557 = vunpack.c.l.b16 %v7499
  %v7558 = vunpack.c.l.b16 %v7500
  %v7559 = vunpack.c.l.b16 %v7501
  %v7560 = vunpack.c.l.b16 %v7502
  %v7561 = vunpack.c.l.b16 %v7503
  %v7562 = vunpack.c.l.b16 %v7504
  %v7563 = vunpack.c.l.b16 %v7505
  %v7564 = vunpack.c.l.b16 %v7506
  %v7565 = vunpack.c.l.b16 %v7507
  %v7566 = vunpack.c.l.b16 %v7508
  %v7567 = vunpack.c.l.b16 %v7509
  %v7568 = vunpack.c.l.b16 %v7510
  %v7569 = vunpack.c.l.b16 %v7511
  %v7570 = vunpack.c.l.b16 %v7512
  %v7571 = vunpack.c.l.b16 %v7513
  %v7572 = vunpack.c.l.b16 %v7514
  %v7573 = vunpack.c.l.b16 %v7515
  %v7574 = vunpack.c.l.b16 %v7516
  %v7575 = vunpack.c.l.b16 %v7517
  %v7576 = vunpack.c.l.b16 %v7518
  %v7577 = vpack.c.b16 %v7549, %v7548
  %v7578 = vpack.c.b16 %v7551, %v7550
  %v7579 = vpack.c.b16 %v7553, %v7552
  %v7580 = vpack.c.b16 %v7555, %v7554
  %v7581 = vpack.c.b16 %v7557, %v7556
  %v7582 = vpack.c.b16 %v7559, %v7558
  %v7583 = vpack.c.b16 %v7561, %v7560
  %v7584 = vpack.c.b16 %v7563, %v7562
  %v7585 = vpack.c.b16 %v7565, %v7564
  %v7586 = vpack.c.b16 %v7567, %v7566
  %v7587 = vpack.c.b16 %v7569, %v7568
  %v7588 = vpack.c.b16 %v7571, %v7570
  %v7589 = vpack.c.b16 %v7573, %v7572
  %v7590 = vpack.c.b16 %v7575, %v7574
  %v7591 = vpack.c.b16 %v7576, %v7576
  %v7592 = vrot.slane %v7577, 2
  %v7593 = vrot.slane %v7578, 2
  %v7594 = vsel %vm5391, %v7592, %v7593
  %v7595 = vrot.slane %v7579, 2
  %v7596 = vsel %vm5391, %v7593, %v7595
  %v7597 = vrot.slane %v7580, 2
  %v7598 = vsel %vm5391, %v7595, %v7597
  %v7599 = vrot.slane %v7581, 2
  %v7600 = vsel %vm5391, %v7597, %v7599
  %v7601 = vrot.slane %v7582, 2
  %v7602 = vsel %vm5391, %v7599, %v7601
  %v7603 = vrot.slane %v7583, 2
  %v7604 = vsel %vm5391, %v7601, %v7603
  %v7605 = vrot.slane %v7584, 2
  %v7606 = vsel %vm5391, %v7603, %v7605
  %v7607 = vrot.slane %v7585, 2
  %v7608 = vsel %vm5391, %v7605, %v7607
  %v7609 = vrot.slane %v7586, 2
  %v7610 = vsel %vm5391, %v7607, %v7609
  %v7611 = vrot.slane %v7587, 2
  %v7612 = vsel %vm5391, %v7609, %v7611
  %v7613 = vrot.slane %v7588, 2
  %v7614 = vsel %vm5391, %v7611, %v7613
  %v7615 = vrot.slane %v7589, 2
  %v7616 = vsel %vm5391, %v7613, %v7615
  %v7617 = vrot.slane %v7590, 2
  %v7618 = vsel %vm5391, %v7615, %v7617
  %v7619 = vrot.slane %v7591, 2
  %v7620 = vsel %vm5391, %v7617, %v7619
  %v7635 = vsel %vm338, %v4924, 0
  %v7638 = vsel %vm5042, %v7620, 0
  %7640 = vmatprep.subr.bf16.mxu0 0
  %7641 = vmatpush1.bf16.msra.mxu0 %v7594
  %7642 = vmatprep.subr.bf16.mxu0 0
  %7643 = vmatpush1.bf16.msra.mxu0 %v7596
  %7644 = vmatprep.subr.bf16.mxu0 0
  %7645 = vmatpush1.bf16.msra.mxu0 %v7598
  %7646 = vmatprep.subr.bf16.mxu0 0
  %7647 = vmatpush1.bf16.msra.mxu0 %v7600
  %7648 = vmatprep.subr.bf16.mxu0 0
  %7649 = vmatpush1.bf16.msra.mxu0 %v7602
  %7650 = vmatprep.subr.bf16.mxu0 0
  %7651 = vmatpush1.bf16.msra.mxu0 %v7604
  %7652 = vmatprep.subr.bf16.mxu0 0
  %7653 = vmatpush1.bf16.msra.mxu0 %v7606
  %7654 = vmatprep.subr.bf16.mxu0 0
  %7655 = vmatpush1.bf16.msra.mxu0 %v7608
  %7656 = vmatprep.subr.bf16.mxu0 0
  %7657 = vmatpush1.bf16.msra.mxu0 %v7610
  %7658 = vmatprep.subr.bf16.mxu0 0
  %7659 = vmatpush1.bf16.msra.mxu0 %v7612
  %7660 = vmatprep.subr.bf16.mxu0 0
  %7661 = vmatpush1.bf16.msra.mxu0 %v7614
  %7662 = vmatprep.subr.bf16.mxu0 0
  %7663 = vmatpush1.bf16.msra.mxu0 %v7616
  %7664 = vmatprep.subr.bf16.mxu0 0
  %7665 = vmatpush1.bf16.msra.mxu0 %v7618
  %7666 = vmatprep.subr.bf16.mxu0 0
  %7667 = vmatpush1.bf16.msra.mxu0 %v7638
  %7668 = vmatprep.subr.bf16.mxu0 0
  %7669 = vmatpush1.bf16.msra.mxu0 0
  %7670 = vmatprep.subr.bf16.mxu0 0
  %7671 = vmatpush1.bf16.msra.mxu0 0
  %7672 = vmatprep.mubr.bf16.mxu0 %v7635
  %7673 = vmatmul.mubr.bf16.gmra.mrb[0].mxu0 %v4923
  %v7674 = vpop.f32.mrb[0].mxu0
  %v7675 = vadd.f32 0.0, %v7674
  %v7676 = vpop.f32.mrb[0].mxu0
  %v7677 = vpop.f32.mrb[0].mxu0
  %v7678 = vadd.f32 0.0, %v7677
  %v7679 = vpop.f32.mrb[0].mxu0
  %7680 = vdwg.mxu0
  %v7681 = vadd.f32 %v7488, %v7675
  %v7682 = vadd.f32 %v7489, %v7678
  %v7683 = vld [vmem:[%s6 + $0x680] sm:$0xe]
  %v7684 = vld [vmem:[%s6 + $0x684] sm:$0xf]
  %v7685 = vld [vmem:[%s6 + $0x688] sm:$0xf]
  %v7686 = vld [vmem:[%s6 + $0x68c] sm:$0xf]
  %v7687 = vld [vmem:[%s6 + $0x690] sm:$0xf]
  %v7688 = vld [vmem:[%s6 + $0x694] sm:$0xf]
  %v7689 = vld [vmem:[%s6 + $0x698] sm:$0xf]
  %v7690 = vld [vmem:[%s6 + $0x69c] sm:$0xf]
  %v7691 = vld [vmem:[%s6 + $0x6a0] sm:$0xf]
  %v7692 = vld [vmem:[%s6 + $0x6a4] sm:$0xf]
  %v7693 = vld [vmem:[%s6 + $0x6a8] sm:$0xf]
  %v7694 = vld [vmem:[%s6 + $0x6ac] sm:$0xf]
  %v7695 = vld [vmem:[%s6 + $0x6b0] sm:$0xf]
  %v7696 = vld [vmem:[%s6 + $0x6b4] sm:$0xf]
  %v7697 = vld [vmem:[%s6 + $0x6b8] sm:$0xf]
  %v7698 = vld [vmem:[%s6 + $0x6bc] sm:$0xf]
  %v7699 = vld [vmem:[%s6 + $0x6c0] sm:$0xf]
  %v7700 = vld [vmem:[%s6 + $0x6c4] sm:$0xf]
  %v7701 = vld [vmem:[%s6 + $0x6c8] sm:$0xf]
  %v7702 = vld [vmem:[%s6 + $0x6cc] sm:$0xf]
  %v7703 = vld [vmem:[%s6 + $0x6d0] sm:$0xf]
  %v7704 = vld [vmem:[%s6 + $0x6d4] sm:$0xf]
  %v7705 = vld [vmem:[%s6 + $0x6d8] sm:$0xf]
  %v7706 = vld [vmem:[%s6 + $0x6dc] sm:$0xf]
  %v7707 = vld [vmem:[%s6 + $0x6e0] sm:$0xf]
  %v7708 = vld [vmem:[%s6 + $0x6e4] sm:$0xf]
  %v7709 = vld [vmem:[%s6 + $0x6e8] sm:$0xf]
  %v7710 = vld [vmem:[%s6 + $0x6ec] sm:$0xf]
  %v7739 = vunpack.c.l.b16 %v7683
  %v7740 = vunpack.c.l.b16 %v7684
  %v7741 = vunpack.c.l.b16 %v7685
  %v7742 = vunpack.c.l.b16 %v7686
  %v7743 = vunpack.c.l.b16 %v7687
  %v7744 = vunpack.c.l.b16 %v7688
  %v7745 = vunpack.c.l.b16 %v7689
  %v7746 = vunpack.c.l.b16 %v7690
  %v7747 = vunpack.c.l.b16 %v7691
  %v7748 = vunpack.c.l.b16 %v7692
  %v7749 = vunpack.c.l.b16 %v7693
  %v7750 = vunpack.c.l.b16 %v7694
  %v7751 = vunpack.c.l.b16 %v7695
  %v7752 = vunpack.c.l.b16 %v7696
  %v7753 = vunpack.c.l.b16 %v7697
  %v7754 = vunpack.c.l.b16 %v7698
  %v7755 = vunpack.c.l.b16 %v7699
  %v7756 = vunpack.c.l.b16 %v7700
  %v7757 = vunpack.c.l.b16 %v7701
  %v7758 = vunpack.c.l.b16 %v7702
  %v7759 = vunpack.c.l.b16 %v7703
  %v7760 = vunpack.c.l.b16 %v7704
  %v7761 = vunpack.c.l.b16 %v7705
  %v7762 = vunpack.c.l.b16 %v7706
  %v7763 = vunpack.c.l.b16 %v7707
  %v7764 = vunpack.c.l.b16 %v7708
  %v7765 = vunpack.c.l.b16 %v7709
  %v7766 = vunpack.c.l.b16 %v7710
  %v7767 = vpack.c.b16 %v7740, %v7739
  %v7768 = vpack.c.b16 %v7742, %v7741
  %v7769 = vpack.c.b16 %v7744, %v7743
  %v7770 = vpack.c.b16 %v7746, %v7745
  %v7771 = vpack.c.b16 %v7748, %v7747
  %v7772 = vpack.c.b16 %v7750, %v7749
  %v7773 = vpack.c.b16 %v7752, %v7751
  %v7774 = vpack.c.b16 %v7754, %v7753
  %v7775 = vpack.c.b16 %v7756, %v7755
  %v7776 = vpack.c.b16 %v7758, %v7757
  %v7777 = vpack.c.b16 %v7760, %v7759
  %v7778 = vpack.c.b16 %v7762, %v7761
  %v7779 = vpack.c.b16 %v7764, %v7763
  %v7780 = vpack.c.b16 %v7766, %v7765
  %v7781 = vrot.slane %v7767, 1
  %v7782 = vrot.slane %v7768, 1
  %v7783 = vsel %vm5581, %v7781, %v7782
  %v7784 = vrot.slane %v7769, 1
  %v7785 = vsel %vm5581, %v7782, %v7784
  %v7786 = vrot.slane %v7770, 1
  %v7787 = vsel %vm5581, %v7784, %v7786
  %v7788 = vrot.slane %v7771, 1
  %v7789 = vsel %vm5581, %v7786, %v7788
  %v7790 = vrot.slane %v7772, 1
  %v7791 = vsel %vm5581, %v7788, %v7790
  %v7792 = vrot.slane %v7773, 1
  %v7793 = vsel %vm5581, %v7790, %v7792
  %v7794 = vrot.slane %v7774, 1
  %v7795 = vsel %vm5581, %v7792, %v7794
  %v7796 = vrot.slane %v7775, 1
  %v7797 = vsel %vm5581, %v7794, %v7796
  %v7798 = vrot.slane %v7776, 1
  %v7799 = vsel %vm5581, %v7796, %v7798
  %v7800 = vrot.slane %v7777, 1
  %v7801 = vsel %vm5581, %v7798, %v7800
  %v7802 = vrot.slane %v7778, 1
  %v7803 = vsel %vm5581, %v7800, %v7802
  %v7804 = vrot.slane %v7779, 1
  %v7805 = vsel %vm5581, %v7802, %v7804
  %v7806 = vrot.slane %v7780, 1
  %v7807 = vsel %vm5581, %v7804, %v7806
  %v7822 = vsel %vm338, %v4926, 0
  %v7825 = vsel %vm5042, %v7806, 0
  %7827 = vmatprep.subr.bf16.mxu0 0
  %7828 = vmatpush1.bf16.msra.mxu0 %v7783
  %7829 = vmatprep.subr.bf16.mxu0 0
  %7830 = vmatpush1.bf16.msra.mxu0 %v7785
  %7831 = vmatprep.subr.bf16.mxu0 0
  %7832 = vmatpush1.bf16.msra.mxu0 %v7787
  %7833 = vmatprep.subr.bf16.mxu0 0
  %7834 = vmatpush1.bf16.msra.mxu0 %v7789
  %7835 = vmatprep.subr.bf16.mxu0 0
  %7836 = vmatpush1.bf16.msra.mxu0 %v7791
  %7837 = vmatprep.subr.bf16.mxu0 0
  %7838 = vmatpush1.bf16.msra.mxu0 %v7793
  %7839 = vmatprep.subr.bf16.mxu0 0
  %7840 = vmatpush1.bf16.msra.mxu0 %v7795
  %7841 = vmatprep.subr.bf16.mxu0 0
  %7842 = vmatpush1.bf16.msra.mxu0 %v7797
  %7843 = vmatprep.subr.bf16.mxu0 0
  %7844 = vmatpush1.bf16.msra.mxu0 %v7799
  %7845 = vmatprep.subr.bf16.mxu0 0
  %7846 = vmatpush1.bf16.msra.mxu0 %v7801
  %7847 = vmatprep.subr.bf16.mxu0 0
  %7848 = vmatpush1.bf16.msra.mxu0 %v7803
  %7849 = vmatprep.subr.bf16.mxu0 0
  %7850 = vmatpush1.bf16.msra.mxu0 %v7805
  %7851 = vmatprep.subr.bf16.mxu0 0
  %7852 = vmatpush1.bf16.msra.mxu0 %v7807
  %7853 = vmatprep.subr.bf16.mxu0 0
  %7854 = vmatpush1.bf16.msra.mxu0 %v7825
  %7855 = vmatprep.subr.bf16.mxu0 0
  %7856 = vmatpush1.bf16.msra.mxu0 0
  %7857 = vmatprep.subr.bf16.mxu0 0
  %7858 = vmatpush1.bf16.msra.mxu0 0
  %7859 = vmatprep.mubr.bf16.mxu0 %v7822
  %7860 = vmatmul.mubr.bf16.gmra.mrb[0].mxu0 %v4925
  %v7861 = vpop.f32.mrb[0].mxu0
  %v7862 = vadd.f32 0.0, %v7861
  %v7863 = vpop.f32.mrb[0].mxu0
  %v7864 = vpop.f32.mrb[0].mxu0
  %v7865 = vadd.f32 0.0, %v7864
  %v7866 = vpop.f32.mrb[0].mxu0
  %7867 = vdwg.mxu0
  %v7868 = vadd.f32 %v7681, %v7862
  %v7869 = vadd.f32 %v7682, %v7865
  %v7870 = vmax.f32 %v7868, 0.0
  %v7871 = vmax.f32 %v7869, 0.0
  %v7872 = vpack.c.bf16 %v7871, %v7870
  %v7873 = vld [vmem:[%s8] sm:$0xf]
  %v7874 = vld [vmem:[%s8 + $0x4] sm:$0xf]
  %v7875 = vld [vmem:[%s8 + $0x8] sm:$0xf]
  %v7876 = vld [vmem:[%s8 + $0xc] sm:$0xf]
  %v7877 = vld [vmem:[%s8 + $0x10] sm:$0xf]
  %v7878 = vld [vmem:[%s8 + $0x14] sm:$0xf]
  %v7879 = vld [vmem:[%s8 + $0x18] sm:$0xf]
  %v7880 = vld [vmem:[%s8 + $0x1c] sm:$0xf]
  %v7881 = vld [vmem:[%s8 + $0x20] sm:$0xf]
  %v7882 = vld [vmem:[%s8 + $0x24] sm:$0xf]
  %v7883 = vld [vmem:[%s8 + $0x28] sm:$0xf]
  %v7884 = vld [vmem:[%s8 + $0x2c] sm:$0xf]
  %v7885 = vld [vmem:[%s8 + $0x30] sm:$0xf]
  %v7886 = vld [vmem:[%s8 + $0x34] sm:$0xf]
  %v7887 = vld [vmem:[%s8 + $0x38] sm:$0xf]
  %v7888 = vld [vmem:[%s9] sm:$0x1]
  %v7890 = vlaneseq
  %v7891 = vshrl.u32 %v7890, 7
  %v7892 = vsub.s32 0, %v7891
  %v7893 = vrot.slane %v7888, %v7892
  %v7910 = vunpack.c.l.b16 %v7873
  %v7911 = vunpack.c.l.b16 %v7874
  %v7912 = vunpack.c.l.b16 %v7875
  %v7913 = vunpack.c.l.b16 %v7876
  %v7914 = vunpack.c.l.b16 %v7877
  %v7915 = vunpack.c.l.b16 %v7878
  %v7916 = vunpack.c.l.b16 %v7879
  %v7917 = vunpack.c.l.b16 %v7880
  %v7918 = vunpack.c.l.b16 %v7881
  %v7919 = vunpack.c.l.b16 %v7882
  %v7920 = vunpack.c.l.b16 %v7883
  %v7921 = vunpack.c.l.b16 %v7884
  %v7922 = vunpack.c.l.b16 %v7885
  %v7923 = vunpack.c.l.b16 %v7886
  %v7924 = vunpack.c.l.b16 %v7887
  %v7925 = vpack.c.b16 %v7911, %v7910
  %v7926 = vpack.c.b16 %v7913, %v7912
  %v7927 = vpack.c.b16 %v7915, %v7914
  %v7928 = vpack.c.b16 %v7917, %v7916
  %v7929 = vpack.c.b16 %v7919, %v7918
  %v7930 = vpack.c.b16 %v7921, %v7920
  %v7931 = vpack.c.b16 %v7923, %v7922
  %v7932 = vpack.c.b16 %v7924, %v7924
  %vm7940 = vcmask 982016
  %v7942 = vsel %vm7940, %v7872, 0
  %vm7944 = vcmask 1043456
  %v7946 = vsel %vm7944, %v7932, 0
  %7948 = vmatprep.subr.bf16.mxu0 0
  %7949 = vmatpush1.bf16.msra.mxu0 %v7925
  %7950 = vmatprep.subr.bf16.mxu0 0
  %7951 = vmatpush1.bf16.msra.mxu0 %v7926
  %7952 = vmatprep.subr.bf16.mxu0 0
  %7953 = vmatpush1.bf16.msra.mxu0 %v7927
  %7954 = vmatprep.subr.bf16.mxu0 0
  %7955 = vmatpush1.bf16.msra.mxu0 %v7928
  %7956 = vmatprep.subr.bf16.mxu0 0
  %7957 = vmatpush1.bf16.msra.mxu0 %v7929
  %7958 = vmatprep.subr.bf16.mxu0 0
  %7959 = vmatpush1.bf16.msra.mxu0 %v7930
  %7960 = vmatprep.subr.bf16.mxu0 0
  %7961 = vmatpush1.bf16.msra.mxu0 %v7931
  %7962 = vmatprep.subr.bf16.mxu0 0
  %7963 = vmatpush1.bf16.msra.mxu0 %v7946
  %7964 = vmatprep.subr.bf16.mxu0 0
  %7965 = vmatpush1.bf16.msra.mxu0 0
  %7966 = vmatprep.subr.bf16.mxu0 0
  %7967 = vmatpush1.bf16.msra.mxu0 0
  %7968 = vmatprep.subr.bf16.mxu0 0
  %7969 = vmatpush1.bf16.msra.mxu0 0
  %7970 = vmatprep.subr.bf16.mxu0 0
  %7971 = vmatpush1.bf16.msra.mxu0 0
  %7972 = vmatprep.subr.bf16.mxu0 0
  %7973 = vmatpush1.bf16.msra.mxu0 0
  %7974 = vmatprep.subr.bf16.mxu0 0
  %7975 = vmatpush1.bf16.msra.mxu0 0
  %7976 = vmatprep.subr.bf16.mxu0 0
  %7977 = vmatpush1.bf16.msra.mxu0 0
  %7978 = vmatprep.subr.bf16.mxu0 0
  %7979 = vmatpush1.bf16.msra.mxu0 0
  %7980 = vmatprep.mubr.bf16.mxu0 0
  %7981 = vmatmul.mubr.bf16.gmra.mrb[0].mxu0 %v7942
  %v7982 = vpop.f32.mrb[0].mxu0
  %v7983 = vadd.f32 %v7893, %v7982
  %v7984 = vpop.f32.mrb[0].mxu0
  %v7985 = vpop.f32.mrb[0].mxu0
  %v7986 = vadd.f32 %v7893, %v7985
  %v7987 = vpop.f32.mrb[0].mxu0
  %7988 = vdwg.mxu0
  %v7989 = vmax.f32 %v7983, 0.0
  %v7990 = vmax.f32 %v7986, 0.0
  %v7991 = vpack.c.bf16 %v7990, %v7989
  %v7992 = vld [vmem:[%s10] sm:$0xf]
  %v7993 = vld [vmem:[%s10 + $0x4] sm:$0xf]
  %v7994 = vld [vmem:[%s10 + $0x8] sm:$0xf]
  %v7995 = vld [vmem:[%s10 + $0xc] sm:$0xf]
  %v7996 = vld [vmem:[%s10 + $0x10] sm:$0xf]
  %v7997 = vld [vmem:[%s10 + $0x14] sm:$0xf]
  %v7998 = vld [vmem:[%s10 + $0x18] sm:$0xf]
  %v7999 = vld [vmem:[%s10 + $0x1c] sm:$0xf]
  %v8000 = vld [vmem:[%s10 + $0x20] sm:$0xf]
  %v8001 = vld [vmem:[%s10 + $0x24] sm:$0xf]
  %v8002 = vld [vmem:[%s10 + $0x28] sm:$0x3]
  %v8003 = vld [vmem:[%s11] sm:$0x1]
  %v8005 = vlaneseq
  %v8006 = vshrl.u32 %v8005, 7
  %v8007 = vsub.s32 0, %v8006
  %v8008 = vrot.slane %v8003, %v8007
  %v8021 = vunpack.c.l.b16 %v7992
  %v8022 = vunpack.c.l.b16 %v7993
  %v8023 = vunpack.c.l.b16 %v7994
  %v8024 = vunpack.c.l.b16 %v7995
  %v8025 = vunpack.c.l.b16 %v7996
  %v8026 = vunpack.c.l.b16 %v7997
  %v8027 = vunpack.c.l.b16 %v7998
  %v8028 = vunpack.c.l.b16 %v7999
  %v8029 = vunpack.c.l.b16 %v8000
  %v8030 = vunpack.c.l.b16 %v8001
  %v8031 = vunpack.c.l.b16 %v8002
  %v8032 = vpack.c.b16 %v8022, %v8021
  %v8033 = vpack.c.b16 %v8024, %v8023
  %v8034 = vpack.c.b16 %v8026, %v8025
  %v8035 = vpack.c.b16 %v8028, %v8027
  %v8036 = vpack.c.b16 %v8030, %v8029
  %v8037 = vpack.c.b16 %v8031, %v8031
  %vm8043 = vcmask 687104
  %v8045 = vsel %vm8043, %v7991, 0
  %vm8047 = vcmask 1041408
  %v8049 = vsel %vm8047, %v8037, 0
  %8051 = vmatprep.subr.bf16.mxu0 0
  %8052 = vmatpush1.bf16.msra.mxu0 %v8032
  %8053 = vmatprep.subr.bf16.mxu0 0
  %8054 = vmatpush1.bf16.msra.mxu0 %v8033
  %8055 = vmatprep.subr.bf16.mxu0 0
  %8056 = vmatpush1.bf16.msra.mxu0 %v8034
  %8057 = vmatprep.subr.bf16.mxu0 0
  %8058 = vmatpush1.bf16.msra.mxu0 %v8035
  %8059 = vmatprep.subr.bf16.mxu0 0
  %8060 = vmatpush1.bf16.msra.mxu0 %v8036
  %8061 = vmatprep.subr.bf16.mxu0 0
  %8062 = vmatpush1.bf16.msra.mxu0 %v8049
  %8063 = vmatprep.subr.bf16.mxu0 0
  %8064 = vmatpush1.bf16.msra.mxu0 0
  %8065 = vmatprep.subr.bf16.mxu0 0
  %8066 = vmatpush1.bf16.msra.mxu0 0
  %8067 = vmatprep.subr.bf16.mxu0 0
  %8068 = vmatpush1.bf16.msra.mxu0 0
  %8069 = vmatprep.subr.bf16.mxu0 0
  %8070 = vmatpush1.bf16.msra.mxu0 0
  %8071 = vmatprep.subr.bf16.mxu0 0
  %8072 = vmatpush1.bf16.msra.mxu0 0
  %8073 = vmatprep.subr.bf16.mxu0 0
  %8074 = vmatpush1.bf16.msra.mxu0 0
  %8075 = vmatprep.subr.bf16.mxu0 0
  %8076 = vmatpush1.bf16.msra.mxu0 0
  %8077 = vmatprep.subr.bf16.mxu0 0
  %8078 = vmatpush1.bf16.msra.mxu0 0
  %8079 = vmatprep.subr.bf16.mxu0 0
  %8080 = vmatpush1.bf16.msra.mxu0 0
  %8081 = vmatprep.subr.bf16.mxu0 0
  %8082 = vmatpush1.bf16.msra.mxu0 0
  %8083 = vmatprep.mubr.bf16.mxu0 0
  %8084 = vmatmul.mubr.bf16.gmra.mrb[0].mxu0 %v8045
  %v8085 = vpop.f32.mrb[0].mxu0
  %v8086 = vadd.f32 %v8008, %v8085
  %v8087 = vpop.f32.mrb[0].mxu0
  %v8088 = vpop.f32.mrb[0].mxu0
  %v8089 = vadd.f32 %v8008, %v8088
  %v8090 = vpop.f32.mrb[0].mxu0
  %8091 = vdwg.mxu0
  %8092 = vst [vmem:[%s12] sm:$0xff] %v8086
  %8093 = vst [vmem:[%s12 + $0x8] sm:$0xff] %v8089
  // Predicated region
  $region50: #{lenet5_dropout_forward.1} parent=0 // pred_check
    _
  $region51: #{lenet5_dropout_forward.1} parent=0 // pred_check_branch
    %8095 = sbr.rel (0) target = $region53
  $region52: #{lenet5_dropout_forward.1} parent=0 // pred_region
    _
  $region53: #{lenet5_dropout_forward.1} parent=0 // pred_fallthru
    _
  // Predicated region
  $region54: #{lenet5_dropout_forward.1} parent=0 // pred_check
    _
  $region55: #{lenet5_dropout_forward.1} parent=0 // pred_check_branch
    %8097 = sbr.rel (0) target = $region57
  $region56: #{lenet5_dropout_forward.1} parent=0 // pred_region
    _
  $region57: #{lenet5_dropout_forward.1} parent=0 // pred_fallthru
    _

</llo_original>
